<compile_context>
chip_gen: v6e
topology: v6e:2x2x1
jax: 0.10.0
libtpu: 0.0.40
codegen_flags: <defaults>
</compile_context>

<pallas_src>
import jax
import jax.numpy as jnp
from jax.experimental import pallas as pl
from jax.experimental.pallas import tpu as pltpu

# Make the pure-JAX reference and the in-kernel dots numerically comparable
# (exact f32 matmuls on TPU instead of default bf16-pass matmuls).
jax.config.update("jax_default_matmul_precision", "highest")

# --- config (synthetic, deterministic) -------------------------------------
BATCH = 2
SEQ = 8            # max_seq_len == seq here (no layer_past / cache)
HIDDEN = 32        # embed_dim / hidden_size
NUM_HEADS = 4
HEAD_DIM = HIDDEN // NUM_HEADS
WINDOW = 4         # local-attention window size
LN_EPS = 1e-5
ATTENTION_TYPE = "local"   # the InnerAttention layer picks 'local' here

_HP = jax.lax.Precision.HIGHEST


# --- Pallas kernel ----------------------------------------------------------
def inner_attention_kernel(x_ref, gamma_ref, beta_ref, wqkv_ref, wot_ref,
                           bo_ref, o_ref):
    B, S, E, H, D = BATCH, SEQ, HIDDEN, NUM_HEADS, HEAD_DIM
    G = H * B                                           # folded (head, batch) axis

    gamma = gamma_ref[...]                              # (1, E)
    beta = beta_ref[...]                                # (1, E)
    wqkv = wqkv_ref[...]                                # (E, 3E) lane-dense
    wot = wot_ref[...]                                  # (E, E)  = Wo.T
    bo = bo_ref[...]                                    # (1, E)

    # ---- LayerNorm over embed dim, whole batch at once (f32, VPU) ----
    x = x_ref[...].astype(jnp.float32)                  # (B, S, E)
    mean = jnp.mean(x, axis=-1, keepdims=True)
    xc = x - mean
    var = jnp.mean(xc * xc, axis=-1, keepdims=True)
    xn = xc * jax.lax.rsqrt(var + LN_EPS) * gamma + beta    # (B, S, E)

    # ---- QKV projection: ONE lane-dense matmul (B*S, E) @ (E, 3E) ----
    xn2d = xn.reshape(B * S, E)
    qkv2d = jnp.dot(xn2d, wqkv, preferred_element_type=jnp.float32,
                    precision=_HP)                       # (B*S, 3E)

    # ---- split q/k/v and heads; fold (head, batch) into one leading axis ----
    # Columns of wqkv are ordered [q | k | v] x [head] x [dim].
    def split_heads(block_idx):
        pieces = []
        for h in range(H):
            off = block_idx * E + h * D
            pieces.append(qkv2d[:, off:off + D].reshape(B, S, D))   # (B, S, D)
        return jnp.stack(pieces, axis=0).reshape(G, S, D)           # g = h*B + b

    q = split_heads(0)                                   # (G, S, D)
    k = split_heads(1)
    v = split_heads(2)

    # ---- local/causal keep-mask generated in-kernel ----
    row = jax.lax.broadcasted_iota(jnp.int32, (S, S), 0)
    col = jax.lax.broadcasted_iota(jnp.int32, (S, S), 1)
    keep = ((col <= row) & ((row - col) < WINDOW))[None]            # (1, S, S)
    mask_value = jnp.finfo(jnp.float32).min              # matches torch.finfo(f32).min

    # ---- attention: canonical leading-batch einsums, unscaled QK^T ----
    scores = jnp.einsum('gqd,gkd->gqk', q, k,
                        preferred_element_type=jnp.float32,
                        precision=_HP)                    # (G, S, S)
    scores = jnp.where(keep, scores, mask_value)
    scores = scores - jnp.max(scores, axis=-1, keepdims=True)
    p = jnp.exp(scores)
    probs = p / jnp.sum(p, axis=-1, keepdims=True)        # exact softmax

    ctx = jnp.einsum('gqk,gkd->gqd', probs, v,
                     preferred_element_type=jnp.float32,
                     precision=_HP)                       # (G, S, D)

    # ---- merge heads back onto the lane dim, then out_proj (one matmul) ----
    ctx_hb = ctx.reshape(H, B, S, D)
    ctx_merged = jnp.concatenate([ctx_hb[h] for h in range(H)], axis=-1)  # (B,S,E)
    out2d = jnp.dot(ctx_merged.reshape(B * S, E), wot,
                    preferred_element_type=jnp.float32,
                    precision=_HP) + bo                   # (B*S, E)

    # attn_dropout / resid_dropout are identity in eval mode.
    o_ref[...] = out2d.reshape(B, S, E).astype(o_ref.dtype)   # single full store


# --- wrapper ----------------------------------------------------------------
@jax.jit
def inner_attention_forward(x, gamma, beta, wq, wk, wv, wo, bo):
    B, S, E = x.shape

    # Pre-transpose weights in XLA (done once): y = x @ W.T  ->  x @ (W.T).
    wqkv = jnp.concatenate([wq.T, wk.T, wv.T], axis=1)    # (E, 3E), lane-dense
    wot = wo.T                                            # (E, E)

    return pl.pallas_call(
        inner_attention_kernel,
        out_shape=jax.ShapeDtypeStruct((B, S, E), x.dtype),
        grid_spec=pltpu.PrefetchScalarGridSpec(
            num_scalar_prefetch=0,
            grid=(1,),   # single invocation: whole (tiny) problem in one step
            in_specs=[
                pl.BlockSpec((B, S, E), lambda i: (0, 0, 0)),     # hidden_states
                pl.BlockSpec((1, E), lambda i: (0, 0)),           # ln gamma
                pl.BlockSpec((1, E), lambda i: (0, 0)),           # ln beta
                pl.BlockSpec((E, 3 * E), lambda i: (0, 0)),       # Wqkv (flat)
                pl.BlockSpec((E, E), lambda i: (0, 0)),           # Wo.T
                pl.BlockSpec((1, E), lambda i: (0, 0)),           # out_proj bias
            ],
            out_specs=pl.BlockSpec((B, S, E), lambda i: (0, 0, 0)),
        ),
        compiler_params=pltpu.CompilerParams(
            dimension_semantics=("arbitrary",)),
    )(x, gamma, beta, wqkv, wot, bo)


def build_mask(seq_len, attention_type, window_size):
    """Reproduce the registered `bias` buffer: tril XOR tril(-window)."""
    i = jnp.arange(seq_len)[:, None]
    j = jnp.arange(seq_len)[None, :]
    causal = j <= i
    if attention_type == "local":
        keep = causal & ((i - j) < window_size)
    else:  # 'global'
        keep = causal
    return keep.astype(jnp.int32)


def reference_forward(x, gamma, beta, wq, wk, wv, wo, bo, mask):
    """Pure-JAX reference mirroring the PyTorch module (eval mode), f32."""
    xf = x.astype(jnp.float32)
    mean = jnp.mean(xf, axis=-1, keepdims=True)
    var = jnp.mean((xf - mean) ** 2, axis=-1, keepdims=True)
    xn = (xf - mean) / jnp.sqrt(var + LN_EPS) * gamma[0] + beta[0]
    q = jnp.dot(xn, wq.T, precision=_HP)
    k = jnp.dot(xn, wk.T, precision=_HP)
    v = jnp.dot(xn, wv.T, precision=_HP)
    B, S, E = x.shape
    qh = q.reshape(B, S, NUM_HEADS, HEAD_DIM).transpose(0, 2, 1, 3)
    kh = k.reshape(B, S, NUM_HEADS, HEAD_DIM).transpose(0, 2, 1, 3)
    vh = v.reshape(B, S, NUM_HEADS, HEAD_DIM).transpose(0, 2, 1, 3)
    scores = jnp.einsum("bhqd,bhkd->bhqk", qh, kh, precision=_HP)
    scores = jnp.where(mask[None, None].astype(bool), scores,
                       jnp.finfo(jnp.float32).min)
    probs = jax.nn.softmax(scores, axis=-1)
    ctx = jnp.einsum("bhqk,bhkd->bhqd", probs, vh, precision=_HP)
    ctx = ctx.transpose(0, 2, 1, 3).reshape(B, S, E)
    return jnp.dot(ctx, wo.T, precision=_HP) + bo[0]


if __name__ == "__main__":
    key = jax.random.PRNGKey(0)
    ks = jax.random.split(key, 8)

    x = jax.random.normal(ks[0], (BATCH, SEQ, HIDDEN), dtype=jnp.float32)

    # Deterministic synthetic parameters (module __init__ shapes).
    gamma = jnp.ones((1, HIDDEN), dtype=jnp.float32)           # LayerNorm weight
    beta = jnp.zeros((1, HIDDEN), dtype=jnp.float32)           # LayerNorm bias
    scale = 1.0 / jnp.sqrt(jnp.float32(HIDDEN))
    wq = jax.random.normal(ks[1], (HIDDEN, HIDDEN), jnp.float32) * scale
    wk = jax.random.normal(ks[2], (HIDDEN, HIDDEN), jnp.float32) * scale
    wv = jax.random.normal(ks[3], (HIDDEN, HIDDEN), jnp.float32) * scale
    wo = jax.random.normal(ks[4], (HIDDEN, HIDDEN), jnp.float32) * scale
    bo = (jax.random.normal(ks[5], (1, HIDDEN), jnp.float32) * 0.01)

    out = inner_attention_forward(x, gamma, beta, wq, wk, wv, wo, bo)
    out = jax.block_until_ready(out)

    mask = build_mask(SEQ, ATTENTION_TYPE, WINDOW)
    ref = reference_forward(x, gamma, beta, wq, wk, wv, wo, bo, mask)
    assert out.shape == (BATCH, SEQ, HIDDEN)
    assert jnp.allclose(out, ref, rtol=1e-3, atol=1e-3), "mismatch vs reference"

    print("KERNEL_OK")
</pallas_src>

<mosaic_0001>
module attributes {stable_mosaic.version = 11 : i64} {
  func.func @inner_attention_kernel(%arg0: i32, %arg1: memref<2x8x32xf32, #tpu.memory_space<vmem>>, %arg2: memref<1x32xf32, #tpu.memory_space<vmem>>, %arg3: memref<1x32xf32, #tpu.memory_space<vmem>>, %arg4: memref<32x96xf32, #tpu.memory_space<vmem>>, %arg5: memref<32x32xf32, #tpu.memory_space<vmem>>, %arg6: memref<1x32xf32, #tpu.memory_space<vmem>>, %arg7: memref<2x8x32xf32, #tpu.memory_space<vmem>>) attributes {dimension_semantics = [#tpu.dimension_semantics<arbitrary>], iteration_bounds = array<i64: 1>, scalar_prefetch = 0 : i64, scratch_operands = 0 : i64, tpu.core_type = #tpu.core_type<tc>, window_params = [{pipeline_mode = #tpu.pipeline_mode<synchronous>, transform_indices = @transform_0, window_bounds = array<i64: 2, 8, 32>}, {pipeline_mode = #tpu.pipeline_mode<synchronous>, transform_indices = @transform_1, window_bounds = array<i64: 1, 32>}, {pipeline_mode = #tpu.pipeline_mode<synchronous>, transform_indices = @transform_2, window_bounds = array<i64: 1, 32>}, {pipeline_mode = #tpu.pipeline_mode<synchronous>, transform_indices = @transform_3, window_bounds = array<i64: 32, 96>}, {pipeline_mode = #tpu.pipeline_mode<synchronous>, transform_indices = @transform_4, window_bounds = array<i64: 32, 32>}, {pipeline_mode = #tpu.pipeline_mode<synchronous>, transform_indices = @transform_5, window_bounds = array<i64: 1, 32>}, {pipeline_mode = #tpu.pipeline_mode<synchronous>, transform_indices = @transform_6, window_bounds = array<i64: 2, 8, 32>}]} {
    %c0 = arith.constant 0 : index
    %c0_0 = arith.constant 0 : index
    %0 = vector.load %arg2[%c0, %c0_0] : memref<1x32xf32, #tpu.memory_space<vmem>>, vector<1x32xf32>
    %c0_1 = arith.constant 0 : index
    %c0_2 = arith.constant 0 : index
    %1 = vector.load %arg3[%c0_1, %c0_2] : memref<1x32xf32, #tpu.memory_space<vmem>>, vector<1x32xf32>
    %c0_3 = arith.constant 0 : index
    %c0_4 = arith.constant 0 : index
    %2 = vector.load %arg4[%c0_3, %c0_4] : memref<32x96xf32, #tpu.memory_space<vmem>>, vector<32x96xf32>
    %c0_5 = arith.constant 0 : index
    %c0_6 = arith.constant 0 : index
    %3 = vector.load %arg5[%c0_5, %c0_6] : memref<32x32xf32, #tpu.memory_space<vmem>>, vector<32x32xf32>
    %c0_7 = arith.constant 0 : index
    %c0_8 = arith.constant 0 : index
    %4 = vector.load %arg6[%c0_7, %c0_8] : memref<1x32xf32, #tpu.memory_space<vmem>>, vector<1x32xf32>
    %c0_9 = arith.constant 0 : index
    %c0_10 = arith.constant 0 : index
    %c0_11 = arith.constant 0 : index
    %5 = vector.load %arg1[%c0_9, %c0_10, %c0_11] : memref<2x8x32xf32, #tpu.memory_space<vmem>>, vector<2x8x32xf32>
    %cst = arith.constant dense<0.000000e+00> : vector<2x8xf32>
    %6 = vector.multi_reduction <add>, %5, %cst [2] : vector<2x8x32xf32> to vector<2x8xf32>
    %7 = vector.shape_cast %6 : vector<2x8xf32> to vector<2x8x1xf32>
    %cst_12 = arith.constant 3.200000e+01 : f32
    %8 = vector.broadcast %cst_12 : f32 to vector<2x8x1xf32>
    %9 = arith.divf %7, %8 : vector<2x8x1xf32>
    %10 = vector.broadcast %9 : vector<2x8x1xf32> to vector<2x8x32xf32>
    %11 = arith.subf %5, %10 : vector<2x8x32xf32>
    %12 = arith.mulf %11, %11 : vector<2x8x32xf32>
    %cst_13 = arith.constant dense<0.000000e+00> : vector<2x8xf32>
    %13 = vector.multi_reduction <add>, %12, %cst_13 [2] : vector<2x8x32xf32> to vector<2x8xf32>
    %14 = vector.shape_cast %13 : vector<2x8xf32> to vector<2x8x1xf32>
    %cst_14 = arith.constant 3.200000e+01 : f32
    %15 = vector.broadcast %cst_14 : f32 to vector<2x8x1xf32>
    %16 = arith.divf %14, %15 : vector<2x8x1xf32>
    %cst_15 = arith.constant 9.99999974E-6 : f32
    %17 = vector.broadcast %cst_15 : f32 to vector<2x8x1xf32>
    %18 = arith.addf %16, %17 : vector<2x8x1xf32>
    %19 = math.rsqrt %18 : vector<2x8x1xf32>
    %20 = vector.broadcast %19 : vector<2x8x1xf32> to vector<2x8x32xf32>
    %21 = arith.mulf %11, %20 : vector<2x8x32xf32>
    %22 = vector.shape_cast %0 : vector<1x32xf32> to vector<1x1x32xf32>
    %23 = vector.broadcast %22 : vector<1x1x32xf32> to vector<2x8x32xf32>
    %24 = arith.mulf %21, %23 : vector<2x8x32xf32>
    %25 = vector.shape_cast %1 : vector<1x32xf32> to vector<1x1x32xf32>
    %26 = vector.broadcast %25 : vector<1x1x32xf32> to vector<2x8x32xf32>
    %27 = arith.addf %24, %26 : vector<2x8x32xf32>
    %28 = vector.shape_cast %27 : vector<2x8x32xf32> to vector<16x32xf32>
    %cst_16 = arith.constant dense<0.000000e+00> : vector<16x96xf32>
    %29 = tpu.matmul %28, %2, %cst_16 {dimension_numbers = #tpu.dot_dimension_numbers<[1], [0], [0], [1], [0, 0, 1, 1], [], []>, precision = #tpu.contract_precision<fp32>} : vector<16x32xf32>, vector<32x96xf32>, vector<16x96xf32> -> vector<16x96xf32>
    %30 = vector.extract_strided_slice %29 {offsets = [0, 0], sizes = [16, 8], strides = [1, 1]} : vector<16x96xf32> to vector<16x8xf32>
    %31 = vector.shape_cast %30 : vector<16x8xf32> to vector<2x8x8xf32>
    %32 = vector.extract_strided_slice %29 {offsets = [0, 8], sizes = [16, 8], strides = [1, 1]} : vector<16x96xf32> to vector<16x8xf32>
    %33 = vector.shape_cast %32 : vector<16x8xf32> to vector<2x8x8xf32>
    %34 = vector.extract_strided_slice %29 {offsets = [0, 16], sizes = [16, 8], strides = [1, 1]} : vector<16x96xf32> to vector<16x8xf32>
    %35 = vector.shape_cast %34 : vector<16x8xf32> to vector<2x8x8xf32>
    %36 = vector.extract_strided_slice %29 {offsets = [0, 24], sizes = [16, 8], strides = [1, 1]} : vector<16x96xf32> to vector<16x8xf32>
    %37 = vector.shape_cast %36 : vector<16x8xf32> to vector<2x8x8xf32>
    %38 = vector.shape_cast %31 : vector<2x8x8xf32> to vector<1x2x8x8xf32>
    %39 = vector.shape_cast %33 : vector<2x8x8xf32> to vector<1x2x8x8xf32>
    %40 = vector.shape_cast %35 : vector<2x8x8xf32> to vector<1x2x8x8xf32>
    %41 = vector.shape_cast %37 : vector<2x8x8xf32> to vector<1x2x8x8xf32>
    %42 = tpu.concatenate %38, %39, %40, %41 in 0 : vector<1x2x8x8xf32>, vector<1x2x8x8xf32>, vector<1x2x8x8xf32>, vector<1x2x8x8xf32> -> vector<4x2x8x8xf32>
    %43 = vector.shape_cast %42 : vector<4x2x8x8xf32> to vector<8x8x8xf32>
    %44 = vector.extract_strided_slice %29 {offsets = [0, 32], sizes = [16, 8], strides = [1, 1]} : vector<16x96xf32> to vector<16x8xf32>
    %45 = vector.shape_cast %44 : vector<16x8xf32> to vector<2x8x8xf32>
    %46 = vector.extract_strided_slice %29 {offsets = [0, 40], sizes = [16, 8], strides = [1, 1]} : vector<16x96xf32> to vector<16x8xf32>
    %47 = vector.shape_cast %46 : vector<16x8xf32> to vector<2x8x8xf32>
    %48 = vector.extract_strided_slice %29 {offsets = [0, 48], sizes = [16, 8], strides = [1, 1]} : vector<16x96xf32> to vector<16x8xf32>
    %49 = vector.shape_cast %48 : vector<16x8xf32> to vector<2x8x8xf32>
    %50 = vector.extract_strided_slice %29 {offsets = [0, 56], sizes = [16, 8], strides = [1, 1]} : vector<16x96xf32> to vector<16x8xf32>
    %51 = vector.shape_cast %50 : vector<16x8xf32> to vector<2x8x8xf32>
    %52 = vector.shape_cast %45 : vector<2x8x8xf32> to vector<1x2x8x8xf32>
    %53 = vector.shape_cast %47 : vector<2x8x8xf32> to vector<1x2x8x8xf32>
    %54 = vector.shape_cast %49 : vector<2x8x8xf32> to vector<1x2x8x8xf32>
    %55 = vector.shape_cast %51 : vector<2x8x8xf32> to vector<1x2x8x8xf32>
    %56 = tpu.concatenate %52, %53, %54, %55 in 0 : vector<1x2x8x8xf32>, vector<1x2x8x8xf32>, vector<1x2x8x8xf32>, vector<1x2x8x8xf32> -> vector<4x2x8x8xf32>
    %57 = vector.shape_cast %56 : vector<4x2x8x8xf32> to vector<8x8x8xf32>
    %58 = vector.extract_strided_slice %29 {offsets = [0, 64], sizes = [16, 8], strides = [1, 1]} : vector<16x96xf32> to vector<16x8xf32>
    %59 = vector.shape_cast %58 : vector<16x8xf32> to vector<2x8x8xf32>
    %60 = vector.extract_strided_slice %29 {offsets = [0, 72], sizes = [16, 8], strides = [1, 1]} : vector<16x96xf32> to vector<16x8xf32>
    %61 = vector.shape_cast %60 : vector<16x8xf32> to vector<2x8x8xf32>
    %62 = vector.extract_strided_slice %29 {offsets = [0, 80], sizes = [16, 8], strides = [1, 1]} : vector<16x96xf32> to vector<16x8xf32>
    %63 = vector.shape_cast %62 : vector<16x8xf32> to vector<2x8x8xf32>
    %64 = vector.extract_strided_slice %29 {offsets = [0, 88], sizes = [16, 8], strides = [1, 1]} : vector<16x96xf32> to vector<16x8xf32>
    %65 = vector.shape_cast %64 : vector<16x8xf32> to vector<2x8x8xf32>
    %66 = vector.shape_cast %59 : vector<2x8x8xf32> to vector<1x2x8x8xf32>
    %67 = vector.shape_cast %61 : vector<2x8x8xf32> to vector<1x2x8x8xf32>
    %68 = vector.shape_cast %63 : vector<2x8x8xf32> to vector<1x2x8x8xf32>
    %69 = vector.shape_cast %65 : vector<2x8x8xf32> to vector<1x2x8x8xf32>
    %70 = tpu.concatenate %66, %67, %68, %69 in 0 : vector<1x2x8x8xf32>, vector<1x2x8x8xf32>, vector<1x2x8x8xf32>, vector<1x2x8x8xf32> -> vector<4x2x8x8xf32>
    %71 = vector.shape_cast %70 : vector<4x2x8x8xf32> to vector<8x8x8xf32>
    %72 = tpu.iota {dimensions = array<i32: 0>} : vector<8x8xi32>
    %73 = tpu.iota {dimensions = array<i32: 1>} : vector<8x8xi32>
    %74 = arith.cmpi sle, %73, %72 : vector<8x8xi32>
    %75 = arith.subi %72, %73 : vector<8x8xi32>
    %c4_i32 = arith.constant 4 : i32
    %76 = vector.broadcast %c4_i32 : i32 to vector<8x8xi32>
    %77 = arith.cmpi slt, %75, %76 : vector<8x8xi32>
    %78 = arith.andi %74, %77 : vector<8x8xi1>
    %79 = vector.shape_cast %78 : vector<8x8xi1> to vector<1x8x8xi1>
    "tpu.trace_start"() <{level = 10 : i32, message = "gqd,gkd->gqk"}> : () -> ()
    %cst_17 = arith.constant dense<0.000000e+00> : vector<8x8x8xf32>
    %80 = tpu.matmul %43, %57, %cst_17 {dimension_numbers = #tpu.dot_dimension_numbers<[2], [2], [1], [1], [0, 0, 0, 1, 1, 1], [0], [0]>, precision = #tpu.contract_precision<fp32>} : vector<8x8x8xf32>, vector<8x8x8xf32>, vector<8x8x8xf32> -> vector<8x8x8xf32>
    %cst_18 = arith.constant -3.40282347E+38 : f32
    "tpu.trace_stop"() : () -> ()
    %81 = vector.shape_cast %79 : vector<1x8x8xi1> to vector<1x8x8xi1>
    %82 = vector.broadcast %81 : vector<1x8x8xi1> to vector<8x8x8xi1>
    %83 = vector.broadcast %cst_18 : f32 to vector<8x8x8xf32>
    %84 = arith.select %82, %80, %83 : vector<8x8x8xi1>, vector<8x8x8xf32>
    %cst_19 = arith.constant dense<0xFF800000> : vector<8x8xf32>
    %85 = vector.multi_reduction <maximumf>, %84, %cst_19 [2] : vector<8x8x8xf32> to vector<8x8xf32>
    %86 = vector.shape_cast %85 : vector<8x8xf32> to vector<8x8x1xf32>
    %87 = vector.broadcast %86 : vector<8x8x1xf32> to vector<8x8x8xf32>
    %88 = arith.subf %84, %87 : vector<8x8x8xf32>
    %89 = math.exp %88 : vector<8x8x8xf32>
    %cst_20 = arith.constant dense<0.000000e+00> : vector<8x8xf32>
    %90 = vector.multi_reduction <add>, %89, %cst_20 [2] : vector<8x8x8xf32> to vector<8x8xf32>
    %91 = vector.shape_cast %90 : vector<8x8xf32> to vector<8x8x1xf32>
    %92 = vector.broadcast %91 : vector<8x8x1xf32> to vector<8x8x8xf32>
    %93 = arith.divf %89, %92 : vector<8x8x8xf32>
    "tpu.trace_start"() <{level = 10 : i32, message = "gqk,gkd->gqd"}> : () -> ()
    %cst_21 = arith.constant dense<0.000000e+00> : vector<8x8x8xf32>
    %94 = tpu.matmul %93, %71, %cst_21 {dimension_numbers = #tpu.dot_dimension_numbers<[2], [1], [1], [2], [0, 0, 0, 1, 1, 2], [0], [0]>, precision = #tpu.contract_precision<fp32>} : vector<8x8x8xf32>, vector<8x8x8xf32>, vector<8x8x8xf32> -> vector<8x8x8xf32>
    "tpu.trace_stop"() : () -> ()
    %95 = vector.shape_cast %94 : vector<8x8x8xf32> to vector<4x2x8x8xf32>
    %96 = vector.extract_strided_slice %95 {offsets = [0, 0, 0, 0], sizes = [1, 2, 8, 8], strides = [1, 1, 1, 1]} : vector<4x2x8x8xf32> to vector<1x2x8x8xf32>
    %97 = vector.shape_cast %96 : vector<1x2x8x8xf32> to vector<2x8x8xf32>
    %98 = vector.extract_strided_slice %95 {offsets = [1, 0, 0, 0], sizes = [1, 2, 8, 8], strides = [1, 1, 1, 1]} : vector<4x2x8x8xf32> to vector<1x2x8x8xf32>
    %99 = vector.shape_cast %98 : vector<1x2x8x8xf32> to vector<2x8x8xf32>
    %100 = vector.extract_strided_slice %95 {offsets = [2, 0, 0, 0], sizes = [1, 2, 8, 8], strides = [1, 1, 1, 1]} : vector<4x2x8x8xf32> to vector<1x2x8x8xf32>
    %101 = vector.shape_cast %100 : vector<1x2x8x8xf32> to vector<2x8x8xf32>
    %102 = vector.extract_strided_slice %95 {offsets = [3, 0, 0, 0], sizes = [1, 2, 8, 8], strides = [1, 1, 1, 1]} : vector<4x2x8x8xf32> to vector<1x2x8x8xf32>
    %103 = vector.shape_cast %102 : vector<1x2x8x8xf32> to vector<2x8x8xf32>
    %104 = tpu.concatenate %97, %99, %101, %103 in 2 : vector<2x8x8xf32>, vector<2x8x8xf32>, vector<2x8x8xf32>, vector<2x8x8xf32> -> vector<2x8x32xf32>
    %105 = vector.shape_cast %104 : vector<2x8x32xf32> to vector<16x32xf32>
    %cst_22 = arith.constant dense<0.000000e+00> : vector<16x32xf32>
    %106 = tpu.matmul %105, %3, %cst_22 {dimension_numbers = #tpu.dot_dimension_numbers<[1], [0], [0], [1], [0, 0, 1, 1], [], []>, precision = #tpu.contract_precision<fp32>} : vector<16x32xf32>, vector<32x32xf32>, vector<16x32xf32> -> vector<16x32xf32>
    %107 = vector.broadcast %4 : vector<1x32xf32> to vector<16x32xf32>
    %108 = arith.addf %106, %107 : vector<16x32xf32>
    %109 = vector.shape_cast %108 : vector<16x32xf32> to vector<2x8x32xf32>
    %c0_23 = arith.constant 0 : index
    %c0_24 = arith.constant 0 : index
    %c0_25 = arith.constant 0 : index
    %110 = vector.load %arg7[%c0_23, %c0_24, %c0_25] : memref<2x8x32xf32, #tpu.memory_space<vmem>>, vector<2x8x32xf32>
    tpu.vector_store %arg7[%c0_23, %c0_24, %c0_25], %109 {strides = array<i32>} : memref<2x8x32xf32, #tpu.memory_space<vmem>>, vector<2x8x32xf32>,
    return
  }
  func.func @transform_0(%arg0: i32) -> (i32, i32, i32) {
    %c0_i32 = arith.constant 0 : i32
    %c0_i32_0 = arith.constant 0 : i32
    %c0_i32_1 = arith.constant 0 : i32
    %c0_i32_2 = arith.constant 0 : i32
    return %c0_i32, %c0_i32_0, %c0_i32_1 : i32, i32, i32
  }
  func.func @transform_1(%arg0: i32) -> (i32, i32) {
    %c0_i32 = arith.constant 0 : i32
    %c0_i32_0 = arith.constant 0 : i32
    %c0_i32_1 = arith.constant 0 : i32
    return %c0_i32, %c0_i32_0 : i32, i32
  }
  func.func @transform_2(%arg0: i32) -> (i32, i32) {
    %c0_i32 = arith.constant 0 : i32
    %c0_i32_0 = arith.constant 0 : i32
    %c0_i32_1 = arith.constant 0 : i32
    return %c0_i32, %c0_i32_0 : i32, i32
  }
  func.func @transform_3(%arg0: i32) -> (i32, i32) {
    %c0_i32 = arith.constant 0 : i32
    %c0_i32_0 = arith.constant 0 : i32
    %c0_i32_1 = arith.constant 0 : i32
    return %c0_i32, %c0_i32_0 : i32, i32
  }
  func.func @transform_4(%arg0: i32) -> (i32, i32) {
    %c0_i32 = arith.constant 0 : i32
    %c0_i32_0 = arith.constant 0 : i32
    %c0_i32_1 = arith.constant 0 : i32
    return %c0_i32, %c0_i32_0 : i32, i32
  }
  func.func @transform_5(%arg0: i32) -> (i32, i32) {
    %c0_i32 = arith.constant 0 : i32
    %c0_i32_0 = arith.constant 0 : i32
    %c0_i32_1 = arith.constant 0 : i32
    return %c0_i32, %c0_i32_0 : i32, i32
  }
  func.func @transform_6(%arg0: i32) -> (i32, i32, i32) {
    %c0_i32 = arith.constant 0 : i32
    %c0_i32_0 = arith.constant 0 : i32
    %c0_i32_1 = arith.constant 0 : i32
    %c0_i32_2 = arith.constant 0 : i32
    return %c0_i32, %c0_i32_0, %c0_i32_1 : i32, i32, i32
  }
}

</mosaic_0001>

<llo_original>
// kernel: inner_attention_forward.1
$region0: #{inner_attention_forward.1}
  #allocation0 [shape = 'u32[]', space=smem, size = 0x4, offset = 0x4, fixed_abs, tag = 'smem constant byte address 0x4 - core index']
  #allocation1 [shape = 'u32[144,128]{1,0:T(1,128)}', space=vmem, size = 0x12000, scoped, tag = 'internal scratch']
  %s0 = inlined_call_operand.vmem [shape: f32[2,8,32], index: 0, kind: input, shape index: {}]
  %s1 = inlined_call_operand.vmem [shape: f32[1,32], index: 1, kind: input, shape index: {}]
  %s2 = inlined_call_operand.vmem [shape: f32[1,32], index: 2, kind: input, shape index: {}]
  %s3 = inlined_call_operand.vmem [shape: f32[32,96], index: 3, kind: input, shape index: {}]
  %s4 = inlined_call_operand.vmem [shape: f32[32,32], index: 4, kind: input, shape index: {}]
  %s5 = inlined_call_operand.vmem [shape: f32[1,32], index: 5, kind: input, shape index: {}]
  %s6 = inlined_call_operand.hbm [shape: f32[2,8,32], index: 6, kind: output, shape index: {}]
  %s7 = sld [smem:[#allocation0]]
  $region34: #{inner_attention_forward.1} parent=0
    _
  %s9 = ssub.s32 1, %s7
  %s10 = scalar_select 0, %s9, %s7
  $region1: #{inner_attention_forward.1} parent=0
    #allocation2 [shape = 'u8[8192]{0}', space=vmem, size = 0x2000, scoped, tag = 'output window, operand 0, single buffered']
    #allocation3 [shape = 's32[1]{0}', space=sflag, size = 0x4, scoped, tag = 'scoped memory for inner_attention_forward.1']
    %11 = vsyncpa [#allocation3], 0
    // Predicated region
    $region2: #{inner_attention_forward.1} parent=1 // pred_check
      _
    $region3: #{inner_attention_forward.1} parent=1 // pred_check_branch
      %13 = sbr.rel (0) target = $region5
    $region4: #{inner_attention_forward.1} parent=1 // pred_region
      _
    $region5: #{inner_attention_forward.1} parent=1 // pred_fallthru
      _
    // Predicated region
    $region6: #{inner_attention_forward.1} parent=1 // pred_check
      _
    $region7: #{inner_attention_forward.1} parent=1 // pred_check_branch
      %15 = sbr.rel (0) target = $region9
    $region8: #{inner_attention_forward.1} parent=1 // pred_region
      _
    $region9: #{inner_attention_forward.1} parent=1 // pred_fallthru
      _
    // Predicated region
    $region10: #{inner_attention_forward.1} parent=1 // pred_check
      _
    $region11: #{inner_attention_forward.1} parent=1 // pred_check_branch
      %17 = sbr.rel (0) target = $region13
    $region12: #{inner_attention_forward.1} parent=1 // pred_region
      _
    $region13: #{inner_attention_forward.1} parent=1 // pred_fallthru
      _
    // Predicated region
    $region14: #{inner_attention_forward.1} parent=1 // pred_check
      _
    $region15: #{inner_attention_forward.1} parent=1 // pred_check_branch
      %19 = sbr.rel (0) target = $region17
    $region16: #{inner_attention_forward.1} parent=1 // pred_region
      _
    $region17: #{inner_attention_forward.1} parent=1 // pred_fallthru
      _
    // Predicated region
    $region18: #{inner_attention_forward.1} parent=1 // pred_check
      _
    $region19: #{inner_attention_forward.1} parent=1 // pred_check_branch
      %21 = sbr.rel (0) target = $region21
    $region20: #{inner_attention_forward.1} parent=1 // pred_region
      _
    $region21: #{inner_attention_forward.1} parent=1 // pred_fallthru
      _
    // Predicated region
    $region22: #{inner_attention_forward.1} parent=1 // pred_check
      _
    $region23: #{inner_attention_forward.1} parent=1 // pred_check_branch
      %23 = sbr.rel (0) target = $region25
    $region24: #{inner_attention_forward.1} parent=1 // pred_region
      _
    $region25: #{inner_attention_forward.1} parent=1 // pred_fallthru
      _
    %v24 = vld [vmem:[%s1] sm:$0x1]
    %v25 = vld [vmem:[%s2] sm:$0x1]
    %v26 = vld [vmem:[%s3] sm:$0xff]
    %v27 = vld [vmem:[%s3 + $0x8] sm:$0xff]
    %v28 = vld [vmem:[%s3 + $0x10] sm:$0xff]
    %v29 = vld [vmem:[%s3 + $0x18] sm:$0xff]
    %v30 = vld [vmem:[%s4] sm:$0xff]
    %v31 = vld [vmem:[%s4 + $0x8] sm:$0xff]
    %v32 = vld [vmem:[%s4 + $0x10] sm:$0xff]
    %v33 = vld [vmem:[%s4 + $0x18] sm:$0xff]
    %v34 = vld [vmem:[%s5] sm:$0x1]
    %v35 = vld [vmem:[%s0] sm:$0xff]
    %v36 = vld [vmem:[%s0 + $0x8] sm:$0xff]
    %vm37 = vcmask 261120
    %v38 = vsel %vm37, %v35, 0.0
    %39 = vadd.xlane.f32.xlu0 %v38
    %v40 = vpop.xlane.xlu0 %39
    %v41 = vsel %vm37, %v36, 0.0
    %42 = vadd.xlane.f32.xlu0 %v41
    %v43 = vpop.xlane.xlu0 %42
    %v44 = vrcp.pop 32.0
    %v45 = vmul.f32 %v40, %v44
    %v46 = vmul.f32 %v43, %v44
    %v47 = vsub.f32 %v35, %v45
    %v48 = vsub.f32 %v36, %v46
    %v49 = vmul.f32 %v47, %v47
    %v50 = vmul.f32 %v48, %v48
    %v51 = vsel %vm37, %v49, 0.0
    %52 = vadd.xlane.f32.xlu0 %v51
    %v53 = vpop.xlane.xlu0 %52
    %v54 = vsel %vm37, %v50, 0.0
    %55 = vadd.xlane.f32.xlu0 %v54
    %v56 = vpop.xlane.xlu0 %55
    %v57 = vmul.f32 %v53, %v44
    %v58 = vmul.f32 %v56, %v44
    %v59 = vadd.f32 %v57, 1e-05
    %v60 = vadd.f32 %v58, 1e-05
    %v61 = vrsqrt.pop %v59
    %v62 = vrsqrt.pop %v60
    %v63 = vmul.f32 %v47, %v61
    %v64 = vmul.f32 %v48, %v62
    %v66 = vlaneseq
    %v67 = vshrl.u32 %v66, 7
    %v68 = vsub.s32 0, %v67
    %v69 = vrot.slane %v24, %v68
    %v71 = vmul.f32 %v63, %v69
    %v72 = vmul.f32 %v64, %v69
    %v74 = vlaneseq
    %v75 = vshrl.u32 %v74, 7
    %v76 = vsub.s32 0, %v75
    %v77 = vrot.slane %v25, %v76
    %v79 = vadd.f32 %v71, %v77
    %v80 = vadd.f32 %v72, %v77
    %v82 = vsel %vm37, %v79, 0
    %v85 = vsel %vm37, %v80, 0
    %87 = vmatprep.subr.mxu0 0.0
    %88 = vmatpush1.msra.mxu0 0.0
    %89 = vmatprep.subr.mxu0 0.0
    %90 = vmatpush1.msra.mxu0 0.0
    %91 = vmatprep.subr.mxu0 0.0
    %92 = vmatpush1.msra.mxu0 0.0
    %93 = vmatprep.subr.mxu0 0.0
    %94 = vmatpush1.msra.mxu0 0.0
    %95 = vmatprep.subr.mxu0 0.0
    %96 = vmatpush1.msra.mxu0 0.0
    %97 = vmatprep.subr.mxu0 0.0
    %98 = vmatpush1.msra.mxu0 0.0
    %99 = vmatprep.subr.mxu0 0.0
    %100 = vmatpush1.msra.mxu0 0.0
    %101 = vmatprep.subr.mxu0 0.0
    %102 = vmatpush1.msra.mxu0 0.0
    %103 = vmatprep.subr.mxu0 0.0
    %104 = vmatpush1.msra.mxu0 0.0
    %105 = vmatprep.subr.mxu0 0.0
    %106 = vmatpush1.msra.mxu0 0.0
    %107 = vmatprep.subr.mxu0 0.0
    %108 = vmatpush1.msra.mxu0 0.0
    %109 = vmatprep.subr.mxu0 0.0
    %110 = vmatpush1.msra.mxu0 0.0
    %111 = vmatprep.subr.mxu0 0.0
    %v112 = vand.u32 %v29, 4294901760
    %113 = vmatpush1.msra.mxu0 %v112
    %114 = vmatprep.subr.mxu0 0.0
    %v115 = vand.u32 %v28, 4294901760
    %116 = vmatpush1.msra.mxu0 %v115
    %117 = vmatprep.subr.mxu0 0.0
    %v118 = vand.u32 %v27, 4294901760
    %119 = vmatpush1.msra.mxu0 %v118
    %120 = vmatprep.subr.mxu0 0.0
    %v121 = vand.u32 %v26, 4294901760
    %122 = vmatpush1.msra.mxu0 %v121
    %123 = vmatprep.subr.mxu0 0.0
    %124 = vmatpush2.msra.mxu0 0.0
    %125 = vmatprep.subr.mxu0 0.0
    %126 = vmatpush2.msra.mxu0 0.0
    %127 = vmatprep.subr.mxu0 0.0
    %128 = vmatpush2.msra.mxu0 0.0
    %129 = vmatprep.subr.mxu0 0.0
    %130 = vmatpush2.msra.mxu0 0.0
    %131 = vmatprep.subr.mxu0 0.0
    %132 = vmatpush2.msra.mxu0 0.0
    %133 = vmatprep.subr.mxu0 0.0
    %134 = vmatpush2.msra.mxu0 0.0
    %135 = vmatprep.subr.mxu0 0.0
    %136 = vmatpush2.msra.mxu0 0.0
    %137 = vmatprep.subr.mxu0 0.0
    %138 = vmatpush2.msra.mxu0 0.0
    %139 = vmatprep.subr.mxu0 0.0
    %140 = vmatpush2.msra.mxu0 0.0
    %141 = vmatprep.subr.mxu0 0.0
    %142 = vmatpush2.msra.mxu0 0.0
    %143 = vmatprep.subr.mxu0 0.0
    %144 = vmatpush2.msra.mxu0 0.0
    %145 = vmatprep.subr.mxu0 0.0
    %146 = vmatpush2.msra.mxu0 0.0
    %147 = vmatprep.subr.mxu0 0.0
    %148 = vmatpush2.msra.mxu0 0.0
    %149 = vmatprep.subr.mxu0 0.0
    %150 = vmatpush2.msra.mxu0 0.0
    %151 = vmatprep.subr.mxu0 0.0
    %152 = vmatpush2.msra.mxu0 0.0
    %153 = vmatprep.subr.mxu0 0.0
    %154 = vmatpush2.msra.mxu0 0.0
    %155 = vmatprep.mubr.f32.mxu0 0.0
    %v156 = vand.u32 %v82, 4294901760
    %v157 = vsub.f32 %v82, %v156
    %v158 = vand.u32 %v157, 4294901760
    %v159 = vsub.f32 %v157, %v158
    %v160 = vand.u32 %v159, 4294901760
    %161 = vmatmul.mubr.f32.gmra.mxu0 %v160
    %v162 = vpop.f32.mrf.mxu0
    %v163 = vadd.f32 0.0, %v162
    %v164 = vpop.f32.mrf.mxu0
    %165 = vmatprep.mubr.f32.mxu0 0.0
    %v166 = vand.u32 %v85, 4294901760
    %v167 = vsub.f32 %v85, %v166
    %v168 = vand.u32 %v167, 4294901760
    %v169 = vsub.f32 %v167, %v168
    %v170 = vand.u32 %v169, 4294901760
    %171 = vmatmul.mubr.f32.gmra.mxu0 %v170
    %v172 = vpop.f32.mrf.mxu0
    %v173 = vadd.f32 0.0, %v172
    %v174 = vpop.f32.mrf.mxu0
    %175 = vdwg.mxu0
    %176 = vmatprep.subr.mxu0 0.0
    %177 = vmatpush1.msra.mxu0 0.0
    %178 = vmatprep.subr.mxu0 0.0
    %179 = vmatpush1.msra.mxu0 0.0
    %180 = vmatprep.subr.mxu0 0.0
    %181 = vmatpush1.msra.mxu0 0.0
    %182 = vmatprep.subr.mxu0 0.0
    %183 = vmatpush1.msra.mxu0 0.0
    %184 = vmatprep.subr.mxu0 0.0
    %185 = vmatpush1.msra.mxu0 0.0
    %186 = vmatprep.subr.mxu0 0.0
    %187 = vmatpush1.msra.mxu0 0.0
    %188 = vmatprep.subr.mxu0 0.0
    %189 = vmatpush1.msra.mxu0 0.0
    %190 = vmatprep.subr.mxu0 0.0
    %191 = vmatpush1.msra.mxu0 0.0
    %192 = vmatprep.subr.mxu0 0.0
    %193 = vmatpush1.msra.mxu0 0.0
    %194 = vmatprep.subr.mxu0 0.0
    %195 = vmatpush1.msra.mxu0 0.0
    %196 = vmatprep.subr.mxu0 0.0
    %197 = vmatpush1.msra.mxu0 0.0
    %198 = vmatprep.subr.mxu0 0.0
    %199 = vmatpush1.msra.mxu0 0.0
    %200 = vmatprep.subr.mxu0 0.0
    %v201 = vand.u32 %v29, 4294901760
    %v202 = vsub.f32 %v29, %v201
    %v203 = vand.u32 %v202, 4294901760
    %v204 = vsub.f32 %v202, %v203
    %v205 = vand.u32 %v204, 4294901760
    %206 = vmatpush1.msra.mxu0 %v205
    %207 = vmatprep.subr.mxu0 0.0
    %v208 = vand.u32 %v28, 4294901760
    %v209 = vsub.f32 %v28, %v208
    %v210 = vand.u32 %v209, 4294901760
    %v211 = vsub.f32 %v209, %v210
    %v212 = vand.u32 %v211, 4294901760
    %213 = vmatpush1.msra.mxu0 %v212
    %214 = vmatprep.subr.mxu0 0.0
    %v215 = vand.u32 %v27, 4294901760
    %v216 = vsub.f32 %v27, %v215
    %v217 = vand.u32 %v216, 4294901760
    %v218 = vsub.f32 %v216, %v217
    %v219 = vand.u32 %v218, 4294901760
    %220 = vmatpush1.msra.mxu0 %v219
    %221 = vmatprep.subr.mxu0 0.0
    %v222 = vand.u32 %v26, 4294901760
    %v223 = vsub.f32 %v26, %v222
    %v224 = vand.u32 %v223, 4294901760
    %v225 = vsub.f32 %v223, %v224
    %v226 = vand.u32 %v225, 4294901760
    %227 = vmatpush1.msra.mxu0 %v226
    %228 = vmatprep.subr.mxu0 0.0
    %229 = vmatpush2.msra.mxu0 0.0
    %230 = vmatprep.subr.mxu0 0.0
    %231 = vmatpush2.msra.mxu0 0.0
    %232 = vmatprep.subr.mxu0 0.0
    %233 = vmatpush2.msra.mxu0 0.0
    %234 = vmatprep.subr.mxu0 0.0
    %235 = vmatpush2.msra.mxu0 0.0
    %236 = vmatprep.subr.mxu0 0.0
    %237 = vmatpush2.msra.mxu0 0.0
    %238 = vmatprep.subr.mxu0 0.0
    %239 = vmatpush2.msra.mxu0 0.0
    %240 = vmatprep.subr.mxu0 0.0
    %241 = vmatpush2.msra.mxu0 0.0
    %242 = vmatprep.subr.mxu0 0.0
    %243 = vmatpush2.msra.mxu0 0.0
    %244 = vmatprep.subr.mxu0 0.0
    %245 = vmatpush2.msra.mxu0 0.0
    %246 = vmatprep.subr.mxu0 0.0
    %247 = vmatpush2.msra.mxu0 0.0
    %248 = vmatprep.subr.mxu0 0.0
    %249 = vmatpush2.msra.mxu0 0.0
    %250 = vmatprep.subr.mxu0 0.0
    %251 = vmatpush2.msra.mxu0 0.0
    %252 = vmatprep.subr.mxu0 0.0
    %253 = vmatpush2.msra.mxu0 0.0
    %254 = vmatprep.subr.mxu0 0.0
    %255 = vmatpush2.msra.mxu0 0.0
    %256 = vmatprep.subr.mxu0 0.0
    %257 = vmatpush2.msra.mxu0 0.0
    %258 = vmatprep.subr.mxu0 0.0
    %259 = vmatpush2.msra.mxu0 0.0
    %260 = vmatprep.mubr.f32.mxu0 0.0
    %v261 = vand.u32 %v82, 4294901760
    %262 = vmatmul.mubr.f32.gmra.mxu0 %v261
    %v263 = vpop.f32.mrf.mxu0
    %v264 = vadd.f32 %v163, %v263
    %v265 = vpop.f32.mrf.mxu0
    %266 = vmatprep.mubr.f32.mxu0 0.0
    %v267 = vand.u32 %v85, 4294901760
    %268 = vmatmul.mubr.f32.gmra.mxu0 %v267
    %v269 = vpop.f32.mrf.mxu0
    %v270 = vadd.f32 %v173, %v269
    %v271 = vpop.f32.mrf.mxu0
    %272 = vdwg.mxu0
    %273 = vmatprep.subr.mxu0 0.0
    %274 = vmatpush1.msra.mxu0 0.0
    %275 = vmatprep.subr.mxu0 0.0
    %276 = vmatpush1.msra.mxu0 0.0
    %277 = vmatprep.subr.mxu0 0.0
    %278 = vmatpush1.msra.mxu0 0.0
    %279 = vmatprep.subr.mxu0 0.0
    %280 = vmatpush1.msra.mxu0 0.0
    %281 = vmatprep.subr.mxu0 0.0
    %282 = vmatpush1.msra.mxu0 0.0
    %283 = vmatprep.subr.mxu0 0.0
    %284 = vmatpush1.msra.mxu0 0.0
    %285 = vmatprep.subr.mxu0 0.0
    %286 = vmatpush1.msra.mxu0 0.0
    %287 = vmatprep.subr.mxu0 0.0
    %288 = vmatpush1.msra.mxu0 0.0
    %289 = vmatprep.subr.mxu0 0.0
    %290 = vmatpush1.msra.mxu0 0.0
    %291 = vmatprep.subr.mxu0 0.0
    %292 = vmatpush1.msra.mxu0 0.0
    %293 = vmatprep.subr.mxu0 0.0
    %294 = vmatpush1.msra.mxu0 0.0
    %295 = vmatprep.subr.mxu0 0.0
    %296 = vmatpush1.msra.mxu0 0.0
    %297 = vmatprep.subr.mxu0 0.0
    %v298 = vand.u32 %v29, 4294901760
    %v299 = vsub.f32 %v29, %v298
    %300 = vmatpush1.msra.mxu0 %v299
    %301 = vmatprep.subr.mxu0 0.0
    %v302 = vand.u32 %v28, 4294901760
    %v303 = vsub.f32 %v28, %v302
    %304 = vmatpush1.msra.mxu0 %v303
    %305 = vmatprep.subr.mxu0 0.0
    %v306 = vand.u32 %v27, 4294901760
    %v307 = vsub.f32 %v27, %v306
    %308 = vmatpush1.msra.mxu0 %v307
    %309 = vmatprep.subr.mxu0 0.0
    %v310 = vand.u32 %v26, 4294901760
    %v311 = vsub.f32 %v26, %v310
    %312 = vmatpush1.msra.mxu0 %v311
    %313 = vmatprep.subr.mxu0 0.0
    %314 = vmatpush2.msra.mxu0 0.0
    %315 = vmatprep.subr.mxu0 0.0
    %316 = vmatpush2.msra.mxu0 0.0
    %317 = vmatprep.subr.mxu0 0.0
    %318 = vmatpush2.msra.mxu0 0.0
    %319 = vmatprep.subr.mxu0 0.0
    %320 = vmatpush2.msra.mxu0 0.0
    %321 = vmatprep.subr.mxu0 0.0
    %322 = vmatpush2.msra.mxu0 0.0
    %323 = vmatprep.subr.mxu0 0.0
    %324 = vmatpush2.msra.mxu0 0.0
    %325 = vmatprep.subr.mxu0 0.0
    %326 = vmatpush2.msra.mxu0 0.0
    %327 = vmatprep.subr.mxu0 0.0
    %328 = vmatpush2.msra.mxu0 0.0
    %329 = vmatprep.subr.mxu0 0.0
    %330 = vmatpush2.msra.mxu0 0.0
    %331 = vmatprep.subr.mxu0 0.0
    %332 = vmatpush2.msra.mxu0 0.0
    %333 = vmatprep.subr.mxu0 0.0
    %334 = vmatpush2.msra.mxu0 0.0
    %335 = vmatprep.subr.mxu0 0.0
    %336 = vmatpush2.msra.mxu0 0.0
    %337 = vmatprep.subr.mxu0 0.0
    %338 = vmatpush2.msra.mxu0 0.0
    %339 = vmatprep.subr.mxu0 0.0
    %340 = vmatpush2.msra.mxu0 0.0
    %341 = vmatprep.subr.mxu0 0.0
    %342 = vmatpush2.msra.mxu0 0.0
    %343 = vmatprep.subr.mxu0 0.0
    %344 = vmatpush2.msra.mxu0 0.0
    %345 = vmatprep.mubr.f32.mxu0 0.0
    %v346 = vand.u32 %v82, 4294901760
    %v347 = vsub.f32 %v82, %v346
    %348 = vmatmul.mubr.f32.gmra.mxu0 %v347
    %v349 = vpop.f32.mrf.mxu0
    %v350 = vadd.f32 %v264, %v349
    %v351 = vpop.f32.mrf.mxu0
    %352 = vmatprep.mubr.f32.mxu0 0.0
    %v353 = vand.u32 %v85, 4294901760
    %v354 = vsub.f32 %v85, %v353
    %355 = vmatmul.mubr.f32.gmra.mxu0 %v354
    %v356 = vpop.f32.mrf.mxu0
    %v357 = vadd.f32 %v270, %v356
    %v358 = vpop.f32.mrf.mxu0
    %359 = vdwg.mxu0
    %360 = vmatprep.subr.mxu0 0.0
    %361 = vmatpush1.msra.mxu0 0.0
    %362 = vmatprep.subr.mxu0 0.0
    %363 = vmatpush1.msra.mxu0 0.0
    %364 = vmatprep.subr.mxu0 0.0
    %365 = vmatpush1.msra.mxu0 0.0
    %366 = vmatprep.subr.mxu0 0.0
    %367 = vmatpush1.msra.mxu0 0.0
    %368 = vmatprep.subr.mxu0 0.0
    %369 = vmatpush1.msra.mxu0 0.0
    %370 = vmatprep.subr.mxu0 0.0
    %371 = vmatpush1.msra.mxu0 0.0
    %372 = vmatprep.subr.mxu0 0.0
    %373 = vmatpush1.msra.mxu0 0.0
    %374 = vmatprep.subr.mxu0 0.0
    %375 = vmatpush1.msra.mxu0 0.0
    %376 = vmatprep.subr.mxu0 0.0
    %377 = vmatpush1.msra.mxu0 0.0
    %378 = vmatprep.subr.mxu0 0.0
    %379 = vmatpush1.msra.mxu0 0.0
    %380 = vmatprep.subr.mxu0 0.0
    %381 = vmatpush1.msra.mxu0 0.0
    %382 = vmatprep.subr.mxu0 0.0
    %383 = vmatpush1.msra.mxu0 0.0
    %384 = vmatprep.subr.mxu0 0.0
    %v385 = vand.u32 %v29, 4294901760
    %386 = vmatpush1.msra.mxu0 %v385
    %387 = vmatprep.subr.mxu0 0.0
    %v388 = vand.u32 %v28, 4294901760
    %389 = vmatpush1.msra.mxu0 %v388
    %390 = vmatprep.subr.mxu0 0.0
    %v391 = vand.u32 %v27, 4294901760
    %392 = vmatpush1.msra.mxu0 %v391
    %393 = vmatprep.subr.mxu0 0.0
    %v394 = vand.u32 %v26, 4294901760
    %395 = vmatpush1.msra.mxu0 %v394
    %396 = vmatprep.subr.mxu0 0.0
    %397 = vmatpush2.msra.mxu0 0.0
    %398 = vmatprep.subr.mxu0 0.0
    %399 = vmatpush2.msra.mxu0 0.0
    %400 = vmatprep.subr.mxu0 0.0
    %401 = vmatpush2.msra.mxu0 0.0
    %402 = vmatprep.subr.mxu0 0.0
    %403 = vmatpush2.msra.mxu0 0.0
    %404 = vmatprep.subr.mxu0 0.0
    %405 = vmatpush2.msra.mxu0 0.0
    %406 = vmatprep.subr.mxu0 0.0
    %407 = vmatpush2.msra.mxu0 0.0
    %408 = vmatprep.subr.mxu0 0.0
    %409 = vmatpush2.msra.mxu0 0.0
    %410 = vmatprep.subr.mxu0 0.0
    %411 = vmatpush2.msra.mxu0 0.0
    %412 = vmatprep.subr.mxu0 0.0
    %413 = vmatpush2.msra.mxu0 0.0
    %414 = vmatprep.subr.mxu0 0.0
    %415 = vmatpush2.msra.mxu0 0.0
    %416 = vmatprep.subr.mxu0 0.0
    %417 = vmatpush2.msra.mxu0 0.0
    %418 = vmatprep.subr.mxu0 0.0
    %419 = vmatpush2.msra.mxu0 0.0
    %420 = vmatprep.subr.mxu0 0.0
    %421 = vmatpush2.msra.mxu0 0.0
    %422 = vmatprep.subr.mxu0 0.0
    %423 = vmatpush2.msra.mxu0 0.0
    %424 = vmatprep.subr.mxu0 0.0
    %425 = vmatpush2.msra.mxu0 0.0
    %426 = vmatprep.subr.mxu0 0.0
    %427 = vmatpush2.msra.mxu0 0.0
    %428 = vmatprep.mubr.f32.mxu0 0.0
    %v429 = vand.u32 %v82, 4294901760
    %v430 = vsub.f32 %v82, %v429
    %v431 = vand.u32 %v430, 4294901760
    %432 = vmatmul.mubr.f32.gmra.mxu0 %v431
    %v433 = vpop.f32.mrf.mxu0
    %v434 = vadd.f32 %v350, %v433
    %v435 = vpop.f32.mrf.mxu0
    %436 = vmatprep.mubr.f32.mxu0 0.0
    %v437 = vand.u32 %v85, 4294901760
    %v438 = vsub.f32 %v85, %v437
    %v439 = vand.u32 %v438, 4294901760
    %440 = vmatmul.mubr.f32.gmra.mxu0 %v439
    %v441 = vpop.f32.mrf.mxu0
    %v442 = vadd.f32 %v357, %v441
    %v443 = vpop.f32.mrf.mxu0
    %444 = vdwg.mxu0
    %445 = vmatprep.subr.mxu0 0.0
    %446 = vmatpush1.msra.mxu0 0.0
    %447 = vmatprep.subr.mxu0 0.0
    %448 = vmatpush1.msra.mxu0 0.0
    %449 = vmatprep.subr.mxu0 0.0
    %450 = vmatpush1.msra.mxu0 0.0
    %451 = vmatprep.subr.mxu0 0.0
    %452 = vmatpush1.msra.mxu0 0.0
    %453 = vmatprep.subr.mxu0 0.0
    %454 = vmatpush1.msra.mxu0 0.0
    %455 = vmatprep.subr.mxu0 0.0
    %456 = vmatpush1.msra.mxu0 0.0
    %457 = vmatprep.subr.mxu0 0.0
    %458 = vmatpush1.msra.mxu0 0.0
    %459 = vmatprep.subr.mxu0 0.0
    %460 = vmatpush1.msra.mxu0 0.0
    %461 = vmatprep.subr.mxu0 0.0
    %462 = vmatpush1.msra.mxu0 0.0
    %463 = vmatprep.subr.mxu0 0.0
    %464 = vmatpush1.msra.mxu0 0.0
    %465 = vmatprep.subr.mxu0 0.0
    %466 = vmatpush1.msra.mxu0 0.0
    %467 = vmatprep.subr.mxu0 0.0
    %468 = vmatpush1.msra.mxu0 0.0
    %469 = vmatprep.subr.mxu0 0.0
    %v470 = vand.u32 %v29, 4294901760
    %v471 = vsub.f32 %v29, %v470
    %v472 = vand.u32 %v471, 4294901760
    %473 = vmatpush1.msra.mxu0 %v472
    %474 = vmatprep.subr.mxu0 0.0
    %v475 = vand.u32 %v28, 4294901760
    %v476 = vsub.f32 %v28, %v475
    %v477 = vand.u32 %v476, 4294901760
    %478 = vmatpush1.msra.mxu0 %v477
    %479 = vmatprep.subr.mxu0 0.0
    %v480 = vand.u32 %v27, 4294901760
    %v481 = vsub.f32 %v27, %v480
    %v482 = vand.u32 %v481, 4294901760
    %483 = vmatpush1.msra.mxu0 %v482
    %484 = vmatprep.subr.mxu0 0.0
    %v485 = vand.u32 %v26, 4294901760
    %v486 = vsub.f32 %v26, %v485
    %v487 = vand.u32 %v486, 4294901760
    %488 = vmatpush1.msra.mxu0 %v487
    %489 = vmatprep.subr.mxu0 0.0
    %490 = vmatpush2.msra.mxu0 0.0
    %491 = vmatprep.subr.mxu0 0.0
    %492 = vmatpush2.msra.mxu0 0.0
    %493 = vmatprep.subr.mxu0 0.0
    %494 = vmatpush2.msra.mxu0 0.0
    %495 = vmatprep.subr.mxu0 0.0
    %496 = vmatpush2.msra.mxu0 0.0
    %497 = vmatprep.subr.mxu0 0.0
    %498 = vmatpush2.msra.mxu0 0.0
    %499 = vmatprep.subr.mxu0 0.0
    %500 = vmatpush2.msra.mxu0 0.0
    %501 = vmatprep.subr.mxu0 0.0
    %502 = vmatpush2.msra.mxu0 0.0
    %503 = vmatprep.subr.mxu0 0.0
    %504 = vmatpush2.msra.mxu0 0.0
    %505 = vmatprep.subr.mxu0 0.0
    %506 = vmatpush2.msra.mxu0 0.0
    %507 = vmatprep.subr.mxu0 0.0
    %508 = vmatpush2.msra.mxu0 0.0
    %509 = vmatprep.subr.mxu0 0.0
    %510 = vmatpush2.msra.mxu0 0.0
    %511 = vmatprep.subr.mxu0 0.0
    %512 = vmatpush2.msra.mxu0 0.0
    %513 = vmatprep.subr.mxu0 0.0
    %514 = vmatpush2.msra.mxu0 0.0
    %515 = vmatprep.subr.mxu0 0.0
    %516 = vmatpush2.msra.mxu0 0.0
    %517 = vmatprep.subr.mxu0 0.0
    %518 = vmatpush2.msra.mxu0 0.0
    %519 = vmatprep.subr.mxu0 0.0
    %520 = vmatpush2.msra.mxu0 0.0
    %521 = vmatprep.mubr.f32.mxu0 0.0
    %v522 = vand.u32 %v82, 4294901760
    %523 = vmatmul.mubr.f32.gmra.mxu0 %v522
    %v524 = vpop.f32.mrf.mxu0
    %v525 = vadd.f32 %v434, %v524
    %v526 = vpop.f32.mrf.mxu0
    %527 = vmatprep.mubr.f32.mxu0 0.0
    %v528 = vand.u32 %v85, 4294901760
    %529 = vmatmul.mubr.f32.gmra.mxu0 %v528
    %v530 = vpop.f32.mrf.mxu0
    %v531 = vadd.f32 %v442, %v530
    %v532 = vpop.f32.mrf.mxu0
    %533 = vdwg.mxu0
    %534 = vmatprep.subr.mxu0 0.0
    %535 = vmatpush1.msra.mxu0 0.0
    %536 = vmatprep.subr.mxu0 0.0
    %537 = vmatpush1.msra.mxu0 0.0
    %538 = vmatprep.subr.mxu0 0.0
    %539 = vmatpush1.msra.mxu0 0.0
    %540 = vmatprep.subr.mxu0 0.0
    %541 = vmatpush1.msra.mxu0 0.0
    %542 = vmatprep.subr.mxu0 0.0
    %543 = vmatpush1.msra.mxu0 0.0
    %544 = vmatprep.subr.mxu0 0.0
    %545 = vmatpush1.msra.mxu0 0.0
    %546 = vmatprep.subr.mxu0 0.0
    %547 = vmatpush1.msra.mxu0 0.0
    %548 = vmatprep.subr.mxu0 0.0
    %549 = vmatpush1.msra.mxu0 0.0
    %550 = vmatprep.subr.mxu0 0.0
    %551 = vmatpush1.msra.mxu0 0.0
    %552 = vmatprep.subr.mxu0 0.0
    %553 = vmatpush1.msra.mxu0 0.0
    %554 = vmatprep.subr.mxu0 0.0
    %555 = vmatpush1.msra.mxu0 0.0
    %556 = vmatprep.subr.mxu0 0.0
    %557 = vmatpush1.msra.mxu0 0.0
    %558 = vmatprep.subr.mxu0 0.0
    %v559 = vand.u32 %v29, 4294901760
    %560 = vmatpush1.msra.mxu0 %v559
    %561 = vmatprep.subr.mxu0 0.0
    %v562 = vand.u32 %v28, 4294901760
    %563 = vmatpush1.msra.mxu0 %v562
    %564 = vmatprep.subr.mxu0 0.0
    %v565 = vand.u32 %v27, 4294901760
    %566 = vmatpush1.msra.mxu0 %v565
    %567 = vmatprep.subr.mxu0 0.0
    %v568 = vand.u32 %v26, 4294901760
    %569 = vmatpush1.msra.mxu0 %v568
    %570 = vmatprep.subr.mxu0 0.0
    %571 = vmatpush2.msra.mxu0 0.0
    %572 = vmatprep.subr.mxu0 0.0
    %573 = vmatpush2.msra.mxu0 0.0
    %574 = vmatprep.subr.mxu0 0.0
    %575 = vmatpush2.msra.mxu0 0.0
    %576 = vmatprep.subr.mxu0 0.0
    %577 = vmatpush2.msra.mxu0 0.0
    %578 = vmatprep.subr.mxu0 0.0
    %579 = vmatpush2.msra.mxu0 0.0
    %580 = vmatprep.subr.mxu0 0.0
    %581 = vmatpush2.msra.mxu0 0.0
    %582 = vmatprep.subr.mxu0 0.0
    %583 = vmatpush2.msra.mxu0 0.0
    %584 = vmatprep.subr.mxu0 0.0
    %585 = vmatpush2.msra.mxu0 0.0
    %586 = vmatprep.subr.mxu0 0.0
    %587 = vmatpush2.msra.mxu0 0.0
    %588 = vmatprep.subr.mxu0 0.0
    %589 = vmatpush2.msra.mxu0 0.0
    %590 = vmatprep.subr.mxu0 0.0
    %591 = vmatpush2.msra.mxu0 0.0
    %592 = vmatprep.subr.mxu0 0.0
    %593 = vmatpush2.msra.mxu0 0.0
    %594 = vmatprep.subr.mxu0 0.0
    %595 = vmatpush2.msra.mxu0 0.0
    %596 = vmatprep.subr.mxu0 0.0
    %597 = vmatpush2.msra.mxu0 0.0
    %598 = vmatprep.subr.mxu0 0.0
    %599 = vmatpush2.msra.mxu0 0.0
    %600 = vmatprep.subr.mxu0 0.0
    %601 = vmatpush2.msra.mxu0 0.0
    %602 = vmatprep.mubr.f32.mxu0 0.0
    %v603 = vand.u32 %v82, 4294901760
    %604 = vmatmul.mubr.f32.gmra.mxu0 %v603
    %v605 = vpop.f32.mrf.mxu0
    %v606 = vadd.f32 %v525, %v605
    %v607 = vpop.f32.mrf.mxu0
    %608 = vmatprep.mubr.f32.mxu0 0.0
    %v609 = vand.u32 %v85, 4294901760
    %610 = vmatmul.mubr.f32.gmra.mxu0 %v609
    %v611 = vpop.f32.mrf.mxu0
    %v612 = vadd.f32 %v531, %v611
    %v613 = vpop.f32.mrf.mxu0
    %614 = vdwg.mxu0
    %617 = vrot.lane.b32.xlu0 %v606, 120
    %v618 = vpop.permute.xlu0 %617
    %619 = vrot.lane.b32.xlu0 %v612, 120
    %v620 = vpop.permute.xlu0 %619
    %621 = vrot.lane.b32.xlu0 %v606, 112
    %v622 = vpop.permute.xlu0 %621
    %623 = vrot.lane.b32.xlu0 %v612, 112
    %v624 = vpop.permute.xlu0 %623
    %625 = vrot.lane.b32.xlu0 %v606, 104
    %v626 = vpop.permute.xlu0 %625
    %627 = vrot.lane.b32.xlu0 %v612, 104
    %v628 = vpop.permute.xlu0 %627
    %v629 = vlaneseq
    %v630 = vshrl.u32 %v629, 7
    %v631 = vlaneseq
    %v632 = vand.u32 %v631, 127
    %vm633 = vcmp.le.s32.totalorder %v632, %v630
    %v634 = vsub.s32 %v630, %v632
    %vm635 = vcmp.lt.s32.totalorder %v634, 4
    %vm636 = vmand %vm633, %vm635
    %637 = vrot.lane.b32.xlu0 %v606, 96
    %v638 = vpop.permute.xlu0 %637
    %vm639 = vcmask 64512
    %v640 = vsel %vm639, %v606, 0
    %v642 = vsel %vm639, %v638, 0
    %644 = vmatprep.subr.mxu0 0.0
    %645 = vmatpush1.xpose.msra.mxu0 0.0
    %646 = vmatprep.subr.mxu0 0.0
    %647 = vmatpush1.xpose.msra.mxu0 0.0
    %648 = vmatprep.subr.mxu0 0.0
    %649 = vmatpush1.xpose.msra.mxu0 0.0
    %650 = vmatprep.subr.mxu0 0.0
    %651 = vmatpush1.xpose.msra.mxu0 0.0
    %652 = vmatprep.subr.mxu0 0.0
    %653 = vmatpush1.xpose.msra.mxu0 0.0
    %654 = vmatprep.subr.mxu0 0.0
    %655 = vmatpush1.xpose.msra.mxu0 0.0
    %656 = vmatprep.subr.mxu0 0.0
    %657 = vmatpush1.xpose.msra.mxu0 0.0
    %658 = vmatprep.subr.mxu0 0.0
    %659 = vmatpush1.xpose.msra.mxu0 0.0
    %660 = vmatprep.subr.mxu0 0.0
    %661 = vmatpush1.xpose.msra.mxu0 0.0
    %662 = vmatprep.subr.mxu0 0.0
    %663 = vmatpush1.xpose.msra.mxu0 0.0
    %664 = vmatprep.subr.mxu0 0.0
    %665 = vmatpush1.xpose.msra.mxu0 0.0
    %666 = vmatprep.subr.mxu0 0.0
    %667 = vmatpush1.xpose.msra.mxu0 0.0
    %668 = vmatprep.subr.mxu0 0.0
    %669 = vmatpush1.xpose.msra.mxu0 0.0
    %670 = vmatprep.subr.mxu0 0.0
    %671 = vmatpush1.xpose.msra.mxu0 0.0
    %672 = vmatprep.subr.mxu0 0.0
    %673 = vmatpush1.xpose.msra.mxu0 0.0
    %674 = vmatprep.subr.mxu0 0.0
    %v675 = vand.u32 %v642, 4294901760
    %676 = vmatpush1.xpose.msra.mxu0 %v675
    %677 = vmatprep.subr.mxu0 0.0
    %678 = vmatpush2.xpose.msra.mxu0 0.0
    %679 = vmatprep.subr.mxu0 0.0
    %680 = vmatpush2.xpose.msra.mxu0 0.0
    %681 = vmatprep.subr.mxu0 0.0
    %682 = vmatpush2.xpose.msra.mxu0 0.0
    %683 = vmatprep.subr.mxu0 0.0
    %684 = vmatpush2.xpose.msra.mxu0 0.0
    %685 = vmatprep.subr.mxu0 0.0
    %686 = vmatpush2.xpose.msra.mxu0 0.0
    %687 = vmatprep.subr.mxu0 0.0
    %688 = vmatpush2.xpose.msra.mxu0 0.0
    %689 = vmatprep.subr.mxu0 0.0
    %690 = vmatpush2.xpose.msra.mxu0 0.0
    %691 = vmatprep.subr.mxu0 0.0
    %692 = vmatpush2.xpose.msra.mxu0 0.0
    %693 = vmatprep.subr.mxu0 0.0
    %694 = vmatpush2.xpose.msra.mxu0 0.0
    %695 = vmatprep.subr.mxu0 0.0
    %696 = vmatpush2.xpose.msra.mxu0 0.0
    %697 = vmatprep.subr.mxu0 0.0
    %698 = vmatpush2.xpose.msra.mxu0 0.0
    %699 = vmatprep.subr.mxu0 0.0
    %700 = vmatpush2.xpose.msra.mxu0 0.0
    %701 = vmatprep.subr.mxu0 0.0
    %702 = vmatpush2.xpose.msra.mxu0 0.0
    %703 = vmatprep.subr.mxu0 0.0
    %704 = vmatpush2.xpose.msra.mxu0 0.0
    %705 = vmatprep.subr.mxu0 0.0
    %706 = vmatpush2.xpose.msra.mxu0 0.0
    %707 = vmatprep.subr.mxu0 0.0
    %708 = vmatpush2.xpose.msra.mxu0 0.0
    %709 = vmatprep.mubr.f32.mxu0 0.0
    %v710 = vand.u32 %v640, 4294901760
    %v711 = vsub.f32 %v640, %v710
    %v712 = vand.u32 %v711, 4294901760
    %v713 = vsub.f32 %v711, %v712
    %v714 = vand.u32 %v713, 4294901760
    %715 = vmatmul.mubr.f32.gmra.mxu0 %v714
    %v716 = vpop.f32.mrf.mxu0
    %v717 = vadd.f32 0.0, %v716
    %v718 = vpop.f32.mrf.mxu0
    %719 = vdwg.mxu0
    %720 = vmatprep.subr.mxu0 0.0
    %721 = vmatpush1.xpose.msra.mxu0 0.0
    %722 = vmatprep.subr.mxu0 0.0
    %723 = vmatpush1.xpose.msra.mxu0 0.0
    %724 = vmatprep.subr.mxu0 0.0
    %725 = vmatpush1.xpose.msra.mxu0 0.0
    %726 = vmatprep.subr.mxu0 0.0
    %727 = vmatpush1.xpose.msra.mxu0 0.0
    %728 = vmatprep.subr.mxu0 0.0
    %729 = vmatpush1.xpose.msra.mxu0 0.0
    %730 = vmatprep.subr.mxu0 0.0
    %731 = vmatpush1.xpose.msra.mxu0 0.0
    %732 = vmatprep.subr.mxu0 0.0
    %733 = vmatpush1.xpose.msra.mxu0 0.0
    %734 = vmatprep.subr.mxu0 0.0
    %735 = vmatpush1.xpose.msra.mxu0 0.0
    %736 = vmatprep.subr.mxu0 0.0
    %737 = vmatpush1.xpose.msra.mxu0 0.0
    %738 = vmatprep.subr.mxu0 0.0
    %739 = vmatpush1.xpose.msra.mxu0 0.0
    %740 = vmatprep.subr.mxu0 0.0
    %741 = vmatpush1.xpose.msra.mxu0 0.0
    %742 = vmatprep.subr.mxu0 0.0
    %743 = vmatpush1.xpose.msra.mxu0 0.0
    %744 = vmatprep.subr.mxu0 0.0
    %745 = vmatpush1.xpose.msra.mxu0 0.0
    %746 = vmatprep.subr.mxu0 0.0
    %747 = vmatpush1.xpose.msra.mxu0 0.0
    %748 = vmatprep.subr.mxu0 0.0
    %749 = vmatpush1.xpose.msra.mxu0 0.0
    %750 = vmatprep.subr.mxu0 0.0
    %v751 = vand.u32 %v642, 4294901760
    %v752 = vsub.f32 %v642, %v751
    %v753 = vand.u32 %v752, 4294901760
    %v754 = vsub.f32 %v752, %v753
    %v755 = vand.u32 %v754, 4294901760
    %756 = vmatpush1.xpose.msra.mxu0 %v755
    %757 = vmatprep.subr.mxu0 0.0
    %758 = vmatpush2.xpose.msra.mxu0 0.0
    %759 = vmatprep.subr.mxu0 0.0
    %760 = vmatpush2.xpose.msra.mxu0 0.0
    %761 = vmatprep.subr.mxu0 0.0
    %762 = vmatpush2.xpose.msra.mxu0 0.0
    %763 = vmatprep.subr.mxu0 0.0
    %764 = vmatpush2.xpose.msra.mxu0 0.0
    %765 = vmatprep.subr.mxu0 0.0
    %766 = vmatpush2.xpose.msra.mxu0 0.0
    %767 = vmatprep.subr.mxu0 0.0
    %768 = vmatpush2.xpose.msra.mxu0 0.0
    %769 = vmatprep.subr.mxu0 0.0
    %770 = vmatpush2.xpose.msra.mxu0 0.0
    %771 = vmatprep.subr.mxu0 0.0
    %772 = vmatpush2.xpose.msra.mxu0 0.0
    %773 = vmatprep.subr.mxu0 0.0
    %774 = vmatpush2.xpose.msra.mxu0 0.0
    %775 = vmatprep.subr.mxu0 0.0
    %776 = vmatpush2.xpose.msra.mxu0 0.0
    %777 = vmatprep.subr.mxu0 0.0
    %778 = vmatpush2.xpose.msra.mxu0 0.0
    %779 = vmatprep.subr.mxu0 0.0
    %780 = vmatpush2.xpose.msra.mxu0 0.0
    %781 = vmatprep.subr.mxu0 0.0
    %782 = vmatpush2.xpose.msra.mxu0 0.0
    %783 = vmatprep.subr.mxu0 0.0
    %784 = vmatpush2.xpose.msra.mxu0 0.0
    %785 = vmatprep.subr.mxu0 0.0
    %786 = vmatpush2.xpose.msra.mxu0 0.0
    %787 = vmatprep.subr.mxu0 0.0
    %788 = vmatpush2.xpose.msra.mxu0 0.0
    %789 = vmatprep.mubr.f32.mxu0 0.0
    %v790 = vand.u32 %v640, 4294901760
    %791 = vmatmul.mubr.f32.gmra.mxu0 %v790
    %v792 = vpop.f32.mrf.mxu0
    %v793 = vadd.f32 %v717, %v792
    %v794 = vpop.f32.mrf.mxu0
    %795 = vdwg.mxu0
    %796 = vmatprep.subr.mxu0 0.0
    %797 = vmatpush1.xpose.msra.mxu0 0.0
    %798 = vmatprep.subr.mxu0 0.0
    %799 = vmatpush1.xpose.msra.mxu0 0.0
    %800 = vmatprep.subr.mxu0 0.0
    %801 = vmatpush1.xpose.msra.mxu0 0.0
    %802 = vmatprep.subr.mxu0 0.0
    %803 = vmatpush1.xpose.msra.mxu0 0.0
    %804 = vmatprep.subr.mxu0 0.0
    %805 = vmatpush1.xpose.msra.mxu0 0.0
    %806 = vmatprep.subr.mxu0 0.0
    %807 = vmatpush1.xpose.msra.mxu0 0.0
    %808 = vmatprep.subr.mxu0 0.0
    %809 = vmatpush1.xpose.msra.mxu0 0.0
    %810 = vmatprep.subr.mxu0 0.0
    %811 = vmatpush1.xpose.msra.mxu0 0.0
    %812 = vmatprep.subr.mxu0 0.0
    %813 = vmatpush1.xpose.msra.mxu0 0.0
    %814 = vmatprep.subr.mxu0 0.0
    %815 = vmatpush1.xpose.msra.mxu0 0.0
    %816 = vmatprep.subr.mxu0 0.0
    %817 = vmatpush1.xpose.msra.mxu0 0.0
    %818 = vmatprep.subr.mxu0 0.0
    %819 = vmatpush1.xpose.msra.mxu0 0.0
    %820 = vmatprep.subr.mxu0 0.0
    %821 = vmatpush1.xpose.msra.mxu0 0.0
    %822 = vmatprep.subr.mxu0 0.0
    %823 = vmatpush1.xpose.msra.mxu0 0.0
    %824 = vmatprep.subr.mxu0 0.0
    %825 = vmatpush1.xpose.msra.mxu0 0.0
    %826 = vmatprep.subr.mxu0 0.0
    %v827 = vand.u32 %v642, 4294901760
    %v828 = vsub.f32 %v642, %v827
    %829 = vmatpush1.xpose.msra.mxu0 %v828
    %830 = vmatprep.subr.mxu0 0.0
    %831 = vmatpush2.xpose.msra.mxu0 0.0
    %832 = vmatprep.subr.mxu0 0.0
    %833 = vmatpush2.xpose.msra.mxu0 0.0
    %834 = vmatprep.subr.mxu0 0.0
    %835 = vmatpush2.xpose.msra.mxu0 0.0
    %836 = vmatprep.subr.mxu0 0.0
    %837 = vmatpush2.xpose.msra.mxu0 0.0
    %838 = vmatprep.subr.mxu0 0.0
    %839 = vmatpush2.xpose.msra.mxu0 0.0
    %840 = vmatprep.subr.mxu0 0.0
    %841 = vmatpush2.xpose.msra.mxu0 0.0
    %842 = vmatprep.subr.mxu0 0.0
    %843 = vmatpush2.xpose.msra.mxu0 0.0
    %844 = vmatprep.subr.mxu0 0.0
    %845 = vmatpush2.xpose.msra.mxu0 0.0
    %846 = vmatprep.subr.mxu0 0.0
    %847 = vmatpush2.xpose.msra.mxu0 0.0
    %848 = vmatprep.subr.mxu0 0.0
    %849 = vmatpush2.xpose.msra.mxu0 0.0
    %850 = vmatprep.subr.mxu0 0.0
    %851 = vmatpush2.xpose.msra.mxu0 0.0
    %852 = vmatprep.subr.mxu0 0.0
    %853 = vmatpush2.xpose.msra.mxu0 0.0
    %854 = vmatprep.subr.mxu0 0.0
    %855 = vmatpush2.xpose.msra.mxu0 0.0
    %856 = vmatprep.subr.mxu0 0.0
    %857 = vmatpush2.xpose.msra.mxu0 0.0
    %858 = vmatprep.subr.mxu0 0.0
    %859 = vmatpush2.xpose.msra.mxu0 0.0
    %860 = vmatprep.subr.mxu0 0.0
    %861 = vmatpush2.xpose.msra.mxu0 0.0
    %862 = vmatprep.mubr.f32.mxu0 0.0
    %v863 = vand.u32 %v640, 4294901760
    %v864 = vsub.f32 %v640, %v863
    %865 = vmatmul.mubr.f32.gmra.mxu0 %v864
    %v866 = vpop.f32.mrf.mxu0
    %v867 = vadd.f32 %v793, %v866
    %v868 = vpop.f32.mrf.mxu0
    %869 = vdwg.mxu0
    %870 = vmatprep.subr.mxu0 0.0
    %871 = vmatpush1.xpose.msra.mxu0 0.0
    %872 = vmatprep.subr.mxu0 0.0
    %873 = vmatpush1.xpose.msra.mxu0 0.0
    %874 = vmatprep.subr.mxu0 0.0
    %875 = vmatpush1.xpose.msra.mxu0 0.0
    %876 = vmatprep.subr.mxu0 0.0
    %877 = vmatpush1.xpose.msra.mxu0 0.0
    %878 = vmatprep.subr.mxu0 0.0
    %879 = vmatpush1.xpose.msra.mxu0 0.0
    %880 = vmatprep.subr.mxu0 0.0
    %881 = vmatpush1.xpose.msra.mxu0 0.0
    %882 = vmatprep.subr.mxu0 0.0
    %883 = vmatpush1.xpose.msra.mxu0 0.0
    %884 = vmatprep.subr.mxu0 0.0
    %885 = vmatpush1.xpose.msra.mxu0 0.0
    %886 = vmatprep.subr.mxu0 0.0
    %887 = vmatpush1.xpose.msra.mxu0 0.0
    %888 = vmatprep.subr.mxu0 0.0
    %889 = vmatpush1.xpose.msra.mxu0 0.0
    %890 = vmatprep.subr.mxu0 0.0
    %891 = vmatpush1.xpose.msra.mxu0 0.0
    %892 = vmatprep.subr.mxu0 0.0
    %893 = vmatpush1.xpose.msra.mxu0 0.0
    %894 = vmatprep.subr.mxu0 0.0
    %895 = vmatpush1.xpose.msra.mxu0 0.0
    %896 = vmatprep.subr.mxu0 0.0
    %897 = vmatpush1.xpose.msra.mxu0 0.0
    %898 = vmatprep.subr.mxu0 0.0
    %899 = vmatpush1.xpose.msra.mxu0 0.0
    %900 = vmatprep.subr.mxu0 0.0
    %v901 = vand.u32 %v642, 4294901760
    %902 = vmatpush1.xpose.msra.mxu0 %v901
    %903 = vmatprep.subr.mxu0 0.0
    %904 = vmatpush2.xpose.msra.mxu0 0.0
    %905 = vmatprep.subr.mxu0 0.0
    %906 = vmatpush2.xpose.msra.mxu0 0.0
    %907 = vmatprep.subr.mxu0 0.0
    %908 = vmatpush2.xpose.msra.mxu0 0.0
    %909 = vmatprep.subr.mxu0 0.0
    %910 = vmatpush2.xpose.msra.mxu0 0.0
    %911 = vmatprep.subr.mxu0 0.0
    %912 = vmatpush2.xpose.msra.mxu0 0.0
    %913 = vmatprep.subr.mxu0 0.0
    %914 = vmatpush2.xpose.msra.mxu0 0.0
    %915 = vmatprep.subr.mxu0 0.0
    %916 = vmatpush2.xpose.msra.mxu0 0.0
    %917 = vmatprep.subr.mxu0 0.0
    %918 = vmatpush2.xpose.msra.mxu0 0.0
    %919 = vmatprep.subr.mxu0 0.0
    %920 = vmatpush2.xpose.msra.mxu0 0.0
    %921 = vmatprep.subr.mxu0 0.0
    %922 = vmatpush2.xpose.msra.mxu0 0.0
    %923 = vmatprep.subr.mxu0 0.0
    %924 = vmatpush2.xpose.msra.mxu0 0.0
    %925 = vmatprep.subr.mxu0 0.0
    %926 = vmatpush2.xpose.msra.mxu0 0.0
    %927 = vmatprep.subr.mxu0 0.0
    %928 = vmatpush2.xpose.msra.mxu0 0.0
    %929 = vmatprep.subr.mxu0 0.0
    %930 = vmatpush2.xpose.msra.mxu0 0.0
    %931 = vmatprep.subr.mxu0 0.0
    %932 = vmatpush2.xpose.msra.mxu0 0.0
    %933 = vmatprep.subr.mxu0 0.0
    %934 = vmatpush2.xpose.msra.mxu0 0.0
    %935 = vmatprep.mubr.f32.mxu0 0.0
    %v936 = vand.u32 %v640, 4294901760
    %v937 = vsub.f32 %v640, %v936
    %v938 = vand.u32 %v937, 4294901760
    %939 = vmatmul.mubr.f32.gmra.mxu0 %v938
    %v940 = vpop.f32.mrf.mxu0
    %v941 = vadd.f32 %v867, %v940
    %v942 = vpop.f32.mrf.mxu0
    %943 = vdwg.mxu0
    %944 = vmatprep.subr.mxu0 0.0
    %945 = vmatpush1.xpose.msra.mxu0 0.0
    %946 = vmatprep.subr.mxu0 0.0
    %947 = vmatpush1.xpose.msra.mxu0 0.0
    %948 = vmatprep.subr.mxu0 0.0
    %949 = vmatpush1.xpose.msra.mxu0 0.0
    %950 = vmatprep.subr.mxu0 0.0
    %951 = vmatpush1.xpose.msra.mxu0 0.0
    %952 = vmatprep.subr.mxu0 0.0
    %953 = vmatpush1.xpose.msra.mxu0 0.0
    %954 = vmatprep.subr.mxu0 0.0
    %955 = vmatpush1.xpose.msra.mxu0 0.0
    %956 = vmatprep.subr.mxu0 0.0
    %957 = vmatpush1.xpose.msra.mxu0 0.0
    %958 = vmatprep.subr.mxu0 0.0
    %959 = vmatpush1.xpose.msra.mxu0 0.0
    %960 = vmatprep.subr.mxu0 0.0
    %961 = vmatpush1.xpose.msra.mxu0 0.0
    %962 = vmatprep.subr.mxu0 0.0
    %963 = vmatpush1.xpose.msra.mxu0 0.0
    %964 = vmatprep.subr.mxu0 0.0
    %965 = vmatpush1.xpose.msra.mxu0 0.0
    %966 = vmatprep.subr.mxu0 0.0
    %967 = vmatpush1.xpose.msra.mxu0 0.0
    %968 = vmatprep.subr.mxu0 0.0
    %969 = vmatpush1.xpose.msra.mxu0 0.0
    %970 = vmatprep.subr.mxu0 0.0
    %971 = vmatpush1.xpose.msra.mxu0 0.0
    %972 = vmatprep.subr.mxu0 0.0
    %973 = vmatpush1.xpose.msra.mxu0 0.0
    %974 = vmatprep.subr.mxu0 0.0
    %v975 = vand.u32 %v642, 4294901760
    %v976 = vsub.f32 %v642, %v975
    %v977 = vand.u32 %v976, 4294901760
    %978 = vmatpush1.xpose.msra.mxu0 %v977
    %979 = vmatprep.subr.mxu0 0.0
    %980 = vmatpush2.xpose.msra.mxu0 0.0
    %981 = vmatprep.subr.mxu0 0.0
    %982 = vmatpush2.xpose.msra.mxu0 0.0
    %983 = vmatprep.subr.mxu0 0.0
    %984 = vmatpush2.xpose.msra.mxu0 0.0
    %985 = vmatprep.subr.mxu0 0.0
    %986 = vmatpush2.xpose.msra.mxu0 0.0
    %987 = vmatprep.subr.mxu0 0.0
    %988 = vmatpush2.xpose.msra.mxu0 0.0
    %989 = vmatprep.subr.mxu0 0.0
    %990 = vmatpush2.xpose.msra.mxu0 0.0
    %991 = vmatprep.subr.mxu0 0.0
    %992 = vmatpush2.xpose.msra.mxu0 0.0
    %993 = vmatprep.subr.mxu0 0.0
    %994 = vmatpush2.xpose.msra.mxu0 0.0
    %995 = vmatprep.subr.mxu0 0.0
    %996 = vmatpush2.xpose.msra.mxu0 0.0
    %997 = vmatprep.subr.mxu0 0.0
    %998 = vmatpush2.xpose.msra.mxu0 0.0
    %999 = vmatprep.subr.mxu0 0.0
    %1000 = vmatpush2.xpose.msra.mxu0 0.0
    %1001 = vmatprep.subr.mxu0 0.0
    %1002 = vmatpush2.xpose.msra.mxu0 0.0
    %1003 = vmatprep.subr.mxu0 0.0
    %1004 = vmatpush2.xpose.msra.mxu0 0.0
    %1005 = vmatprep.subr.mxu0 0.0
    %1006 = vmatpush2.xpose.msra.mxu0 0.0
    %1007 = vmatprep.subr.mxu0 0.0
    %1008 = vmatpush2.xpose.msra.mxu0 0.0
    %1009 = vmatprep.subr.mxu0 0.0
    %1010 = vmatpush2.xpose.msra.mxu0 0.0
    %1011 = vmatprep.mubr.f32.mxu0 0.0
    %v1012 = vand.u32 %v640, 4294901760
    %1013 = vmatmul.mubr.f32.gmra.mxu0 %v1012
    %v1014 = vpop.f32.mrf.mxu0
    %v1015 = vadd.f32 %v941, %v1014
    %v1016 = vpop.f32.mrf.mxu0
    %1017 = vdwg.mxu0
    %1018 = vmatprep.subr.mxu0 0.0
    %1019 = vmatpush1.xpose.msra.mxu0 0.0
    %1020 = vmatprep.subr.mxu0 0.0
    %1021 = vmatpush1.xpose.msra.mxu0 0.0
    %1022 = vmatprep.subr.mxu0 0.0
    %1023 = vmatpush1.xpose.msra.mxu0 0.0
    %1024 = vmatprep.subr.mxu0 0.0
    %1025 = vmatpush1.xpose.msra.mxu0 0.0
    %1026 = vmatprep.subr.mxu0 0.0
    %1027 = vmatpush1.xpose.msra.mxu0 0.0
    %1028 = vmatprep.subr.mxu0 0.0
    %1029 = vmatpush1.xpose.msra.mxu0 0.0
    %1030 = vmatprep.subr.mxu0 0.0
    %1031 = vmatpush1.xpose.msra.mxu0 0.0
    %1032 = vmatprep.subr.mxu0 0.0
    %1033 = vmatpush1.xpose.msra.mxu0 0.0
    %1034 = vmatprep.subr.mxu0 0.0
    %1035 = vmatpush1.xpose.msra.mxu0 0.0
    %1036 = vmatprep.subr.mxu0 0.0
    %1037 = vmatpush1.xpose.msra.mxu0 0.0
    %1038 = vmatprep.subr.mxu0 0.0
    %1039 = vmatpush1.xpose.msra.mxu0 0.0
    %1040 = vmatprep.subr.mxu0 0.0
    %1041 = vmatpush1.xpose.msra.mxu0 0.0
    %1042 = vmatprep.subr.mxu0 0.0
    %1043 = vmatpush1.xpose.msra.mxu0 0.0
    %1044 = vmatprep.subr.mxu0 0.0
    %1045 = vmatpush1.xpose.msra.mxu0 0.0
    %1046 = vmatprep.subr.mxu0 0.0
    %1047 = vmatpush1.xpose.msra.mxu0 0.0
    %1048 = vmatprep.subr.mxu0 0.0
    %v1049 = vand.u32 %v642, 4294901760
    %1050 = vmatpush1.xpose.msra.mxu0 %v1049
    %1051 = vmatprep.subr.mxu0 0.0
    %1052 = vmatpush2.xpose.msra.mxu0 0.0
    %1053 = vmatprep.subr.mxu0 0.0
    %1054 = vmatpush2.xpose.msra.mxu0 0.0
    %1055 = vmatprep.subr.mxu0 0.0
    %1056 = vmatpush2.xpose.msra.mxu0 0.0
    %1057 = vmatprep.subr.mxu0 0.0
    %1058 = vmatpush2.xpose.msra.mxu0 0.0
    %1059 = vmatprep.subr.mxu0 0.0
    %1060 = vmatpush2.xpose.msra.mxu0 0.0
    %1061 = vmatprep.subr.mxu0 0.0
    %1062 = vmatpush2.xpose.msra.mxu0 0.0
    %1063 = vmatprep.subr.mxu0 0.0
    %1064 = vmatpush2.xpose.msra.mxu0 0.0
    %1065 = vmatprep.subr.mxu0 0.0
    %1066 = vmatpush2.xpose.msra.mxu0 0.0
    %1067 = vmatprep.subr.mxu0 0.0
    %1068 = vmatpush2.xpose.msra.mxu0 0.0
    %1069 = vmatprep.subr.mxu0 0.0
    %1070 = vmatpush2.xpose.msra.mxu0 0.0
    %1071 = vmatprep.subr.mxu0 0.0
    %1072 = vmatpush2.xpose.msra.mxu0 0.0
    %1073 = vmatprep.subr.mxu0 0.0
    %1074 = vmatpush2.xpose.msra.mxu0 0.0
    %1075 = vmatprep.subr.mxu0 0.0
    %1076 = vmatpush2.xpose.msra.mxu0 0.0
    %1077 = vmatprep.subr.mxu0 0.0
    %1078 = vmatpush2.xpose.msra.mxu0 0.0
    %1079 = vmatprep.subr.mxu0 0.0
    %1080 = vmatpush2.xpose.msra.mxu0 0.0
    %1081 = vmatprep.subr.mxu0 0.0
    %1082 = vmatpush2.xpose.msra.mxu0 0.0
    %1083 = vmatprep.mubr.f32.mxu0 0.0
    %v1084 = vand.u32 %v640, 4294901760
    %1085 = vmatmul.mubr.f32.gmra.mxu0 %v1084
    %v1086 = vpop.f32.mrf.mxu0
    %v1087 = vadd.f32 %v1015, %v1086
    %v1088 = vpop.f32.mrf.mxu0
    %1089 = vdwg.mxu0
    %1090 = vrot.lane.b32.xlu0 %v612, 96
    %v1091 = vpop.permute.xlu0 %1090
    %v1092 = vsel %vm639, %v612, 0
    %v1094 = vsel %vm639, %v1091, 0
    %1096 = vmatprep.subr.mxu0 0.0
    %1097 = vmatpush1.xpose.msra.mxu0 0.0
    %1098 = vmatprep.subr.mxu0 0.0
    %1099 = vmatpush1.xpose.msra.mxu0 0.0
    %1100 = vmatprep.subr.mxu0 0.0
    %1101 = vmatpush1.xpose.msra.mxu0 0.0
    %1102 = vmatprep.subr.mxu0 0.0
    %1103 = vmatpush1.xpose.msra.mxu0 0.0
    %1104 = vmatprep.subr.mxu0 0.0
    %1105 = vmatpush1.xpose.msra.mxu0 0.0
    %1106 = vmatprep.subr.mxu0 0.0
    %1107 = vmatpush1.xpose.msra.mxu0 0.0
    %1108 = vmatprep.subr.mxu0 0.0
    %1109 = vmatpush1.xpose.msra.mxu0 0.0
    %1110 = vmatprep.subr.mxu0 0.0
    %1111 = vmatpush1.xpose.msra.mxu0 0.0
    %1112 = vmatprep.subr.mxu0 0.0
    %1113 = vmatpush1.xpose.msra.mxu0 0.0
    %1114 = vmatprep.subr.mxu0 0.0
    %1115 = vmatpush1.xpose.msra.mxu0 0.0
    %1116 = vmatprep.subr.mxu0 0.0
    %1117 = vmatpush1.xpose.msra.mxu0 0.0
    %1118 = vmatprep.subr.mxu0 0.0
    %1119 = vmatpush1.xpose.msra.mxu0 0.0
    %1120 = vmatprep.subr.mxu0 0.0
    %1121 = vmatpush1.xpose.msra.mxu0 0.0
    %1122 = vmatprep.subr.mxu0 0.0
    %1123 = vmatpush1.xpose.msra.mxu0 0.0
    %1124 = vmatprep.subr.mxu0 0.0
    %1125 = vmatpush1.xpose.msra.mxu0 0.0
    %1126 = vmatprep.subr.mxu0 0.0
    %v1127 = vand.u32 %v1094, 4294901760
    %1128 = vmatpush1.xpose.msra.mxu0 %v1127
    %1129 = vmatprep.subr.mxu0 0.0
    %1130 = vmatpush2.xpose.msra.mxu0 0.0
    %1131 = vmatprep.subr.mxu0 0.0
    %1132 = vmatpush2.xpose.msra.mxu0 0.0
    %1133 = vmatprep.subr.mxu0 0.0
    %1134 = vmatpush2.xpose.msra.mxu0 0.0
    %1135 = vmatprep.subr.mxu0 0.0
    %1136 = vmatpush2.xpose.msra.mxu0 0.0
    %1137 = vmatprep.subr.mxu0 0.0
    %1138 = vmatpush2.xpose.msra.mxu0 0.0
    %1139 = vmatprep.subr.mxu0 0.0
    %1140 = vmatpush2.xpose.msra.mxu0 0.0
    %1141 = vmatprep.subr.mxu0 0.0
    %1142 = vmatpush2.xpose.msra.mxu0 0.0
    %1143 = vmatprep.subr.mxu0 0.0
    %1144 = vmatpush2.xpose.msra.mxu0 0.0
    %1145 = vmatprep.subr.mxu0 0.0
    %1146 = vmatpush2.xpose.msra.mxu0 0.0
    %1147 = vmatprep.subr.mxu0 0.0
    %1148 = vmatpush2.xpose.msra.mxu0 0.0
    %1149 = vmatprep.subr.mxu0 0.0
    %1150 = vmatpush2.xpose.msra.mxu0 0.0
    %1151 = vmatprep.subr.mxu0 0.0
    %1152 = vmatpush2.xpose.msra.mxu0 0.0
    %1153 = vmatprep.subr.mxu0 0.0
    %1154 = vmatpush2.xpose.msra.mxu0 0.0
    %1155 = vmatprep.subr.mxu0 0.0
    %1156 = vmatpush2.xpose.msra.mxu0 0.0
    %1157 = vmatprep.subr.mxu0 0.0
    %1158 = vmatpush2.xpose.msra.mxu0 0.0
    %1159 = vmatprep.subr.mxu0 0.0
    %1160 = vmatpush2.xpose.msra.mxu0 0.0
    %1161 = vmatprep.mubr.f32.mxu0 0.0
    %v1162 = vand.u32 %v1092, 4294901760
    %v1163 = vsub.f32 %v1092, %v1162
    %v1164 = vand.u32 %v1163, 4294901760
    %v1165 = vsub.f32 %v1163, %v1164
    %v1166 = vand.u32 %v1165, 4294901760
    %1167 = vmatmul.mubr.f32.gmra.mxu0 %v1166
    %v1168 = vpop.f32.mrf.mxu0
    %v1169 = vadd.f32 0.0, %v1168
    %v1170 = vpop.f32.mrf.mxu0
    %1171 = vdwg.mxu0
    %1172 = vmatprep.subr.mxu0 0.0
    %1173 = vmatpush1.xpose.msra.mxu0 0.0
    %1174 = vmatprep.subr.mxu0 0.0
    %1175 = vmatpush1.xpose.msra.mxu0 0.0
    %1176 = vmatprep.subr.mxu0 0.0
    %1177 = vmatpush1.xpose.msra.mxu0 0.0
    %1178 = vmatprep.subr.mxu0 0.0
    %1179 = vmatpush1.xpose.msra.mxu0 0.0
    %1180 = vmatprep.subr.mxu0 0.0
    %1181 = vmatpush1.xpose.msra.mxu0 0.0
    %1182 = vmatprep.subr.mxu0 0.0
    %1183 = vmatpush1.xpose.msra.mxu0 0.0
    %1184 = vmatprep.subr.mxu0 0.0
    %1185 = vmatpush1.xpose.msra.mxu0 0.0
    %1186 = vmatprep.subr.mxu0 0.0
    %1187 = vmatpush1.xpose.msra.mxu0 0.0
    %1188 = vmatprep.subr.mxu0 0.0
    %1189 = vmatpush1.xpose.msra.mxu0 0.0
    %1190 = vmatprep.subr.mxu0 0.0
    %1191 = vmatpush1.xpose.msra.mxu0 0.0
    %1192 = vmatprep.subr.mxu0 0.0
    %1193 = vmatpush1.xpose.msra.mxu0 0.0
    %1194 = vmatprep.subr.mxu0 0.0
    %1195 = vmatpush1.xpose.msra.mxu0 0.0
    %1196 = vmatprep.subr.mxu0 0.0
    %1197 = vmatpush1.xpose.msra.mxu0 0.0
    %1198 = vmatprep.subr.mxu0 0.0
    %1199 = vmatpush1.xpose.msra.mxu0 0.0
    %1200 = vmatprep.subr.mxu0 0.0
    %1201 = vmatpush1.xpose.msra.mxu0 0.0
    %1202 = vmatprep.subr.mxu0 0.0
    %v1203 = vand.u32 %v1094, 4294901760
    %v1204 = vsub.f32 %v1094, %v1203
    %v1205 = vand.u32 %v1204, 4294901760
    %v1206 = vsub.f32 %v1204, %v1205
    %v1207 = vand.u32 %v1206, 4294901760
    %1208 = vmatpush1.xpose.msra.mxu0 %v1207
    %1209 = vmatprep.subr.mxu0 0.0
    %1210 = vmatpush2.xpose.msra.mxu0 0.0
    %1211 = vmatprep.subr.mxu0 0.0
    %1212 = vmatpush2.xpose.msra.mxu0 0.0
    %1213 = vmatprep.subr.mxu0 0.0
    %1214 = vmatpush2.xpose.msra.mxu0 0.0
    %1215 = vmatprep.subr.mxu0 0.0
    %1216 = vmatpush2.xpose.msra.mxu0 0.0
    %1217 = vmatprep.subr.mxu0 0.0
    %1218 = vmatpush2.xpose.msra.mxu0 0.0
    %1219 = vmatprep.subr.mxu0 0.0
    %1220 = vmatpush2.xpose.msra.mxu0 0.0
    %1221 = vmatprep.subr.mxu0 0.0
    %1222 = vmatpush2.xpose.msra.mxu0 0.0
    %1223 = vmatprep.subr.mxu0 0.0
    %1224 = vmatpush2.xpose.msra.mxu0 0.0
    %1225 = vmatprep.subr.mxu0 0.0
    %1226 = vmatpush2.xpose.msra.mxu0 0.0
    %1227 = vmatprep.subr.mxu0 0.0
    %1228 = vmatpush2.xpose.msra.mxu0 0.0
    %1229 = vmatprep.subr.mxu0 0.0
    %1230 = vmatpush2.xpose.msra.mxu0 0.0
    %1231 = vmatprep.subr.mxu0 0.0
    %1232 = vmatpush2.xpose.msra.mxu0 0.0
    %1233 = vmatprep.subr.mxu0 0.0
    %1234 = vmatpush2.xpose.msra.mxu0 0.0
    %1235 = vmatprep.subr.mxu0 0.0
    %1236 = vmatpush2.xpose.msra.mxu0 0.0
    %1237 = vmatprep.subr.mxu0 0.0
    %1238 = vmatpush2.xpose.msra.mxu0 0.0
    %1239 = vmatprep.subr.mxu0 0.0
    %1240 = vmatpush2.xpose.msra.mxu0 0.0
    %1241 = vmatprep.mubr.f32.mxu0 0.0
    %v1242 = vand.u32 %v1092, 4294901760
    %1243 = vmatmul.mubr.f32.gmra.mxu0 %v1242
    %v1244 = vpop.f32.mrf.mxu0
    %v1245 = vadd.f32 %v1169, %v1244
    %v1246 = vpop.f32.mrf.mxu0
    %1247 = vdwg.mxu0
    %1248 = vmatprep.subr.mxu0 0.0
    %1249 = vmatpush1.xpose.msra.mxu0 0.0
    %1250 = vmatprep.subr.mxu0 0.0
    %1251 = vmatpush1.xpose.msra.mxu0 0.0
    %1252 = vmatprep.subr.mxu0 0.0
    %1253 = vmatpush1.xpose.msra.mxu0 0.0
    %1254 = vmatprep.subr.mxu0 0.0
    %1255 = vmatpush1.xpose.msra.mxu0 0.0
    %1256 = vmatprep.subr.mxu0 0.0
    %1257 = vmatpush1.xpose.msra.mxu0 0.0
    %1258 = vmatprep.subr.mxu0 0.0
    %1259 = vmatpush1.xpose.msra.mxu0 0.0
    %1260 = vmatprep.subr.mxu0 0.0
    %1261 = vmatpush1.xpose.msra.mxu0 0.0
    %1262 = vmatprep.subr.mxu0 0.0
    %1263 = vmatpush1.xpose.msra.mxu0 0.0
    %1264 = vmatprep.subr.mxu0 0.0
    %1265 = vmatpush1.xpose.msra.mxu0 0.0
    %1266 = vmatprep.subr.mxu0 0.0
    %1267 = vmatpush1.xpose.msra.mxu0 0.0
    %1268 = vmatprep.subr.mxu0 0.0
    %1269 = vmatpush1.xpose.msra.mxu0 0.0
    %1270 = vmatprep.subr.mxu0 0.0
    %1271 = vmatpush1.xpose.msra.mxu0 0.0
    %1272 = vmatprep.subr.mxu0 0.0
    %1273 = vmatpush1.xpose.msra.mxu0 0.0
    %1274 = vmatprep.subr.mxu0 0.0
    %1275 = vmatpush1.xpose.msra.mxu0 0.0
    %1276 = vmatprep.subr.mxu0 0.0
    %1277 = vmatpush1.xpose.msra.mxu0 0.0
    %1278 = vmatprep.subr.mxu0 0.0
    %v1279 = vand.u32 %v1094, 4294901760
    %v1280 = vsub.f32 %v1094, %v1279
    %1281 = vmatpush1.xpose.msra.mxu0 %v1280
    %1282 = vmatprep.subr.mxu0 0.0
    %1283 = vmatpush2.xpose.msra.mxu0 0.0
    %1284 = vmatprep.subr.mxu0 0.0
    %1285 = vmatpush2.xpose.msra.mxu0 0.0
    %1286 = vmatprep.subr.mxu0 0.0
    %1287 = vmatpush2.xpose.msra.mxu0 0.0
    %1288 = vmatprep.subr.mxu0 0.0
    %1289 = vmatpush2.xpose.msra.mxu0 0.0
    %1290 = vmatprep.subr.mxu0 0.0
    %1291 = vmatpush2.xpose.msra.mxu0 0.0
    %1292 = vmatprep.subr.mxu0 0.0
    %1293 = vmatpush2.xpose.msra.mxu0 0.0
    %1294 = vmatprep.subr.mxu0 0.0
    %1295 = vmatpush2.xpose.msra.mxu0 0.0
    %1296 = vmatprep.subr.mxu0 0.0
    %1297 = vmatpush2.xpose.msra.mxu0 0.0
    %1298 = vmatprep.subr.mxu0 0.0
    %1299 = vmatpush2.xpose.msra.mxu0 0.0
    %1300 = vmatprep.subr.mxu0 0.0
    %1301 = vmatpush2.xpose.msra.mxu0 0.0
    %1302 = vmatprep.subr.mxu0 0.0
    %1303 = vmatpush2.xpose.msra.mxu0 0.0
    %1304 = vmatprep.subr.mxu0 0.0
    %1305 = vmatpush2.xpose.msra.mxu0 0.0
    %1306 = vmatprep.subr.mxu0 0.0
    %1307 = vmatpush2.xpose.msra.mxu0 0.0
    %1308 = vmatprep.subr.mxu0 0.0
    %1309 = vmatpush2.xpose.msra.mxu0 0.0
    %1310 = vmatprep.subr.mxu0 0.0
    %1311 = vmatpush2.xpose.msra.mxu0 0.0
    %1312 = vmatprep.subr.mxu0 0.0
    %1313 = vmatpush2.xpose.msra.mxu0 0.0
    %1314 = vmatprep.mubr.f32.mxu0 0.0
    %v1315 = vand.u32 %v1092, 4294901760
    %v1316 = vsub.f32 %v1092, %v1315
    %1317 = vmatmul.mubr.f32.gmra.mxu0 %v1316
    %v1318 = vpop.f32.mrf.mxu0
    %v1319 = vadd.f32 %v1245, %v1318
    %v1320 = vpop.f32.mrf.mxu0
    %1321 = vdwg.mxu0
    %1322 = vmatprep.subr.mxu0 0.0
    %1323 = vmatpush1.xpose.msra.mxu0 0.0
    %1324 = vmatprep.subr.mxu0 0.0
    %1325 = vmatpush1.xpose.msra.mxu0 0.0
    %1326 = vmatprep.subr.mxu0 0.0
    %1327 = vmatpush1.xpose.msra.mxu0 0.0
    %1328 = vmatprep.subr.mxu0 0.0
    %1329 = vmatpush1.xpose.msra.mxu0 0.0
    %1330 = vmatprep.subr.mxu0 0.0
    %1331 = vmatpush1.xpose.msra.mxu0 0.0
    %1332 = vmatprep.subr.mxu0 0.0
    %1333 = vmatpush1.xpose.msra.mxu0 0.0
    %1334 = vmatprep.subr.mxu0 0.0
    %1335 = vmatpush1.xpose.msra.mxu0 0.0
    %1336 = vmatprep.subr.mxu0 0.0
    %1337 = vmatpush1.xpose.msra.mxu0 0.0
    %1338 = vmatprep.subr.mxu0 0.0
    %1339 = vmatpush1.xpose.msra.mxu0 0.0
    %1340 = vmatprep.subr.mxu0 0.0
    %1341 = vmatpush1.xpose.msra.mxu0 0.0
    %1342 = vmatprep.subr.mxu0 0.0
    %1343 = vmatpush1.xpose.msra.mxu0 0.0
    %1344 = vmatprep.subr.mxu0 0.0
    %1345 = vmatpush1.xpose.msra.mxu0 0.0
    %1346 = vmatprep.subr.mxu0 0.0
    %1347 = vmatpush1.xpose.msra.mxu0 0.0
    %1348 = vmatprep.subr.mxu0 0.0
    %1349 = vmatpush1.xpose.msra.mxu0 0.0
    %1350 = vmatprep.subr.mxu0 0.0
    %1351 = vmatpush1.xpose.msra.mxu0 0.0
    %1352 = vmatprep.subr.mxu0 0.0
    %v1353 = vand.u32 %v1094, 4294901760
    %1354 = vmatpush1.xpose.msra.mxu0 %v1353
    %1355 = vmatprep.subr.mxu0 0.0
    %1356 = vmatpush2.xpose.msra.mxu0 0.0
    %1357 = vmatprep.subr.mxu0 0.0
    %1358 = vmatpush2.xpose.msra.mxu0 0.0
    %1359 = vmatprep.subr.mxu0 0.0
    %1360 = vmatpush2.xpose.msra.mxu0 0.0
    %1361 = vmatprep.subr.mxu0 0.0
    %1362 = vmatpush2.xpose.msra.mxu0 0.0
    %1363 = vmatprep.subr.mxu0 0.0
    %1364 = vmatpush2.xpose.msra.mxu0 0.0
    %1365 = vmatprep.subr.mxu0 0.0
    %1366 = vmatpush2.xpose.msra.mxu0 0.0
    %1367 = vmatprep.subr.mxu0 0.0
    %1368 = vmatpush2.xpose.msra.mxu0 0.0
    %1369 = vmatprep.subr.mxu0 0.0
    %1370 = vmatpush2.xpose.msra.mxu0 0.0
    %1371 = vmatprep.subr.mxu0 0.0
    %1372 = vmatpush2.xpose.msra.mxu0 0.0
    %1373 = vmatprep.subr.mxu0 0.0
    %1374 = vmatpush2.xpose.msra.mxu0 0.0
    %1375 = vmatprep.subr.mxu0 0.0
    %1376 = vmatpush2.xpose.msra.mxu0 0.0
    %1377 = vmatprep.subr.mxu0 0.0
    %1378 = vmatpush2.xpose.msra.mxu0 0.0
    %1379 = vmatprep.subr.mxu0 0.0
    %1380 = vmatpush2.xpose.msra.mxu0 0.0
    %1381 = vmatprep.subr.mxu0 0.0
    %1382 = vmatpush2.xpose.msra.mxu0 0.0
    %1383 = vmatprep.subr.mxu0 0.0
    %1384 = vmatpush2.xpose.msra.mxu0 0.0
    %1385 = vmatprep.subr.mxu0 0.0
    %1386 = vmatpush2.xpose.msra.mxu0 0.0
    %1387 = vmatprep.mubr.f32.mxu0 0.0
    %v1388 = vand.u32 %v1092, 4294901760
    %v1389 = vsub.f32 %v1092, %v1388
    %v1390 = vand.u32 %v1389, 4294901760
    %1391 = vmatmul.mubr.f32.gmra.mxu0 %v1390
    %v1392 = vpop.f32.mrf.mxu0
    %v1393 = vadd.f32 %v1319, %v1392
    %v1394 = vpop.f32.mrf.mxu0
    %1395 = vdwg.mxu0
    %1396 = vmatprep.subr.mxu0 0.0
    %1397 = vmatpush1.xpose.msra.mxu0 0.0
    %1398 = vmatprep.subr.mxu0 0.0
    %1399 = vmatpush1.xpose.msra.mxu0 0.0
    %1400 = vmatprep.subr.mxu0 0.0
    %1401 = vmatpush1.xpose.msra.mxu0 0.0
    %1402 = vmatprep.subr.mxu0 0.0
    %1403 = vmatpush1.xpose.msra.mxu0 0.0
    %1404 = vmatprep.subr.mxu0 0.0
    %1405 = vmatpush1.xpose.msra.mxu0 0.0
    %1406 = vmatprep.subr.mxu0 0.0
    %1407 = vmatpush1.xpose.msra.mxu0 0.0
    %1408 = vmatprep.subr.mxu0 0.0
    %1409 = vmatpush1.xpose.msra.mxu0 0.0
    %1410 = vmatprep.subr.mxu0 0.0
    %1411 = vmatpush1.xpose.msra.mxu0 0.0
    %1412 = vmatprep.subr.mxu0 0.0
    %1413 = vmatpush1.xpose.msra.mxu0 0.0
    %1414 = vmatprep.subr.mxu0 0.0
    %1415 = vmatpush1.xpose.msra.mxu0 0.0
    %1416 = vmatprep.subr.mxu0 0.0
    %1417 = vmatpush1.xpose.msra.mxu0 0.0
    %1418 = vmatprep.subr.mxu0 0.0
    %1419 = vmatpush1.xpose.msra.mxu0 0.0
    %1420 = vmatprep.subr.mxu0 0.0
    %1421 = vmatpush1.xpose.msra.mxu0 0.0
    %1422 = vmatprep.subr.mxu0 0.0
    %1423 = vmatpush1.xpose.msra.mxu0 0.0
    %1424 = vmatprep.subr.mxu0 0.0
    %1425 = vmatpush1.xpose.msra.mxu0 0.0
    %1426 = vmatprep.subr.mxu0 0.0
    %v1427 = vand.u32 %v1094, 4294901760
    %v1428 = vsub.f32 %v1094, %v1427
    %v1429 = vand.u32 %v1428, 4294901760
    %1430 = vmatpush1.xpose.msra.mxu0 %v1429
    %1431 = vmatprep.subr.mxu0 0.0
    %1432 = vmatpush2.xpose.msra.mxu0 0.0
    %1433 = vmatprep.subr.mxu0 0.0
    %1434 = vmatpush2.xpose.msra.mxu0 0.0
    %1435 = vmatprep.subr.mxu0 0.0
    %1436 = vmatpush2.xpose.msra.mxu0 0.0
    %1437 = vmatprep.subr.mxu0 0.0
    %1438 = vmatpush2.xpose.msra.mxu0 0.0
    %1439 = vmatprep.subr.mxu0 0.0
    %1440 = vmatpush2.xpose.msra.mxu0 0.0
    %1441 = vmatprep.subr.mxu0 0.0
    %1442 = vmatpush2.xpose.msra.mxu0 0.0
    %1443 = vmatprep.subr.mxu0 0.0
    %1444 = vmatpush2.xpose.msra.mxu0 0.0
    %1445 = vmatprep.subr.mxu0 0.0
    %1446 = vmatpush2.xpose.msra.mxu0 0.0
    %1447 = vmatprep.subr.mxu0 0.0
    %1448 = vmatpush2.xpose.msra.mxu0 0.0
    %1449 = vmatprep.subr.mxu0 0.0
    %1450 = vmatpush2.xpose.msra.mxu0 0.0
    %1451 = vmatprep.subr.mxu0 0.0
    %1452 = vmatpush2.xpose.msra.mxu0 0.0
    %1453 = vmatprep.subr.mxu0 0.0
    %1454 = vmatpush2.xpose.msra.mxu0 0.0
    %1455 = vmatprep.subr.mxu0 0.0
    %1456 = vmatpush2.xpose.msra.mxu0 0.0
    %1457 = vmatprep.subr.mxu0 0.0
    %1458 = vmatpush2.xpose.msra.mxu0 0.0
    %1459 = vmatprep.subr.mxu0 0.0
    %1460 = vmatpush2.xpose.msra.mxu0 0.0
    %1461 = vmatprep.subr.mxu0 0.0
    %1462 = vmatpush2.xpose.msra.mxu0 0.0
    %1463 = vmatprep.mubr.f32.mxu0 0.0
    %v1464 = vand.u32 %v1092, 4294901760
    %1465 = vmatmul.mubr.f32.gmra.mxu0 %v1464
    %v1466 = vpop.f32.mrf.mxu0
    %v1467 = vadd.f32 %v1393, %v1466
    %v1468 = vpop.f32.mrf.mxu0
    %1469 = vdwg.mxu0
    %1470 = vmatprep.subr.mxu0 0.0
    %1471 = vmatpush1.xpose.msra.mxu0 0.0
    %1472 = vmatprep.subr.mxu0 0.0
    %1473 = vmatpush1.xpose.msra.mxu0 0.0
    %1474 = vmatprep.subr.mxu0 0.0
    %1475 = vmatpush1.xpose.msra.mxu0 0.0
    %1476 = vmatprep.subr.mxu0 0.0
    %1477 = vmatpush1.xpose.msra.mxu0 0.0
    %1478 = vmatprep.subr.mxu0 0.0
    %1479 = vmatpush1.xpose.msra.mxu0 0.0
    %1480 = vmatprep.subr.mxu0 0.0
    %1481 = vmatpush1.xpose.msra.mxu0 0.0
    %1482 = vmatprep.subr.mxu0 0.0
    %1483 = vmatpush1.xpose.msra.mxu0 0.0
    %1484 = vmatprep.subr.mxu0 0.0
    %1485 = vmatpush1.xpose.msra.mxu0 0.0
    %1486 = vmatprep.subr.mxu0 0.0
    %1487 = vmatpush1.xpose.msra.mxu0 0.0
    %1488 = vmatprep.subr.mxu0 0.0
    %1489 = vmatpush1.xpose.msra.mxu0 0.0
    %1490 = vmatprep.subr.mxu0 0.0
    %1491 = vmatpush1.xpose.msra.mxu0 0.0
    %1492 = vmatprep.subr.mxu0 0.0
    %1493 = vmatpush1.xpose.msra.mxu0 0.0
    %1494 = vmatprep.subr.mxu0 0.0
    %1495 = vmatpush1.xpose.msra.mxu0 0.0
    %1496 = vmatprep.subr.mxu0 0.0
    %1497 = vmatpush1.xpose.msra.mxu0 0.0
    %1498 = vmatprep.subr.mxu0 0.0
    %1499 = vmatpush1.xpose.msra.mxu0 0.0
    %1500 = vmatprep.subr.mxu0 0.0
    %v1501 = vand.u32 %v1094, 4294901760
    %1502 = vmatpush1.xpose.msra.mxu0 %v1501
    %1503 = vmatprep.subr.mxu0 0.0
    %1504 = vmatpush2.xpose.msra.mxu0 0.0
    %1505 = vmatprep.subr.mxu0 0.0
    %1506 = vmatpush2.xpose.msra.mxu0 0.0
    %1507 = vmatprep.subr.mxu0 0.0
    %1508 = vmatpush2.xpose.msra.mxu0 0.0
    %1509 = vmatprep.subr.mxu0 0.0
    %1510 = vmatpush2.xpose.msra.mxu0 0.0
    %1511 = vmatprep.subr.mxu0 0.0
    %1512 = vmatpush2.xpose.msra.mxu0 0.0
    %1513 = vmatprep.subr.mxu0 0.0
    %1514 = vmatpush2.xpose.msra.mxu0 0.0
    %1515 = vmatprep.subr.mxu0 0.0
    %1516 = vmatpush2.xpose.msra.mxu0 0.0
    %1517 = vmatprep.subr.mxu0 0.0
    %1518 = vmatpush2.xpose.msra.mxu0 0.0
    %1519 = vmatprep.subr.mxu0 0.0
    %1520 = vmatpush2.xpose.msra.mxu0 0.0
    %1521 = vmatprep.subr.mxu0 0.0
    %1522 = vmatpush2.xpose.msra.mxu0 0.0
    %1523 = vmatprep.subr.mxu0 0.0
    %1524 = vmatpush2.xpose.msra.mxu0 0.0
    %1525 = vmatprep.subr.mxu0 0.0
    %1526 = vmatpush2.xpose.msra.mxu0 0.0
    %1527 = vmatprep.subr.mxu0 0.0
    %1528 = vmatpush2.xpose.msra.mxu0 0.0
    %1529 = vmatprep.subr.mxu0 0.0
    %1530 = vmatpush2.xpose.msra.mxu0 0.0
    %1531 = vmatprep.subr.mxu0 0.0
    %1532 = vmatpush2.xpose.msra.mxu0 0.0
    %1533 = vmatprep.subr.mxu0 0.0
    %1534 = vmatpush2.xpose.msra.mxu0 0.0
    %1535 = vmatprep.mubr.f32.mxu0 0.0
    %v1536 = vand.u32 %v1092, 4294901760
    %1537 = vmatmul.mubr.f32.gmra.mxu0 %v1536
    %v1538 = vpop.f32.mrf.mxu0
    %v1539 = vadd.f32 %v1467, %v1538
    %v1540 = vpop.f32.mrf.mxu0
    %1541 = vdwg.mxu0
    %1542 = vrot.lane.b32.xlu0 %v618, 96
    %v1543 = vpop.permute.xlu0 %1542
    %v1544 = vsel %vm639, %v618, 0
    %v1546 = vsel %vm639, %v1543, 0
    %1548 = vmatprep.subr.mxu0 0.0
    %1549 = vmatpush1.xpose.msra.mxu0 0.0
    %1550 = vmatprep.subr.mxu0 0.0
    %1551 = vmatpush1.xpose.msra.mxu0 0.0
    %1552 = vmatprep.subr.mxu0 0.0
    %1553 = vmatpush1.xpose.msra.mxu0 0.0
    %1554 = vmatprep.subr.mxu0 0.0
    %1555 = vmatpush1.xpose.msra.mxu0 0.0
    %1556 = vmatprep.subr.mxu0 0.0
    %1557 = vmatpush1.xpose.msra.mxu0 0.0
    %1558 = vmatprep.subr.mxu0 0.0
    %1559 = vmatpush1.xpose.msra.mxu0 0.0
    %1560 = vmatprep.subr.mxu0 0.0
    %1561 = vmatpush1.xpose.msra.mxu0 0.0
    %1562 = vmatprep.subr.mxu0 0.0
    %1563 = vmatpush1.xpose.msra.mxu0 0.0
    %1564 = vmatprep.subr.mxu0 0.0
    %1565 = vmatpush1.xpose.msra.mxu0 0.0
    %1566 = vmatprep.subr.mxu0 0.0
    %1567 = vmatpush1.xpose.msra.mxu0 0.0
    %1568 = vmatprep.subr.mxu0 0.0
    %1569 = vmatpush1.xpose.msra.mxu0 0.0
    %1570 = vmatprep.subr.mxu0 0.0
    %1571 = vmatpush1.xpose.msra.mxu0 0.0
    %1572 = vmatprep.subr.mxu0 0.0
    %1573 = vmatpush1.xpose.msra.mxu0 0.0
    %1574 = vmatprep.subr.mxu0 0.0
    %1575 = vmatpush1.xpose.msra.mxu0 0.0
    %1576 = vmatprep.subr.mxu0 0.0
    %1577 = vmatpush1.xpose.msra.mxu0 0.0
    %1578 = vmatprep.subr.mxu0 0.0
    %v1579 = vand.u32 %v1546, 4294901760
    %1580 = vmatpush1.xpose.msra.mxu0 %v1579
    %1581 = vmatprep.subr.mxu0 0.0
    %1582 = vmatpush2.xpose.msra.mxu0 0.0
    %1583 = vmatprep.subr.mxu0 0.0
    %1584 = vmatpush2.xpose.msra.mxu0 0.0
    %1585 = vmatprep.subr.mxu0 0.0
    %1586 = vmatpush2.xpose.msra.mxu0 0.0
    %1587 = vmatprep.subr.mxu0 0.0
    %1588 = vmatpush2.xpose.msra.mxu0 0.0
    %1589 = vmatprep.subr.mxu0 0.0
    %1590 = vmatpush2.xpose.msra.mxu0 0.0
    %1591 = vmatprep.subr.mxu0 0.0
    %1592 = vmatpush2.xpose.msra.mxu0 0.0
    %1593 = vmatprep.subr.mxu0 0.0
    %1594 = vmatpush2.xpose.msra.mxu0 0.0
    %1595 = vmatprep.subr.mxu0 0.0
    %1596 = vmatpush2.xpose.msra.mxu0 0.0
    %1597 = vmatprep.subr.mxu0 0.0
    %1598 = vmatpush2.xpose.msra.mxu0 0.0
    %1599 = vmatprep.subr.mxu0 0.0
    %1600 = vmatpush2.xpose.msra.mxu0 0.0
    %1601 = vmatprep.subr.mxu0 0.0
    %1602 = vmatpush2.xpose.msra.mxu0 0.0
    %1603 = vmatprep.subr.mxu0 0.0
    %1604 = vmatpush2.xpose.msra.mxu0 0.0
    %1605 = vmatprep.subr.mxu0 0.0
    %1606 = vmatpush2.xpose.msra.mxu0 0.0
    %1607 = vmatprep.subr.mxu0 0.0
    %1608 = vmatpush2.xpose.msra.mxu0 0.0
    %1609 = vmatprep.subr.mxu0 0.0
    %1610 = vmatpush2.xpose.msra.mxu0 0.0
    %1611 = vmatprep.subr.mxu0 0.0
    %1612 = vmatpush2.xpose.msra.mxu0 0.0
    %1613 = vmatprep.mubr.f32.mxu0 0.0
    %v1614 = vand.u32 %v1544, 4294901760
    %v1615 = vsub.f32 %v1544, %v1614
    %v1616 = vand.u32 %v1615, 4294901760
    %v1617 = vsub.f32 %v1615, %v1616
    %v1618 = vand.u32 %v1617, 4294901760
    %1619 = vmatmul.mubr.f32.gmra.mxu0 %v1618
    %v1620 = vpop.f32.mrf.mxu0
    %v1621 = vadd.f32 0.0, %v1620
    %v1622 = vpop.f32.mrf.mxu0
    %1623 = vdwg.mxu0
    %1624 = vmatprep.subr.mxu0 0.0
    %1625 = vmatpush1.xpose.msra.mxu0 0.0
    %1626 = vmatprep.subr.mxu0 0.0
    %1627 = vmatpush1.xpose.msra.mxu0 0.0
    %1628 = vmatprep.subr.mxu0 0.0
    %1629 = vmatpush1.xpose.msra.mxu0 0.0
    %1630 = vmatprep.subr.mxu0 0.0
    %1631 = vmatpush1.xpose.msra.mxu0 0.0
    %1632 = vmatprep.subr.mxu0 0.0
    %1633 = vmatpush1.xpose.msra.mxu0 0.0
    %1634 = vmatprep.subr.mxu0 0.0
    %1635 = vmatpush1.xpose.msra.mxu0 0.0
    %1636 = vmatprep.subr.mxu0 0.0
    %1637 = vmatpush1.xpose.msra.mxu0 0.0
    %1638 = vmatprep.subr.mxu0 0.0
    %1639 = vmatpush1.xpose.msra.mxu0 0.0
    %1640 = vmatprep.subr.mxu0 0.0
    %1641 = vmatpush1.xpose.msra.mxu0 0.0
    %1642 = vmatprep.subr.mxu0 0.0
    %1643 = vmatpush1.xpose.msra.mxu0 0.0
    %1644 = vmatprep.subr.mxu0 0.0
    %1645 = vmatpush1.xpose.msra.mxu0 0.0
    %1646 = vmatprep.subr.mxu0 0.0
    %1647 = vmatpush1.xpose.msra.mxu0 0.0
    %1648 = vmatprep.subr.mxu0 0.0
    %1649 = vmatpush1.xpose.msra.mxu0 0.0
    %1650 = vmatprep.subr.mxu0 0.0
    %1651 = vmatpush1.xpose.msra.mxu0 0.0
    %1652 = vmatprep.subr.mxu0 0.0
    %1653 = vmatpush1.xpose.msra.mxu0 0.0
    %1654 = vmatprep.subr.mxu0 0.0
    %v1655 = vand.u32 %v1546, 4294901760
    %v1656 = vsub.f32 %v1546, %v1655
    %v1657 = vand.u32 %v1656, 4294901760
    %v1658 = vsub.f32 %v1656, %v1657
    %v1659 = vand.u32 %v1658, 4294901760
    %1660 = vmatpush1.xpose.msra.mxu0 %v1659
    %1661 = vmatprep.subr.mxu0 0.0
    %1662 = vmatpush2.xpose.msra.mxu0 0.0
    %1663 = vmatprep.subr.mxu0 0.0
    %1664 = vmatpush2.xpose.msra.mxu0 0.0
    %1665 = vmatprep.subr.mxu0 0.0
    %1666 = vmatpush2.xpose.msra.mxu0 0.0
    %1667 = vmatprep.subr.mxu0 0.0
    %1668 = vmatpush2.xpose.msra.mxu0 0.0
    %1669 = vmatprep.subr.mxu0 0.0
    %1670 = vmatpush2.xpose.msra.mxu0 0.0
    %1671 = vmatprep.subr.mxu0 0.0
    %1672 = vmatpush2.xpose.msra.mxu0 0.0
    %1673 = vmatprep.subr.mxu0 0.0
    %1674 = vmatpush2.xpose.msra.mxu0 0.0
    %1675 = vmatprep.subr.mxu0 0.0
    %1676 = vmatpush2.xpose.msra.mxu0 0.0
    %1677 = vmatprep.subr.mxu0 0.0
    %1678 = vmatpush2.xpose.msra.mxu0 0.0
    %1679 = vmatprep.subr.mxu0 0.0
    %1680 = vmatpush2.xpose.msra.mxu0 0.0
    %1681 = vmatprep.subr.mxu0 0.0
    %1682 = vmatpush2.xpose.msra.mxu0 0.0
    %1683 = vmatprep.subr.mxu0 0.0
    %1684 = vmatpush2.xpose.msra.mxu0 0.0
    %1685 = vmatprep.subr.mxu0 0.0
    %1686 = vmatpush2.xpose.msra.mxu0 0.0
    %1687 = vmatprep.subr.mxu0 0.0
    %1688 = vmatpush2.xpose.msra.mxu0 0.0
    %1689 = vmatprep.subr.mxu0 0.0
    %1690 = vmatpush2.xpose.msra.mxu0 0.0
    %1691 = vmatprep.subr.mxu0 0.0
    %1692 = vmatpush2.xpose.msra.mxu0 0.0
    %1693 = vmatprep.mubr.f32.mxu0 0.0
    %v1694 = vand.u32 %v1544, 4294901760
    %1695 = vmatmul.mubr.f32.gmra.mxu0 %v1694
    %v1696 = vpop.f32.mrf.mxu0
    %v1697 = vadd.f32 %v1621, %v1696
    %v1698 = vpop.f32.mrf.mxu0
    %1699 = vdwg.mxu0
    %1700 = vmatprep.subr.mxu0 0.0
    %1701 = vmatpush1.xpose.msra.mxu0 0.0
    %1702 = vmatprep.subr.mxu0 0.0
    %1703 = vmatpush1.xpose.msra.mxu0 0.0
    %1704 = vmatprep.subr.mxu0 0.0
    %1705 = vmatpush1.xpose.msra.mxu0 0.0
    %1706 = vmatprep.subr.mxu0 0.0
    %1707 = vmatpush1.xpose.msra.mxu0 0.0
    %1708 = vmatprep.subr.mxu0 0.0
    %1709 = vmatpush1.xpose.msra.mxu0 0.0
    %1710 = vmatprep.subr.mxu0 0.0
    %1711 = vmatpush1.xpose.msra.mxu0 0.0
    %1712 = vmatprep.subr.mxu0 0.0
    %1713 = vmatpush1.xpose.msra.mxu0 0.0
    %1714 = vmatprep.subr.mxu0 0.0
    %1715 = vmatpush1.xpose.msra.mxu0 0.0
    %1716 = vmatprep.subr.mxu0 0.0
    %1717 = vmatpush1.xpose.msra.mxu0 0.0
    %1718 = vmatprep.subr.mxu0 0.0
    %1719 = vmatpush1.xpose.msra.mxu0 0.0
    %1720 = vmatprep.subr.mxu0 0.0
    %1721 = vmatpush1.xpose.msra.mxu0 0.0
    %1722 = vmatprep.subr.mxu0 0.0
    %1723 = vmatpush1.xpose.msra.mxu0 0.0
    %1724 = vmatprep.subr.mxu0 0.0
    %1725 = vmatpush1.xpose.msra.mxu0 0.0
    %1726 = vmatprep.subr.mxu0 0.0
    %1727 = vmatpush1.xpose.msra.mxu0 0.0
    %1728 = vmatprep.subr.mxu0 0.0
    %1729 = vmatpush1.xpose.msra.mxu0 0.0
    %1730 = vmatprep.subr.mxu0 0.0
    %v1731 = vand.u32 %v1546, 4294901760
    %v1732 = vsub.f32 %v1546, %v1731
    %1733 = vmatpush1.xpose.msra.mxu0 %v1732
    %1734 = vmatprep.subr.mxu0 0.0
    %1735 = vmatpush2.xpose.msra.mxu0 0.0
    %1736 = vmatprep.subr.mxu0 0.0
    %1737 = vmatpush2.xpose.msra.mxu0 0.0
    %1738 = vmatprep.subr.mxu0 0.0
    %1739 = vmatpush2.xpose.msra.mxu0 0.0
    %1740 = vmatprep.subr.mxu0 0.0
    %1741 = vmatpush2.xpose.msra.mxu0 0.0
    %1742 = vmatprep.subr.mxu0 0.0
    %1743 = vmatpush2.xpose.msra.mxu0 0.0
    %1744 = vmatprep.subr.mxu0 0.0
    %1745 = vmatpush2.xpose.msra.mxu0 0.0
    %1746 = vmatprep.subr.mxu0 0.0
    %1747 = vmatpush2.xpose.msra.mxu0 0.0
    %1748 = vmatprep.subr.mxu0 0.0
    %1749 = vmatpush2.xpose.msra.mxu0 0.0
    %1750 = vmatprep.subr.mxu0 0.0
    %1751 = vmatpush2.xpose.msra.mxu0 0.0
    %1752 = vmatprep.subr.mxu0 0.0
    %1753 = vmatpush2.xpose.msra.mxu0 0.0
    %1754 = vmatprep.subr.mxu0 0.0
    %1755 = vmatpush2.xpose.msra.mxu0 0.0
    %1756 = vmatprep.subr.mxu0 0.0
    %1757 = vmatpush2.xpose.msra.mxu0 0.0
    %1758 = vmatprep.subr.mxu0 0.0
    %1759 = vmatpush2.xpose.msra.mxu0 0.0
    %1760 = vmatprep.subr.mxu0 0.0
    %1761 = vmatpush2.xpose.msra.mxu0 0.0
    %1762 = vmatprep.subr.mxu0 0.0
    %1763 = vmatpush2.xpose.msra.mxu0 0.0
    %1764 = vmatprep.subr.mxu0 0.0
    %1765 = vmatpush2.xpose.msra.mxu0 0.0
    %1766 = vmatprep.mubr.f32.mxu0 0.0
    %v1767 = vand.u32 %v1544, 4294901760
    %v1768 = vsub.f32 %v1544, %v1767
    %1769 = vmatmul.mubr.f32.gmra.mxu0 %v1768
    %v1770 = vpop.f32.mrf.mxu0
    %v1771 = vadd.f32 %v1697, %v1770
    %v1772 = vpop.f32.mrf.mxu0
    %1773 = vdwg.mxu0
    %1774 = vmatprep.subr.mxu0 0.0
    %1775 = vmatpush1.xpose.msra.mxu0 0.0
    %1776 = vmatprep.subr.mxu0 0.0
    %1777 = vmatpush1.xpose.msra.mxu0 0.0
    %1778 = vmatprep.subr.mxu0 0.0
    %1779 = vmatpush1.xpose.msra.mxu0 0.0
    %1780 = vmatprep.subr.mxu0 0.0
    %1781 = vmatpush1.xpose.msra.mxu0 0.0
    %1782 = vmatprep.subr.mxu0 0.0
    %1783 = vmatpush1.xpose.msra.mxu0 0.0
    %1784 = vmatprep.subr.mxu0 0.0
    %1785 = vmatpush1.xpose.msra.mxu0 0.0
    %1786 = vmatprep.subr.mxu0 0.0
    %1787 = vmatpush1.xpose.msra.mxu0 0.0
    %1788 = vmatprep.subr.mxu0 0.0
    %1789 = vmatpush1.xpose.msra.mxu0 0.0
    %1790 = vmatprep.subr.mxu0 0.0
    %1791 = vmatpush1.xpose.msra.mxu0 0.0
    %1792 = vmatprep.subr.mxu0 0.0
    %1793 = vmatpush1.xpose.msra.mxu0 0.0
    %1794 = vmatprep.subr.mxu0 0.0
    %1795 = vmatpush1.xpose.msra.mxu0 0.0
    %1796 = vmatprep.subr.mxu0 0.0
    %1797 = vmatpush1.xpose.msra.mxu0 0.0
    %1798 = vmatprep.subr.mxu0 0.0
    %1799 = vmatpush1.xpose.msra.mxu0 0.0
    %1800 = vmatprep.subr.mxu0 0.0
    %1801 = vmatpush1.xpose.msra.mxu0 0.0
    %1802 = vmatprep.subr.mxu0 0.0
    %1803 = vmatpush1.xpose.msra.mxu0 0.0
    %1804 = vmatprep.subr.mxu0 0.0
    %v1805 = vand.u32 %v1546, 4294901760
    %1806 = vmatpush1.xpose.msra.mxu0 %v1805
    %1807 = vmatprep.subr.mxu0 0.0
    %1808 = vmatpush2.xpose.msra.mxu0 0.0
    %1809 = vmatprep.subr.mxu0 0.0
    %1810 = vmatpush2.xpose.msra.mxu0 0.0
    %1811 = vmatprep.subr.mxu0 0.0
    %1812 = vmatpush2.xpose.msra.mxu0 0.0
    %1813 = vmatprep.subr.mxu0 0.0
    %1814 = vmatpush2.xpose.msra.mxu0 0.0
    %1815 = vmatprep.subr.mxu0 0.0
    %1816 = vmatpush2.xpose.msra.mxu0 0.0
    %1817 = vmatprep.subr.mxu0 0.0
    %1818 = vmatpush2.xpose.msra.mxu0 0.0
    %1819 = vmatprep.subr.mxu0 0.0
    %1820 = vmatpush2.xpose.msra.mxu0 0.0
    %1821 = vmatprep.subr.mxu0 0.0
    %1822 = vmatpush2.xpose.msra.mxu0 0.0
    %1823 = vmatprep.subr.mxu0 0.0
    %1824 = vmatpush2.xpose.msra.mxu0 0.0
    %1825 = vmatprep.subr.mxu0 0.0
    %1826 = vmatpush2.xpose.msra.mxu0 0.0
    %1827 = vmatprep.subr.mxu0 0.0
    %1828 = vmatpush2.xpose.msra.mxu0 0.0
    %1829 = vmatprep.subr.mxu0 0.0
    %1830 = vmatpush2.xpose.msra.mxu0 0.0
    %1831 = vmatprep.subr.mxu0 0.0
    %1832 = vmatpush2.xpose.msra.mxu0 0.0
    %1833 = vmatprep.subr.mxu0 0.0
    %1834 = vmatpush2.xpose.msra.mxu0 0.0
    %1835 = vmatprep.subr.mxu0 0.0
    %1836 = vmatpush2.xpose.msra.mxu0 0.0
    %1837 = vmatprep.subr.mxu0 0.0
    %1838 = vmatpush2.xpose.msra.mxu0 0.0
    %1839 = vmatprep.mubr.f32.mxu0 0.0
    %v1840 = vand.u32 %v1544, 4294901760
    %v1841 = vsub.f32 %v1544, %v1840
    %v1842 = vand.u32 %v1841, 4294901760
    %1843 = vmatmul.mubr.f32.gmra.mxu0 %v1842
    %v1844 = vpop.f32.mrf.mxu0
    %v1845 = vadd.f32 %v1771, %v1844
    %v1846 = vpop.f32.mrf.mxu0
    %1847 = vdwg.mxu0
    %1848 = vmatprep.subr.mxu0 0.0
    %1849 = vmatpush1.xpose.msra.mxu0 0.0
    %1850 = vmatprep.subr.mxu0 0.0
    %1851 = vmatpush1.xpose.msra.mxu0 0.0
    %1852 = vmatprep.subr.mxu0 0.0
    %1853 = vmatpush1.xpose.msra.mxu0 0.0
    %1854 = vmatprep.subr.mxu0 0.0
    %1855 = vmatpush1.xpose.msra.mxu0 0.0
    %1856 = vmatprep.subr.mxu0 0.0
    %1857 = vmatpush1.xpose.msra.mxu0 0.0
    %1858 = vmatprep.subr.mxu0 0.0
    %1859 = vmatpush1.xpose.msra.mxu0 0.0
    %1860 = vmatprep.subr.mxu0 0.0
    %1861 = vmatpush1.xpose.msra.mxu0 0.0
    %1862 = vmatprep.subr.mxu0 0.0
    %1863 = vmatpush1.xpose.msra.mxu0 0.0
    %1864 = vmatprep.subr.mxu0 0.0
    %1865 = vmatpush1.xpose.msra.mxu0 0.0
    %1866 = vmatprep.subr.mxu0 0.0
    %1867 = vmatpush1.xpose.msra.mxu0 0.0
    %1868 = vmatprep.subr.mxu0 0.0
    %1869 = vmatpush1.xpose.msra.mxu0 0.0
    %1870 = vmatprep.subr.mxu0 0.0
    %1871 = vmatpush1.xpose.msra.mxu0 0.0
    %1872 = vmatprep.subr.mxu0 0.0
    %1873 = vmatpush1.xpose.msra.mxu0 0.0
    %1874 = vmatprep.subr.mxu0 0.0
    %1875 = vmatpush1.xpose.msra.mxu0 0.0
    %1876 = vmatprep.subr.mxu0 0.0
    %1877 = vmatpush1.xpose.msra.mxu0 0.0
    %1878 = vmatprep.subr.mxu0 0.0
    %v1879 = vand.u32 %v1546, 4294901760
    %v1880 = vsub.f32 %v1546, %v1879
    %v1881 = vand.u32 %v1880, 4294901760
    %1882 = vmatpush1.xpose.msra.mxu0 %v1881
    %1883 = vmatprep.subr.mxu0 0.0
    %1884 = vmatpush2.xpose.msra.mxu0 0.0
    %1885 = vmatprep.subr.mxu0 0.0
    %1886 = vmatpush2.xpose.msra.mxu0 0.0
    %1887 = vmatprep.subr.mxu0 0.0
    %1888 = vmatpush2.xpose.msra.mxu0 0.0
    %1889 = vmatprep.subr.mxu0 0.0
    %1890 = vmatpush2.xpose.msra.mxu0 0.0
    %1891 = vmatprep.subr.mxu0 0.0
    %1892 = vmatpush2.xpose.msra.mxu0 0.0
    %1893 = vmatprep.subr.mxu0 0.0
    %1894 = vmatpush2.xpose.msra.mxu0 0.0
    %1895 = vmatprep.subr.mxu0 0.0
    %1896 = vmatpush2.xpose.msra.mxu0 0.0
    %1897 = vmatprep.subr.mxu0 0.0
    %1898 = vmatpush2.xpose.msra.mxu0 0.0
    %1899 = vmatprep.subr.mxu0 0.0
    %1900 = vmatpush2.xpose.msra.mxu0 0.0
    %1901 = vmatprep.subr.mxu0 0.0
    %1902 = vmatpush2.xpose.msra.mxu0 0.0
    %1903 = vmatprep.subr.mxu0 0.0
    %1904 = vmatpush2.xpose.msra.mxu0 0.0
    %1905 = vmatprep.subr.mxu0 0.0
    %1906 = vmatpush2.xpose.msra.mxu0 0.0
    %1907 = vmatprep.subr.mxu0 0.0
    %1908 = vmatpush2.xpose.msra.mxu0 0.0
    %1909 = vmatprep.subr.mxu0 0.0
    %1910 = vmatpush2.xpose.msra.mxu0 0.0
    %1911 = vmatprep.subr.mxu0 0.0
    %1912 = vmatpush2.xpose.msra.mxu0 0.0
    %1913 = vmatprep.subr.mxu0 0.0
    %1914 = vmatpush2.xpose.msra.mxu0 0.0
    %1915 = vmatprep.mubr.f32.mxu0 0.0
    %v1916 = vand.u32 %v1544, 4294901760
    %1917 = vmatmul.mubr.f32.gmra.mxu0 %v1916
    %v1918 = vpop.f32.mrf.mxu0
    %v1919 = vadd.f32 %v1845, %v1918
    %v1920 = vpop.f32.mrf.mxu0
    %1921 = vdwg.mxu0
    %1922 = vmatprep.subr.mxu0 0.0
    %1923 = vmatpush1.xpose.msra.mxu0 0.0
    %1924 = vmatprep.subr.mxu0 0.0
    %1925 = vmatpush1.xpose.msra.mxu0 0.0
    %1926 = vmatprep.subr.mxu0 0.0
    %1927 = vmatpush1.xpose.msra.mxu0 0.0
    %1928 = vmatprep.subr.mxu0 0.0
    %1929 = vmatpush1.xpose.msra.mxu0 0.0
    %1930 = vmatprep.subr.mxu0 0.0
    %1931 = vmatpush1.xpose.msra.mxu0 0.0
    %1932 = vmatprep.subr.mxu0 0.0
    %1933 = vmatpush1.xpose.msra.mxu0 0.0
    %1934 = vmatprep.subr.mxu0 0.0
    %1935 = vmatpush1.xpose.msra.mxu0 0.0
    %1936 = vmatprep.subr.mxu0 0.0
    %1937 = vmatpush1.xpose.msra.mxu0 0.0
    %1938 = vmatprep.subr.mxu0 0.0
    %1939 = vmatpush1.xpose.msra.mxu0 0.0
    %1940 = vmatprep.subr.mxu0 0.0
    %1941 = vmatpush1.xpose.msra.mxu0 0.0
    %1942 = vmatprep.subr.mxu0 0.0
    %1943 = vmatpush1.xpose.msra.mxu0 0.0
    %1944 = vmatprep.subr.mxu0 0.0
    %1945 = vmatpush1.xpose.msra.mxu0 0.0
    %1946 = vmatprep.subr.mxu0 0.0
    %1947 = vmatpush1.xpose.msra.mxu0 0.0
    %1948 = vmatprep.subr.mxu0 0.0
    %1949 = vmatpush1.xpose.msra.mxu0 0.0
    %1950 = vmatprep.subr.mxu0 0.0
    %1951 = vmatpush1.xpose.msra.mxu0 0.0
    %1952 = vmatprep.subr.mxu0 0.0
    %v1953 = vand.u32 %v1546, 4294901760
    %1954 = vmatpush1.xpose.msra.mxu0 %v1953
    %1955 = vmatprep.subr.mxu0 0.0
    %1956 = vmatpush2.xpose.msra.mxu0 0.0
    %1957 = vmatprep.subr.mxu0 0.0
    %1958 = vmatpush2.xpose.msra.mxu0 0.0
    %1959 = vmatprep.subr.mxu0 0.0
    %1960 = vmatpush2.xpose.msra.mxu0 0.0
    %1961 = vmatprep.subr.mxu0 0.0
    %1962 = vmatpush2.xpose.msra.mxu0 0.0
    %1963 = vmatprep.subr.mxu0 0.0
    %1964 = vmatpush2.xpose.msra.mxu0 0.0
    %1965 = vmatprep.subr.mxu0 0.0
    %1966 = vmatpush2.xpose.msra.mxu0 0.0
    %1967 = vmatprep.subr.mxu0 0.0
    %1968 = vmatpush2.xpose.msra.mxu0 0.0
    %1969 = vmatprep.subr.mxu0 0.0
    %1970 = vmatpush2.xpose.msra.mxu0 0.0
    %1971 = vmatprep.subr.mxu0 0.0
    %1972 = vmatpush2.xpose.msra.mxu0 0.0
    %1973 = vmatprep.subr.mxu0 0.0
    %1974 = vmatpush2.xpose.msra.mxu0 0.0
    %1975 = vmatprep.subr.mxu0 0.0
    %1976 = vmatpush2.xpose.msra.mxu0 0.0
    %1977 = vmatprep.subr.mxu0 0.0
    %1978 = vmatpush2.xpose.msra.mxu0 0.0
    %1979 = vmatprep.subr.mxu0 0.0
    %1980 = vmatpush2.xpose.msra.mxu0 0.0
    %1981 = vmatprep.subr.mxu0 0.0
    %1982 = vmatpush2.xpose.msra.mxu0 0.0
    %1983 = vmatprep.subr.mxu0 0.0
    %1984 = vmatpush2.xpose.msra.mxu0 0.0
    %1985 = vmatprep.subr.mxu0 0.0
    %1986 = vmatpush2.xpose.msra.mxu0 0.0
    %1987 = vmatprep.mubr.f32.mxu0 0.0
    %v1988 = vand.u32 %v1544, 4294901760
    %1989 = vmatmul.mubr.f32.gmra.mxu0 %v1988
    %v1990 = vpop.f32.mrf.mxu0
    %v1991 = vadd.f32 %v1919, %v1990
    %v1992 = vpop.f32.mrf.mxu0
    %1993 = vdwg.mxu0
    %1994 = vrot.lane.b32.xlu0 %v620, 96
    %v1995 = vpop.permute.xlu0 %1994
    %v1996 = vsel %vm639, %v620, 0
    %v1998 = vsel %vm639, %v1995, 0
    %2000 = vmatprep.subr.mxu0 0.0
    %2001 = vmatpush1.xpose.msra.mxu0 0.0
    %2002 = vmatprep.subr.mxu0 0.0
    %2003 = vmatpush1.xpose.msra.mxu0 0.0
    %2004 = vmatprep.subr.mxu0 0.0
    %2005 = vmatpush1.xpose.msra.mxu0 0.0
    %2006 = vmatprep.subr.mxu0 0.0
    %2007 = vmatpush1.xpose.msra.mxu0 0.0
    %2008 = vmatprep.subr.mxu0 0.0
    %2009 = vmatpush1.xpose.msra.mxu0 0.0
    %2010 = vmatprep.subr.mxu0 0.0
    %2011 = vmatpush1.xpose.msra.mxu0 0.0
    %2012 = vmatprep.subr.mxu0 0.0
    %2013 = vmatpush1.xpose.msra.mxu0 0.0
    %2014 = vmatprep.subr.mxu0 0.0
    %2015 = vmatpush1.xpose.msra.mxu0 0.0
    %2016 = vmatprep.subr.mxu0 0.0
    %2017 = vmatpush1.xpose.msra.mxu0 0.0
    %2018 = vmatprep.subr.mxu0 0.0
    %2019 = vmatpush1.xpose.msra.mxu0 0.0
    %2020 = vmatprep.subr.mxu0 0.0
    %2021 = vmatpush1.xpose.msra.mxu0 0.0
    %2022 = vmatprep.subr.mxu0 0.0
    %2023 = vmatpush1.xpose.msra.mxu0 0.0
    %2024 = vmatprep.subr.mxu0 0.0
    %2025 = vmatpush1.xpose.msra.mxu0 0.0
    %2026 = vmatprep.subr.mxu0 0.0
    %2027 = vmatpush1.xpose.msra.mxu0 0.0
    %2028 = vmatprep.subr.mxu0 0.0
    %2029 = vmatpush1.xpose.msra.mxu0 0.0
    %2030 = vmatprep.subr.mxu0 0.0
    %v2031 = vand.u32 %v1998, 4294901760
    %2032 = vmatpush1.xpose.msra.mxu0 %v2031
    %2033 = vmatprep.subr.mxu0 0.0
    %2034 = vmatpush2.xpose.msra.mxu0 0.0
    %2035 = vmatprep.subr.mxu0 0.0
    %2036 = vmatpush2.xpose.msra.mxu0 0.0
    %2037 = vmatprep.subr.mxu0 0.0
    %2038 = vmatpush2.xpose.msra.mxu0 0.0
    %2039 = vmatprep.subr.mxu0 0.0
    %2040 = vmatpush2.xpose.msra.mxu0 0.0
    %2041 = vmatprep.subr.mxu0 0.0
    %2042 = vmatpush2.xpose.msra.mxu0 0.0
    %2043 = vmatprep.subr.mxu0 0.0
    %2044 = vmatpush2.xpose.msra.mxu0 0.0
    %2045 = vmatprep.subr.mxu0 0.0
    %2046 = vmatpush2.xpose.msra.mxu0 0.0
    %2047 = vmatprep.subr.mxu0 0.0
    %2048 = vmatpush2.xpose.msra.mxu0 0.0
    %2049 = vmatprep.subr.mxu0 0.0
    %2050 = vmatpush2.xpose.msra.mxu0 0.0
    %2051 = vmatprep.subr.mxu0 0.0
    %2052 = vmatpush2.xpose.msra.mxu0 0.0
    %2053 = vmatprep.subr.mxu0 0.0
    %2054 = vmatpush2.xpose.msra.mxu0 0.0
    %2055 = vmatprep.subr.mxu0 0.0
    %2056 = vmatpush2.xpose.msra.mxu0 0.0
    %2057 = vmatprep.subr.mxu0 0.0
    %2058 = vmatpush2.xpose.msra.mxu0 0.0
    %2059 = vmatprep.subr.mxu0 0.0
    %2060 = vmatpush2.xpose.msra.mxu0 0.0
    %2061 = vmatprep.subr.mxu0 0.0
    %2062 = vmatpush2.xpose.msra.mxu0 0.0
    %2063 = vmatprep.subr.mxu0 0.0
    %2064 = vmatpush2.xpose.msra.mxu0 0.0
    %2065 = vmatprep.mubr.f32.mxu0 0.0
    %v2066 = vand.u32 %v1996, 4294901760
    %v2067 = vsub.f32 %v1996, %v2066
    %v2068 = vand.u32 %v2067, 4294901760
    %v2069 = vsub.f32 %v2067, %v2068
    %v2070 = vand.u32 %v2069, 4294901760
    %2071 = vmatmul.mubr.f32.gmra.mxu0 %v2070
    %v2072 = vpop.f32.mrf.mxu0
    %v2073 = vadd.f32 0.0, %v2072
    %v2074 = vpop.f32.mrf.mxu0
    %2075 = vdwg.mxu0
    %2076 = vmatprep.subr.mxu0 0.0
    %2077 = vmatpush1.xpose.msra.mxu0 0.0
    %2078 = vmatprep.subr.mxu0 0.0
    %2079 = vmatpush1.xpose.msra.mxu0 0.0
    %2080 = vmatprep.subr.mxu0 0.0
    %2081 = vmatpush1.xpose.msra.mxu0 0.0
    %2082 = vmatprep.subr.mxu0 0.0
    %2083 = vmatpush1.xpose.msra.mxu0 0.0
    %2084 = vmatprep.subr.mxu0 0.0
    %2085 = vmatpush1.xpose.msra.mxu0 0.0
    %2086 = vmatprep.subr.mxu0 0.0
    %2087 = vmatpush1.xpose.msra.mxu0 0.0
    %2088 = vmatprep.subr.mxu0 0.0
    %2089 = vmatpush1.xpose.msra.mxu0 0.0
    %2090 = vmatprep.subr.mxu0 0.0
    %2091 = vmatpush1.xpose.msra.mxu0 0.0
    %2092 = vmatprep.subr.mxu0 0.0
    %2093 = vmatpush1.xpose.msra.mxu0 0.0
    %2094 = vmatprep.subr.mxu0 0.0
    %2095 = vmatpush1.xpose.msra.mxu0 0.0
    %2096 = vmatprep.subr.mxu0 0.0
    %2097 = vmatpush1.xpose.msra.mxu0 0.0
    %2098 = vmatprep.subr.mxu0 0.0
    %2099 = vmatpush1.xpose.msra.mxu0 0.0
    %2100 = vmatprep.subr.mxu0 0.0
    %2101 = vmatpush1.xpose.msra.mxu0 0.0
    %2102 = vmatprep.subr.mxu0 0.0
    %2103 = vmatpush1.xpose.msra.mxu0 0.0
    %2104 = vmatprep.subr.mxu0 0.0
    %2105 = vmatpush1.xpose.msra.mxu0 0.0
    %2106 = vmatprep.subr.mxu0 0.0
    %v2107 = vand.u32 %v1998, 4294901760
    %v2108 = vsub.f32 %v1998, %v2107
    %v2109 = vand.u32 %v2108, 4294901760
    %v2110 = vsub.f32 %v2108, %v2109
    %v2111 = vand.u32 %v2110, 4294901760
    %2112 = vmatpush1.xpose.msra.mxu0 %v2111
    %2113 = vmatprep.subr.mxu0 0.0
    %2114 = vmatpush2.xpose.msra.mxu0 0.0
    %2115 = vmatprep.subr.mxu0 0.0
    %2116 = vmatpush2.xpose.msra.mxu0 0.0
    %2117 = vmatprep.subr.mxu0 0.0
    %2118 = vmatpush2.xpose.msra.mxu0 0.0
    %2119 = vmatprep.subr.mxu0 0.0
    %2120 = vmatpush2.xpose.msra.mxu0 0.0
    %2121 = vmatprep.subr.mxu0 0.0
    %2122 = vmatpush2.xpose.msra.mxu0 0.0
    %2123 = vmatprep.subr.mxu0 0.0
    %2124 = vmatpush2.xpose.msra.mxu0 0.0
    %2125 = vmatprep.subr.mxu0 0.0
    %2126 = vmatpush2.xpose.msra.mxu0 0.0
    %2127 = vmatprep.subr.mxu0 0.0
    %2128 = vmatpush2.xpose.msra.mxu0 0.0
    %2129 = vmatprep.subr.mxu0 0.0
    %2130 = vmatpush2.xpose.msra.mxu0 0.0
    %2131 = vmatprep.subr.mxu0 0.0
    %2132 = vmatpush2.xpose.msra.mxu0 0.0
    %2133 = vmatprep.subr.mxu0 0.0
    %2134 = vmatpush2.xpose.msra.mxu0 0.0
    %2135 = vmatprep.subr.mxu0 0.0
    %2136 = vmatpush2.xpose.msra.mxu0 0.0
    %2137 = vmatprep.subr.mxu0 0.0
    %2138 = vmatpush2.xpose.msra.mxu0 0.0
    %2139 = vmatprep.subr.mxu0 0.0
    %2140 = vmatpush2.xpose.msra.mxu0 0.0
    %2141 = vmatprep.subr.mxu0 0.0
    %2142 = vmatpush2.xpose.msra.mxu0 0.0
    %2143 = vmatprep.subr.mxu0 0.0
    %2144 = vmatpush2.xpose.msra.mxu0 0.0
    %2145 = vmatprep.mubr.f32.mxu0 0.0
    %v2146 = vand.u32 %v1996, 4294901760
    %2147 = vmatmul.mubr.f32.gmra.mxu0 %v2146
    %v2148 = vpop.f32.mrf.mxu0
    %v2149 = vadd.f32 %v2073, %v2148
    %v2150 = vpop.f32.mrf.mxu0
    %2151 = vdwg.mxu0
    %2152 = vmatprep.subr.mxu0 0.0
    %2153 = vmatpush1.xpose.msra.mxu0 0.0
    %2154 = vmatprep.subr.mxu0 0.0
    %2155 = vmatpush1.xpose.msra.mxu0 0.0
    %2156 = vmatprep.subr.mxu0 0.0
    %2157 = vmatpush1.xpose.msra.mxu0 0.0
    %2158 = vmatprep.subr.mxu0 0.0
    %2159 = vmatpush1.xpose.msra.mxu0 0.0
    %2160 = vmatprep.subr.mxu0 0.0
    %2161 = vmatpush1.xpose.msra.mxu0 0.0
    %2162 = vmatprep.subr.mxu0 0.0
    %2163 = vmatpush1.xpose.msra.mxu0 0.0
    %2164 = vmatprep.subr.mxu0 0.0
    %2165 = vmatpush1.xpose.msra.mxu0 0.0
    %2166 = vmatprep.subr.mxu0 0.0
    %2167 = vmatpush1.xpose.msra.mxu0 0.0
    %2168 = vmatprep.subr.mxu0 0.0
    %2169 = vmatpush1.xpose.msra.mxu0 0.0
    %2170 = vmatprep.subr.mxu0 0.0
    %2171 = vmatpush1.xpose.msra.mxu0 0.0
    %2172 = vmatprep.subr.mxu0 0.0
    %2173 = vmatpush1.xpose.msra.mxu0 0.0
    %2174 = vmatprep.subr.mxu0 0.0
    %2175 = vmatpush1.xpose.msra.mxu0 0.0
    %2176 = vmatprep.subr.mxu0 0.0
    %2177 = vmatpush1.xpose.msra.mxu0 0.0
    %2178 = vmatprep.subr.mxu0 0.0
    %2179 = vmatpush1.xpose.msra.mxu0 0.0
    %2180 = vmatprep.subr.mxu0 0.0
    %2181 = vmatpush1.xpose.msra.mxu0 0.0
    %2182 = vmatprep.subr.mxu0 0.0
    %v2183 = vand.u32 %v1998, 4294901760
    %v2184 = vsub.f32 %v1998, %v2183
    %2185 = vmatpush1.xpose.msra.mxu0 %v2184
    %2186 = vmatprep.subr.mxu0 0.0
    %2187 = vmatpush2.xpose.msra.mxu0 0.0
    %2188 = vmatprep.subr.mxu0 0.0
    %2189 = vmatpush2.xpose.msra.mxu0 0.0
    %2190 = vmatprep.subr.mxu0 0.0
    %2191 = vmatpush2.xpose.msra.mxu0 0.0
    %2192 = vmatprep.subr.mxu0 0.0
    %2193 = vmatpush2.xpose.msra.mxu0 0.0
    %2194 = vmatprep.subr.mxu0 0.0
    %2195 = vmatpush2.xpose.msra.mxu0 0.0
    %2196 = vmatprep.subr.mxu0 0.0
    %2197 = vmatpush2.xpose.msra.mxu0 0.0
    %2198 = vmatprep.subr.mxu0 0.0
    %2199 = vmatpush2.xpose.msra.mxu0 0.0
    %2200 = vmatprep.subr.mxu0 0.0
    %2201 = vmatpush2.xpose.msra.mxu0 0.0
    %2202 = vmatprep.subr.mxu0 0.0
    %2203 = vmatpush2.xpose.msra.mxu0 0.0
    %2204 = vmatprep.subr.mxu0 0.0
    %2205 = vmatpush2.xpose.msra.mxu0 0.0
    %2206 = vmatprep.subr.mxu0 0.0
    %2207 = vmatpush2.xpose.msra.mxu0 0.0
    %2208 = vmatprep.subr.mxu0 0.0
    %2209 = vmatpush2.xpose.msra.mxu0 0.0
    %2210 = vmatprep.subr.mxu0 0.0
    %2211 = vmatpush2.xpose.msra.mxu0 0.0
    %2212 = vmatprep.subr.mxu0 0.0
    %2213 = vmatpush2.xpose.msra.mxu0 0.0
    %2214 = vmatprep.subr.mxu0 0.0
    %2215 = vmatpush2.xpose.msra.mxu0 0.0
    %2216 = vmatprep.subr.mxu0 0.0
    %2217 = vmatpush2.xpose.msra.mxu0 0.0
    %2218 = vmatprep.mubr.f32.mxu0 0.0
    %v2219 = vand.u32 %v1996, 4294901760
    %v2220 = vsub.f32 %v1996, %v2219
    %2221 = vmatmul.mubr.f32.gmra.mxu0 %v2220
    %v2222 = vpop.f32.mrf.mxu0
    %v2223 = vadd.f32 %v2149, %v2222
    %v2224 = vpop.f32.mrf.mxu0
    %2225 = vdwg.mxu0
    %2226 = vmatprep.subr.mxu0 0.0
    %2227 = vmatpush1.xpose.msra.mxu0 0.0
    %2228 = vmatprep.subr.mxu0 0.0
    %2229 = vmatpush1.xpose.msra.mxu0 0.0
    %2230 = vmatprep.subr.mxu0 0.0
    %2231 = vmatpush1.xpose.msra.mxu0 0.0
    %2232 = vmatprep.subr.mxu0 0.0
    %2233 = vmatpush1.xpose.msra.mxu0 0.0
    %2234 = vmatprep.subr.mxu0 0.0
    %2235 = vmatpush1.xpose.msra.mxu0 0.0
    %2236 = vmatprep.subr.mxu0 0.0
    %2237 = vmatpush1.xpose.msra.mxu0 0.0
    %2238 = vmatprep.subr.mxu0 0.0
    %2239 = vmatpush1.xpose.msra.mxu0 0.0
    %2240 = vmatprep.subr.mxu0 0.0
    %2241 = vmatpush1.xpose.msra.mxu0 0.0
    %2242 = vmatprep.subr.mxu0 0.0
    %2243 = vmatpush1.xpose.msra.mxu0 0.0
    %2244 = vmatprep.subr.mxu0 0.0
    %2245 = vmatpush1.xpose.msra.mxu0 0.0
    %2246 = vmatprep.subr.mxu0 0.0
    %2247 = vmatpush1.xpose.msra.mxu0 0.0
    %2248 = vmatprep.subr.mxu0 0.0
    %2249 = vmatpush1.xpose.msra.mxu0 0.0
    %2250 = vmatprep.subr.mxu0 0.0
    %2251 = vmatpush1.xpose.msra.mxu0 0.0
    %2252 = vmatprep.subr.mxu0 0.0
    %2253 = vmatpush1.xpose.msra.mxu0 0.0
    %2254 = vmatprep.subr.mxu0 0.0
    %2255 = vmatpush1.xpose.msra.mxu0 0.0
    %2256 = vmatprep.subr.mxu0 0.0
    %v2257 = vand.u32 %v1998, 4294901760
    %2258 = vmatpush1.xpose.msra.mxu0 %v2257
    %2259 = vmatprep.subr.mxu0 0.0
    %2260 = vmatpush2.xpose.msra.mxu0 0.0
    %2261 = vmatprep.subr.mxu0 0.0
    %2262 = vmatpush2.xpose.msra.mxu0 0.0
    %2263 = vmatprep.subr.mxu0 0.0
    %2264 = vmatpush2.xpose.msra.mxu0 0.0
    %2265 = vmatprep.subr.mxu0 0.0
    %2266 = vmatpush2.xpose.msra.mxu0 0.0
    %2267 = vmatprep.subr.mxu0 0.0
    %2268 = vmatpush2.xpose.msra.mxu0 0.0
    %2269 = vmatprep.subr.mxu0 0.0
    %2270 = vmatpush2.xpose.msra.mxu0 0.0
    %2271 = vmatprep.subr.mxu0 0.0
    %2272 = vmatpush2.xpose.msra.mxu0 0.0
    %2273 = vmatprep.subr.mxu0 0.0
    %2274 = vmatpush2.xpose.msra.mxu0 0.0
    %2275 = vmatprep.subr.mxu0 0.0
    %2276 = vmatpush2.xpose.msra.mxu0 0.0
    %2277 = vmatprep.subr.mxu0 0.0
    %2278 = vmatpush2.xpose.msra.mxu0 0.0
    %2279 = vmatprep.subr.mxu0 0.0
    %2280 = vmatpush2.xpose.msra.mxu0 0.0
    %2281 = vmatprep.subr.mxu0 0.0
    %2282 = vmatpush2.xpose.msra.mxu0 0.0
    %2283 = vmatprep.subr.mxu0 0.0
    %2284 = vmatpush2.xpose.msra.mxu0 0.0
    %2285 = vmatprep.subr.mxu0 0.0
    %2286 = vmatpush2.xpose.msra.mxu0 0.0
    %2287 = vmatprep.subr.mxu0 0.0
    %2288 = vmatpush2.xpose.msra.mxu0 0.0
    %2289 = vmatprep.subr.mxu0 0.0
    %2290 = vmatpush2.xpose.msra.mxu0 0.0
    %2291 = vmatprep.mubr.f32.mxu0 0.0
    %v2292 = vand.u32 %v1996, 4294901760
    %v2293 = vsub.f32 %v1996, %v2292
    %v2294 = vand.u32 %v2293, 4294901760
    %2295 = vmatmul.mubr.f32.gmra.mxu0 %v2294
    %v2296 = vpop.f32.mrf.mxu0
    %v2297 = vadd.f32 %v2223, %v2296
    %v2298 = vpop.f32.mrf.mxu0
    %2299 = vdwg.mxu0
    %2300 = vmatprep.subr.mxu0 0.0
    %2301 = vmatpush1.xpose.msra.mxu0 0.0
    %2302 = vmatprep.subr.mxu0 0.0
    %2303 = vmatpush1.xpose.msra.mxu0 0.0
    %2304 = vmatprep.subr.mxu0 0.0
    %2305 = vmatpush1.xpose.msra.mxu0 0.0
    %2306 = vmatprep.subr.mxu0 0.0
    %2307 = vmatpush1.xpose.msra.mxu0 0.0
    %2308 = vmatprep.subr.mxu0 0.0
    %2309 = vmatpush1.xpose.msra.mxu0 0.0
    %2310 = vmatprep.subr.mxu0 0.0
    %2311 = vmatpush1.xpose.msra.mxu0 0.0
    %2312 = vmatprep.subr.mxu0 0.0
    %2313 = vmatpush1.xpose.msra.mxu0 0.0
    %2314 = vmatprep.subr.mxu0 0.0
    %2315 = vmatpush1.xpose.msra.mxu0 0.0
    %2316 = vmatprep.subr.mxu0 0.0
    %2317 = vmatpush1.xpose.msra.mxu0 0.0
    %2318 = vmatprep.subr.mxu0 0.0
    %2319 = vmatpush1.xpose.msra.mxu0 0.0
    %2320 = vmatprep.subr.mxu0 0.0
    %2321 = vmatpush1.xpose.msra.mxu0 0.0
    %2322 = vmatprep.subr.mxu0 0.0
    %2323 = vmatpush1.xpose.msra.mxu0 0.0
    %2324 = vmatprep.subr.mxu0 0.0
    %2325 = vmatpush1.xpose.msra.mxu0 0.0
    %2326 = vmatprep.subr.mxu0 0.0
    %2327 = vmatpush1.xpose.msra.mxu0 0.0
    %2328 = vmatprep.subr.mxu0 0.0
    %2329 = vmatpush1.xpose.msra.mxu0 0.0
    %2330 = vmatprep.subr.mxu0 0.0
    %v2331 = vand.u32 %v1998, 4294901760
    %v2332 = vsub.f32 %v1998, %v2331
    %v2333 = vand.u32 %v2332, 4294901760
    %2334 = vmatpush1.xpose.msra.mxu0 %v2333
    %2335 = vmatprep.subr.mxu0 0.0
    %2336 = vmatpush2.xpose.msra.mxu0 0.0
    %2337 = vmatprep.subr.mxu0 0.0
    %2338 = vmatpush2.xpose.msra.mxu0 0.0
    %2339 = vmatprep.subr.mxu0 0.0
    %2340 = vmatpush2.xpose.msra.mxu0 0.0
    %2341 = vmatprep.subr.mxu0 0.0
    %2342 = vmatpush2.xpose.msra.mxu0 0.0
    %2343 = vmatprep.subr.mxu0 0.0
    %2344 = vmatpush2.xpose.msra.mxu0 0.0
    %2345 = vmatprep.subr.mxu0 0.0
    %2346 = vmatpush2.xpose.msra.mxu0 0.0
    %2347 = vmatprep.subr.mxu0 0.0
    %2348 = vmatpush2.xpose.msra.mxu0 0.0
    %2349 = vmatprep.subr.mxu0 0.0
    %2350 = vmatpush2.xpose.msra.mxu0 0.0
    %2351 = vmatprep.subr.mxu0 0.0
    %2352 = vmatpush2.xpose.msra.mxu0 0.0
    %2353 = vmatprep.subr.mxu0 0.0
    %2354 = vmatpush2.xpose.msra.mxu0 0.0
    %2355 = vmatprep.subr.mxu0 0.0
    %2356 = vmatpush2.xpose.msra.mxu0 0.0
    %2357 = vmatprep.subr.mxu0 0.0
    %2358 = vmatpush2.xpose.msra.mxu0 0.0
    %2359 = vmatprep.subr.mxu0 0.0
    %2360 = vmatpush2.xpose.msra.mxu0 0.0
    %2361 = vmatprep.subr.mxu0 0.0
    %2362 = vmatpush2.xpose.msra.mxu0 0.0
    %2363 = vmatprep.subr.mxu0 0.0
    %2364 = vmatpush2.xpose.msra.mxu0 0.0
    %2365 = vmatprep.subr.mxu0 0.0
    %2366 = vmatpush2.xpose.msra.mxu0 0.0
    %2367 = vmatprep.mubr.f32.mxu0 0.0
    %v2368 = vand.u32 %v1996, 4294901760
    %2369 = vmatmul.mubr.f32.gmra.mxu0 %v2368
    %v2370 = vpop.f32.mrf.mxu0
    %v2371 = vadd.f32 %v2297, %v2370
    %v2372 = vpop.f32.mrf.mxu0
    %2373 = vdwg.mxu0
    %2374 = vmatprep.subr.mxu0 0.0
    %2375 = vmatpush1.xpose.msra.mxu0 0.0
    %2376 = vmatprep.subr.mxu0 0.0
    %2377 = vmatpush1.xpose.msra.mxu0 0.0
    %2378 = vmatprep.subr.mxu0 0.0
    %2379 = vmatpush1.xpose.msra.mxu0 0.0
    %2380 = vmatprep.subr.mxu0 0.0
    %2381 = vmatpush1.xpose.msra.mxu0 0.0
    %2382 = vmatprep.subr.mxu0 0.0
    %2383 = vmatpush1.xpose.msra.mxu0 0.0
    %2384 = vmatprep.subr.mxu0 0.0
    %2385 = vmatpush1.xpose.msra.mxu0 0.0
    %2386 = vmatprep.subr.mxu0 0.0
    %2387 = vmatpush1.xpose.msra.mxu0 0.0
    %2388 = vmatprep.subr.mxu0 0.0
    %2389 = vmatpush1.xpose.msra.mxu0 0.0
    %2390 = vmatprep.subr.mxu0 0.0
    %2391 = vmatpush1.xpose.msra.mxu0 0.0
    %2392 = vmatprep.subr.mxu0 0.0
    %2393 = vmatpush1.xpose.msra.mxu0 0.0
    %2394 = vmatprep.subr.mxu0 0.0
    %2395 = vmatpush1.xpose.msra.mxu0 0.0
    %2396 = vmatprep.subr.mxu0 0.0
    %2397 = vmatpush1.xpose.msra.mxu0 0.0
    %2398 = vmatprep.subr.mxu0 0.0
    %2399 = vmatpush1.xpose.msra.mxu0 0.0
    %2400 = vmatprep.subr.mxu0 0.0
    %2401 = vmatpush1.xpose.msra.mxu0 0.0
    %2402 = vmatprep.subr.mxu0 0.0
    %2403 = vmatpush1.xpose.msra.mxu0 0.0
    %2404 = vmatprep.subr.mxu0 0.0
    %v2405 = vand.u32 %v1998, 4294901760
    %2406 = vmatpush1.xpose.msra.mxu0 %v2405
    %2407 = vmatprep.subr.mxu0 0.0
    %2408 = vmatpush2.xpose.msra.mxu0 0.0
    %2409 = vmatprep.subr.mxu0 0.0
    %2410 = vmatpush2.xpose.msra.mxu0 0.0
    %2411 = vmatprep.subr.mxu0 0.0
    %2412 = vmatpush2.xpose.msra.mxu0 0.0
    %2413 = vmatprep.subr.mxu0 0.0
    %2414 = vmatpush2.xpose.msra.mxu0 0.0
    %2415 = vmatprep.subr.mxu0 0.0
    %2416 = vmatpush2.xpose.msra.mxu0 0.0
    %2417 = vmatprep.subr.mxu0 0.0
    %2418 = vmatpush2.xpose.msra.mxu0 0.0
    %2419 = vmatprep.subr.mxu0 0.0
    %2420 = vmatpush2.xpose.msra.mxu0 0.0
    %2421 = vmatprep.subr.mxu0 0.0
    %2422 = vmatpush2.xpose.msra.mxu0 0.0
    %2423 = vmatprep.subr.mxu0 0.0
    %2424 = vmatpush2.xpose.msra.mxu0 0.0
    %2425 = vmatprep.subr.mxu0 0.0
    %2426 = vmatpush2.xpose.msra.mxu0 0.0
    %2427 = vmatprep.subr.mxu0 0.0
    %2428 = vmatpush2.xpose.msra.mxu0 0.0
    %2429 = vmatprep.subr.mxu0 0.0
    %2430 = vmatpush2.xpose.msra.mxu0 0.0
    %2431 = vmatprep.subr.mxu0 0.0
    %2432 = vmatpush2.xpose.msra.mxu0 0.0
    %2433 = vmatprep.subr.mxu0 0.0
    %2434 = vmatpush2.xpose.msra.mxu0 0.0
    %2435 = vmatprep.subr.mxu0 0.0
    %2436 = vmatpush2.xpose.msra.mxu0 0.0
    %2437 = vmatprep.subr.mxu0 0.0
    %2438 = vmatpush2.xpose.msra.mxu0 0.0
    %2439 = vmatprep.mubr.f32.mxu0 0.0
    %v2440 = vand.u32 %v1996, 4294901760
    %2441 = vmatmul.mubr.f32.gmra.mxu0 %v2440
    %v2442 = vpop.f32.mrf.mxu0
    %v2443 = vadd.f32 %v2371, %v2442
    %v2444 = vpop.f32.mrf.mxu0
    %2445 = vdwg.mxu0
    %2446 = vrot.lane.b32.xlu0 %v622, 96
    %v2447 = vpop.permute.xlu0 %2446
    %v2448 = vsel %vm639, %v622, 0
    %v2450 = vsel %vm639, %v2447, 0
    %2452 = vmatprep.subr.mxu0 0.0
    %2453 = vmatpush1.xpose.msra.mxu0 0.0
    %2454 = vmatprep.subr.mxu0 0.0
    %2455 = vmatpush1.xpose.msra.mxu0 0.0
    %2456 = vmatprep.subr.mxu0 0.0
    %2457 = vmatpush1.xpose.msra.mxu0 0.0
    %2458 = vmatprep.subr.mxu0 0.0
    %2459 = vmatpush1.xpose.msra.mxu0 0.0
    %2460 = vmatprep.subr.mxu0 0.0
    %2461 = vmatpush1.xpose.msra.mxu0 0.0
    %2462 = vmatprep.subr.mxu0 0.0
    %2463 = vmatpush1.xpose.msra.mxu0 0.0
    %2464 = vmatprep.subr.mxu0 0.0
    %2465 = vmatpush1.xpose.msra.mxu0 0.0
    %2466 = vmatprep.subr.mxu0 0.0
    %2467 = vmatpush1.xpose.msra.mxu0 0.0
    %2468 = vmatprep.subr.mxu0 0.0
    %2469 = vmatpush1.xpose.msra.mxu0 0.0
    %2470 = vmatprep.subr.mxu0 0.0
    %2471 = vmatpush1.xpose.msra.mxu0 0.0
    %2472 = vmatprep.subr.mxu0 0.0
    %2473 = vmatpush1.xpose.msra.mxu0 0.0
    %2474 = vmatprep.subr.mxu0 0.0
    %2475 = vmatpush1.xpose.msra.mxu0 0.0
    %2476 = vmatprep.subr.mxu0 0.0
    %2477 = vmatpush1.xpose.msra.mxu0 0.0
    %2478 = vmatprep.subr.mxu0 0.0
    %2479 = vmatpush1.xpose.msra.mxu0 0.0
    %2480 = vmatprep.subr.mxu0 0.0
    %2481 = vmatpush1.xpose.msra.mxu0 0.0
    %2482 = vmatprep.subr.mxu0 0.0
    %v2483 = vand.u32 %v2450, 4294901760
    %2484 = vmatpush1.xpose.msra.mxu0 %v2483
    %2485 = vmatprep.subr.mxu0 0.0
    %2486 = vmatpush2.xpose.msra.mxu0 0.0
    %2487 = vmatprep.subr.mxu0 0.0
    %2488 = vmatpush2.xpose.msra.mxu0 0.0
    %2489 = vmatprep.subr.mxu0 0.0
    %2490 = vmatpush2.xpose.msra.mxu0 0.0
    %2491 = vmatprep.subr.mxu0 0.0
    %2492 = vmatpush2.xpose.msra.mxu0 0.0
    %2493 = vmatprep.subr.mxu0 0.0
    %2494 = vmatpush2.xpose.msra.mxu0 0.0
    %2495 = vmatprep.subr.mxu0 0.0
    %2496 = vmatpush2.xpose.msra.mxu0 0.0
    %2497 = vmatprep.subr.mxu0 0.0
    %2498 = vmatpush2.xpose.msra.mxu0 0.0
    %2499 = vmatprep.subr.mxu0 0.0
    %2500 = vmatpush2.xpose.msra.mxu0 0.0
    %2501 = vmatprep.subr.mxu0 0.0
    %2502 = vmatpush2.xpose.msra.mxu0 0.0
    %2503 = vmatprep.subr.mxu0 0.0
    %2504 = vmatpush2.xpose.msra.mxu0 0.0
    %2505 = vmatprep.subr.mxu0 0.0
    %2506 = vmatpush2.xpose.msra.mxu0 0.0
    %2507 = vmatprep.subr.mxu0 0.0
    %2508 = vmatpush2.xpose.msra.mxu0 0.0
    %2509 = vmatprep.subr.mxu0 0.0
    %2510 = vmatpush2.xpose.msra.mxu0 0.0
    %2511 = vmatprep.subr.mxu0 0.0
    %2512 = vmatpush2.xpose.msra.mxu0 0.0
    %2513 = vmatprep.subr.mxu0 0.0
    %2514 = vmatpush2.xpose.msra.mxu0 0.0
    %2515 = vmatprep.subr.mxu0 0.0
    %2516 = vmatpush2.xpose.msra.mxu0 0.0
    %2517 = vmatprep.mubr.f32.mxu0 0.0
    %v2518 = vand.u32 %v2448, 4294901760
    %v2519 = vsub.f32 %v2448, %v2518
    %v2520 = vand.u32 %v2519, 4294901760
    %v2521 = vsub.f32 %v2519, %v2520
    %v2522 = vand.u32 %v2521, 4294901760
    %2523 = vmatmul.mubr.f32.gmra.mxu0 %v2522
    %v2524 = vpop.f32.mrf.mxu0
    %v2525 = vadd.f32 0.0, %v2524
    %v2526 = vpop.f32.mrf.mxu0
    %2527 = vdwg.mxu0
    %2528 = vmatprep.subr.mxu0 0.0
    %2529 = vmatpush1.xpose.msra.mxu0 0.0
    %2530 = vmatprep.subr.mxu0 0.0
    %2531 = vmatpush1.xpose.msra.mxu0 0.0
    %2532 = vmatprep.subr.mxu0 0.0
    %2533 = vmatpush1.xpose.msra.mxu0 0.0
    %2534 = vmatprep.subr.mxu0 0.0
    %2535 = vmatpush1.xpose.msra.mxu0 0.0
    %2536 = vmatprep.subr.mxu0 0.0
    %2537 = vmatpush1.xpose.msra.mxu0 0.0
    %2538 = vmatprep.subr.mxu0 0.0
    %2539 = vmatpush1.xpose.msra.mxu0 0.0
    %2540 = vmatprep.subr.mxu0 0.0
    %2541 = vmatpush1.xpose.msra.mxu0 0.0
    %2542 = vmatprep.subr.mxu0 0.0
    %2543 = vmatpush1.xpose.msra.mxu0 0.0
    %2544 = vmatprep.subr.mxu0 0.0
    %2545 = vmatpush1.xpose.msra.mxu0 0.0
    %2546 = vmatprep.subr.mxu0 0.0
    %2547 = vmatpush1.xpose.msra.mxu0 0.0
    %2548 = vmatprep.subr.mxu0 0.0
    %2549 = vmatpush1.xpose.msra.mxu0 0.0
    %2550 = vmatprep.subr.mxu0 0.0
    %2551 = vmatpush1.xpose.msra.mxu0 0.0
    %2552 = vmatprep.subr.mxu0 0.0
    %2553 = vmatpush1.xpose.msra.mxu0 0.0
    %2554 = vmatprep.subr.mxu0 0.0
    %2555 = vmatpush1.xpose.msra.mxu0 0.0
    %2556 = vmatprep.subr.mxu0 0.0
    %2557 = vmatpush1.xpose.msra.mxu0 0.0
    %2558 = vmatprep.subr.mxu0 0.0
    %v2559 = vand.u32 %v2450, 4294901760
    %v2560 = vsub.f32 %v2450, %v2559
    %v2561 = vand.u32 %v2560, 4294901760
    %v2562 = vsub.f32 %v2560, %v2561
    %v2563 = vand.u32 %v2562, 4294901760
    %2564 = vmatpush1.xpose.msra.mxu0 %v2563
    %2565 = vmatprep.subr.mxu0 0.0
    %2566 = vmatpush2.xpose.msra.mxu0 0.0
    %2567 = vmatprep.subr.mxu0 0.0
    %2568 = vmatpush2.xpose.msra.mxu0 0.0
    %2569 = vmatprep.subr.mxu0 0.0
    %2570 = vmatpush2.xpose.msra.mxu0 0.0
    %2571 = vmatprep.subr.mxu0 0.0
    %2572 = vmatpush2.xpose.msra.mxu0 0.0
    %2573 = vmatprep.subr.mxu0 0.0
    %2574 = vmatpush2.xpose.msra.mxu0 0.0
    %2575 = vmatprep.subr.mxu0 0.0
    %2576 = vmatpush2.xpose.msra.mxu0 0.0
    %2577 = vmatprep.subr.mxu0 0.0
    %2578 = vmatpush2.xpose.msra.mxu0 0.0
    %2579 = vmatprep.subr.mxu0 0.0
    %2580 = vmatpush2.xpose.msra.mxu0 0.0
    %2581 = vmatprep.subr.mxu0 0.0
    %2582 = vmatpush2.xpose.msra.mxu0 0.0
    %2583 = vmatprep.subr.mxu0 0.0
    %2584 = vmatpush2.xpose.msra.mxu0 0.0
    %2585 = vmatprep.subr.mxu0 0.0
    %2586 = vmatpush2.xpose.msra.mxu0 0.0
    %2587 = vmatprep.subr.mxu0 0.0
    %2588 = vmatpush2.xpose.msra.mxu0 0.0
    %2589 = vmatprep.subr.mxu0 0.0
    %2590 = vmatpush2.xpose.msra.mxu0 0.0
    %2591 = vmatprep.subr.mxu0 0.0
    %2592 = vmatpush2.xpose.msra.mxu0 0.0
    %2593 = vmatprep.subr.mxu0 0.0
    %2594 = vmatpush2.xpose.msra.mxu0 0.0
    %2595 = vmatprep.subr.mxu0 0.0
    %2596 = vmatpush2.xpose.msra.mxu0 0.0
    %2597 = vmatprep.mubr.f32.mxu0 0.0
    %v2598 = vand.u32 %v2448, 4294901760
    %2599 = vmatmul.mubr.f32.gmra.mxu0 %v2598
    %v2600 = vpop.f32.mrf.mxu0
    %v2601 = vadd.f32 %v2525, %v2600
    %v2602 = vpop.f32.mrf.mxu0
    %2603 = vdwg.mxu0
    %2604 = vmatprep.subr.mxu0 0.0
    %2605 = vmatpush1.xpose.msra.mxu0 0.0
    %2606 = vmatprep.subr.mxu0 0.0
    %2607 = vmatpush1.xpose.msra.mxu0 0.0
    %2608 = vmatprep.subr.mxu0 0.0
    %2609 = vmatpush1.xpose.msra.mxu0 0.0
    %2610 = vmatprep.subr.mxu0 0.0
    %2611 = vmatpush1.xpose.msra.mxu0 0.0
    %2612 = vmatprep.subr.mxu0 0.0
    %2613 = vmatpush1.xpose.msra.mxu0 0.0
    %2614 = vmatprep.subr.mxu0 0.0
    %2615 = vmatpush1.xpose.msra.mxu0 0.0
    %2616 = vmatprep.subr.mxu0 0.0
    %2617 = vmatpush1.xpose.msra.mxu0 0.0
    %2618 = vmatprep.subr.mxu0 0.0
    %2619 = vmatpush1.xpose.msra.mxu0 0.0
    %2620 = vmatprep.subr.mxu0 0.0
    %2621 = vmatpush1.xpose.msra.mxu0 0.0
    %2622 = vmatprep.subr.mxu0 0.0
    %2623 = vmatpush1.xpose.msra.mxu0 0.0
    %2624 = vmatprep.subr.mxu0 0.0
    %2625 = vmatpush1.xpose.msra.mxu0 0.0
    %2626 = vmatprep.subr.mxu0 0.0
    %2627 = vmatpush1.xpose.msra.mxu0 0.0
    %2628 = vmatprep.subr.mxu0 0.0
    %2629 = vmatpush1.xpose.msra.mxu0 0.0
    %2630 = vmatprep.subr.mxu0 0.0
    %2631 = vmatpush1.xpose.msra.mxu0 0.0
    %2632 = vmatprep.subr.mxu0 0.0
    %2633 = vmatpush1.xpose.msra.mxu0 0.0
    %2634 = vmatprep.subr.mxu0 0.0
    %v2635 = vand.u32 %v2450, 4294901760
    %v2636 = vsub.f32 %v2450, %v2635
    %2637 = vmatpush1.xpose.msra.mxu0 %v2636
    %2638 = vmatprep.subr.mxu0 0.0
    %2639 = vmatpush2.xpose.msra.mxu0 0.0
    %2640 = vmatprep.subr.mxu0 0.0
    %2641 = vmatpush2.xpose.msra.mxu0 0.0
    %2642 = vmatprep.subr.mxu0 0.0
    %2643 = vmatpush2.xpose.msra.mxu0 0.0
    %2644 = vmatprep.subr.mxu0 0.0
    %2645 = vmatpush2.xpose.msra.mxu0 0.0
    %2646 = vmatprep.subr.mxu0 0.0
    %2647 = vmatpush2.xpose.msra.mxu0 0.0
    %2648 = vmatprep.subr.mxu0 0.0
    %2649 = vmatpush2.xpose.msra.mxu0 0.0
    %2650 = vmatprep.subr.mxu0 0.0
    %2651 = vmatpush2.xpose.msra.mxu0 0.0
    %2652 = vmatprep.subr.mxu0 0.0
    %2653 = vmatpush2.xpose.msra.mxu0 0.0
    %2654 = vmatprep.subr.mxu0 0.0
    %2655 = vmatpush2.xpose.msra.mxu0 0.0
    %2656 = vmatprep.subr.mxu0 0.0
    %2657 = vmatpush2.xpose.msra.mxu0 0.0
    %2658 = vmatprep.subr.mxu0 0.0
    %2659 = vmatpush2.xpose.msra.mxu0 0.0
    %2660 = vmatprep.subr.mxu0 0.0
    %2661 = vmatpush2.xpose.msra.mxu0 0.0
    %2662 = vmatprep.subr.mxu0 0.0
    %2663 = vmatpush2.xpose.msra.mxu0 0.0
    %2664 = vmatprep.subr.mxu0 0.0
    %2665 = vmatpush2.xpose.msra.mxu0 0.0
    %2666 = vmatprep.subr.mxu0 0.0
    %2667 = vmatpush2.xpose.msra.mxu0 0.0
    %2668 = vmatprep.subr.mxu0 0.0
    %2669 = vmatpush2.xpose.msra.mxu0 0.0
    %2670 = vmatprep.mubr.f32.mxu0 0.0
    %v2671 = vand.u32 %v2448, 4294901760
    %v2672 = vsub.f32 %v2448, %v2671
    %2673 = vmatmul.mubr.f32.gmra.mxu0 %v2672
    %v2674 = vpop.f32.mrf.mxu0
    %v2675 = vadd.f32 %v2601, %v2674
    %v2676 = vpop.f32.mrf.mxu0
    %2677 = vdwg.mxu0
    %2678 = vmatprep.subr.mxu0 0.0
    %2679 = vmatpush1.xpose.msra.mxu0 0.0
    %2680 = vmatprep.subr.mxu0 0.0
    %2681 = vmatpush1.xpose.msra.mxu0 0.0
    %2682 = vmatprep.subr.mxu0 0.0
    %2683 = vmatpush1.xpose.msra.mxu0 0.0
    %2684 = vmatprep.subr.mxu0 0.0
    %2685 = vmatpush1.xpose.msra.mxu0 0.0
    %2686 = vmatprep.subr.mxu0 0.0
    %2687 = vmatpush1.xpose.msra.mxu0 0.0
    %2688 = vmatprep.subr.mxu0 0.0
    %2689 = vmatpush1.xpose.msra.mxu0 0.0
    %2690 = vmatprep.subr.mxu0 0.0
    %2691 = vmatpush1.xpose.msra.mxu0 0.0
    %2692 = vmatprep.subr.mxu0 0.0
    %2693 = vmatpush1.xpose.msra.mxu0 0.0
    %2694 = vmatprep.subr.mxu0 0.0
    %2695 = vmatpush1.xpose.msra.mxu0 0.0
    %2696 = vmatprep.subr.mxu0 0.0
    %2697 = vmatpush1.xpose.msra.mxu0 0.0
    %2698 = vmatprep.subr.mxu0 0.0
    %2699 = vmatpush1.xpose.msra.mxu0 0.0
    %2700 = vmatprep.subr.mxu0 0.0
    %2701 = vmatpush1.xpose.msra.mxu0 0.0
    %2702 = vmatprep.subr.mxu0 0.0
    %2703 = vmatpush1.xpose.msra.mxu0 0.0
    %2704 = vmatprep.subr.mxu0 0.0
    %2705 = vmatpush1.xpose.msra.mxu0 0.0
    %2706 = vmatprep.subr.mxu0 0.0
    %2707 = vmatpush1.xpose.msra.mxu0 0.0
    %2708 = vmatprep.subr.mxu0 0.0
    %v2709 = vand.u32 %v2450, 4294901760
    %2710 = vmatpush1.xpose.msra.mxu0 %v2709
    %2711 = vmatprep.subr.mxu0 0.0
    %2712 = vmatpush2.xpose.msra.mxu0 0.0
    %2713 = vmatprep.subr.mxu0 0.0
    %2714 = vmatpush2.xpose.msra.mxu0 0.0
    %2715 = vmatprep.subr.mxu0 0.0
    %2716 = vmatpush2.xpose.msra.mxu0 0.0
    %2717 = vmatprep.subr.mxu0 0.0
    %2718 = vmatpush2.xpose.msra.mxu0 0.0
    %2719 = vmatprep.subr.mxu0 0.0
    %2720 = vmatpush2.xpose.msra.mxu0 0.0
    %2721 = vmatprep.subr.mxu0 0.0
    %2722 = vmatpush2.xpose.msra.mxu0 0.0
    %2723 = vmatprep.subr.mxu0 0.0
    %2724 = vmatpush2.xpose.msra.mxu0 0.0
    %2725 = vmatprep.subr.mxu0 0.0
    %2726 = vmatpush2.xpose.msra.mxu0 0.0
    %2727 = vmatprep.subr.mxu0 0.0
    %2728 = vmatpush2.xpose.msra.mxu0 0.0
    %2729 = vmatprep.subr.mxu0 0.0
    %2730 = vmatpush2.xpose.msra.mxu0 0.0
    %2731 = vmatprep.subr.mxu0 0.0
    %2732 = vmatpush2.xpose.msra.mxu0 0.0
    %2733 = vmatprep.subr.mxu0 0.0
    %2734 = vmatpush2.xpose.msra.mxu0 0.0
    %2735 = vmatprep.subr.mxu0 0.0
    %2736 = vmatpush2.xpose.msra.mxu0 0.0
    %2737 = vmatprep.subr.mxu0 0.0
    %2738 = vmatpush2.xpose.msra.mxu0 0.0
    %2739 = vmatprep.subr.mxu0 0.0
    %2740 = vmatpush2.xpose.msra.mxu0 0.0
    %2741 = vmatprep.subr.mxu0 0.0
    %2742 = vmatpush2.xpose.msra.mxu0 0.0
    %2743 = vmatprep.mubr.f32.mxu0 0.0
    %v2744 = vand.u32 %v2448, 4294901760
    %v2745 = vsub.f32 %v2448, %v2744
    %v2746 = vand.u32 %v2745, 4294901760
    %2747 = vmatmul.mubr.f32.gmra.mxu0 %v2746
    %v2748 = vpop.f32.mrf.mxu0
    %v2749 = vadd.f32 %v2675, %v2748
    %v2750 = vpop.f32.mrf.mxu0
    %2751 = vdwg.mxu0
    %2752 = vmatprep.subr.mxu0 0.0
    %2753 = vmatpush1.xpose.msra.mxu0 0.0
    %2754 = vmatprep.subr.mxu0 0.0
    %2755 = vmatpush1.xpose.msra.mxu0 0.0
    %2756 = vmatprep.subr.mxu0 0.0
    %2757 = vmatpush1.xpose.msra.mxu0 0.0
    %2758 = vmatprep.subr.mxu0 0.0
    %2759 = vmatpush1.xpose.msra.mxu0 0.0
    %2760 = vmatprep.subr.mxu0 0.0
    %2761 = vmatpush1.xpose.msra.mxu0 0.0
    %2762 = vmatprep.subr.mxu0 0.0
    %2763 = vmatpush1.xpose.msra.mxu0 0.0
    %2764 = vmatprep.subr.mxu0 0.0
    %2765 = vmatpush1.xpose.msra.mxu0 0.0
    %2766 = vmatprep.subr.mxu0 0.0
    %2767 = vmatpush1.xpose.msra.mxu0 0.0
    %2768 = vmatprep.subr.mxu0 0.0
    %2769 = vmatpush1.xpose.msra.mxu0 0.0
    %2770 = vmatprep.subr.mxu0 0.0
    %2771 = vmatpush1.xpose.msra.mxu0 0.0
    %2772 = vmatprep.subr.mxu0 0.0
    %2773 = vmatpush1.xpose.msra.mxu0 0.0
    %2774 = vmatprep.subr.mxu0 0.0
    %2775 = vmatpush1.xpose.msra.mxu0 0.0
    %2776 = vmatprep.subr.mxu0 0.0
    %2777 = vmatpush1.xpose.msra.mxu0 0.0
    %2778 = vmatprep.subr.mxu0 0.0
    %2779 = vmatpush1.xpose.msra.mxu0 0.0
    %2780 = vmatprep.subr.mxu0 0.0
    %2781 = vmatpush1.xpose.msra.mxu0 0.0
    %2782 = vmatprep.subr.mxu0 0.0
    %v2783 = vand.u32 %v2450, 4294901760
    %v2784 = vsub.f32 %v2450, %v2783
    %v2785 = vand.u32 %v2784, 4294901760
    %2786 = vmatpush1.xpose.msra.mxu0 %v2785
    %2787 = vmatprep.subr.mxu0 0.0
    %2788 = vmatpush2.xpose.msra.mxu0 0.0
    %2789 = vmatprep.subr.mxu0 0.0
    %2790 = vmatpush2.xpose.msra.mxu0 0.0
    %2791 = vmatprep.subr.mxu0 0.0
    %2792 = vmatpush2.xpose.msra.mxu0 0.0
    %2793 = vmatprep.subr.mxu0 0.0
    %2794 = vmatpush2.xpose.msra.mxu0 0.0
    %2795 = vmatprep.subr.mxu0 0.0
    %2796 = vmatpush2.xpose.msra.mxu0 0.0
    %2797 = vmatprep.subr.mxu0 0.0
    %2798 = vmatpush2.xpose.msra.mxu0 0.0
    %2799 = vmatprep.subr.mxu0 0.0
    %2800 = vmatpush2.xpose.msra.mxu0 0.0
    %2801 = vmatprep.subr.mxu0 0.0
    %2802 = vmatpush2.xpose.msra.mxu0 0.0
    %2803 = vmatprep.subr.mxu0 0.0
    %2804 = vmatpush2.xpose.msra.mxu0 0.0
    %2805 = vmatprep.subr.mxu0 0.0
    %2806 = vmatpush2.xpose.msra.mxu0 0.0
    %2807 = vmatprep.subr.mxu0 0.0
    %2808 = vmatpush2.xpose.msra.mxu0 0.0
    %2809 = vmatprep.subr.mxu0 0.0
    %2810 = vmatpush2.xpose.msra.mxu0 0.0
    %2811 = vmatprep.subr.mxu0 0.0
    %2812 = vmatpush2.xpose.msra.mxu0 0.0
    %2813 = vmatprep.subr.mxu0 0.0
    %2814 = vmatpush2.xpose.msra.mxu0 0.0
    %2815 = vmatprep.subr.mxu0 0.0
    %2816 = vmatpush2.xpose.msra.mxu0 0.0
    %2817 = vmatprep.subr.mxu0 0.0
    %2818 = vmatpush2.xpose.msra.mxu0 0.0
    %2819 = vmatprep.mubr.f32.mxu0 0.0
    %v2820 = vand.u32 %v2448, 4294901760
    %2821 = vmatmul.mubr.f32.gmra.mxu0 %v2820
    %v2822 = vpop.f32.mrf.mxu0
    %v2823 = vadd.f32 %v2749, %v2822
    %v2824 = vpop.f32.mrf.mxu0
    %2825 = vdwg.mxu0
    %2826 = vmatprep.subr.mxu0 0.0
    %2827 = vmatpush1.xpose.msra.mxu0 0.0
    %2828 = vmatprep.subr.mxu0 0.0
    %2829 = vmatpush1.xpose.msra.mxu0 0.0
    %2830 = vmatprep.subr.mxu0 0.0
    %2831 = vmatpush1.xpose.msra.mxu0 0.0
    %2832 = vmatprep.subr.mxu0 0.0
    %2833 = vmatpush1.xpose.msra.mxu0 0.0
    %2834 = vmatprep.subr.mxu0 0.0
    %2835 = vmatpush1.xpose.msra.mxu0 0.0
    %2836 = vmatprep.subr.mxu0 0.0
    %2837 = vmatpush1.xpose.msra.mxu0 0.0
    %2838 = vmatprep.subr.mxu0 0.0
    %2839 = vmatpush1.xpose.msra.mxu0 0.0
    %2840 = vmatprep.subr.mxu0 0.0
    %2841 = vmatpush1.xpose.msra.mxu0 0.0
    %2842 = vmatprep.subr.mxu0 0.0
    %2843 = vmatpush1.xpose.msra.mxu0 0.0
    %2844 = vmatprep.subr.mxu0 0.0
    %2845 = vmatpush1.xpose.msra.mxu0 0.0
    %2846 = vmatprep.subr.mxu0 0.0
    %2847 = vmatpush1.xpose.msra.mxu0 0.0
    %2848 = vmatprep.subr.mxu0 0.0
    %2849 = vmatpush1.xpose.msra.mxu0 0.0
    %2850 = vmatprep.subr.mxu0 0.0
    %2851 = vmatpush1.xpose.msra.mxu0 0.0
    %2852 = vmatprep.subr.mxu0 0.0
    %2853 = vmatpush1.xpose.msra.mxu0 0.0
    %2854 = vmatprep.subr.mxu0 0.0
    %2855 = vmatpush1.xpose.msra.mxu0 0.0
    %2856 = vmatprep.subr.mxu0 0.0
    %v2857 = vand.u32 %v2450, 4294901760
    %2858 = vmatpush1.xpose.msra.mxu0 %v2857
    %2859 = vmatprep.subr.mxu0 0.0
    %2860 = vmatpush2.xpose.msra.mxu0 0.0
    %2861 = vmatprep.subr.mxu0 0.0
    %2862 = vmatpush2.xpose.msra.mxu0 0.0
    %2863 = vmatprep.subr.mxu0 0.0
    %2864 = vmatpush2.xpose.msra.mxu0 0.0
    %2865 = vmatprep.subr.mxu0 0.0
    %2866 = vmatpush2.xpose.msra.mxu0 0.0
    %2867 = vmatprep.subr.mxu0 0.0
    %2868 = vmatpush2.xpose.msra.mxu0 0.0
    %2869 = vmatprep.subr.mxu0 0.0
    %2870 = vmatpush2.xpose.msra.mxu0 0.0
    %2871 = vmatprep.subr.mxu0 0.0
    %2872 = vmatpush2.xpose.msra.mxu0 0.0
    %2873 = vmatprep.subr.mxu0 0.0
    %2874 = vmatpush2.xpose.msra.mxu0 0.0
    %2875 = vmatprep.subr.mxu0 0.0
    %2876 = vmatpush2.xpose.msra.mxu0 0.0
    %2877 = vmatprep.subr.mxu0 0.0
    %2878 = vmatpush2.xpose.msra.mxu0 0.0
    %2879 = vmatprep.subr.mxu0 0.0
    %2880 = vmatpush2.xpose.msra.mxu0 0.0
    %2881 = vmatprep.subr.mxu0 0.0
    %2882 = vmatpush2.xpose.msra.mxu0 0.0
    %2883 = vmatprep.subr.mxu0 0.0
    %2884 = vmatpush2.xpose.msra.mxu0 0.0
    %2885 = vmatprep.subr.mxu0 0.0
    %2886 = vmatpush2.xpose.msra.mxu0 0.0
    %2887 = vmatprep.subr.mxu0 0.0
    %2888 = vmatpush2.xpose.msra.mxu0 0.0
    %2889 = vmatprep.subr.mxu0 0.0
    %2890 = vmatpush2.xpose.msra.mxu0 0.0
    %2891 = vmatprep.mubr.f32.mxu0 0.0
    %v2892 = vand.u32 %v2448, 4294901760
    %2893 = vmatmul.mubr.f32.gmra.mxu0 %v2892
    %v2894 = vpop.f32.mrf.mxu0
    %v2895 = vadd.f32 %v2823, %v2894
    %v2896 = vpop.f32.mrf.mxu0
    %2897 = vdwg.mxu0
    %2898 = vrot.lane.b32.xlu0 %v624, 96
    %v2899 = vpop.permute.xlu0 %2898
    %v2900 = vsel %vm639, %v624, 0
    %v2902 = vsel %vm639, %v2899, 0
    %2904 = vmatprep.subr.mxu0 0.0
    %2905 = vmatpush1.xpose.msra.mxu0 0.0
    %2906 = vmatprep.subr.mxu0 0.0
    %2907 = vmatpush1.xpose.msra.mxu0 0.0
    %2908 = vmatprep.subr.mxu0 0.0
    %2909 = vmatpush1.xpose.msra.mxu0 0.0
    %2910 = vmatprep.subr.mxu0 0.0
    %2911 = vmatpush1.xpose.msra.mxu0 0.0
    %2912 = vmatprep.subr.mxu0 0.0
    %2913 = vmatpush1.xpose.msra.mxu0 0.0
    %2914 = vmatprep.subr.mxu0 0.0
    %2915 = vmatpush1.xpose.msra.mxu0 0.0
    %2916 = vmatprep.subr.mxu0 0.0
    %2917 = vmatpush1.xpose.msra.mxu0 0.0
    %2918 = vmatprep.subr.mxu0 0.0
    %2919 = vmatpush1.xpose.msra.mxu0 0.0
    %2920 = vmatprep.subr.mxu0 0.0
    %2921 = vmatpush1.xpose.msra.mxu0 0.0
    %2922 = vmatprep.subr.mxu0 0.0
    %2923 = vmatpush1.xpose.msra.mxu0 0.0
    %2924 = vmatprep.subr.mxu0 0.0
    %2925 = vmatpush1.xpose.msra.mxu0 0.0
    %2926 = vmatprep.subr.mxu0 0.0
    %2927 = vmatpush1.xpose.msra.mxu0 0.0
    %2928 = vmatprep.subr.mxu0 0.0
    %2929 = vmatpush1.xpose.msra.mxu0 0.0
    %2930 = vmatprep.subr.mxu0 0.0
    %2931 = vmatpush1.xpose.msra.mxu0 0.0
    %2932 = vmatprep.subr.mxu0 0.0
    %2933 = vmatpush1.xpose.msra.mxu0 0.0
    %2934 = vmatprep.subr.mxu0 0.0
    %v2935 = vand.u32 %v2902, 4294901760
    %2936 = vmatpush1.xpose.msra.mxu0 %v2935
    %2937 = vmatprep.subr.mxu0 0.0
    %2938 = vmatpush2.xpose.msra.mxu0 0.0
    %2939 = vmatprep.subr.mxu0 0.0
    %2940 = vmatpush2.xpose.msra.mxu0 0.0
    %2941 = vmatprep.subr.mxu0 0.0
    %2942 = vmatpush2.xpose.msra.mxu0 0.0
    %2943 = vmatprep.subr.mxu0 0.0
    %2944 = vmatpush2.xpose.msra.mxu0 0.0
    %2945 = vmatprep.subr.mxu0 0.0
    %2946 = vmatpush2.xpose.msra.mxu0 0.0
    %2947 = vmatprep.subr.mxu0 0.0
    %2948 = vmatpush2.xpose.msra.mxu0 0.0
    %2949 = vmatprep.subr.mxu0 0.0
    %2950 = vmatpush2.xpose.msra.mxu0 0.0
    %2951 = vmatprep.subr.mxu0 0.0
    %2952 = vmatpush2.xpose.msra.mxu0 0.0
    %2953 = vmatprep.subr.mxu0 0.0
    %2954 = vmatpush2.xpose.msra.mxu0 0.0
    %2955 = vmatprep.subr.mxu0 0.0
    %2956 = vmatpush2.xpose.msra.mxu0 0.0
    %2957 = vmatprep.subr.mxu0 0.0
    %2958 = vmatpush2.xpose.msra.mxu0 0.0
    %2959 = vmatprep.subr.mxu0 0.0
    %2960 = vmatpush2.xpose.msra.mxu0 0.0
    %2961 = vmatprep.subr.mxu0 0.0
    %2962 = vmatpush2.xpose.msra.mxu0 0.0
    %2963 = vmatprep.subr.mxu0 0.0
    %2964 = vmatpush2.xpose.msra.mxu0 0.0
    %2965 = vmatprep.subr.mxu0 0.0
    %2966 = vmatpush2.xpose.msra.mxu0 0.0
    %2967 = vmatprep.subr.mxu0 0.0
    %2968 = vmatpush2.xpose.msra.mxu0 0.0
    %2969 = vmatprep.mubr.f32.mxu0 0.0
    %v2970 = vand.u32 %v2900, 4294901760
    %v2971 = vsub.f32 %v2900, %v2970
    %v2972 = vand.u32 %v2971, 4294901760
    %v2973 = vsub.f32 %v2971, %v2972
    %v2974 = vand.u32 %v2973, 4294901760
    %2975 = vmatmul.mubr.f32.gmra.mxu0 %v2974
    %v2976 = vpop.f32.mrf.mxu0
    %v2977 = vadd.f32 0.0, %v2976
    %v2978 = vpop.f32.mrf.mxu0
    %2979 = vdwg.mxu0
    %2980 = vmatprep.subr.mxu0 0.0
    %2981 = vmatpush1.xpose.msra.mxu0 0.0
    %2982 = vmatprep.subr.mxu0 0.0
    %2983 = vmatpush1.xpose.msra.mxu0 0.0
    %2984 = vmatprep.subr.mxu0 0.0
    %2985 = vmatpush1.xpose.msra.mxu0 0.0
    %2986 = vmatprep.subr.mxu0 0.0
    %2987 = vmatpush1.xpose.msra.mxu0 0.0
    %2988 = vmatprep.subr.mxu0 0.0
    %2989 = vmatpush1.xpose.msra.mxu0 0.0
    %2990 = vmatprep.subr.mxu0 0.0
    %2991 = vmatpush1.xpose.msra.mxu0 0.0
    %2992 = vmatprep.subr.mxu0 0.0
    %2993 = vmatpush1.xpose.msra.mxu0 0.0
    %2994 = vmatprep.subr.mxu0 0.0
    %2995 = vmatpush1.xpose.msra.mxu0 0.0
    %2996 = vmatprep.subr.mxu0 0.0
    %2997 = vmatpush1.xpose.msra.mxu0 0.0
    %2998 = vmatprep.subr.mxu0 0.0
    %2999 = vmatpush1.xpose.msra.mxu0 0.0
    %3000 = vmatprep.subr.mxu0 0.0
    %3001 = vmatpush1.xpose.msra.mxu0 0.0
    %3002 = vmatprep.subr.mxu0 0.0
    %3003 = vmatpush1.xpose.msra.mxu0 0.0
    %3004 = vmatprep.subr.mxu0 0.0
    %3005 = vmatpush1.xpose.msra.mxu0 0.0
    %3006 = vmatprep.subr.mxu0 0.0
    %3007 = vmatpush1.xpose.msra.mxu0 0.0
    %3008 = vmatprep.subr.mxu0 0.0
    %3009 = vmatpush1.xpose.msra.mxu0 0.0
    %3010 = vmatprep.subr.mxu0 0.0
    %v3011 = vand.u32 %v2902, 4294901760
    %v3012 = vsub.f32 %v2902, %v3011
    %v3013 = vand.u32 %v3012, 4294901760
    %v3014 = vsub.f32 %v3012, %v3013
    %v3015 = vand.u32 %v3014, 4294901760
    %3016 = vmatpush1.xpose.msra.mxu0 %v3015
    %3017 = vmatprep.subr.mxu0 0.0
    %3018 = vmatpush2.xpose.msra.mxu0 0.0
    %3019 = vmatprep.subr.mxu0 0.0
    %3020 = vmatpush2.xpose.msra.mxu0 0.0
    %3021 = vmatprep.subr.mxu0 0.0
    %3022 = vmatpush2.xpose.msra.mxu0 0.0
    %3023 = vmatprep.subr.mxu0 0.0
    %3024 = vmatpush2.xpose.msra.mxu0 0.0
    %3025 = vmatprep.subr.mxu0 0.0
    %3026 = vmatpush2.xpose.msra.mxu0 0.0
    %3027 = vmatprep.subr.mxu0 0.0
    %3028 = vmatpush2.xpose.msra.mxu0 0.0
    %3029 = vmatprep.subr.mxu0 0.0
    %3030 = vmatpush2.xpose.msra.mxu0 0.0
    %3031 = vmatprep.subr.mxu0 0.0
    %3032 = vmatpush2.xpose.msra.mxu0 0.0
    %3033 = vmatprep.subr.mxu0 0.0
    %3034 = vmatpush2.xpose.msra.mxu0 0.0
    %3035 = vmatprep.subr.mxu0 0.0
    %3036 = vmatpush2.xpose.msra.mxu0 0.0
    %3037 = vmatprep.subr.mxu0 0.0
    %3038 = vmatpush2.xpose.msra.mxu0 0.0
    %3039 = vmatprep.subr.mxu0 0.0
    %3040 = vmatpush2.xpose.msra.mxu0 0.0
    %3041 = vmatprep.subr.mxu0 0.0
    %3042 = vmatpush2.xpose.msra.mxu0 0.0
    %3043 = vmatprep.subr.mxu0 0.0
    %3044 = vmatpush2.xpose.msra.mxu0 0.0
    %3045 = vmatprep.subr.mxu0 0.0
    %3046 = vmatpush2.xpose.msra.mxu0 0.0
    %3047 = vmatprep.subr.mxu0 0.0
    %3048 = vmatpush2.xpose.msra.mxu0 0.0
    %3049 = vmatprep.mubr.f32.mxu0 0.0
    %v3050 = vand.u32 %v2900, 4294901760
    %3051 = vmatmul.mubr.f32.gmra.mxu0 %v3050
    %v3052 = vpop.f32.mrf.mxu0
    %v3053 = vadd.f32 %v2977, %v3052
    %v3054 = vpop.f32.mrf.mxu0
    %3055 = vdwg.mxu0
    %3056 = vmatprep.subr.mxu0 0.0
    %3057 = vmatpush1.xpose.msra.mxu0 0.0
    %3058 = vmatprep.subr.mxu0 0.0
    %3059 = vmatpush1.xpose.msra.mxu0 0.0
    %3060 = vmatprep.subr.mxu0 0.0
    %3061 = vmatpush1.xpose.msra.mxu0 0.0
    %3062 = vmatprep.subr.mxu0 0.0
    %3063 = vmatpush1.xpose.msra.mxu0 0.0
    %3064 = vmatprep.subr.mxu0 0.0
    %3065 = vmatpush1.xpose.msra.mxu0 0.0
    %3066 = vmatprep.subr.mxu0 0.0
    %3067 = vmatpush1.xpose.msra.mxu0 0.0
    %3068 = vmatprep.subr.mxu0 0.0
    %3069 = vmatpush1.xpose.msra.mxu0 0.0
    %3070 = vmatprep.subr.mxu0 0.0
    %3071 = vmatpush1.xpose.msra.mxu0 0.0
    %3072 = vmatprep.subr.mxu0 0.0
    %3073 = vmatpush1.xpose.msra.mxu0 0.0
    %3074 = vmatprep.subr.mxu0 0.0
    %3075 = vmatpush1.xpose.msra.mxu0 0.0
    %3076 = vmatprep.subr.mxu0 0.0
    %3077 = vmatpush1.xpose.msra.mxu0 0.0
    %3078 = vmatprep.subr.mxu0 0.0
    %3079 = vmatpush1.xpose.msra.mxu0 0.0
    %3080 = vmatprep.subr.mxu0 0.0
    %3081 = vmatpush1.xpose.msra.mxu0 0.0
    %3082 = vmatprep.subr.mxu0 0.0
    %3083 = vmatpush1.xpose.msra.mxu0 0.0
    %3084 = vmatprep.subr.mxu0 0.0
    %3085 = vmatpush1.xpose.msra.mxu0 0.0
    %3086 = vmatprep.subr.mxu0 0.0
    %v3087 = vand.u32 %v2902, 4294901760
    %v3088 = vsub.f32 %v2902, %v3087
    %3089 = vmatpush1.xpose.msra.mxu0 %v3088
    %3090 = vmatprep.subr.mxu0 0.0
    %3091 = vmatpush2.xpose.msra.mxu0 0.0
    %3092 = vmatprep.subr.mxu0 0.0
    %3093 = vmatpush2.xpose.msra.mxu0 0.0
    %3094 = vmatprep.subr.mxu0 0.0
    %3095 = vmatpush2.xpose.msra.mxu0 0.0
    %3096 = vmatprep.subr.mxu0 0.0
    %3097 = vmatpush2.xpose.msra.mxu0 0.0
    %3098 = vmatprep.subr.mxu0 0.0
    %3099 = vmatpush2.xpose.msra.mxu0 0.0
    %3100 = vmatprep.subr.mxu0 0.0
    %3101 = vmatpush2.xpose.msra.mxu0 0.0
    %3102 = vmatprep.subr.mxu0 0.0
    %3103 = vmatpush2.xpose.msra.mxu0 0.0
    %3104 = vmatprep.subr.mxu0 0.0
    %3105 = vmatpush2.xpose.msra.mxu0 0.0
    %3106 = vmatprep.subr.mxu0 0.0
    %3107 = vmatpush2.xpose.msra.mxu0 0.0
    %3108 = vmatprep.subr.mxu0 0.0
    %3109 = vmatpush2.xpose.msra.mxu0 0.0
    %3110 = vmatprep.subr.mxu0 0.0
    %3111 = vmatpush2.xpose.msra.mxu0 0.0
    %3112 = vmatprep.subr.mxu0 0.0
    %3113 = vmatpush2.xpose.msra.mxu0 0.0
    %3114 = vmatprep.subr.mxu0 0.0
    %3115 = vmatpush2.xpose.msra.mxu0 0.0
    %3116 = vmatprep.subr.mxu0 0.0
    %3117 = vmatpush2.xpose.msra.mxu0 0.0
    %3118 = vmatprep.subr.mxu0 0.0
    %3119 = vmatpush2.xpose.msra.mxu0 0.0
    %3120 = vmatprep.subr.mxu0 0.0
    %3121 = vmatpush2.xpose.msra.mxu0 0.0
    %3122 = vmatprep.mubr.f32.mxu0 0.0
    %v3123 = vand.u32 %v2900, 4294901760
    %v3124 = vsub.f32 %v2900, %v3123
    %3125 = vmatmul.mubr.f32.gmra.mxu0 %v3124
    %v3126 = vpop.f32.mrf.mxu0
    %v3127 = vadd.f32 %v3053, %v3126
    %v3128 = vpop.f32.mrf.mxu0
    %3129 = vdwg.mxu0
    %3130 = vmatprep.subr.mxu0 0.0
    %3131 = vmatpush1.xpose.msra.mxu0 0.0
    %3132 = vmatprep.subr.mxu0 0.0
    %3133 = vmatpush1.xpose.msra.mxu0 0.0
    %3134 = vmatprep.subr.mxu0 0.0
    %3135 = vmatpush1.xpose.msra.mxu0 0.0
    %3136 = vmatprep.subr.mxu0 0.0
    %3137 = vmatpush1.xpose.msra.mxu0 0.0
    %3138 = vmatprep.subr.mxu0 0.0
    %3139 = vmatpush1.xpose.msra.mxu0 0.0
    %3140 = vmatprep.subr.mxu0 0.0
    %3141 = vmatpush1.xpose.msra.mxu0 0.0
    %3142 = vmatprep.subr.mxu0 0.0
    %3143 = vmatpush1.xpose.msra.mxu0 0.0
    %3144 = vmatprep.subr.mxu0 0.0
    %3145 = vmatpush1.xpose.msra.mxu0 0.0
    %3146 = vmatprep.subr.mxu0 0.0
    %3147 = vmatpush1.xpose.msra.mxu0 0.0
    %3148 = vmatprep.subr.mxu0 0.0
    %3149 = vmatpush1.xpose.msra.mxu0 0.0
    %3150 = vmatprep.subr.mxu0 0.0
    %3151 = vmatpush1.xpose.msra.mxu0 0.0
    %3152 = vmatprep.subr.mxu0 0.0
    %3153 = vmatpush1.xpose.msra.mxu0 0.0
    %3154 = vmatprep.subr.mxu0 0.0
    %3155 = vmatpush1.xpose.msra.mxu0 0.0
    %3156 = vmatprep.subr.mxu0 0.0
    %3157 = vmatpush1.xpose.msra.mxu0 0.0
    %3158 = vmatprep.subr.mxu0 0.0
    %3159 = vmatpush1.xpose.msra.mxu0 0.0
    %3160 = vmatprep.subr.mxu0 0.0
    %v3161 = vand.u32 %v2902, 4294901760
    %3162 = vmatpush1.xpose.msra.mxu0 %v3161
    %3163 = vmatprep.subr.mxu0 0.0
    %3164 = vmatpush2.xpose.msra.mxu0 0.0
    %3165 = vmatprep.subr.mxu0 0.0
    %3166 = vmatpush2.xpose.msra.mxu0 0.0
    %3167 = vmatprep.subr.mxu0 0.0
    %3168 = vmatpush2.xpose.msra.mxu0 0.0
    %3169 = vmatprep.subr.mxu0 0.0
    %3170 = vmatpush2.xpose.msra.mxu0 0.0
    %3171 = vmatprep.subr.mxu0 0.0
    %3172 = vmatpush2.xpose.msra.mxu0 0.0
    %3173 = vmatprep.subr.mxu0 0.0
    %3174 = vmatpush2.xpose.msra.mxu0 0.0
    %3175 = vmatprep.subr.mxu0 0.0
    %3176 = vmatpush2.xpose.msra.mxu0 0.0
    %3177 = vmatprep.subr.mxu0 0.0
    %3178 = vmatpush2.xpose.msra.mxu0 0.0
    %3179 = vmatprep.subr.mxu0 0.0
    %3180 = vmatpush2.xpose.msra.mxu0 0.0
    %3181 = vmatprep.subr.mxu0 0.0
    %3182 = vmatpush2.xpose.msra.mxu0 0.0
    %3183 = vmatprep.subr.mxu0 0.0
    %3184 = vmatpush2.xpose.msra.mxu0 0.0
    %3185 = vmatprep.subr.mxu0 0.0
    %3186 = vmatpush2.xpose.msra.mxu0 0.0
    %3187 = vmatprep.subr.mxu0 0.0
    %3188 = vmatpush2.xpose.msra.mxu0 0.0
    %3189 = vmatprep.subr.mxu0 0.0
    %3190 = vmatpush2.xpose.msra.mxu0 0.0
    %3191 = vmatprep.subr.mxu0 0.0
    %3192 = vmatpush2.xpose.msra.mxu0 0.0
    %3193 = vmatprep.subr.mxu0 0.0
    %3194 = vmatpush2.xpose.msra.mxu0 0.0
    %3195 = vmatprep.mubr.f32.mxu0 0.0
    %v3196 = vand.u32 %v2900, 4294901760
    %v3197 = vsub.f32 %v2900, %v3196
    %v3198 = vand.u32 %v3197, 4294901760
    %3199 = vmatmul.mubr.f32.gmra.mxu0 %v3198
    %v3200 = vpop.f32.mrf.mxu0
    %v3201 = vadd.f32 %v3127, %v3200
    %v3202 = vpop.f32.mrf.mxu0
    %3203 = vdwg.mxu0
    %3204 = vmatprep.subr.mxu0 0.0
    %3205 = vmatpush1.xpose.msra.mxu0 0.0
    %3206 = vmatprep.subr.mxu0 0.0
    %3207 = vmatpush1.xpose.msra.mxu0 0.0
    %3208 = vmatprep.subr.mxu0 0.0
    %3209 = vmatpush1.xpose.msra.mxu0 0.0
    %3210 = vmatprep.subr.mxu0 0.0
    %3211 = vmatpush1.xpose.msra.mxu0 0.0
    %3212 = vmatprep.subr.mxu0 0.0
    %3213 = vmatpush1.xpose.msra.mxu0 0.0
    %3214 = vmatprep.subr.mxu0 0.0
    %3215 = vmatpush1.xpose.msra.mxu0 0.0
    %3216 = vmatprep.subr.mxu0 0.0
    %3217 = vmatpush1.xpose.msra.mxu0 0.0
    %3218 = vmatprep.subr.mxu0 0.0
    %3219 = vmatpush1.xpose.msra.mxu0 0.0
    %3220 = vmatprep.subr.mxu0 0.0
    %3221 = vmatpush1.xpose.msra.mxu0 0.0
    %3222 = vmatprep.subr.mxu0 0.0
    %3223 = vmatpush1.xpose.msra.mxu0 0.0
    %3224 = vmatprep.subr.mxu0 0.0
    %3225 = vmatpush1.xpose.msra.mxu0 0.0
    %3226 = vmatprep.subr.mxu0 0.0
    %3227 = vmatpush1.xpose.msra.mxu0 0.0
    %3228 = vmatprep.subr.mxu0 0.0
    %3229 = vmatpush1.xpose.msra.mxu0 0.0
    %3230 = vmatprep.subr.mxu0 0.0
    %3231 = vmatpush1.xpose.msra.mxu0 0.0
    %3232 = vmatprep.subr.mxu0 0.0
    %3233 = vmatpush1.xpose.msra.mxu0 0.0
    %3234 = vmatprep.subr.mxu0 0.0
    %v3235 = vand.u32 %v2902, 4294901760
    %v3236 = vsub.f32 %v2902, %v3235
    %v3237 = vand.u32 %v3236, 4294901760
    %3238 = vmatpush1.xpose.msra.mxu0 %v3237
    %3239 = vmatprep.subr.mxu0 0.0
    %3240 = vmatpush2.xpose.msra.mxu0 0.0
    %3241 = vmatprep.subr.mxu0 0.0
    %3242 = vmatpush2.xpose.msra.mxu0 0.0
    %3243 = vmatprep.subr.mxu0 0.0
    %3244 = vmatpush2.xpose.msra.mxu0 0.0
    %3245 = vmatprep.subr.mxu0 0.0
    %3246 = vmatpush2.xpose.msra.mxu0 0.0
    %3247 = vmatprep.subr.mxu0 0.0
    %3248 = vmatpush2.xpose.msra.mxu0 0.0
    %3249 = vmatprep.subr.mxu0 0.0
    %3250 = vmatpush2.xpose.msra.mxu0 0.0
    %3251 = vmatprep.subr.mxu0 0.0
    %3252 = vmatpush2.xpose.msra.mxu0 0.0
    %3253 = vmatprep.subr.mxu0 0.0
    %3254 = vmatpush2.xpose.msra.mxu0 0.0
    %3255 = vmatprep.subr.mxu0 0.0
    %3256 = vmatpush2.xpose.msra.mxu0 0.0
    %3257 = vmatprep.subr.mxu0 0.0
    %3258 = vmatpush2.xpose.msra.mxu0 0.0
    %3259 = vmatprep.subr.mxu0 0.0
    %3260 = vmatpush2.xpose.msra.mxu0 0.0
    %3261 = vmatprep.subr.mxu0 0.0
    %3262 = vmatpush2.xpose.msra.mxu0 0.0
    %3263 = vmatprep.subr.mxu0 0.0
    %3264 = vmatpush2.xpose.msra.mxu0 0.0
    %3265 = vmatprep.subr.mxu0 0.0
    %3266 = vmatpush2.xpose.msra.mxu0 0.0
    %3267 = vmatprep.subr.mxu0 0.0
    %3268 = vmatpush2.xpose.msra.mxu0 0.0
    %3269 = vmatprep.subr.mxu0 0.0
    %3270 = vmatpush2.xpose.msra.mxu0 0.0
    %3271 = vmatprep.mubr.f32.mxu0 0.0
    %v3272 = vand.u32 %v2900, 4294901760
    %3273 = vmatmul.mubr.f32.gmra.mxu0 %v3272
    %v3274 = vpop.f32.mrf.mxu0
    %v3275 = vadd.f32 %v3201, %v3274
    %v3276 = vpop.f32.mrf.mxu0
    %3277 = vdwg.mxu0
    %3278 = vmatprep.subr.mxu0 0.0
    %3279 = vmatpush1.xpose.msra.mxu0 0.0
    %3280 = vmatprep.subr.mxu0 0.0
    %3281 = vmatpush1.xpose.msra.mxu0 0.0
    %3282 = vmatprep.subr.mxu0 0.0
    %3283 = vmatpush1.xpose.msra.mxu0 0.0
    %3284 = vmatprep.subr.mxu0 0.0
    %3285 = vmatpush1.xpose.msra.mxu0 0.0
    %3286 = vmatprep.subr.mxu0 0.0
    %3287 = vmatpush1.xpose.msra.mxu0 0.0
    %3288 = vmatprep.subr.mxu0 0.0
    %3289 = vmatpush1.xpose.msra.mxu0 0.0
    %3290 = vmatprep.subr.mxu0 0.0
    %3291 = vmatpush1.xpose.msra.mxu0 0.0
    %3292 = vmatprep.subr.mxu0 0.0
    %3293 = vmatpush1.xpose.msra.mxu0 0.0
    %3294 = vmatprep.subr.mxu0 0.0
    %3295 = vmatpush1.xpose.msra.mxu0 0.0
    %3296 = vmatprep.subr.mxu0 0.0
    %3297 = vmatpush1.xpose.msra.mxu0 0.0
    %3298 = vmatprep.subr.mxu0 0.0
    %3299 = vmatpush1.xpose.msra.mxu0 0.0
    %3300 = vmatprep.subr.mxu0 0.0
    %3301 = vmatpush1.xpose.msra.mxu0 0.0
    %3302 = vmatprep.subr.mxu0 0.0
    %3303 = vmatpush1.xpose.msra.mxu0 0.0
    %3304 = vmatprep.subr.mxu0 0.0
    %3305 = vmatpush1.xpose.msra.mxu0 0.0
    %3306 = vmatprep.subr.mxu0 0.0
    %3307 = vmatpush1.xpose.msra.mxu0 0.0
    %3308 = vmatprep.subr.mxu0 0.0
    %v3309 = vand.u32 %v2902, 4294901760
    %3310 = vmatpush1.xpose.msra.mxu0 %v3309
    %3311 = vmatprep.subr.mxu0 0.0
    %3312 = vmatpush2.xpose.msra.mxu0 0.0
    %3313 = vmatprep.subr.mxu0 0.0
    %3314 = vmatpush2.xpose.msra.mxu0 0.0
    %3315 = vmatprep.subr.mxu0 0.0
    %3316 = vmatpush2.xpose.msra.mxu0 0.0
    %3317 = vmatprep.subr.mxu0 0.0
    %3318 = vmatpush2.xpose.msra.mxu0 0.0
    %3319 = vmatprep.subr.mxu0 0.0
    %3320 = vmatpush2.xpose.msra.mxu0 0.0
    %3321 = vmatprep.subr.mxu0 0.0
    %3322 = vmatpush2.xpose.msra.mxu0 0.0
    %3323 = vmatprep.subr.mxu0 0.0
    %3324 = vmatpush2.xpose.msra.mxu0 0.0
    %3325 = vmatprep.subr.mxu0 0.0
    %3326 = vmatpush2.xpose.msra.mxu0 0.0
    %3327 = vmatprep.subr.mxu0 0.0
    %3328 = vmatpush2.xpose.msra.mxu0 0.0
    %3329 = vmatprep.subr.mxu0 0.0
    %3330 = vmatpush2.xpose.msra.mxu0 0.0
    %3331 = vmatprep.subr.mxu0 0.0
    %3332 = vmatpush2.xpose.msra.mxu0 0.0
    %3333 = vmatprep.subr.mxu0 0.0
    %3334 = vmatpush2.xpose.msra.mxu0 0.0
    %3335 = vmatprep.subr.mxu0 0.0
    %3336 = vmatpush2.xpose.msra.mxu0 0.0
    %3337 = vmatprep.subr.mxu0 0.0
    %3338 = vmatpush2.xpose.msra.mxu0 0.0
    %3339 = vmatprep.subr.mxu0 0.0
    %3340 = vmatpush2.xpose.msra.mxu0 0.0
    %3341 = vmatprep.subr.mxu0 0.0
    %3342 = vmatpush2.xpose.msra.mxu0 0.0
    %3343 = vmatprep.mubr.f32.mxu0 0.0
    %v3344 = vand.u32 %v2900, 4294901760
    %3345 = vmatmul.mubr.f32.gmra.mxu0 %v3344
    %v3346 = vpop.f32.mrf.mxu0
    %v3347 = vadd.f32 %v3275, %v3346
    %v3348 = vpop.f32.mrf.mxu0
    %3349 = vdwg.mxu0
    %3350 = vrot.lane.b32.xlu0 %v626, 96
    %v3351 = vpop.permute.xlu0 %3350
    %v3352 = vsel %vm639, %v626, 0
    %v3354 = vsel %vm639, %v3351, 0
    %3356 = vmatprep.subr.mxu0 0.0
    %3357 = vmatpush1.xpose.msra.mxu0 0.0
    %3358 = vmatprep.subr.mxu0 0.0
    %3359 = vmatpush1.xpose.msra.mxu0 0.0
    %3360 = vmatprep.subr.mxu0 0.0
    %3361 = vmatpush1.xpose.msra.mxu0 0.0
    %3362 = vmatprep.subr.mxu0 0.0
    %3363 = vmatpush1.xpose.msra.mxu0 0.0
    %3364 = vmatprep.subr.mxu0 0.0
    %3365 = vmatpush1.xpose.msra.mxu0 0.0
    %3366 = vmatprep.subr.mxu0 0.0
    %3367 = vmatpush1.xpose.msra.mxu0 0.0
    %3368 = vmatprep.subr.mxu0 0.0
    %3369 = vmatpush1.xpose.msra.mxu0 0.0
    %3370 = vmatprep.subr.mxu0 0.0
    %3371 = vmatpush1.xpose.msra.mxu0 0.0
    %3372 = vmatprep.subr.mxu0 0.0
    %3373 = vmatpush1.xpose.msra.mxu0 0.0
    %3374 = vmatprep.subr.mxu0 0.0
    %3375 = vmatpush1.xpose.msra.mxu0 0.0
    %3376 = vmatprep.subr.mxu0 0.0
    %3377 = vmatpush1.xpose.msra.mxu0 0.0
    %3378 = vmatprep.subr.mxu0 0.0
    %3379 = vmatpush1.xpose.msra.mxu0 0.0
    %3380 = vmatprep.subr.mxu0 0.0
    %3381 = vmatpush1.xpose.msra.mxu0 0.0
    %3382 = vmatprep.subr.mxu0 0.0
    %3383 = vmatpush1.xpose.msra.mxu0 0.0
    %3384 = vmatprep.subr.mxu0 0.0
    %3385 = vmatpush1.xpose.msra.mxu0 0.0
    %3386 = vmatprep.subr.mxu0 0.0
    %v3387 = vand.u32 %v3354, 4294901760
    %3388 = vmatpush1.xpose.msra.mxu0 %v3387
    %3389 = vmatprep.subr.mxu0 0.0
    %3390 = vmatpush2.xpose.msra.mxu0 0.0
    %3391 = vmatprep.subr.mxu0 0.0
    %3392 = vmatpush2.xpose.msra.mxu0 0.0
    %3393 = vmatprep.subr.mxu0 0.0
    %3394 = vmatpush2.xpose.msra.mxu0 0.0
    %3395 = vmatprep.subr.mxu0 0.0
    %3396 = vmatpush2.xpose.msra.mxu0 0.0
    %3397 = vmatprep.subr.mxu0 0.0
    %3398 = vmatpush2.xpose.msra.mxu0 0.0
    %3399 = vmatprep.subr.mxu0 0.0
    %3400 = vmatpush2.xpose.msra.mxu0 0.0
    %3401 = vmatprep.subr.mxu0 0.0
    %3402 = vmatpush2.xpose.msra.mxu0 0.0
    %3403 = vmatprep.subr.mxu0 0.0
    %3404 = vmatpush2.xpose.msra.mxu0 0.0
    %3405 = vmatprep.subr.mxu0 0.0
    %3406 = vmatpush2.xpose.msra.mxu0 0.0
    %3407 = vmatprep.subr.mxu0 0.0
    %3408 = vmatpush2.xpose.msra.mxu0 0.0
    %3409 = vmatprep.subr.mxu0 0.0
    %3410 = vmatpush2.xpose.msra.mxu0 0.0
    %3411 = vmatprep.subr.mxu0 0.0
    %3412 = vmatpush2.xpose.msra.mxu0 0.0
    %3413 = vmatprep.subr.mxu0 0.0
    %3414 = vmatpush2.xpose.msra.mxu0 0.0
    %3415 = vmatprep.subr.mxu0 0.0
    %3416 = vmatpush2.xpose.msra.mxu0 0.0
    %3417 = vmatprep.subr.mxu0 0.0
    %3418 = vmatpush2.xpose.msra.mxu0 0.0
    %3419 = vmatprep.subr.mxu0 0.0
    %3420 = vmatpush2.xpose.msra.mxu0 0.0
    %3421 = vmatprep.mubr.f32.mxu0 0.0
    %v3422 = vand.u32 %v3352, 4294901760
    %v3423 = vsub.f32 %v3352, %v3422
    %v3424 = vand.u32 %v3423, 4294901760
    %v3425 = vsub.f32 %v3423, %v3424
    %v3426 = vand.u32 %v3425, 4294901760
    %3427 = vmatmul.mubr.f32.gmra.mxu0 %v3426
    %v3428 = vpop.f32.mrf.mxu0
    %v3429 = vadd.f32 0.0, %v3428
    %v3430 = vpop.f32.mrf.mxu0
    %3431 = vdwg.mxu0
    %3432 = vmatprep.subr.mxu0 0.0
    %3433 = vmatpush1.xpose.msra.mxu0 0.0
    %3434 = vmatprep.subr.mxu0 0.0
    %3435 = vmatpush1.xpose.msra.mxu0 0.0
    %3436 = vmatprep.subr.mxu0 0.0
    %3437 = vmatpush1.xpose.msra.mxu0 0.0
    %3438 = vmatprep.subr.mxu0 0.0
    %3439 = vmatpush1.xpose.msra.mxu0 0.0
    %3440 = vmatprep.subr.mxu0 0.0
    %3441 = vmatpush1.xpose.msra.mxu0 0.0
    %3442 = vmatprep.subr.mxu0 0.0
    %3443 = vmatpush1.xpose.msra.mxu0 0.0
    %3444 = vmatprep.subr.mxu0 0.0
    %3445 = vmatpush1.xpose.msra.mxu0 0.0
    %3446 = vmatprep.subr.mxu0 0.0
    %3447 = vmatpush1.xpose.msra.mxu0 0.0
    %3448 = vmatprep.subr.mxu0 0.0
    %3449 = vmatpush1.xpose.msra.mxu0 0.0
    %3450 = vmatprep.subr.mxu0 0.0
    %3451 = vmatpush1.xpose.msra.mxu0 0.0
    %3452 = vmatprep.subr.mxu0 0.0
    %3453 = vmatpush1.xpose.msra.mxu0 0.0
    %3454 = vmatprep.subr.mxu0 0.0
    %3455 = vmatpush1.xpose.msra.mxu0 0.0
    %3456 = vmatprep.subr.mxu0 0.0
    %3457 = vmatpush1.xpose.msra.mxu0 0.0
    %3458 = vmatprep.subr.mxu0 0.0
    %3459 = vmatpush1.xpose.msra.mxu0 0.0
    %3460 = vmatprep.subr.mxu0 0.0
    %3461 = vmatpush1.xpose.msra.mxu0 0.0
    %3462 = vmatprep.subr.mxu0 0.0
    %v3463 = vand.u32 %v3354, 4294901760
    %v3464 = vsub.f32 %v3354, %v3463
    %v3465 = vand.u32 %v3464, 4294901760
    %v3466 = vsub.f32 %v3464, %v3465
    %v3467 = vand.u32 %v3466, 4294901760
    %3468 = vmatpush1.xpose.msra.mxu0 %v3467
    %3469 = vmatprep.subr.mxu0 0.0
    %3470 = vmatpush2.xpose.msra.mxu0 0.0
    %3471 = vmatprep.subr.mxu0 0.0
    %3472 = vmatpush2.xpose.msra.mxu0 0.0
    %3473 = vmatprep.subr.mxu0 0.0
    %3474 = vmatpush2.xpose.msra.mxu0 0.0
    %3475 = vmatprep.subr.mxu0 0.0
    %3476 = vmatpush2.xpose.msra.mxu0 0.0
    %3477 = vmatprep.subr.mxu0 0.0
    %3478 = vmatpush2.xpose.msra.mxu0 0.0
    %3479 = vmatprep.subr.mxu0 0.0
    %3480 = vmatpush2.xpose.msra.mxu0 0.0
    %3481 = vmatprep.subr.mxu0 0.0
    %3482 = vmatpush2.xpose.msra.mxu0 0.0
    %3483 = vmatprep.subr.mxu0 0.0
    %3484 = vmatpush2.xpose.msra.mxu0 0.0
    %3485 = vmatprep.subr.mxu0 0.0
    %3486 = vmatpush2.xpose.msra.mxu0 0.0
    %3487 = vmatprep.subr.mxu0 0.0
    %3488 = vmatpush2.xpose.msra.mxu0 0.0
    %3489 = vmatprep.subr.mxu0 0.0
    %3490 = vmatpush2.xpose.msra.mxu0 0.0
    %3491 = vmatprep.subr.mxu0 0.0
    %3492 = vmatpush2.xpose.msra.mxu0 0.0
    %3493 = vmatprep.subr.mxu0 0.0
    %3494 = vmatpush2.xpose.msra.mxu0 0.0
    %3495 = vmatprep.subr.mxu0 0.0
    %3496 = vmatpush2.xpose.msra.mxu0 0.0
    %3497 = vmatprep.subr.mxu0 0.0
    %3498 = vmatpush2.xpose.msra.mxu0 0.0
    %3499 = vmatprep.subr.mxu0 0.0
    %3500 = vmatpush2.xpose.msra.mxu0 0.0
    %3501 = vmatprep.mubr.f32.mxu0 0.0
    %v3502 = vand.u32 %v3352, 4294901760
    %3503 = vmatmul.mubr.f32.gmra.mxu0 %v3502
    %v3504 = vpop.f32.mrf.mxu0
    %v3505 = vadd.f32 %v3429, %v3504
    %v3506 = vpop.f32.mrf.mxu0
    %3507 = vdwg.mxu0
    %3508 = vmatprep.subr.mxu0 0.0
    %3509 = vmatpush1.xpose.msra.mxu0 0.0
    %3510 = vmatprep.subr.mxu0 0.0
    %3511 = vmatpush1.xpose.msra.mxu0 0.0
    %3512 = vmatprep.subr.mxu0 0.0
    %3513 = vmatpush1.xpose.msra.mxu0 0.0
    %3514 = vmatprep.subr.mxu0 0.0
    %3515 = vmatpush1.xpose.msra.mxu0 0.0
    %3516 = vmatprep.subr.mxu0 0.0
    %3517 = vmatpush1.xpose.msra.mxu0 0.0
    %3518 = vmatprep.subr.mxu0 0.0
    %3519 = vmatpush1.xpose.msra.mxu0 0.0
    %3520 = vmatprep.subr.mxu0 0.0
    %3521 = vmatpush1.xpose.msra.mxu0 0.0
    %3522 = vmatprep.subr.mxu0 0.0
    %3523 = vmatpush1.xpose.msra.mxu0 0.0
    %3524 = vmatprep.subr.mxu0 0.0
    %3525 = vmatpush1.xpose.msra.mxu0 0.0
    %3526 = vmatprep.subr.mxu0 0.0
    %3527 = vmatpush1.xpose.msra.mxu0 0.0
    %3528 = vmatprep.subr.mxu0 0.0
    %3529 = vmatpush1.xpose.msra.mxu0 0.0
    %3530 = vmatprep.subr.mxu0 0.0
    %3531 = vmatpush1.xpose.msra.mxu0 0.0
    %3532 = vmatprep.subr.mxu0 0.0
    %3533 = vmatpush1.xpose.msra.mxu0 0.0
    %3534 = vmatprep.subr.mxu0 0.0
    %3535 = vmatpush1.xpose.msra.mxu0 0.0
    %3536 = vmatprep.subr.mxu0 0.0
    %3537 = vmatpush1.xpose.msra.mxu0 0.0
    %3538 = vmatprep.subr.mxu0 0.0
    %v3539 = vand.u32 %v3354, 4294901760
    %v3540 = vsub.f32 %v3354, %v3539
    %3541 = vmatpush1.xpose.msra.mxu0 %v3540
    %3542 = vmatprep.subr.mxu0 0.0
    %3543 = vmatpush2.xpose.msra.mxu0 0.0
    %3544 = vmatprep.subr.mxu0 0.0
    %3545 = vmatpush2.xpose.msra.mxu0 0.0
    %3546 = vmatprep.subr.mxu0 0.0
    %3547 = vmatpush2.xpose.msra.mxu0 0.0
    %3548 = vmatprep.subr.mxu0 0.0
    %3549 = vmatpush2.xpose.msra.mxu0 0.0
    %3550 = vmatprep.subr.mxu0 0.0
    %3551 = vmatpush2.xpose.msra.mxu0 0.0
    %3552 = vmatprep.subr.mxu0 0.0
    %3553 = vmatpush2.xpose.msra.mxu0 0.0
    %3554 = vmatprep.subr.mxu0 0.0
    %3555 = vmatpush2.xpose.msra.mxu0 0.0
    %3556 = vmatprep.subr.mxu0 0.0
    %3557 = vmatpush2.xpose.msra.mxu0 0.0
    %3558 = vmatprep.subr.mxu0 0.0
    %3559 = vmatpush2.xpose.msra.mxu0 0.0
    %3560 = vmatprep.subr.mxu0 0.0
    %3561 = vmatpush2.xpose.msra.mxu0 0.0
    %3562 = vmatprep.subr.mxu0 0.0
    %3563 = vmatpush2.xpose.msra.mxu0 0.0
    %3564 = vmatprep.subr.mxu0 0.0
    %3565 = vmatpush2.xpose.msra.mxu0 0.0
    %3566 = vmatprep.subr.mxu0 0.0
    %3567 = vmatpush2.xpose.msra.mxu0 0.0
    %3568 = vmatprep.subr.mxu0 0.0
    %3569 = vmatpush2.xpose.msra.mxu0 0.0
    %3570 = vmatprep.subr.mxu0 0.0
    %3571 = vmatpush2.xpose.msra.mxu0 0.0
    %3572 = vmatprep.subr.mxu0 0.0
    %3573 = vmatpush2.xpose.msra.mxu0 0.0
    %3574 = vmatprep.mubr.f32.mxu0 0.0
    %v3575 = vand.u32 %v3352, 4294901760
    %v3576 = vsub.f32 %v3352, %v3575
    %3577 = vmatmul.mubr.f32.gmra.mxu0 %v3576
    %v3578 = vpop.f32.mrf.mxu0
    %v3579 = vadd.f32 %v3505, %v3578
    %v3580 = vpop.f32.mrf.mxu0
    %3581 = vdwg.mxu0
    %3582 = vmatprep.subr.mxu0 0.0
    %3583 = vmatpush1.xpose.msra.mxu0 0.0
    %3584 = vmatprep.subr.mxu0 0.0
    %3585 = vmatpush1.xpose.msra.mxu0 0.0
    %3586 = vmatprep.subr.mxu0 0.0
    %3587 = vmatpush1.xpose.msra.mxu0 0.0
    %3588 = vmatprep.subr.mxu0 0.0
    %3589 = vmatpush1.xpose.msra.mxu0 0.0
    %3590 = vmatprep.subr.mxu0 0.0
    %3591 = vmatpush1.xpose.msra.mxu0 0.0
    %3592 = vmatprep.subr.mxu0 0.0
    %3593 = vmatpush1.xpose.msra.mxu0 0.0
    %3594 = vmatprep.subr.mxu0 0.0
    %3595 = vmatpush1.xpose.msra.mxu0 0.0
    %3596 = vmatprep.subr.mxu0 0.0
    %3597 = vmatpush1.xpose.msra.mxu0 0.0
    %3598 = vmatprep.subr.mxu0 0.0
    %3599 = vmatpush1.xpose.msra.mxu0 0.0
    %3600 = vmatprep.subr.mxu0 0.0
    %3601 = vmatpush1.xpose.msra.mxu0 0.0
    %3602 = vmatprep.subr.mxu0 0.0
    %3603 = vmatpush1.xpose.msra.mxu0 0.0
    %3604 = vmatprep.subr.mxu0 0.0
    %3605 = vmatpush1.xpose.msra.mxu0 0.0
    %3606 = vmatprep.subr.mxu0 0.0
    %3607 = vmatpush1.xpose.msra.mxu0 0.0
    %3608 = vmatprep.subr.mxu0 0.0
    %3609 = vmatpush1.xpose.msra.mxu0 0.0
    %3610 = vmatprep.subr.mxu0 0.0
    %3611 = vmatpush1.xpose.msra.mxu0 0.0
    %3612 = vmatprep.subr.mxu0 0.0
    %v3613 = vand.u32 %v3354, 4294901760
    %3614 = vmatpush1.xpose.msra.mxu0 %v3613
    %3615 = vmatprep.subr.mxu0 0.0
    %3616 = vmatpush2.xpose.msra.mxu0 0.0
    %3617 = vmatprep.subr.mxu0 0.0
    %3618 = vmatpush2.xpose.msra.mxu0 0.0
    %3619 = vmatprep.subr.mxu0 0.0
    %3620 = vmatpush2.xpose.msra.mxu0 0.0
    %3621 = vmatprep.subr.mxu0 0.0
    %3622 = vmatpush2.xpose.msra.mxu0 0.0
    %3623 = vmatprep.subr.mxu0 0.0
    %3624 = vmatpush2.xpose.msra.mxu0 0.0
    %3625 = vmatprep.subr.mxu0 0.0
    %3626 = vmatpush2.xpose.msra.mxu0 0.0
    %3627 = vmatprep.subr.mxu0 0.0
    %3628 = vmatpush2.xpose.msra.mxu0 0.0
    %3629 = vmatprep.subr.mxu0 0.0
    %3630 = vmatpush2.xpose.msra.mxu0 0.0
    %3631 = vmatprep.subr.mxu0 0.0
    %3632 = vmatpush2.xpose.msra.mxu0 0.0
    %3633 = vmatprep.subr.mxu0 0.0
    %3634 = vmatpush2.xpose.msra.mxu0 0.0
    %3635 = vmatprep.subr.mxu0 0.0
    %3636 = vmatpush2.xpose.msra.mxu0 0.0
    %3637 = vmatprep.subr.mxu0 0.0
    %3638 = vmatpush2.xpose.msra.mxu0 0.0
    %3639 = vmatprep.subr.mxu0 0.0
    %3640 = vmatpush2.xpose.msra.mxu0 0.0
    %3641 = vmatprep.subr.mxu0 0.0
    %3642 = vmatpush2.xpose.msra.mxu0 0.0
    %3643 = vmatprep.subr.mxu0 0.0
    %3644 = vmatpush2.xpose.msra.mxu0 0.0
    %3645 = vmatprep.subr.mxu0 0.0
    %3646 = vmatpush2.xpose.msra.mxu0 0.0
    %3647 = vmatprep.mubr.f32.mxu0 0.0
    %v3648 = vand.u32 %v3352, 4294901760
    %v3649 = vsub.f32 %v3352, %v3648
    %v3650 = vand.u32 %v3649, 4294901760
    %3651 = vmatmul.mubr.f32.gmra.mxu0 %v3650
    %v3652 = vpop.f32.mrf.mxu0
    %v3653 = vadd.f32 %v3579, %v3652
    %v3654 = vpop.f32.mrf.mxu0
    %3655 = vdwg.mxu0
    %3656 = vmatprep.subr.mxu0 0.0
    %3657 = vmatpush1.xpose.msra.mxu0 0.0
    %3658 = vmatprep.subr.mxu0 0.0
    %3659 = vmatpush1.xpose.msra.mxu0 0.0
    %3660 = vmatprep.subr.mxu0 0.0
    %3661 = vmatpush1.xpose.msra.mxu0 0.0
    %3662 = vmatprep.subr.mxu0 0.0
    %3663 = vmatpush1.xpose.msra.mxu0 0.0
    %3664 = vmatprep.subr.mxu0 0.0
    %3665 = vmatpush1.xpose.msra.mxu0 0.0
    %3666 = vmatprep.subr.mxu0 0.0
    %3667 = vmatpush1.xpose.msra.mxu0 0.0
    %3668 = vmatprep.subr.mxu0 0.0
    %3669 = vmatpush1.xpose.msra.mxu0 0.0
    %3670 = vmatprep.subr.mxu0 0.0
    %3671 = vmatpush1.xpose.msra.mxu0 0.0
    %3672 = vmatprep.subr.mxu0 0.0
    %3673 = vmatpush1.xpose.msra.mxu0 0.0
    %3674 = vmatprep.subr.mxu0 0.0
    %3675 = vmatpush1.xpose.msra.mxu0 0.0
    %3676 = vmatprep.subr.mxu0 0.0
    %3677 = vmatpush1.xpose.msra.mxu0 0.0
    %3678 = vmatprep.subr.mxu0 0.0
    %3679 = vmatpush1.xpose.msra.mxu0 0.0
    %3680 = vmatprep.subr.mxu0 0.0
    %3681 = vmatpush1.xpose.msra.mxu0 0.0
    %3682 = vmatprep.subr.mxu0 0.0
    %3683 = vmatpush1.xpose.msra.mxu0 0.0
    %3684 = vmatprep.subr.mxu0 0.0
    %3685 = vmatpush1.xpose.msra.mxu0 0.0
    %3686 = vmatprep.subr.mxu0 0.0
    %v3687 = vand.u32 %v3354, 4294901760
    %v3688 = vsub.f32 %v3354, %v3687
    %v3689 = vand.u32 %v3688, 4294901760
    %3690 = vmatpush1.xpose.msra.mxu0 %v3689
    %3691 = vmatprep.subr.mxu0 0.0
    %3692 = vmatpush2.xpose.msra.mxu0 0.0
    %3693 = vmatprep.subr.mxu0 0.0
    %3694 = vmatpush2.xpose.msra.mxu0 0.0
    %3695 = vmatprep.subr.mxu0 0.0
    %3696 = vmatpush2.xpose.msra.mxu0 0.0
    %3697 = vmatprep.subr.mxu0 0.0
    %3698 = vmatpush2.xpose.msra.mxu0 0.0
    %3699 = vmatprep.subr.mxu0 0.0
    %3700 = vmatpush2.xpose.msra.mxu0 0.0
    %3701 = vmatprep.subr.mxu0 0.0
    %3702 = vmatpush2.xpose.msra.mxu0 0.0
    %3703 = vmatprep.subr.mxu0 0.0
    %3704 = vmatpush2.xpose.msra.mxu0 0.0
    %3705 = vmatprep.subr.mxu0 0.0
    %3706 = vmatpush2.xpose.msra.mxu0 0.0
    %3707 = vmatprep.subr.mxu0 0.0
    %3708 = vmatpush2.xpose.msra.mxu0 0.0
    %3709 = vmatprep.subr.mxu0 0.0
    %3710 = vmatpush2.xpose.msra.mxu0 0.0
    %3711 = vmatprep.subr.mxu0 0.0
    %3712 = vmatpush2.xpose.msra.mxu0 0.0
    %3713 = vmatprep.subr.mxu0 0.0
    %3714 = vmatpush2.xpose.msra.mxu0 0.0
    %3715 = vmatprep.subr.mxu0 0.0
    %3716 = vmatpush2.xpose.msra.mxu0 0.0
    %3717 = vmatprep.subr.mxu0 0.0
    %3718 = vmatpush2.xpose.msra.mxu0 0.0
    %3719 = vmatprep.subr.mxu0 0.0
    %3720 = vmatpush2.xpose.msra.mxu0 0.0
    %3721 = vmatprep.subr.mxu0 0.0
    %3722 = vmatpush2.xpose.msra.mxu0 0.0
    %3723 = vmatprep.mubr.f32.mxu0 0.0
    %v3724 = vand.u32 %v3352, 4294901760
    %3725 = vmatmul.mubr.f32.gmra.mxu0 %v3724
    %v3726 = vpop.f32.mrf.mxu0
    %v3727 = vadd.f32 %v3653, %v3726
    %v3728 = vpop.f32.mrf.mxu0
    %3729 = vdwg.mxu0
    %3730 = vmatprep.subr.mxu0 0.0
    %3731 = vmatpush1.xpose.msra.mxu0 0.0
    %3732 = vmatprep.subr.mxu0 0.0
    %3733 = vmatpush1.xpose.msra.mxu0 0.0
    %3734 = vmatprep.subr.mxu0 0.0
    %3735 = vmatpush1.xpose.msra.mxu0 0.0
    %3736 = vmatprep.subr.mxu0 0.0
    %3737 = vmatpush1.xpose.msra.mxu0 0.0
    %3738 = vmatprep.subr.mxu0 0.0
    %3739 = vmatpush1.xpose.msra.mxu0 0.0
    %3740 = vmatprep.subr.mxu0 0.0
    %3741 = vmatpush1.xpose.msra.mxu0 0.0
    %3742 = vmatprep.subr.mxu0 0.0
    %3743 = vmatpush1.xpose.msra.mxu0 0.0
    %3744 = vmatprep.subr.mxu0 0.0
    %3745 = vmatpush1.xpose.msra.mxu0 0.0
    %3746 = vmatprep.subr.mxu0 0.0
    %3747 = vmatpush1.xpose.msra.mxu0 0.0
    %3748 = vmatprep.subr.mxu0 0.0
    %3749 = vmatpush1.xpose.msra.mxu0 0.0
    %3750 = vmatprep.subr.mxu0 0.0
    %3751 = vmatpush1.xpose.msra.mxu0 0.0
    %3752 = vmatprep.subr.mxu0 0.0
    %3753 = vmatpush1.xpose.msra.mxu0 0.0
    %3754 = vmatprep.subr.mxu0 0.0
    %3755 = vmatpush1.xpose.msra.mxu0 0.0
    %3756 = vmatprep.subr.mxu0 0.0
    %3757 = vmatpush1.xpose.msra.mxu0 0.0
    %3758 = vmatprep.subr.mxu0 0.0
    %3759 = vmatpush1.xpose.msra.mxu0 0.0
    %3760 = vmatprep.subr.mxu0 0.0
    %v3761 = vand.u32 %v3354, 4294901760
    %3762 = vmatpush1.xpose.msra.mxu0 %v3761
    %3763 = vmatprep.subr.mxu0 0.0
    %3764 = vmatpush2.xpose.msra.mxu0 0.0
    %3765 = vmatprep.subr.mxu0 0.0
    %3766 = vmatpush2.xpose.msra.mxu0 0.0
    %3767 = vmatprep.subr.mxu0 0.0
    %3768 = vmatpush2.xpose.msra.mxu0 0.0
    %3769 = vmatprep.subr.mxu0 0.0
    %3770 = vmatpush2.xpose.msra.mxu0 0.0
    %3771 = vmatprep.subr.mxu0 0.0
    %3772 = vmatpush2.xpose.msra.mxu0 0.0
    %3773 = vmatprep.subr.mxu0 0.0
    %3774 = vmatpush2.xpose.msra.mxu0 0.0
    %3775 = vmatprep.subr.mxu0 0.0
    %3776 = vmatpush2.xpose.msra.mxu0 0.0
    %3777 = vmatprep.subr.mxu0 0.0
    %3778 = vmatpush2.xpose.msra.mxu0 0.0
    %3779 = vmatprep.subr.mxu0 0.0
    %3780 = vmatpush2.xpose.msra.mxu0 0.0
    %3781 = vmatprep.subr.mxu0 0.0
    %3782 = vmatpush2.xpose.msra.mxu0 0.0
    %3783 = vmatprep.subr.mxu0 0.0
    %3784 = vmatpush2.xpose.msra.mxu0 0.0
    %3785 = vmatprep.subr.mxu0 0.0
    %3786 = vmatpush2.xpose.msra.mxu0 0.0
    %3787 = vmatprep.subr.mxu0 0.0
    %3788 = vmatpush2.xpose.msra.mxu0 0.0
    %3789 = vmatprep.subr.mxu0 0.0
    %3790 = vmatpush2.xpose.msra.mxu0 0.0
    %3791 = vmatprep.subr.mxu0 0.0
    %3792 = vmatpush2.xpose.msra.mxu0 0.0
    %3793 = vmatprep.subr.mxu0 0.0
    %3794 = vmatpush2.xpose.msra.mxu0 0.0
    %3795 = vmatprep.mubr.f32.mxu0 0.0
    %v3796 = vand.u32 %v3352, 4294901760
    %3797 = vmatmul.mubr.f32.gmra.mxu0 %v3796
    %v3798 = vpop.f32.mrf.mxu0
    %v3799 = vadd.f32 %v3727, %v3798
    %v3800 = vpop.f32.mrf.mxu0
    %3801 = vdwg.mxu0
    %3802 = vrot.lane.b32.xlu0 %v628, 96
    %v3803 = vpop.permute.xlu0 %3802
    %v3804 = vsel %vm639, %v628, 0
    %v3806 = vsel %vm639, %v3803, 0
    %3808 = vmatprep.subr.mxu0 0.0
    %3809 = vmatpush1.xpose.msra.mxu0 0.0
    %3810 = vmatprep.subr.mxu0 0.0
    %3811 = vmatpush1.xpose.msra.mxu0 0.0
    %3812 = vmatprep.subr.mxu0 0.0
    %3813 = vmatpush1.xpose.msra.mxu0 0.0
    %3814 = vmatprep.subr.mxu0 0.0
    %3815 = vmatpush1.xpose.msra.mxu0 0.0
    %3816 = vmatprep.subr.mxu0 0.0
    %3817 = vmatpush1.xpose.msra.mxu0 0.0
    %3818 = vmatprep.subr.mxu0 0.0
    %3819 = vmatpush1.xpose.msra.mxu0 0.0
    %3820 = vmatprep.subr.mxu0 0.0
    %3821 = vmatpush1.xpose.msra.mxu0 0.0
    %3822 = vmatprep.subr.mxu0 0.0
    %3823 = vmatpush1.xpose.msra.mxu0 0.0
    %3824 = vmatprep.subr.mxu0 0.0
    %3825 = vmatpush1.xpose.msra.mxu0 0.0
    %3826 = vmatprep.subr.mxu0 0.0
    %3827 = vmatpush1.xpose.msra.mxu0 0.0
    %3828 = vmatprep.subr.mxu0 0.0
    %3829 = vmatpush1.xpose.msra.mxu0 0.0
    %3830 = vmatprep.subr.mxu0 0.0
    %3831 = vmatpush1.xpose.msra.mxu0 0.0
    %3832 = vmatprep.subr.mxu0 0.0
    %3833 = vmatpush1.xpose.msra.mxu0 0.0
    %3834 = vmatprep.subr.mxu0 0.0
    %3835 = vmatpush1.xpose.msra.mxu0 0.0
    %3836 = vmatprep.subr.mxu0 0.0
    %3837 = vmatpush1.xpose.msra.mxu0 0.0
    %3838 = vmatprep.subr.mxu0 0.0
    %v3839 = vand.u32 %v3806, 4294901760
    %3840 = vmatpush1.xpose.msra.mxu0 %v3839
    %3841 = vmatprep.subr.mxu0 0.0
    %3842 = vmatpush2.xpose.msra.mxu0 0.0
    %3843 = vmatprep.subr.mxu0 0.0
    %3844 = vmatpush2.xpose.msra.mxu0 0.0
    %3845 = vmatprep.subr.mxu0 0.0
    %3846 = vmatpush2.xpose.msra.mxu0 0.0
    %3847 = vmatprep.subr.mxu0 0.0
    %3848 = vmatpush2.xpose.msra.mxu0 0.0
    %3849 = vmatprep.subr.mxu0 0.0
    %3850 = vmatpush2.xpose.msra.mxu0 0.0
    %3851 = vmatprep.subr.mxu0 0.0
    %3852 = vmatpush2.xpose.msra.mxu0 0.0
    %3853 = vmatprep.subr.mxu0 0.0
    %3854 = vmatpush2.xpose.msra.mxu0 0.0
    %3855 = vmatprep.subr.mxu0 0.0
    %3856 = vmatpush2.xpose.msra.mxu0 0.0
    %3857 = vmatprep.subr.mxu0 0.0
    %3858 = vmatpush2.xpose.msra.mxu0 0.0
    %3859 = vmatprep.subr.mxu0 0.0
    %3860 = vmatpush2.xpose.msra.mxu0 0.0
    %3861 = vmatprep.subr.mxu0 0.0
    %3862 = vmatpush2.xpose.msra.mxu0 0.0
    %3863 = vmatprep.subr.mxu0 0.0
    %3864 = vmatpush2.xpose.msra.mxu0 0.0
    %3865 = vmatprep.subr.mxu0 0.0
    %3866 = vmatpush2.xpose.msra.mxu0 0.0
    %3867 = vmatprep.subr.mxu0 0.0
    %3868 = vmatpush2.xpose.msra.mxu0 0.0
    %3869 = vmatprep.subr.mxu0 0.0
    %3870 = vmatpush2.xpose.msra.mxu0 0.0
    %3871 = vmatprep.subr.mxu0 0.0
    %3872 = vmatpush2.xpose.msra.mxu0 0.0
    %3873 = vmatprep.mubr.f32.mxu0 0.0
    %v3874 = vand.u32 %v3804, 4294901760
    %v3875 = vsub.f32 %v3804, %v3874
    %v3876 = vand.u32 %v3875, 4294901760
    %v3877 = vsub.f32 %v3875, %v3876
    %v3878 = vand.u32 %v3877, 4294901760
    %3879 = vmatmul.mubr.f32.gmra.mxu0 %v3878
    %v3880 = vpop.f32.mrf.mxu0
    %v3881 = vadd.f32 0.0, %v3880
    %v3882 = vpop.f32.mrf.mxu0
    %3883 = vdwg.mxu0
    %3884 = vmatprep.subr.mxu0 0.0
    %3885 = vmatpush1.xpose.msra.mxu0 0.0
    %3886 = vmatprep.subr.mxu0 0.0
    %3887 = vmatpush1.xpose.msra.mxu0 0.0
    %3888 = vmatprep.subr.mxu0 0.0
    %3889 = vmatpush1.xpose.msra.mxu0 0.0
    %3890 = vmatprep.subr.mxu0 0.0
    %3891 = vmatpush1.xpose.msra.mxu0 0.0
    %3892 = vmatprep.subr.mxu0 0.0
    %3893 = vmatpush1.xpose.msra.mxu0 0.0
    %3894 = vmatprep.subr.mxu0 0.0
    %3895 = vmatpush1.xpose.msra.mxu0 0.0
    %3896 = vmatprep.subr.mxu0 0.0
    %3897 = vmatpush1.xpose.msra.mxu0 0.0
    %3898 = vmatprep.subr.mxu0 0.0
    %3899 = vmatpush1.xpose.msra.mxu0 0.0
    %3900 = vmatprep.subr.mxu0 0.0
    %3901 = vmatpush1.xpose.msra.mxu0 0.0
    %3902 = vmatprep.subr.mxu0 0.0
    %3903 = vmatpush1.xpose.msra.mxu0 0.0
    %3904 = vmatprep.subr.mxu0 0.0
    %3905 = vmatpush1.xpose.msra.mxu0 0.0
    %3906 = vmatprep.subr.mxu0 0.0
    %3907 = vmatpush1.xpose.msra.mxu0 0.0
    %3908 = vmatprep.subr.mxu0 0.0
    %3909 = vmatpush1.xpose.msra.mxu0 0.0
    %3910 = vmatprep.subr.mxu0 0.0
    %3911 = vmatpush1.xpose.msra.mxu0 0.0
    %3912 = vmatprep.subr.mxu0 0.0
    %3913 = vmatpush1.xpose.msra.mxu0 0.0
    %3914 = vmatprep.subr.mxu0 0.0
    %v3915 = vand.u32 %v3806, 4294901760
    %v3916 = vsub.f32 %v3806, %v3915
    %v3917 = vand.u32 %v3916, 4294901760
    %v3918 = vsub.f32 %v3916, %v3917
    %v3919 = vand.u32 %v3918, 4294901760
    %3920 = vmatpush1.xpose.msra.mxu0 %v3919
    %3921 = vmatprep.subr.mxu0 0.0
    %3922 = vmatpush2.xpose.msra.mxu0 0.0
    %3923 = vmatprep.subr.mxu0 0.0
    %3924 = vmatpush2.xpose.msra.mxu0 0.0
    %3925 = vmatprep.subr.mxu0 0.0
    %3926 = vmatpush2.xpose.msra.mxu0 0.0
    %3927 = vmatprep.subr.mxu0 0.0
    %3928 = vmatpush2.xpose.msra.mxu0 0.0
    %3929 = vmatprep.subr.mxu0 0.0
    %3930 = vmatpush2.xpose.msra.mxu0 0.0
    %3931 = vmatprep.subr.mxu0 0.0
    %3932 = vmatpush2.xpose.msra.mxu0 0.0
    %3933 = vmatprep.subr.mxu0 0.0
    %3934 = vmatpush2.xpose.msra.mxu0 0.0
    %3935 = vmatprep.subr.mxu0 0.0
    %3936 = vmatpush2.xpose.msra.mxu0 0.0
    %3937 = vmatprep.subr.mxu0 0.0
    %3938 = vmatpush2.xpose.msra.mxu0 0.0
    %3939 = vmatprep.subr.mxu0 0.0
    %3940 = vmatpush2.xpose.msra.mxu0 0.0
    %3941 = vmatprep.subr.mxu0 0.0
    %3942 = vmatpush2.xpose.msra.mxu0 0.0
    %3943 = vmatprep.subr.mxu0 0.0
    %3944 = vmatpush2.xpose.msra.mxu0 0.0
    %3945 = vmatprep.subr.mxu0 0.0
    %3946 = vmatpush2.xpose.msra.mxu0 0.0
    %3947 = vmatprep.subr.mxu0 0.0
    %3948 = vmatpush2.xpose.msra.mxu0 0.0
    %3949 = vmatprep.subr.mxu0 0.0
    %3950 = vmatpush2.xpose.msra.mxu0 0.0
    %3951 = vmatprep.subr.mxu0 0.0
    %3952 = vmatpush2.xpose.msra.mxu0 0.0
    %3953 = vmatprep.mubr.f32.mxu0 0.0
    %v3954 = vand.u32 %v3804, 4294901760
    %3955 = vmatmul.mubr.f32.gmra.mxu0 %v3954
    %v3956 = vpop.f32.mrf.mxu0
    %v3957 = vadd.f32 %v3881, %v3956
    %v3958 = vpop.f32.mrf.mxu0
    %3959 = vdwg.mxu0
    %3960 = vmatprep.subr.mxu0 0.0
    %3961 = vmatpush1.xpose.msra.mxu0 0.0
    %3962 = vmatprep.subr.mxu0 0.0
    %3963 = vmatpush1.xpose.msra.mxu0 0.0
    %3964 = vmatprep.subr.mxu0 0.0
    %3965 = vmatpush1.xpose.msra.mxu0 0.0
    %3966 = vmatprep.subr.mxu0 0.0
    %3967 = vmatpush1.xpose.msra.mxu0 0.0
    %3968 = vmatprep.subr.mxu0 0.0
    %3969 = vmatpush1.xpose.msra.mxu0 0.0
    %3970 = vmatprep.subr.mxu0 0.0
    %3971 = vmatpush1.xpose.msra.mxu0 0.0
    %3972 = vmatprep.subr.mxu0 0.0
    %3973 = vmatpush1.xpose.msra.mxu0 0.0
    %3974 = vmatprep.subr.mxu0 0.0
    %3975 = vmatpush1.xpose.msra.mxu0 0.0
    %3976 = vmatprep.subr.mxu0 0.0
    %3977 = vmatpush1.xpose.msra.mxu0 0.0
    %3978 = vmatprep.subr.mxu0 0.0
    %3979 = vmatpush1.xpose.msra.mxu0 0.0
    %3980 = vmatprep.subr.mxu0 0.0
    %3981 = vmatpush1.xpose.msra.mxu0 0.0
    %3982 = vmatprep.subr.mxu0 0.0
    %3983 = vmatpush1.xpose.msra.mxu0 0.0
    %3984 = vmatprep.subr.mxu0 0.0
    %3985 = vmatpush1.xpose.msra.mxu0 0.0
    %3986 = vmatprep.subr.mxu0 0.0
    %3987 = vmatpush1.xpose.msra.mxu0 0.0
    %3988 = vmatprep.subr.mxu0 0.0
    %3989 = vmatpush1.xpose.msra.mxu0 0.0
    %3990 = vmatprep.subr.mxu0 0.0
    %v3991 = vand.u32 %v3806, 4294901760
    %v3992 = vsub.f32 %v3806, %v3991
    %3993 = vmatpush1.xpose.msra.mxu0 %v3992
    %3994 = vmatprep.subr.mxu0 0.0
    %3995 = vmatpush2.xpose.msra.mxu0 0.0
    %3996 = vmatprep.subr.mxu0 0.0
    %3997 = vmatpush2.xpose.msra.mxu0 0.0
    %3998 = vmatprep.subr.mxu0 0.0
    %3999 = vmatpush2.xpose.msra.mxu0 0.0
    %4000 = vmatprep.subr.mxu0 0.0
    %4001 = vmatpush2.xpose.msra.mxu0 0.0
    %4002 = vmatprep.subr.mxu0 0.0
    %4003 = vmatpush2.xpose.msra.mxu0 0.0
    %4004 = vmatprep.subr.mxu0 0.0
    %4005 = vmatpush2.xpose.msra.mxu0 0.0
    %4006 = vmatprep.subr.mxu0 0.0
    %4007 = vmatpush2.xpose.msra.mxu0 0.0
    %4008 = vmatprep.subr.mxu0 0.0
    %4009 = vmatpush2.xpose.msra.mxu0 0.0
    %4010 = vmatprep.subr.mxu0 0.0
    %4011 = vmatpush2.xpose.msra.mxu0 0.0
    %4012 = vmatprep.subr.mxu0 0.0
    %4013 = vmatpush2.xpose.msra.mxu0 0.0
    %4014 = vmatprep.subr.mxu0 0.0
    %4015 = vmatpush2.xpose.msra.mxu0 0.0
    %4016 = vmatprep.subr.mxu0 0.0
    %4017 = vmatpush2.xpose.msra.mxu0 0.0
    %4018 = vmatprep.subr.mxu0 0.0
    %4019 = vmatpush2.xpose.msra.mxu0 0.0
    %4020 = vmatprep.subr.mxu0 0.0
    %4021 = vmatpush2.xpose.msra.mxu0 0.0
    %4022 = vmatprep.subr.mxu0 0.0
    %4023 = vmatpush2.xpose.msra.mxu0 0.0
    %4024 = vmatprep.subr.mxu0 0.0
    %4025 = vmatpush2.xpose.msra.mxu0 0.0
    %4026 = vmatprep.mubr.f32.mxu0 0.0
    %v4027 = vand.u32 %v3804, 4294901760
    %v4028 = vsub.f32 %v3804, %v4027
    %4029 = vmatmul.mubr.f32.gmra.mxu0 %v4028
    %v4030 = vpop.f32.mrf.mxu0
    %v4031 = vadd.f32 %v3957, %v4030
    %v4032 = vpop.f32.mrf.mxu0
    %4033 = vdwg.mxu0
    %4034 = vmatprep.subr.mxu0 0.0
    %4035 = vmatpush1.xpose.msra.mxu0 0.0
    %4036 = vmatprep.subr.mxu0 0.0
    %4037 = vmatpush1.xpose.msra.mxu0 0.0
    %4038 = vmatprep.subr.mxu0 0.0
    %4039 = vmatpush1.xpose.msra.mxu0 0.0
    %4040 = vmatprep.subr.mxu0 0.0
    %4041 = vmatpush1.xpose.msra.mxu0 0.0
    %4042 = vmatprep.subr.mxu0 0.0
    %4043 = vmatpush1.xpose.msra.mxu0 0.0
    %4044 = vmatprep.subr.mxu0 0.0
    %4045 = vmatpush1.xpose.msra.mxu0 0.0
    %4046 = vmatprep.subr.mxu0 0.0
    %4047 = vmatpush1.xpose.msra.mxu0 0.0
    %4048 = vmatprep.subr.mxu0 0.0
    %4049 = vmatpush1.xpose.msra.mxu0 0.0
    %4050 = vmatprep.subr.mxu0 0.0
    %4051 = vmatpush1.xpose.msra.mxu0 0.0
    %4052 = vmatprep.subr.mxu0 0.0
    %4053 = vmatpush1.xpose.msra.mxu0 0.0
    %4054 = vmatprep.subr.mxu0 0.0
    %4055 = vmatpush1.xpose.msra.mxu0 0.0
    %4056 = vmatprep.subr.mxu0 0.0
    %4057 = vmatpush1.xpose.msra.mxu0 0.0
    %4058 = vmatprep.subr.mxu0 0.0
    %4059 = vmatpush1.xpose.msra.mxu0 0.0
    %4060 = vmatprep.subr.mxu0 0.0
    %4061 = vmatpush1.xpose.msra.mxu0 0.0
    %4062 = vmatprep.subr.mxu0 0.0
    %4063 = vmatpush1.xpose.msra.mxu0 0.0
    %4064 = vmatprep.subr.mxu0 0.0
    %v4065 = vand.u32 %v3806, 4294901760
    %4066 = vmatpush1.xpose.msra.mxu0 %v4065
    %4067 = vmatprep.subr.mxu0 0.0
    %4068 = vmatpush2.xpose.msra.mxu0 0.0
    %4069 = vmatprep.subr.mxu0 0.0
    %4070 = vmatpush2.xpose.msra.mxu0 0.0
    %4071 = vmatprep.subr.mxu0 0.0
    %4072 = vmatpush2.xpose.msra.mxu0 0.0
    %4073 = vmatprep.subr.mxu0 0.0
    %4074 = vmatpush2.xpose.msra.mxu0 0.0
    %4075 = vmatprep.subr.mxu0 0.0
    %4076 = vmatpush2.xpose.msra.mxu0 0.0
    %4077 = vmatprep.subr.mxu0 0.0
    %4078 = vmatpush2.xpose.msra.mxu0 0.0
    %4079 = vmatprep.subr.mxu0 0.0
    %4080 = vmatpush2.xpose.msra.mxu0 0.0
    %4081 = vmatprep.subr.mxu0 0.0
    %4082 = vmatpush2.xpose.msra.mxu0 0.0
    %4083 = vmatprep.subr.mxu0 0.0
    %4084 = vmatpush2.xpose.msra.mxu0 0.0
    %4085 = vmatprep.subr.mxu0 0.0
    %4086 = vmatpush2.xpose.msra.mxu0 0.0
    %4087 = vmatprep.subr.mxu0 0.0
    %4088 = vmatpush2.xpose.msra.mxu0 0.0
    %4089 = vmatprep.subr.mxu0 0.0
    %4090 = vmatpush2.xpose.msra.mxu0 0.0
    %4091 = vmatprep.subr.mxu0 0.0
    %4092 = vmatpush2.xpose.msra.mxu0 0.0
    %4093 = vmatprep.subr.mxu0 0.0
    %4094 = vmatpush2.xpose.msra.mxu0 0.0
    %4095 = vmatprep.subr.mxu0 0.0
    %4096 = vmatpush2.xpose.msra.mxu0 0.0
    %4097 = vmatprep.subr.mxu0 0.0
    %4098 = vmatpush2.xpose.msra.mxu0 0.0
    %4099 = vmatprep.mubr.f32.mxu0 0.0
    %v4100 = vand.u32 %v3804, 4294901760
    %v4101 = vsub.f32 %v3804, %v4100
    %v4102 = vand.u32 %v4101, 4294901760
    %4103 = vmatmul.mubr.f32.gmra.mxu0 %v4102
    %v4104 = vpop.f32.mrf.mxu0
    %v4105 = vadd.f32 %v4031, %v4104
    %v4106 = vpop.f32.mrf.mxu0
    %4107 = vdwg.mxu0
    %4108 = vmatprep.subr.mxu0 0.0
    %4109 = vmatpush1.xpose.msra.mxu0 0.0
    %4110 = vmatprep.subr.mxu0 0.0
    %4111 = vmatpush1.xpose.msra.mxu0 0.0
    %4112 = vmatprep.subr.mxu0 0.0
    %4113 = vmatpush1.xpose.msra.mxu0 0.0
    %4114 = vmatprep.subr.mxu0 0.0
    %4115 = vmatpush1.xpose.msra.mxu0 0.0
    %4116 = vmatprep.subr.mxu0 0.0
    %4117 = vmatpush1.xpose.msra.mxu0 0.0
    %4118 = vmatprep.subr.mxu0 0.0
    %4119 = vmatpush1.xpose.msra.mxu0 0.0
    %4120 = vmatprep.subr.mxu0 0.0
    %4121 = vmatpush1.xpose.msra.mxu0 0.0
    %4122 = vmatprep.subr.mxu0 0.0
    %4123 = vmatpush1.xpose.msra.mxu0 0.0
    %4124 = vmatprep.subr.mxu0 0.0
    %4125 = vmatpush1.xpose.msra.mxu0 0.0
    %4126 = vmatprep.subr.mxu0 0.0
    %4127 = vmatpush1.xpose.msra.mxu0 0.0
    %4128 = vmatprep.subr.mxu0 0.0
    %4129 = vmatpush1.xpose.msra.mxu0 0.0
    %4130 = vmatprep.subr.mxu0 0.0
    %4131 = vmatpush1.xpose.msra.mxu0 0.0
    %4132 = vmatprep.subr.mxu0 0.0
    %4133 = vmatpush1.xpose.msra.mxu0 0.0
    %4134 = vmatprep.subr.mxu0 0.0
    %4135 = vmatpush1.xpose.msra.mxu0 0.0
    %4136 = vmatprep.subr.mxu0 0.0
    %4137 = vmatpush1.xpose.msra.mxu0 0.0
    %4138 = vmatprep.subr.mxu0 0.0
    %v4139 = vand.u32 %v3806, 4294901760
    %v4140 = vsub.f32 %v3806, %v4139
    %v4141 = vand.u32 %v4140, 4294901760
    %4142 = vmatpush1.xpose.msra.mxu0 %v4141
    %4143 = vmatprep.subr.mxu0 0.0
    %4144 = vmatpush2.xpose.msra.mxu0 0.0
    %4145 = vmatprep.subr.mxu0 0.0
    %4146 = vmatpush2.xpose.msra.mxu0 0.0
    %4147 = vmatprep.subr.mxu0 0.0
    %4148 = vmatpush2.xpose.msra.mxu0 0.0
    %4149 = vmatprep.subr.mxu0 0.0
    %4150 = vmatpush2.xpose.msra.mxu0 0.0
    %4151 = vmatprep.subr.mxu0 0.0
    %4152 = vmatpush2.xpose.msra.mxu0 0.0
    %4153 = vmatprep.subr.mxu0 0.0
    %4154 = vmatpush2.xpose.msra.mxu0 0.0
    %4155 = vmatprep.subr.mxu0 0.0
    %4156 = vmatpush2.xpose.msra.mxu0 0.0
    %4157 = vmatprep.subr.mxu0 0.0
    %4158 = vmatpush2.xpose.msra.mxu0 0.0
    %4159 = vmatprep.subr.mxu0 0.0
    %4160 = vmatpush2.xpose.msra.mxu0 0.0
    %4161 = vmatprep.subr.mxu0 0.0
    %4162 = vmatpush2.xpose.msra.mxu0 0.0
    %4163 = vmatprep.subr.mxu0 0.0
    %4164 = vmatpush2.xpose.msra.mxu0 0.0
    %4165 = vmatprep.subr.mxu0 0.0
    %4166 = vmatpush2.xpose.msra.mxu0 0.0
    %4167 = vmatprep.subr.mxu0 0.0
    %4168 = vmatpush2.xpose.msra.mxu0 0.0
    %4169 = vmatprep.subr.mxu0 0.0
    %4170 = vmatpush2.xpose.msra.mxu0 0.0
    %4171 = vmatprep.subr.mxu0 0.0
    %4172 = vmatpush2.xpose.msra.mxu0 0.0
    %4173 = vmatprep.subr.mxu0 0.0
    %4174 = vmatpush2.xpose.msra.mxu0 0.0
    %4175 = vmatprep.mubr.f32.mxu0 0.0
    %v4176 = vand.u32 %v3804, 4294901760
    %4177 = vmatmul.mubr.f32.gmra.mxu0 %v4176
    %v4178 = vpop.f32.mrf.mxu0
    %v4179 = vadd.f32 %v4105, %v4178
    %v4180 = vpop.f32.mrf.mxu0
    %4181 = vdwg.mxu0
    %4182 = vmatprep.subr.mxu0 0.0
    %4183 = vmatpush1.xpose.msra.mxu0 0.0
    %4184 = vmatprep.subr.mxu0 0.0
    %4185 = vmatpush1.xpose.msra.mxu0 0.0
    %4186 = vmatprep.subr.mxu0 0.0
    %4187 = vmatpush1.xpose.msra.mxu0 0.0
    %4188 = vmatprep.subr.mxu0 0.0
    %4189 = vmatpush1.xpose.msra.mxu0 0.0
    %4190 = vmatprep.subr.mxu0 0.0
    %4191 = vmatpush1.xpose.msra.mxu0 0.0
    %4192 = vmatprep.subr.mxu0 0.0
    %4193 = vmatpush1.xpose.msra.mxu0 0.0
    %4194 = vmatprep.subr.mxu0 0.0
    %4195 = vmatpush1.xpose.msra.mxu0 0.0
    %4196 = vmatprep.subr.mxu0 0.0
    %4197 = vmatpush1.xpose.msra.mxu0 0.0
    %4198 = vmatprep.subr.mxu0 0.0
    %4199 = vmatpush1.xpose.msra.mxu0 0.0
    %4200 = vmatprep.subr.mxu0 0.0
    %4201 = vmatpush1.xpose.msra.mxu0 0.0
    %4202 = vmatprep.subr.mxu0 0.0
    %4203 = vmatpush1.xpose.msra.mxu0 0.0
    %4204 = vmatprep.subr.mxu0 0.0
    %4205 = vmatpush1.xpose.msra.mxu0 0.0
    %4206 = vmatprep.subr.mxu0 0.0
    %4207 = vmatpush1.xpose.msra.mxu0 0.0
    %4208 = vmatprep.subr.mxu0 0.0
    %4209 = vmatpush1.xpose.msra.mxu0 0.0
    %4210 = vmatprep.subr.mxu0 0.0
    %4211 = vmatpush1.xpose.msra.mxu0 0.0
    %4212 = vmatprep.subr.mxu0 0.0
    %v4213 = vand.u32 %v3806, 4294901760
    %4214 = vmatpush1.xpose.msra.mxu0 %v4213
    %4215 = vmatprep.subr.mxu0 0.0
    %4216 = vmatpush2.xpose.msra.mxu0 0.0
    %4217 = vmatprep.subr.mxu0 0.0
    %4218 = vmatpush2.xpose.msra.mxu0 0.0
    %4219 = vmatprep.subr.mxu0 0.0
    %4220 = vmatpush2.xpose.msra.mxu0 0.0
    %4221 = vmatprep.subr.mxu0 0.0
    %4222 = vmatpush2.xpose.msra.mxu0 0.0
    %4223 = vmatprep.subr.mxu0 0.0
    %4224 = vmatpush2.xpose.msra.mxu0 0.0
    %4225 = vmatprep.subr.mxu0 0.0
    %4226 = vmatpush2.xpose.msra.mxu0 0.0
    %4227 = vmatprep.subr.mxu0 0.0
    %4228 = vmatpush2.xpose.msra.mxu0 0.0
    %4229 = vmatprep.subr.mxu0 0.0
    %4230 = vmatpush2.xpose.msra.mxu0 0.0
    %4231 = vmatprep.subr.mxu0 0.0
    %4232 = vmatpush2.xpose.msra.mxu0 0.0
    %4233 = vmatprep.subr.mxu0 0.0
    %4234 = vmatpush2.xpose.msra.mxu0 0.0
    %4235 = vmatprep.subr.mxu0 0.0
    %4236 = vmatpush2.xpose.msra.mxu0 0.0
    %4237 = vmatprep.subr.mxu0 0.0
    %4238 = vmatpush2.xpose.msra.mxu0 0.0
    %4239 = vmatprep.subr.mxu0 0.0
    %4240 = vmatpush2.xpose.msra.mxu0 0.0
    %4241 = vmatprep.subr.mxu0 0.0
    %4242 = vmatpush2.xpose.msra.mxu0 0.0
    %4243 = vmatprep.subr.mxu0 0.0
    %4244 = vmatpush2.xpose.msra.mxu0 0.0
    %4245 = vmatprep.subr.mxu0 0.0
    %4246 = vmatpush2.xpose.msra.mxu0 0.0
    %4247 = vmatprep.mubr.f32.mxu0 0.0
    %v4248 = vand.u32 %v3804, 4294901760
    %4249 = vmatmul.mubr.f32.gmra.mxu0 %v4248
    %v4250 = vpop.f32.mrf.mxu0
    %v4251 = vadd.f32 %v4179, %v4250
    %v4252 = vpop.f32.mrf.mxu0
    %4253 = vdwg.mxu0
    %v4254 = vsel %vm636, 1, 0
    %vm4255 = vcmp.eq.s32.totalorder %v4254, 1
    %v4256 = vsel %vm4255, %v1087, -3.4028235e+38
    %v4257 = vsel %vm4255, %v1539, -3.4028235e+38
    %v4258 = vsel %vm4255, %v1991, -3.4028235e+38
    %v4259 = vsel %vm4255, %v2443, -3.4028235e+38
    %v4260 = vsel %vm4255, %v2895, -3.4028235e+38
    %v4261 = vsel %vm4255, %v3347, -3.4028235e+38
    %v4262 = vsel %vm4255, %v3799, -3.4028235e+38
    %v4263 = vsel %vm4255, %v4251, -3.4028235e+38
    %v4264 = vsel %vm639, %v4256, -inf
    %4265 = vmax.xlane.f32.xlu0 %v4264
    %v4266 = vpop.xlane.xlu0 %4265
    %v4267 = vsel %vm639, %v4257, -inf
    %4268 = vmax.xlane.f32.xlu0 %v4267
    %v4269 = vpop.xlane.xlu0 %4268
    %v4270 = vsel %vm639, %v4258, -inf
    %4271 = vmax.xlane.f32.xlu0 %v4270
    %v4272 = vpop.xlane.xlu0 %4271
    %v4273 = vsel %vm639, %v4259, -inf
    %4274 = vmax.xlane.f32.xlu0 %v4273
    %v4275 = vpop.xlane.xlu0 %4274
    %v4276 = vsel %vm639, %v4260, -inf
    %4277 = vmax.xlane.f32.xlu0 %v4276
    %v4278 = vpop.xlane.xlu0 %4277
    %v4279 = vsel %vm639, %v4261, -inf
    %4280 = vmax.xlane.f32.xlu0 %v4279
    %v4281 = vpop.xlane.xlu0 %4280
    %v4282 = vsel %vm639, %v4262, -inf
    %4283 = vmax.xlane.f32.xlu0 %v4282
    %v4284 = vpop.xlane.xlu0 %4283
    %v4285 = vsel %vm639, %v4263, -inf
    %4286 = vmax.xlane.f32.xlu0 %v4285
    %v4287 = vpop.xlane.xlu0 %4286
    %v4288 = vsub.f32 %v4256, %v4266
    %v4289 = vsub.f32 %v4257, %v4269
    %v4290 = vsub.f32 %v4258, %v4272
    %v4291 = vsub.f32 %v4259, %v4275
    %v4292 = vsub.f32 %v4260, %v4278
    %v4293 = vsub.f32 %v4261, %v4281
    %v4294 = vsub.f32 %v4262, %v4284
    %v4295 = vsub.f32 %v4263, %v4287
    %v4296 = vmul.f32 %v4288, 1.442695
    %v4297 = vpow.pop %v4296
    %v4298 = vmul.f32 %v4289, 1.442695
    %v4299 = vpow.pop %v4298
    %v4300 = vmul.f32 %v4290, 1.442695
    %v4301 = vpow.pop %v4300
    %v4302 = vmul.f32 %v4291, 1.442695
    %v4303 = vpow.pop %v4302
    %v4304 = vmul.f32 %v4292, 1.442695
    %v4305 = vpow.pop %v4304
    %v4306 = vmul.f32 %v4293, 1.442695
    %v4307 = vpow.pop %v4306
    %v4308 = vmul.f32 %v4294, 1.442695
    %v4309 = vpow.pop %v4308
    %v4310 = vmul.f32 %v4295, 1.442695
    %v4311 = vpow.pop %v4310
    %v4312 = vsel %vm639, %v4297, 0.0
    %4313 = vadd.xlane.f32.xlu0 %v4312
    %v4314 = vpop.xlane.xlu0 %4313
    %v4315 = vsel %vm639, %v4299, 0.0
    %4316 = vadd.xlane.f32.xlu0 %v4315
    %v4317 = vpop.xlane.xlu0 %4316
    %v4318 = vsel %vm639, %v4301, 0.0
    %4319 = vadd.xlane.f32.xlu0 %v4318
    %v4320 = vpop.xlane.xlu0 %4319
    %v4321 = vsel %vm639, %v4303, 0.0
    %4322 = vadd.xlane.f32.xlu0 %v4321
    %v4323 = vpop.xlane.xlu0 %4322
    %v4324 = vsel %vm639, %v4305, 0.0
    %4325 = vadd.xlane.f32.xlu0 %v4324
    %v4326 = vpop.xlane.xlu0 %4325
    %v4327 = vsel %vm639, %v4307, 0.0
    %4328 = vadd.xlane.f32.xlu0 %v4327
    %v4329 = vpop.xlane.xlu0 %4328
    %v4330 = vsel %vm639, %v4309, 0.0
    %4331 = vadd.xlane.f32.xlu0 %v4330
    %v4332 = vpop.xlane.xlu0 %4331
    %v4333 = vsel %vm639, %v4311, 0.0
    %4334 = vadd.xlane.f32.xlu0 %v4333
    %v4335 = vpop.xlane.xlu0 %4334
    %v4336 = vrcp.pop %v4314
    %v4337 = vmul.f32 %v4297, %v4336
    %v4338 = vrcp.pop %v4317
    %v4339 = vmul.f32 %v4299, %v4338
    %v4340 = vrcp.pop %v4320
    %v4341 = vmul.f32 %v4301, %v4340
    %v4342 = vrcp.pop %v4323
    %v4343 = vmul.f32 %v4303, %v4342
    %v4344 = vrcp.pop %v4326
    %v4345 = vmul.f32 %v4305, %v4344
    %v4346 = vrcp.pop %v4329
    %v4347 = vmul.f32 %v4307, %v4346
    %v4348 = vrcp.pop %v4332
    %v4349 = vmul.f32 %v4309, %v4348
    %v4350 = vrcp.pop %v4335
    %v4351 = vmul.f32 %v4311, %v4350
    %4352 = vrot.lane.b32.xlu0 %v606, 64
    %v4353 = vpop.permute.xlu0 %4352
    %v4356 = vsel %vm639, %v4337, 0
    %4358 = vmatprep.subr.mxu0 0.0
    %4359 = vmatpush1.msra.mxu0 0.0
    %4360 = vmatprep.subr.mxu0 0.0
    %4361 = vmatpush1.msra.mxu0 0.0
    %4362 = vmatprep.subr.mxu0 0.0
    %4363 = vmatpush1.msra.mxu0 0.0
    %4364 = vmatprep.subr.mxu0 0.0
    %4365 = vmatpush1.msra.mxu0 0.0
    %4366 = vmatprep.subr.mxu0 0.0
    %4367 = vmatpush1.msra.mxu0 0.0
    %4368 = vmatprep.subr.mxu0 0.0
    %4369 = vmatpush1.msra.mxu0 0.0
    %4370 = vmatprep.subr.mxu0 0.0
    %4371 = vmatpush1.msra.mxu0 0.0
    %4372 = vmatprep.subr.mxu0 0.0
    %4373 = vmatpush1.msra.mxu0 0.0
    %4374 = vmatprep.subr.mxu0 0.0
    %4375 = vmatpush1.msra.mxu0 0.0
    %4376 = vmatprep.subr.mxu0 0.0
    %4377 = vmatpush1.msra.mxu0 0.0
    %4378 = vmatprep.subr.mxu0 0.0
    %4379 = vmatpush1.msra.mxu0 0.0
    %4380 = vmatprep.subr.mxu0 0.0
    %4381 = vmatpush1.msra.mxu0 0.0
    %4382 = vmatprep.subr.mxu0 0.0
    %4383 = vmatpush1.msra.mxu0 0.0
    %4384 = vmatprep.subr.mxu0 0.0
    %4385 = vmatpush1.msra.mxu0 0.0
    %4386 = vmatprep.subr.mxu0 0.0
    %4387 = vmatpush1.msra.mxu0 0.0
    %4388 = vmatprep.subr.mxu0 0.0
    %v4389 = vand.u32 %v4353, 4294901760
    %4390 = vmatpush1.msra.mxu0 %v4389
    %4391 = vmatprep.subr.mxu0 0.0
    %4392 = vmatpush2.msra.mxu0 0.0
    %4393 = vmatprep.subr.mxu0 0.0
    %4394 = vmatpush2.msra.mxu0 0.0
    %4395 = vmatprep.subr.mxu0 0.0
    %4396 = vmatpush2.msra.mxu0 0.0
    %4397 = vmatprep.subr.mxu0 0.0
    %4398 = vmatpush2.msra.mxu0 0.0
    %4399 = vmatprep.subr.mxu0 0.0
    %4400 = vmatpush2.msra.mxu0 0.0
    %4401 = vmatprep.subr.mxu0 0.0
    %4402 = vmatpush2.msra.mxu0 0.0
    %4403 = vmatprep.subr.mxu0 0.0
    %4404 = vmatpush2.msra.mxu0 0.0
    %4405 = vmatprep.subr.mxu0 0.0
    %4406 = vmatpush2.msra.mxu0 0.0
    %4407 = vmatprep.subr.mxu0 0.0
    %4408 = vmatpush2.msra.mxu0 0.0
    %4409 = vmatprep.subr.mxu0 0.0
    %4410 = vmatpush2.msra.mxu0 0.0
    %4411 = vmatprep.subr.mxu0 0.0
    %4412 = vmatpush2.msra.mxu0 0.0
    %4413 = vmatprep.subr.mxu0 0.0
    %4414 = vmatpush2.msra.mxu0 0.0
    %4415 = vmatprep.subr.mxu0 0.0
    %4416 = vmatpush2.msra.mxu0 0.0
    %4417 = vmatprep.subr.mxu0 0.0
    %4418 = vmatpush2.msra.mxu0 0.0
    %4419 = vmatprep.subr.mxu0 0.0
    %4420 = vmatpush2.msra.mxu0 0.0
    %4421 = vmatprep.subr.mxu0 0.0
    %4422 = vmatpush2.msra.mxu0 0.0
    %4423 = vmatprep.mubr.f32.mxu0 0.0
    %v4424 = vand.u32 %v4356, 4294901760
    %v4425 = vsub.f32 %v4356, %v4424
    %v4426 = vand.u32 %v4425, 4294901760
    %v4427 = vsub.f32 %v4425, %v4426
    %v4428 = vand.u32 %v4427, 4294901760
    %4429 = vmatmul.mubr.f32.gmra.mxu0 %v4428
    %v4430 = vpop.f32.mrf.mxu0
    %v4431 = vadd.f32 0.0, %v4430
    %v4432 = vpop.f32.mrf.mxu0
    %4433 = vdwg.mxu0
    %4434 = vmatprep.subr.mxu0 0.0
    %4435 = vmatpush1.msra.mxu0 0.0
    %4436 = vmatprep.subr.mxu0 0.0
    %4437 = vmatpush1.msra.mxu0 0.0
    %4438 = vmatprep.subr.mxu0 0.0
    %4439 = vmatpush1.msra.mxu0 0.0
    %4440 = vmatprep.subr.mxu0 0.0
    %4441 = vmatpush1.msra.mxu0 0.0
    %4442 = vmatprep.subr.mxu0 0.0
    %4443 = vmatpush1.msra.mxu0 0.0
    %4444 = vmatprep.subr.mxu0 0.0
    %4445 = vmatpush1.msra.mxu0 0.0
    %4446 = vmatprep.subr.mxu0 0.0
    %4447 = vmatpush1.msra.mxu0 0.0
    %4448 = vmatprep.subr.mxu0 0.0
    %4449 = vmatpush1.msra.mxu0 0.0
    %4450 = vmatprep.subr.mxu0 0.0
    %4451 = vmatpush1.msra.mxu0 0.0
    %4452 = vmatprep.subr.mxu0 0.0
    %4453 = vmatpush1.msra.mxu0 0.0
    %4454 = vmatprep.subr.mxu0 0.0
    %4455 = vmatpush1.msra.mxu0 0.0
    %4456 = vmatprep.subr.mxu0 0.0
    %4457 = vmatpush1.msra.mxu0 0.0
    %4458 = vmatprep.subr.mxu0 0.0
    %4459 = vmatpush1.msra.mxu0 0.0
    %4460 = vmatprep.subr.mxu0 0.0
    %4461 = vmatpush1.msra.mxu0 0.0
    %4462 = vmatprep.subr.mxu0 0.0
    %4463 = vmatpush1.msra.mxu0 0.0
    %4464 = vmatprep.subr.mxu0 0.0
    %v4465 = vand.u32 %v4353, 4294901760
    %v4466 = vsub.f32 %v4353, %v4465
    %v4467 = vand.u32 %v4466, 4294901760
    %v4468 = vsub.f32 %v4466, %v4467
    %v4469 = vand.u32 %v4468, 4294901760
    %4470 = vmatpush1.msra.mxu0 %v4469
    %4471 = vmatprep.subr.mxu0 0.0
    %4472 = vmatpush2.msra.mxu0 0.0
    %4473 = vmatprep.subr.mxu0 0.0
    %4474 = vmatpush2.msra.mxu0 0.0
    %4475 = vmatprep.subr.mxu0 0.0
    %4476 = vmatpush2.msra.mxu0 0.0
    %4477 = vmatprep.subr.mxu0 0.0
    %4478 = vmatpush2.msra.mxu0 0.0
    %4479 = vmatprep.subr.mxu0 0.0
    %4480 = vmatpush2.msra.mxu0 0.0
    %4481 = vmatprep.subr.mxu0 0.0
    %4482 = vmatpush2.msra.mxu0 0.0
    %4483 = vmatprep.subr.mxu0 0.0
    %4484 = vmatpush2.msra.mxu0 0.0
    %4485 = vmatprep.subr.mxu0 0.0
    %4486 = vmatpush2.msra.mxu0 0.0
    %4487 = vmatprep.subr.mxu0 0.0
    %4488 = vmatpush2.msra.mxu0 0.0
    %4489 = vmatprep.subr.mxu0 0.0
    %4490 = vmatpush2.msra.mxu0 0.0
    %4491 = vmatprep.subr.mxu0 0.0
    %4492 = vmatpush2.msra.mxu0 0.0
    %4493 = vmatprep.subr.mxu0 0.0
    %4494 = vmatpush2.msra.mxu0 0.0
    %4495 = vmatprep.subr.mxu0 0.0
    %4496 = vmatpush2.msra.mxu0 0.0
    %4497 = vmatprep.subr.mxu0 0.0
    %4498 = vmatpush2.msra.mxu0 0.0
    %4499 = vmatprep.subr.mxu0 0.0
    %4500 = vmatpush2.msra.mxu0 0.0
    %4501 = vmatprep.subr.mxu0 0.0
    %4502 = vmatpush2.msra.mxu0 0.0
    %4503 = vmatprep.mubr.f32.mxu0 0.0
    %v4504 = vand.u32 %v4356, 4294901760
    %4505 = vmatmul.mubr.f32.gmra.mxu0 %v4504
    %v4506 = vpop.f32.mrf.mxu0
    %v4507 = vadd.f32 %v4431, %v4506
    %v4508 = vpop.f32.mrf.mxu0
    %4509 = vdwg.mxu0
    %4510 = vmatprep.subr.mxu0 0.0
    %4511 = vmatpush1.msra.mxu0 0.0
    %4512 = vmatprep.subr.mxu0 0.0
    %4513 = vmatpush1.msra.mxu0 0.0
    %4514 = vmatprep.subr.mxu0 0.0
    %4515 = vmatpush1.msra.mxu0 0.0
    %4516 = vmatprep.subr.mxu0 0.0
    %4517 = vmatpush1.msra.mxu0 0.0
    %4518 = vmatprep.subr.mxu0 0.0
    %4519 = vmatpush1.msra.mxu0 0.0
    %4520 = vmatprep.subr.mxu0 0.0
    %4521 = vmatpush1.msra.mxu0 0.0
    %4522 = vmatprep.subr.mxu0 0.0
    %4523 = vmatpush1.msra.mxu0 0.0
    %4524 = vmatprep.subr.mxu0 0.0
    %4525 = vmatpush1.msra.mxu0 0.0
    %4526 = vmatprep.subr.mxu0 0.0
    %4527 = vmatpush1.msra.mxu0 0.0
    %4528 = vmatprep.subr.mxu0 0.0
    %4529 = vmatpush1.msra.mxu0 0.0
    %4530 = vmatprep.subr.mxu0 0.0
    %4531 = vmatpush1.msra.mxu0 0.0
    %4532 = vmatprep.subr.mxu0 0.0
    %4533 = vmatpush1.msra.mxu0 0.0
    %4534 = vmatprep.subr.mxu0 0.0
    %4535 = vmatpush1.msra.mxu0 0.0
    %4536 = vmatprep.subr.mxu0 0.0
    %4537 = vmatpush1.msra.mxu0 0.0
    %4538 = vmatprep.subr.mxu0 0.0
    %4539 = vmatpush1.msra.mxu0 0.0
    %4540 = vmatprep.subr.mxu0 0.0
    %v4541 = vand.u32 %v4353, 4294901760
    %v4542 = vsub.f32 %v4353, %v4541
    %4543 = vmatpush1.msra.mxu0 %v4542
    %4544 = vmatprep.subr.mxu0 0.0
    %4545 = vmatpush2.msra.mxu0 0.0
    %4546 = vmatprep.subr.mxu0 0.0
    %4547 = vmatpush2.msra.mxu0 0.0
    %4548 = vmatprep.subr.mxu0 0.0
    %4549 = vmatpush2.msra.mxu0 0.0
    %4550 = vmatprep.subr.mxu0 0.0
    %4551 = vmatpush2.msra.mxu0 0.0
    %4552 = vmatprep.subr.mxu0 0.0
    %4553 = vmatpush2.msra.mxu0 0.0
    %4554 = vmatprep.subr.mxu0 0.0
    %4555 = vmatpush2.msra.mxu0 0.0
    %4556 = vmatprep.subr.mxu0 0.0
    %4557 = vmatpush2.msra.mxu0 0.0
    %4558 = vmatprep.subr.mxu0 0.0
    %4559 = vmatpush2.msra.mxu0 0.0
    %4560 = vmatprep.subr.mxu0 0.0
    %4561 = vmatpush2.msra.mxu0 0.0
    %4562 = vmatprep.subr.mxu0 0.0
    %4563 = vmatpush2.msra.mxu0 0.0
    %4564 = vmatprep.subr.mxu0 0.0
    %4565 = vmatpush2.msra.mxu0 0.0
    %4566 = vmatprep.subr.mxu0 0.0
    %4567 = vmatpush2.msra.mxu0 0.0
    %4568 = vmatprep.subr.mxu0 0.0
    %4569 = vmatpush2.msra.mxu0 0.0
    %4570 = vmatprep.subr.mxu0 0.0
    %4571 = vmatpush2.msra.mxu0 0.0
    %4572 = vmatprep.subr.mxu0 0.0
    %4573 = vmatpush2.msra.mxu0 0.0
    %4574 = vmatprep.subr.mxu0 0.0
    %4575 = vmatpush2.msra.mxu0 0.0
    %4576 = vmatprep.mubr.f32.mxu0 0.0
    %v4577 = vand.u32 %v4356, 4294901760
    %v4578 = vsub.f32 %v4356, %v4577
    %4579 = vmatmul.mubr.f32.gmra.mxu0 %v4578
    %v4580 = vpop.f32.mrf.mxu0
    %v4581 = vadd.f32 %v4507, %v4580
    %v4582 = vpop.f32.mrf.mxu0
    %4583 = vdwg.mxu0
    %4584 = vmatprep.subr.mxu0 0.0
    %4585 = vmatpush1.msra.mxu0 0.0
    %4586 = vmatprep.subr.mxu0 0.0
    %4587 = vmatpush1.msra.mxu0 0.0
    %4588 = vmatprep.subr.mxu0 0.0
    %4589 = vmatpush1.msra.mxu0 0.0
    %4590 = vmatprep.subr.mxu0 0.0
    %4591 = vmatpush1.msra.mxu0 0.0
    %4592 = vmatprep.subr.mxu0 0.0
    %4593 = vmatpush1.msra.mxu0 0.0
    %4594 = vmatprep.subr.mxu0 0.0
    %4595 = vmatpush1.msra.mxu0 0.0
    %4596 = vmatprep.subr.mxu0 0.0
    %4597 = vmatpush1.msra.mxu0 0.0
    %4598 = vmatprep.subr.mxu0 0.0
    %4599 = vmatpush1.msra.mxu0 0.0
    %4600 = vmatprep.subr.mxu0 0.0
    %4601 = vmatpush1.msra.mxu0 0.0
    %4602 = vmatprep.subr.mxu0 0.0
    %4603 = vmatpush1.msra.mxu0 0.0
    %4604 = vmatprep.subr.mxu0 0.0
    %4605 = vmatpush1.msra.mxu0 0.0
    %4606 = vmatprep.subr.mxu0 0.0
    %4607 = vmatpush1.msra.mxu0 0.0
    %4608 = vmatprep.subr.mxu0 0.0
    %4609 = vmatpush1.msra.mxu0 0.0
    %4610 = vmatprep.subr.mxu0 0.0
    %4611 = vmatpush1.msra.mxu0 0.0
    %4612 = vmatprep.subr.mxu0 0.0
    %4613 = vmatpush1.msra.mxu0 0.0
    %4614 = vmatprep.subr.mxu0 0.0
    %v4615 = vand.u32 %v4353, 4294901760
    %4616 = vmatpush1.msra.mxu0 %v4615
    %4617 = vmatprep.subr.mxu0 0.0
    %4618 = vmatpush2.msra.mxu0 0.0
    %4619 = vmatprep.subr.mxu0 0.0
    %4620 = vmatpush2.msra.mxu0 0.0
    %4621 = vmatprep.subr.mxu0 0.0
    %4622 = vmatpush2.msra.mxu0 0.0
    %4623 = vmatprep.subr.mxu0 0.0
    %4624 = vmatpush2.msra.mxu0 0.0
    %4625 = vmatprep.subr.mxu0 0.0
    %4626 = vmatpush2.msra.mxu0 0.0
    %4627 = vmatprep.subr.mxu0 0.0
    %4628 = vmatpush2.msra.mxu0 0.0
    %4629 = vmatprep.subr.mxu0 0.0
    %4630 = vmatpush2.msra.mxu0 0.0
    %4631 = vmatprep.subr.mxu0 0.0
    %4632 = vmatpush2.msra.mxu0 0.0
    %4633 = vmatprep.subr.mxu0 0.0
    %4634 = vmatpush2.msra.mxu0 0.0
    %4635 = vmatprep.subr.mxu0 0.0
    %4636 = vmatpush2.msra.mxu0 0.0
    %4637 = vmatprep.subr.mxu0 0.0
    %4638 = vmatpush2.msra.mxu0 0.0
    %4639 = vmatprep.subr.mxu0 0.0
    %4640 = vmatpush2.msra.mxu0 0.0
    %4641 = vmatprep.subr.mxu0 0.0
    %4642 = vmatpush2.msra.mxu0 0.0
    %4643 = vmatprep.subr.mxu0 0.0
    %4644 = vmatpush2.msra.mxu0 0.0
    %4645 = vmatprep.subr.mxu0 0.0
    %4646 = vmatpush2.msra.mxu0 0.0
    %4647 = vmatprep.subr.mxu0 0.0
    %4648 = vmatpush2.msra.mxu0 0.0
    %4649 = vmatprep.mubr.f32.mxu0 0.0
    %v4650 = vand.u32 %v4356, 4294901760
    %v4651 = vsub.f32 %v4356, %v4650
    %v4652 = vand.u32 %v4651, 4294901760
    %4653 = vmatmul.mubr.f32.gmra.mxu0 %v4652
    %v4654 = vpop.f32.mrf.mxu0
    %v4655 = vadd.f32 %v4581, %v4654
    %v4656 = vpop.f32.mrf.mxu0
    %4657 = vdwg.mxu0
    %4658 = vmatprep.subr.mxu0 0.0
    %4659 = vmatpush1.msra.mxu0 0.0
    %4660 = vmatprep.subr.mxu0 0.0
    %4661 = vmatpush1.msra.mxu0 0.0
    %4662 = vmatprep.subr.mxu0 0.0
    %4663 = vmatpush1.msra.mxu0 0.0
    %4664 = vmatprep.subr.mxu0 0.0
    %4665 = vmatpush1.msra.mxu0 0.0
    %4666 = vmatprep.subr.mxu0 0.0
    %4667 = vmatpush1.msra.mxu0 0.0
    %4668 = vmatprep.subr.mxu0 0.0
    %4669 = vmatpush1.msra.mxu0 0.0
    %4670 = vmatprep.subr.mxu0 0.0
    %4671 = vmatpush1.msra.mxu0 0.0
    %4672 = vmatprep.subr.mxu0 0.0
    %4673 = vmatpush1.msra.mxu0 0.0
    %4674 = vmatprep.subr.mxu0 0.0
    %4675 = vmatpush1.msra.mxu0 0.0
    %4676 = vmatprep.subr.mxu0 0.0
    %4677 = vmatpush1.msra.mxu0 0.0
    %4678 = vmatprep.subr.mxu0 0.0
    %4679 = vmatpush1.msra.mxu0 0.0
    %4680 = vmatprep.subr.mxu0 0.0
    %4681 = vmatpush1.msra.mxu0 0.0
    %4682 = vmatprep.subr.mxu0 0.0
    %4683 = vmatpush1.msra.mxu0 0.0
    %4684 = vmatprep.subr.mxu0 0.0
    %4685 = vmatpush1.msra.mxu0 0.0
    %4686 = vmatprep.subr.mxu0 0.0
    %4687 = vmatpush1.msra.mxu0 0.0
    %4688 = vmatprep.subr.mxu0 0.0
    %v4689 = vand.u32 %v4353, 4294901760
    %v4690 = vsub.f32 %v4353, %v4689
    %v4691 = vand.u32 %v4690, 4294901760
    %4692 = vmatpush1.msra.mxu0 %v4691
    %4693 = vmatprep.subr.mxu0 0.0
    %4694 = vmatpush2.msra.mxu0 0.0
    %4695 = vmatprep.subr.mxu0 0.0
    %4696 = vmatpush2.msra.mxu0 0.0
    %4697 = vmatprep.subr.mxu0 0.0
    %4698 = vmatpush2.msra.mxu0 0.0
    %4699 = vmatprep.subr.mxu0 0.0
    %4700 = vmatpush2.msra.mxu0 0.0
    %4701 = vmatprep.subr.mxu0 0.0
    %4702 = vmatpush2.msra.mxu0 0.0
    %4703 = vmatprep.subr.mxu0 0.0
    %4704 = vmatpush2.msra.mxu0 0.0
    %4705 = vmatprep.subr.mxu0 0.0
    %4706 = vmatpush2.msra.mxu0 0.0
    %4707 = vmatprep.subr.mxu0 0.0
    %4708 = vmatpush2.msra.mxu0 0.0
    %4709 = vmatprep.subr.mxu0 0.0
    %4710 = vmatpush2.msra.mxu0 0.0
    %4711 = vmatprep.subr.mxu0 0.0
    %4712 = vmatpush2.msra.mxu0 0.0
    %4713 = vmatprep.subr.mxu0 0.0
    %4714 = vmatpush2.msra.mxu0 0.0
    %4715 = vmatprep.subr.mxu0 0.0
    %4716 = vmatpush2.msra.mxu0 0.0
    %4717 = vmatprep.subr.mxu0 0.0
    %4718 = vmatpush2.msra.mxu0 0.0
    %4719 = vmatprep.subr.mxu0 0.0
    %4720 = vmatpush2.msra.mxu0 0.0
    %4721 = vmatprep.subr.mxu0 0.0
    %4722 = vmatpush2.msra.mxu0 0.0
    %4723 = vmatprep.subr.mxu0 0.0
    %4724 = vmatpush2.msra.mxu0 0.0
    %4725 = vmatprep.mubr.f32.mxu0 0.0
    %v4726 = vand.u32 %v4356, 4294901760
    %4727 = vmatmul.mubr.f32.gmra.mxu0 %v4726
    %v4728 = vpop.f32.mrf.mxu0
    %v4729 = vadd.f32 %v4655, %v4728
    %v4730 = vpop.f32.mrf.mxu0
    %4731 = vdwg.mxu0
    %4732 = vmatprep.subr.mxu0 0.0
    %4733 = vmatpush1.msra.mxu0 0.0
    %4734 = vmatprep.subr.mxu0 0.0
    %4735 = vmatpush1.msra.mxu0 0.0
    %4736 = vmatprep.subr.mxu0 0.0
    %4737 = vmatpush1.msra.mxu0 0.0
    %4738 = vmatprep.subr.mxu0 0.0
    %4739 = vmatpush1.msra.mxu0 0.0
    %4740 = vmatprep.subr.mxu0 0.0
    %4741 = vmatpush1.msra.mxu0 0.0
    %4742 = vmatprep.subr.mxu0 0.0
    %4743 = vmatpush1.msra.mxu0 0.0
    %4744 = vmatprep.subr.mxu0 0.0
    %4745 = vmatpush1.msra.mxu0 0.0
    %4746 = vmatprep.subr.mxu0 0.0
    %4747 = vmatpush1.msra.mxu0 0.0
    %4748 = vmatprep.subr.mxu0 0.0
    %4749 = vmatpush1.msra.mxu0 0.0
    %4750 = vmatprep.subr.mxu0 0.0
    %4751 = vmatpush1.msra.mxu0 0.0
    %4752 = vmatprep.subr.mxu0 0.0
    %4753 = vmatpush1.msra.mxu0 0.0
    %4754 = vmatprep.subr.mxu0 0.0
    %4755 = vmatpush1.msra.mxu0 0.0
    %4756 = vmatprep.subr.mxu0 0.0
    %4757 = vmatpush1.msra.mxu0 0.0
    %4758 = vmatprep.subr.mxu0 0.0
    %4759 = vmatpush1.msra.mxu0 0.0
    %4760 = vmatprep.subr.mxu0 0.0
    %4761 = vmatpush1.msra.mxu0 0.0
    %4762 = vmatprep.subr.mxu0 0.0
    %v4763 = vand.u32 %v4353, 4294901760
    %4764 = vmatpush1.msra.mxu0 %v4763
    %4765 = vmatprep.subr.mxu0 0.0
    %4766 = vmatpush2.msra.mxu0 0.0
    %4767 = vmatprep.subr.mxu0 0.0
    %4768 = vmatpush2.msra.mxu0 0.0
    %4769 = vmatprep.subr.mxu0 0.0
    %4770 = vmatpush2.msra.mxu0 0.0
    %4771 = vmatprep.subr.mxu0 0.0
    %4772 = vmatpush2.msra.mxu0 0.0
    %4773 = vmatprep.subr.mxu0 0.0
    %4774 = vmatpush2.msra.mxu0 0.0
    %4775 = vmatprep.subr.mxu0 0.0
    %4776 = vmatpush2.msra.mxu0 0.0
    %4777 = vmatprep.subr.mxu0 0.0
    %4778 = vmatpush2.msra.mxu0 0.0
    %4779 = vmatprep.subr.mxu0 0.0
    %4780 = vmatpush2.msra.mxu0 0.0
    %4781 = vmatprep.subr.mxu0 0.0
    %4782 = vmatpush2.msra.mxu0 0.0
    %4783 = vmatprep.subr.mxu0 0.0
    %4784 = vmatpush2.msra.mxu0 0.0
    %4785 = vmatprep.subr.mxu0 0.0
    %4786 = vmatpush2.msra.mxu0 0.0
    %4787 = vmatprep.subr.mxu0 0.0
    %4788 = vmatpush2.msra.mxu0 0.0
    %4789 = vmatprep.subr.mxu0 0.0
    %4790 = vmatpush2.msra.mxu0 0.0
    %4791 = vmatprep.subr.mxu0 0.0
    %4792 = vmatpush2.msra.mxu0 0.0
    %4793 = vmatprep.subr.mxu0 0.0
    %4794 = vmatpush2.msra.mxu0 0.0
    %4795 = vmatprep.subr.mxu0 0.0
    %4796 = vmatpush2.msra.mxu0 0.0
    %4797 = vmatprep.mubr.f32.mxu0 0.0
    %v4798 = vand.u32 %v4356, 4294901760
    %4799 = vmatmul.mubr.f32.gmra.mxu0 %v4798
    %v4800 = vpop.f32.mrf.mxu0
    %v4801 = vadd.f32 %v4729, %v4800
    %v4802 = vpop.f32.mrf.mxu0
    %4803 = vdwg.mxu0
    %4804 = vrot.lane.b32.xlu0 %v612, 64
    %v4805 = vpop.permute.xlu0 %4804
    %v4808 = vsel %vm639, %v4339, 0
    %4810 = vmatprep.subr.mxu0 0.0
    %4811 = vmatpush1.msra.mxu0 0.0
    %4812 = vmatprep.subr.mxu0 0.0
    %4813 = vmatpush1.msra.mxu0 0.0
    %4814 = vmatprep.subr.mxu0 0.0
    %4815 = vmatpush1.msra.mxu0 0.0
    %4816 = vmatprep.subr.mxu0 0.0
    %4817 = vmatpush1.msra.mxu0 0.0
    %4818 = vmatprep.subr.mxu0 0.0
    %4819 = vmatpush1.msra.mxu0 0.0
    %4820 = vmatprep.subr.mxu0 0.0
    %4821 = vmatpush1.msra.mxu0 0.0
    %4822 = vmatprep.subr.mxu0 0.0
    %4823 = vmatpush1.msra.mxu0 0.0
    %4824 = vmatprep.subr.mxu0 0.0
    %4825 = vmatpush1.msra.mxu0 0.0
    %4826 = vmatprep.subr.mxu0 0.0
    %4827 = vmatpush1.msra.mxu0 0.0
    %4828 = vmatprep.subr.mxu0 0.0
    %4829 = vmatpush1.msra.mxu0 0.0
    %4830 = vmatprep.subr.mxu0 0.0
    %4831 = vmatpush1.msra.mxu0 0.0
    %4832 = vmatprep.subr.mxu0 0.0
    %4833 = vmatpush1.msra.mxu0 0.0
    %4834 = vmatprep.subr.mxu0 0.0
    %4835 = vmatpush1.msra.mxu0 0.0
    %4836 = vmatprep.subr.mxu0 0.0
    %4837 = vmatpush1.msra.mxu0 0.0
    %4838 = vmatprep.subr.mxu0 0.0
    %4839 = vmatpush1.msra.mxu0 0.0
    %4840 = vmatprep.subr.mxu0 0.0
    %v4841 = vand.u32 %v4805, 4294901760
    %4842 = vmatpush1.msra.mxu0 %v4841
    %4843 = vmatprep.subr.mxu0 0.0
    %4844 = vmatpush2.msra.mxu0 0.0
    %4845 = vmatprep.subr.mxu0 0.0
    %4846 = vmatpush2.msra.mxu0 0.0
    %4847 = vmatprep.subr.mxu0 0.0
    %4848 = vmatpush2.msra.mxu0 0.0
    %4849 = vmatprep.subr.mxu0 0.0
    %4850 = vmatpush2.msra.mxu0 0.0
    %4851 = vmatprep.subr.mxu0 0.0
    %4852 = vmatpush2.msra.mxu0 0.0
    %4853 = vmatprep.subr.mxu0 0.0
    %4854 = vmatpush2.msra.mxu0 0.0
    %4855 = vmatprep.subr.mxu0 0.0
    %4856 = vmatpush2.msra.mxu0 0.0
    %4857 = vmatprep.subr.mxu0 0.0
    %4858 = vmatpush2.msra.mxu0 0.0
    %4859 = vmatprep.subr.mxu0 0.0
    %4860 = vmatpush2.msra.mxu0 0.0
    %4861 = vmatprep.subr.mxu0 0.0
    %4862 = vmatpush2.msra.mxu0 0.0
    %4863 = vmatprep.subr.mxu0 0.0
    %4864 = vmatpush2.msra.mxu0 0.0
    %4865 = vmatprep.subr.mxu0 0.0
    %4866 = vmatpush2.msra.mxu0 0.0
    %4867 = vmatprep.subr.mxu0 0.0
    %4868 = vmatpush2.msra.mxu0 0.0
    %4869 = vmatprep.subr.mxu0 0.0
    %4870 = vmatpush2.msra.mxu0 0.0
    %4871 = vmatprep.subr.mxu0 0.0
    %4872 = vmatpush2.msra.mxu0 0.0
    %4873 = vmatprep.subr.mxu0 0.0
    %4874 = vmatpush2.msra.mxu0 0.0
    %4875 = vmatprep.mubr.f32.mxu0 0.0
    %v4876 = vand.u32 %v4808, 4294901760
    %v4877 = vsub.f32 %v4808, %v4876
    %v4878 = vand.u32 %v4877, 4294901760
    %v4879 = vsub.f32 %v4877, %v4878
    %v4880 = vand.u32 %v4879, 4294901760
    %4881 = vmatmul.mubr.f32.gmra.mxu0 %v4880
    %v4882 = vpop.f32.mrf.mxu0
    %v4883 = vadd.f32 0.0, %v4882
    %v4884 = vpop.f32.mrf.mxu0
    %4885 = vdwg.mxu0
    %4886 = vmatprep.subr.mxu0 0.0
    %4887 = vmatpush1.msra.mxu0 0.0
    %4888 = vmatprep.subr.mxu0 0.0
    %4889 = vmatpush1.msra.mxu0 0.0
    %4890 = vmatprep.subr.mxu0 0.0
    %4891 = vmatpush1.msra.mxu0 0.0
    %4892 = vmatprep.subr.mxu0 0.0
    %4893 = vmatpush1.msra.mxu0 0.0
    %4894 = vmatprep.subr.mxu0 0.0
    %4895 = vmatpush1.msra.mxu0 0.0
    %4896 = vmatprep.subr.mxu0 0.0
    %4897 = vmatpush1.msra.mxu0 0.0
    %4898 = vmatprep.subr.mxu0 0.0
    %4899 = vmatpush1.msra.mxu0 0.0
    %4900 = vmatprep.subr.mxu0 0.0
    %4901 = vmatpush1.msra.mxu0 0.0
    %4902 = vmatprep.subr.mxu0 0.0
    %4903 = vmatpush1.msra.mxu0 0.0
    %4904 = vmatprep.subr.mxu0 0.0
    %4905 = vmatpush1.msra.mxu0 0.0
    %4906 = vmatprep.subr.mxu0 0.0
    %4907 = vmatpush1.msra.mxu0 0.0
    %4908 = vmatprep.subr.mxu0 0.0
    %4909 = vmatpush1.msra.mxu0 0.0
    %4910 = vmatprep.subr.mxu0 0.0
    %4911 = vmatpush1.msra.mxu0 0.0
    %4912 = vmatprep.subr.mxu0 0.0
    %4913 = vmatpush1.msra.mxu0 0.0
    %4914 = vmatprep.subr.mxu0 0.0
    %4915 = vmatpush1.msra.mxu0 0.0
    %4916 = vmatprep.subr.mxu0 0.0
    %v4917 = vand.u32 %v4805, 4294901760
    %v4918 = vsub.f32 %v4805, %v4917
    %v4919 = vand.u32 %v4918, 4294901760
    %v4920 = vsub.f32 %v4918, %v4919
    %v4921 = vand.u32 %v4920, 4294901760
    %4922 = vmatpush1.msra.mxu0 %v4921
    %4923 = vmatprep.subr.mxu0 0.0
    %4924 = vmatpush2.msra.mxu0 0.0
    %4925 = vmatprep.subr.mxu0 0.0
    %4926 = vmatpush2.msra.mxu0 0.0
    %4927 = vmatprep.subr.mxu0 0.0
    %4928 = vmatpush2.msra.mxu0 0.0
    %4929 = vmatprep.subr.mxu0 0.0
    %4930 = vmatpush2.msra.mxu0 0.0
    %4931 = vmatprep.subr.mxu0 0.0
    %4932 = vmatpush2.msra.mxu0 0.0
    %4933 = vmatprep.subr.mxu0 0.0
    %4934 = vmatpush2.msra.mxu0 0.0
    %4935 = vmatprep.subr.mxu0 0.0
    %4936 = vmatpush2.msra.mxu0 0.0
    %4937 = vmatprep.subr.mxu0 0.0
    %4938 = vmatpush2.msra.mxu0 0.0
    %4939 = vmatprep.subr.mxu0 0.0
    %4940 = vmatpush2.msra.mxu0 0.0
    %4941 = vmatprep.subr.mxu0 0.0
    %4942 = vmatpush2.msra.mxu0 0.0
    %4943 = vmatprep.subr.mxu0 0.0
    %4944 = vmatpush2.msra.mxu0 0.0
    %4945 = vmatprep.subr.mxu0 0.0
    %4946 = vmatpush2.msra.mxu0 0.0
    %4947 = vmatprep.subr.mxu0 0.0
    %4948 = vmatpush2.msra.mxu0 0.0
    %4949 = vmatprep.subr.mxu0 0.0
    %4950 = vmatpush2.msra.mxu0 0.0
    %4951 = vmatprep.subr.mxu0 0.0
    %4952 = vmatpush2.msra.mxu0 0.0
    %4953 = vmatprep.subr.mxu0 0.0
    %4954 = vmatpush2.msra.mxu0 0.0
    %4955 = vmatprep.mubr.f32.mxu0 0.0
    %v4956 = vand.u32 %v4808, 4294901760
    %4957 = vmatmul.mubr.f32.gmra.mxu0 %v4956
    %v4958 = vpop.f32.mrf.mxu0
    %v4959 = vadd.f32 %v4883, %v4958
    %v4960 = vpop.f32.mrf.mxu0
    %4961 = vdwg.mxu0
    %4962 = vmatprep.subr.mxu0 0.0
    %4963 = vmatpush1.msra.mxu0 0.0
    %4964 = vmatprep.subr.mxu0 0.0
    %4965 = vmatpush1.msra.mxu0 0.0
    %4966 = vmatprep.subr.mxu0 0.0
    %4967 = vmatpush1.msra.mxu0 0.0
    %4968 = vmatprep.subr.mxu0 0.0
    %4969 = vmatpush1.msra.mxu0 0.0
    %4970 = vmatprep.subr.mxu0 0.0
    %4971 = vmatpush1.msra.mxu0 0.0
    %4972 = vmatprep.subr.mxu0 0.0
    %4973 = vmatpush1.msra.mxu0 0.0
    %4974 = vmatprep.subr.mxu0 0.0
    %4975 = vmatpush1.msra.mxu0 0.0
    %4976 = vmatprep.subr.mxu0 0.0
    %4977 = vmatpush1.msra.mxu0 0.0
    %4978 = vmatprep.subr.mxu0 0.0
    %4979 = vmatpush1.msra.mxu0 0.0
    %4980 = vmatprep.subr.mxu0 0.0
    %4981 = vmatpush1.msra.mxu0 0.0
    %4982 = vmatprep.subr.mxu0 0.0
    %4983 = vmatpush1.msra.mxu0 0.0
    %4984 = vmatprep.subr.mxu0 0.0
    %4985 = vmatpush1.msra.mxu0 0.0
    %4986 = vmatprep.subr.mxu0 0.0
    %4987 = vmatpush1.msra.mxu0 0.0
    %4988 = vmatprep.subr.mxu0 0.0
    %4989 = vmatpush1.msra.mxu0 0.0
    %4990 = vmatprep.subr.mxu0 0.0
    %4991 = vmatpush1.msra.mxu0 0.0
    %4992 = vmatprep.subr.mxu0 0.0
    %v4993 = vand.u32 %v4805, 4294901760
    %v4994 = vsub.f32 %v4805, %v4993
    %4995 = vmatpush1.msra.mxu0 %v4994
    %4996 = vmatprep.subr.mxu0 0.0
    %4997 = vmatpush2.msra.mxu0 0.0
    %4998 = vmatprep.subr.mxu0 0.0
    %4999 = vmatpush2.msra.mxu0 0.0
    %5000 = vmatprep.subr.mxu0 0.0
    %5001 = vmatpush2.msra.mxu0 0.0
    %5002 = vmatprep.subr.mxu0 0.0
    %5003 = vmatpush2.msra.mxu0 0.0
    %5004 = vmatprep.subr.mxu0 0.0
    %5005 = vmatpush2.msra.mxu0 0.0
    %5006 = vmatprep.subr.mxu0 0.0
    %5007 = vmatpush2.msra.mxu0 0.0
    %5008 = vmatprep.subr.mxu0 0.0
    %5009 = vmatpush2.msra.mxu0 0.0
    %5010 = vmatprep.subr.mxu0 0.0
    %5011 = vmatpush2.msra.mxu0 0.0
    %5012 = vmatprep.subr.mxu0 0.0
    %5013 = vmatpush2.msra.mxu0 0.0
    %5014 = vmatprep.subr.mxu0 0.0
    %5015 = vmatpush2.msra.mxu0 0.0
    %5016 = vmatprep.subr.mxu0 0.0
    %5017 = vmatpush2.msra.mxu0 0.0
    %5018 = vmatprep.subr.mxu0 0.0
    %5019 = vmatpush2.msra.mxu0 0.0
    %5020 = vmatprep.subr.mxu0 0.0
    %5021 = vmatpush2.msra.mxu0 0.0
    %5022 = vmatprep.subr.mxu0 0.0
    %5023 = vmatpush2.msra.mxu0 0.0
    %5024 = vmatprep.subr.mxu0 0.0
    %5025 = vmatpush2.msra.mxu0 0.0
    %5026 = vmatprep.subr.mxu0 0.0
    %5027 = vmatpush2.msra.mxu0 0.0
    %5028 = vmatprep.mubr.f32.mxu0 0.0
    %v5029 = vand.u32 %v4808, 4294901760
    %v5030 = vsub.f32 %v4808, %v5029
    %5031 = vmatmul.mubr.f32.gmra.mxu0 %v5030
    %v5032 = vpop.f32.mrf.mxu0
    %v5033 = vadd.f32 %v4959, %v5032
    %v5034 = vpop.f32.mrf.mxu0
    %5035 = vdwg.mxu0
    %5036 = vmatprep.subr.mxu0 0.0
    %5037 = vmatpush1.msra.mxu0 0.0
    %5038 = vmatprep.subr.mxu0 0.0
    %5039 = vmatpush1.msra.mxu0 0.0
    %5040 = vmatprep.subr.mxu0 0.0
    %5041 = vmatpush1.msra.mxu0 0.0
    %5042 = vmatprep.subr.mxu0 0.0
    %5043 = vmatpush1.msra.mxu0 0.0
    %5044 = vmatprep.subr.mxu0 0.0
    %5045 = vmatpush1.msra.mxu0 0.0
    %5046 = vmatprep.subr.mxu0 0.0
    %5047 = vmatpush1.msra.mxu0 0.0
    %5048 = vmatprep.subr.mxu0 0.0
    %5049 = vmatpush1.msra.mxu0 0.0
    %5050 = vmatprep.subr.mxu0 0.0
    %5051 = vmatpush1.msra.mxu0 0.0
    %5052 = vmatprep.subr.mxu0 0.0
    %5053 = vmatpush1.msra.mxu0 0.0
    %5054 = vmatprep.subr.mxu0 0.0
    %5055 = vmatpush1.msra.mxu0 0.0
    %5056 = vmatprep.subr.mxu0 0.0
    %5057 = vmatpush1.msra.mxu0 0.0
    %5058 = vmatprep.subr.mxu0 0.0
    %5059 = vmatpush1.msra.mxu0 0.0
    %5060 = vmatprep.subr.mxu0 0.0
    %5061 = vmatpush1.msra.mxu0 0.0
    %5062 = vmatprep.subr.mxu0 0.0
    %5063 = vmatpush1.msra.mxu0 0.0
    %5064 = vmatprep.subr.mxu0 0.0
    %5065 = vmatpush1.msra.mxu0 0.0
    %5066 = vmatprep.subr.mxu0 0.0
    %v5067 = vand.u32 %v4805, 4294901760
    %5068 = vmatpush1.msra.mxu0 %v5067
    %5069 = vmatprep.subr.mxu0 0.0
    %5070 = vmatpush2.msra.mxu0 0.0
    %5071 = vmatprep.subr.mxu0 0.0
    %5072 = vmatpush2.msra.mxu0 0.0
    %5073 = vmatprep.subr.mxu0 0.0
    %5074 = vmatpush2.msra.mxu0 0.0
    %5075 = vmatprep.subr.mxu0 0.0
    %5076 = vmatpush2.msra.mxu0 0.0
    %5077 = vmatprep.subr.mxu0 0.0
    %5078 = vmatpush2.msra.mxu0 0.0
    %5079 = vmatprep.subr.mxu0 0.0
    %5080 = vmatpush2.msra.mxu0 0.0
    %5081 = vmatprep.subr.mxu0 0.0
    %5082 = vmatpush2.msra.mxu0 0.0
    %5083 = vmatprep.subr.mxu0 0.0
    %5084 = vmatpush2.msra.mxu0 0.0
    %5085 = vmatprep.subr.mxu0 0.0
    %5086 = vmatpush2.msra.mxu0 0.0
    %5087 = vmatprep.subr.mxu0 0.0
    %5088 = vmatpush2.msra.mxu0 0.0
    %5089 = vmatprep.subr.mxu0 0.0
    %5090 = vmatpush2.msra.mxu0 0.0
    %5091 = vmatprep.subr.mxu0 0.0
    %5092 = vmatpush2.msra.mxu0 0.0
    %5093 = vmatprep.subr.mxu0 0.0
    %5094 = vmatpush2.msra.mxu0 0.0
    %5095 = vmatprep.subr.mxu0 0.0
    %5096 = vmatpush2.msra.mxu0 0.0
    %5097 = vmatprep.subr.mxu0 0.0
    %5098 = vmatpush2.msra.mxu0 0.0
    %5099 = vmatprep.subr.mxu0 0.0
    %5100 = vmatpush2.msra.mxu0 0.0
    %5101 = vmatprep.mubr.f32.mxu0 0.0
    %v5102 = vand.u32 %v4808, 4294901760
    %v5103 = vsub.f32 %v4808, %v5102
    %v5104 = vand.u32 %v5103, 4294901760
    %5105 = vmatmul.mubr.f32.gmra.mxu0 %v5104
    %v5106 = vpop.f32.mrf.mxu0
    %v5107 = vadd.f32 %v5033, %v5106
    %v5108 = vpop.f32.mrf.mxu0
    %5109 = vdwg.mxu0
    %5110 = vmatprep.subr.mxu0 0.0
    %5111 = vmatpush1.msra.mxu0 0.0
    %5112 = vmatprep.subr.mxu0 0.0
    %5113 = vmatpush1.msra.mxu0 0.0
    %5114 = vmatprep.subr.mxu0 0.0
    %5115 = vmatpush1.msra.mxu0 0.0
    %5116 = vmatprep.subr.mxu0 0.0
    %5117 = vmatpush1.msra.mxu0 0.0
    %5118 = vmatprep.subr.mxu0 0.0
    %5119 = vmatpush1.msra.mxu0 0.0
    %5120 = vmatprep.subr.mxu0 0.0
    %5121 = vmatpush1.msra.mxu0 0.0
    %5122 = vmatprep.subr.mxu0 0.0
    %5123 = vmatpush1.msra.mxu0 0.0
    %5124 = vmatprep.subr.mxu0 0.0
    %5125 = vmatpush1.msra.mxu0 0.0
    %5126 = vmatprep.subr.mxu0 0.0
    %5127 = vmatpush1.msra.mxu0 0.0
    %5128 = vmatprep.subr.mxu0 0.0
    %5129 = vmatpush1.msra.mxu0 0.0
    %5130 = vmatprep.subr.mxu0 0.0
    %5131 = vmatpush1.msra.mxu0 0.0
    %5132 = vmatprep.subr.mxu0 0.0
    %5133 = vmatpush1.msra.mxu0 0.0
    %5134 = vmatprep.subr.mxu0 0.0
    %5135 = vmatpush1.msra.mxu0 0.0
    %5136 = vmatprep.subr.mxu0 0.0
    %5137 = vmatpush1.msra.mxu0 0.0
    %5138 = vmatprep.subr.mxu0 0.0
    %5139 = vmatpush1.msra.mxu0 0.0
    %5140 = vmatprep.subr.mxu0 0.0
    %v5141 = vand.u32 %v4805, 4294901760
    %v5142 = vsub.f32 %v4805, %v5141
    %v5143 = vand.u32 %v5142, 4294901760
    %5144 = vmatpush1.msra.mxu0 %v5143
    %5145 = vmatprep.subr.mxu0 0.0
    %5146 = vmatpush2.msra.mxu0 0.0
    %5147 = vmatprep.subr.mxu0 0.0
    %5148 = vmatpush2.msra.mxu0 0.0
    %5149 = vmatprep.subr.mxu0 0.0
    %5150 = vmatpush2.msra.mxu0 0.0
    %5151 = vmatprep.subr.mxu0 0.0
    %5152 = vmatpush2.msra.mxu0 0.0
    %5153 = vmatprep.subr.mxu0 0.0
    %5154 = vmatpush2.msra.mxu0 0.0
    %5155 = vmatprep.subr.mxu0 0.0
    %5156 = vmatpush2.msra.mxu0 0.0
    %5157 = vmatprep.subr.mxu0 0.0
    %5158 = vmatpush2.msra.mxu0 0.0
    %5159 = vmatprep.subr.mxu0 0.0
    %5160 = vmatpush2.msra.mxu0 0.0
    %5161 = vmatprep.subr.mxu0 0.0
    %5162 = vmatpush2.msra.mxu0 0.0
    %5163 = vmatprep.subr.mxu0 0.0
    %5164 = vmatpush2.msra.mxu0 0.0
    %5165 = vmatprep.subr.mxu0 0.0
    %5166 = vmatpush2.msra.mxu0 0.0
    %5167 = vmatprep.subr.mxu0 0.0
    %5168 = vmatpush2.msra.mxu0 0.0
    %5169 = vmatprep.subr.mxu0 0.0
    %5170 = vmatpush2.msra.mxu0 0.0
    %5171 = vmatprep.subr.mxu0 0.0
    %5172 = vmatpush2.msra.mxu0 0.0
    %5173 = vmatprep.subr.mxu0 0.0
    %5174 = vmatpush2.msra.mxu0 0.0
    %5175 = vmatprep.subr.mxu0 0.0
    %5176 = vmatpush2.msra.mxu0 0.0
    %5177 = vmatprep.mubr.f32.mxu0 0.0
    %v5178 = vand.u32 %v4808, 4294901760
    %5179 = vmatmul.mubr.f32.gmra.mxu0 %v5178
    %v5180 = vpop.f32.mrf.mxu0
    %v5181 = vadd.f32 %v5107, %v5180
    %v5182 = vpop.f32.mrf.mxu0
    %5183 = vdwg.mxu0
    %5184 = vmatprep.subr.mxu0 0.0
    %5185 = vmatpush1.msra.mxu0 0.0
    %5186 = vmatprep.subr.mxu0 0.0
    %5187 = vmatpush1.msra.mxu0 0.0
    %5188 = vmatprep.subr.mxu0 0.0
    %5189 = vmatpush1.msra.mxu0 0.0
    %5190 = vmatprep.subr.mxu0 0.0
    %5191 = vmatpush1.msra.mxu0 0.0
    %5192 = vmatprep.subr.mxu0 0.0
    %5193 = vmatpush1.msra.mxu0 0.0
    %5194 = vmatprep.subr.mxu0 0.0
    %5195 = vmatpush1.msra.mxu0 0.0
    %5196 = vmatprep.subr.mxu0 0.0
    %5197 = vmatpush1.msra.mxu0 0.0
    %5198 = vmatprep.subr.mxu0 0.0
    %5199 = vmatpush1.msra.mxu0 0.0
    %5200 = vmatprep.subr.mxu0 0.0
    %5201 = vmatpush1.msra.mxu0 0.0
    %5202 = vmatprep.subr.mxu0 0.0
    %5203 = vmatpush1.msra.mxu0 0.0
    %5204 = vmatprep.subr.mxu0 0.0
    %5205 = vmatpush1.msra.mxu0 0.0
    %5206 = vmatprep.subr.mxu0 0.0
    %5207 = vmatpush1.msra.mxu0 0.0
    %5208 = vmatprep.subr.mxu0 0.0
    %5209 = vmatpush1.msra.mxu0 0.0
    %5210 = vmatprep.subr.mxu0 0.0
    %5211 = vmatpush1.msra.mxu0 0.0
    %5212 = vmatprep.subr.mxu0 0.0
    %5213 = vmatpush1.msra.mxu0 0.0
    %5214 = vmatprep.subr.mxu0 0.0
    %v5215 = vand.u32 %v4805, 4294901760
    %5216 = vmatpush1.msra.mxu0 %v5215
    %5217 = vmatprep.subr.mxu0 0.0
    %5218 = vmatpush2.msra.mxu0 0.0
    %5219 = vmatprep.subr.mxu0 0.0
    %5220 = vmatpush2.msra.mxu0 0.0
    %5221 = vmatprep.subr.mxu0 0.0
    %5222 = vmatpush2.msra.mxu0 0.0
    %5223 = vmatprep.subr.mxu0 0.0
    %5224 = vmatpush2.msra.mxu0 0.0
    %5225 = vmatprep.subr.mxu0 0.0
    %5226 = vmatpush2.msra.mxu0 0.0
    %5227 = vmatprep.subr.mxu0 0.0
    %5228 = vmatpush2.msra.mxu0 0.0
    %5229 = vmatprep.subr.mxu0 0.0
    %5230 = vmatpush2.msra.mxu0 0.0
    %5231 = vmatprep.subr.mxu0 0.0
    %5232 = vmatpush2.msra.mxu0 0.0
    %5233 = vmatprep.subr.mxu0 0.0
    %5234 = vmatpush2.msra.mxu0 0.0
    %5235 = vmatprep.subr.mxu0 0.0
    %5236 = vmatpush2.msra.mxu0 0.0
    %5237 = vmatprep.subr.mxu0 0.0
    %5238 = vmatpush2.msra.mxu0 0.0
    %5239 = vmatprep.subr.mxu0 0.0
    %5240 = vmatpush2.msra.mxu0 0.0
    %5241 = vmatprep.subr.mxu0 0.0
    %5242 = vmatpush2.msra.mxu0 0.0
    %5243 = vmatprep.subr.mxu0 0.0
    %5244 = vmatpush2.msra.mxu0 0.0
    %5245 = vmatprep.subr.mxu0 0.0
    %5246 = vmatpush2.msra.mxu0 0.0
    %5247 = vmatprep.subr.mxu0 0.0
    %5248 = vmatpush2.msra.mxu0 0.0
    %5249 = vmatprep.mubr.f32.mxu0 0.0
    %v5250 = vand.u32 %v4808, 4294901760
    %5251 = vmatmul.mubr.f32.gmra.mxu0 %v5250
    %v5252 = vpop.f32.mrf.mxu0
    %v5253 = vadd.f32 %v5181, %v5252
    %v5254 = vpop.f32.mrf.mxu0
    %5255 = vdwg.mxu0
    %5256 = vrot.lane.b32.xlu0 %v618, 64
    %v5257 = vpop.permute.xlu0 %5256
    %v5260 = vsel %vm639, %v4341, 0
    %5262 = vmatprep.subr.mxu0 0.0
    %5263 = vmatpush1.msra.mxu0 0.0
    %5264 = vmatprep.subr.mxu0 0.0
    %5265 = vmatpush1.msra.mxu0 0.0
    %5266 = vmatprep.subr.mxu0 0.0
    %5267 = vmatpush1.msra.mxu0 0.0
    %5268 = vmatprep.subr.mxu0 0.0
    %5269 = vmatpush1.msra.mxu0 0.0
    %5270 = vmatprep.subr.mxu0 0.0
    %5271 = vmatpush1.msra.mxu0 0.0
    %5272 = vmatprep.subr.mxu0 0.0
    %5273 = vmatpush1.msra.mxu0 0.0
    %5274 = vmatprep.subr.mxu0 0.0
    %5275 = vmatpush1.msra.mxu0 0.0
    %5276 = vmatprep.subr.mxu0 0.0
    %5277 = vmatpush1.msra.mxu0 0.0
    %5278 = vmatprep.subr.mxu0 0.0
    %5279 = vmatpush1.msra.mxu0 0.0
    %5280 = vmatprep.subr.mxu0 0.0
    %5281 = vmatpush1.msra.mxu0 0.0
    %5282 = vmatprep.subr.mxu0 0.0
    %5283 = vmatpush1.msra.mxu0 0.0
    %5284 = vmatprep.subr.mxu0 0.0
    %5285 = vmatpush1.msra.mxu0 0.0
    %5286 = vmatprep.subr.mxu0 0.0
    %5287 = vmatpush1.msra.mxu0 0.0
    %5288 = vmatprep.subr.mxu0 0.0
    %5289 = vmatpush1.msra.mxu0 0.0
    %5290 = vmatprep.subr.mxu0 0.0
    %5291 = vmatpush1.msra.mxu0 0.0
    %5292 = vmatprep.subr.mxu0 0.0
    %v5293 = vand.u32 %v5257, 4294901760
    %5294 = vmatpush1.msra.mxu0 %v5293
    %5295 = vmatprep.subr.mxu0 0.0
    %5296 = vmatpush2.msra.mxu0 0.0
    %5297 = vmatprep.subr.mxu0 0.0
    %5298 = vmatpush2.msra.mxu0 0.0
    %5299 = vmatprep.subr.mxu0 0.0
    %5300 = vmatpush2.msra.mxu0 0.0
    %5301 = vmatprep.subr.mxu0 0.0
    %5302 = vmatpush2.msra.mxu0 0.0
    %5303 = vmatprep.subr.mxu0 0.0
    %5304 = vmatpush2.msra.mxu0 0.0
    %5305 = vmatprep.subr.mxu0 0.0
    %5306 = vmatpush2.msra.mxu0 0.0
    %5307 = vmatprep.subr.mxu0 0.0
    %5308 = vmatpush2.msra.mxu0 0.0
    %5309 = vmatprep.subr.mxu0 0.0
    %5310 = vmatpush2.msra.mxu0 0.0
    %5311 = vmatprep.subr.mxu0 0.0
    %5312 = vmatpush2.msra.mxu0 0.0
    %5313 = vmatprep.subr.mxu0 0.0
    %5314 = vmatpush2.msra.mxu0 0.0
    %5315 = vmatprep.subr.mxu0 0.0
    %5316 = vmatpush2.msra.mxu0 0.0
    %5317 = vmatprep.subr.mxu0 0.0
    %5318 = vmatpush2.msra.mxu0 0.0
    %5319 = vmatprep.subr.mxu0 0.0
    %5320 = vmatpush2.msra.mxu0 0.0
    %5321 = vmatprep.subr.mxu0 0.0
    %5322 = vmatpush2.msra.mxu0 0.0
    %5323 = vmatprep.subr.mxu0 0.0
    %5324 = vmatpush2.msra.mxu0 0.0
    %5325 = vmatprep.subr.mxu0 0.0
    %5326 = vmatpush2.msra.mxu0 0.0
    %5327 = vmatprep.mubr.f32.mxu0 0.0
    %v5328 = vand.u32 %v5260, 4294901760
    %v5329 = vsub.f32 %v5260, %v5328
    %v5330 = vand.u32 %v5329, 4294901760
    %v5331 = vsub.f32 %v5329, %v5330
    %v5332 = vand.u32 %v5331, 4294901760
    %5333 = vmatmul.mubr.f32.gmra.mxu0 %v5332
    %v5334 = vpop.f32.mrf.mxu0
    %v5335 = vadd.f32 0.0, %v5334
    %v5336 = vpop.f32.mrf.mxu0
    %5337 = vdwg.mxu0
    %5338 = vmatprep.subr.mxu0 0.0
    %5339 = vmatpush1.msra.mxu0 0.0
    %5340 = vmatprep.subr.mxu0 0.0
    %5341 = vmatpush1.msra.mxu0 0.0
    %5342 = vmatprep.subr.mxu0 0.0
    %5343 = vmatpush1.msra.mxu0 0.0
    %5344 = vmatprep.subr.mxu0 0.0
    %5345 = vmatpush1.msra.mxu0 0.0
    %5346 = vmatprep.subr.mxu0 0.0
    %5347 = vmatpush1.msra.mxu0 0.0
    %5348 = vmatprep.subr.mxu0 0.0
    %5349 = vmatpush1.msra.mxu0 0.0
    %5350 = vmatprep.subr.mxu0 0.0
    %5351 = vmatpush1.msra.mxu0 0.0
    %5352 = vmatprep.subr.mxu0 0.0
    %5353 = vmatpush1.msra.mxu0 0.0
    %5354 = vmatprep.subr.mxu0 0.0
    %5355 = vmatpush1.msra.mxu0 0.0
    %5356 = vmatprep.subr.mxu0 0.0
    %5357 = vmatpush1.msra.mxu0 0.0
    %5358 = vmatprep.subr.mxu0 0.0
    %5359 = vmatpush1.msra.mxu0 0.0
    %5360 = vmatprep.subr.mxu0 0.0
    %5361 = vmatpush1.msra.mxu0 0.0
    %5362 = vmatprep.subr.mxu0 0.0
    %5363 = vmatpush1.msra.mxu0 0.0
    %5364 = vmatprep.subr.mxu0 0.0
    %5365 = vmatpush1.msra.mxu0 0.0
    %5366 = vmatprep.subr.mxu0 0.0
    %5367 = vmatpush1.msra.mxu0 0.0
    %5368 = vmatprep.subr.mxu0 0.0
    %v5369 = vand.u32 %v5257, 4294901760
    %v5370 = vsub.f32 %v5257, %v5369
    %v5371 = vand.u32 %v5370, 4294901760
    %v5372 = vsub.f32 %v5370, %v5371
    %v5373 = vand.u32 %v5372, 4294901760
    %5374 = vmatpush1.msra.mxu0 %v5373
    %5375 = vmatprep.subr.mxu0 0.0
    %5376 = vmatpush2.msra.mxu0 0.0
    %5377 = vmatprep.subr.mxu0 0.0
    %5378 = vmatpush2.msra.mxu0 0.0
    %5379 = vmatprep.subr.mxu0 0.0
    %5380 = vmatpush2.msra.mxu0 0.0
    %5381 = vmatprep.subr.mxu0 0.0
    %5382 = vmatpush2.msra.mxu0 0.0
    %5383 = vmatprep.subr.mxu0 0.0
    %5384 = vmatpush2.msra.mxu0 0.0
    %5385 = vmatprep.subr.mxu0 0.0
    %5386 = vmatpush2.msra.mxu0 0.0
    %5387 = vmatprep.subr.mxu0 0.0
    %5388 = vmatpush2.msra.mxu0 0.0
    %5389 = vmatprep.subr.mxu0 0.0
    %5390 = vmatpush2.msra.mxu0 0.0
    %5391 = vmatprep.subr.mxu0 0.0
    %5392 = vmatpush2.msra.mxu0 0.0
    %5393 = vmatprep.subr.mxu0 0.0
    %5394 = vmatpush2.msra.mxu0 0.0
    %5395 = vmatprep.subr.mxu0 0.0
    %5396 = vmatpush2.msra.mxu0 0.0
    %5397 = vmatprep.subr.mxu0 0.0
    %5398 = vmatpush2.msra.mxu0 0.0
    %5399 = vmatprep.subr.mxu0 0.0
    %5400 = vmatpush2.msra.mxu0 0.0
    %5401 = vmatprep.subr.mxu0 0.0
    %5402 = vmatpush2.msra.mxu0 0.0
    %5403 = vmatprep.subr.mxu0 0.0
    %5404 = vmatpush2.msra.mxu0 0.0
    %5405 = vmatprep.subr.mxu0 0.0
    %5406 = vmatpush2.msra.mxu0 0.0
    %5407 = vmatprep.mubr.f32.mxu0 0.0
    %v5408 = vand.u32 %v5260, 4294901760
    %5409 = vmatmul.mubr.f32.gmra.mxu0 %v5408
    %v5410 = vpop.f32.mrf.mxu0
    %v5411 = vadd.f32 %v5335, %v5410
    %v5412 = vpop.f32.mrf.mxu0
    %5413 = vdwg.mxu0
    %5414 = vmatprep.subr.mxu0 0.0
    %5415 = vmatpush1.msra.mxu0 0.0
    %5416 = vmatprep.subr.mxu0 0.0
    %5417 = vmatpush1.msra.mxu0 0.0
    %5418 = vmatprep.subr.mxu0 0.0
    %5419 = vmatpush1.msra.mxu0 0.0
    %5420 = vmatprep.subr.mxu0 0.0
    %5421 = vmatpush1.msra.mxu0 0.0
    %5422 = vmatprep.subr.mxu0 0.0
    %5423 = vmatpush1.msra.mxu0 0.0
    %5424 = vmatprep.subr.mxu0 0.0
    %5425 = vmatpush1.msra.mxu0 0.0
    %5426 = vmatprep.subr.mxu0 0.0
    %5427 = vmatpush1.msra.mxu0 0.0
    %5428 = vmatprep.subr.mxu0 0.0
    %5429 = vmatpush1.msra.mxu0 0.0
    %5430 = vmatprep.subr.mxu0 0.0
    %5431 = vmatpush1.msra.mxu0 0.0
    %5432 = vmatprep.subr.mxu0 0.0
    %5433 = vmatpush1.msra.mxu0 0.0
    %5434 = vmatprep.subr.mxu0 0.0
    %5435 = vmatpush1.msra.mxu0 0.0
    %5436 = vmatprep.subr.mxu0 0.0
    %5437 = vmatpush1.msra.mxu0 0.0
    %5438 = vmatprep.subr.mxu0 0.0
    %5439 = vmatpush1.msra.mxu0 0.0
    %5440 = vmatprep.subr.mxu0 0.0
    %5441 = vmatpush1.msra.mxu0 0.0
    %5442 = vmatprep.subr.mxu0 0.0
    %5443 = vmatpush1.msra.mxu0 0.0
    %5444 = vmatprep.subr.mxu0 0.0
    %v5445 = vand.u32 %v5257, 4294901760
    %v5446 = vsub.f32 %v5257, %v5445
    %5447 = vmatpush1.msra.mxu0 %v5446
    %5448 = vmatprep.subr.mxu0 0.0
    %5449 = vmatpush2.msra.mxu0 0.0
    %5450 = vmatprep.subr.mxu0 0.0
    %5451 = vmatpush2.msra.mxu0 0.0
    %5452 = vmatprep.subr.mxu0 0.0
    %5453 = vmatpush2.msra.mxu0 0.0
    %5454 = vmatprep.subr.mxu0 0.0
    %5455 = vmatpush2.msra.mxu0 0.0
    %5456 = vmatprep.subr.mxu0 0.0
    %5457 = vmatpush2.msra.mxu0 0.0
    %5458 = vmatprep.subr.mxu0 0.0
    %5459 = vmatpush2.msra.mxu0 0.0
    %5460 = vmatprep.subr.mxu0 0.0
    %5461 = vmatpush2.msra.mxu0 0.0
    %5462 = vmatprep.subr.mxu0 0.0
    %5463 = vmatpush2.msra.mxu0 0.0
    %5464 = vmatprep.subr.mxu0 0.0
    %5465 = vmatpush2.msra.mxu0 0.0
    %5466 = vmatprep.subr.mxu0 0.0
    %5467 = vmatpush2.msra.mxu0 0.0
    %5468 = vmatprep.subr.mxu0 0.0
    %5469 = vmatpush2.msra.mxu0 0.0
    %5470 = vmatprep.subr.mxu0 0.0
    %5471 = vmatpush2.msra.mxu0 0.0
    %5472 = vmatprep.subr.mxu0 0.0
    %5473 = vmatpush2.msra.mxu0 0.0
    %5474 = vmatprep.subr.mxu0 0.0
    %5475 = vmatpush2.msra.mxu0 0.0
    %5476 = vmatprep.subr.mxu0 0.0
    %5477 = vmatpush2.msra.mxu0 0.0
    %5478 = vmatprep.subr.mxu0 0.0
    %5479 = vmatpush2.msra.mxu0 0.0
    %5480 = vmatprep.mubr.f32.mxu0 0.0
    %v5481 = vand.u32 %v5260, 4294901760
    %v5482 = vsub.f32 %v5260, %v5481
    %5483 = vmatmul.mubr.f32.gmra.mxu0 %v5482
    %v5484 = vpop.f32.mrf.mxu0
    %v5485 = vadd.f32 %v5411, %v5484
    %v5486 = vpop.f32.mrf.mxu0
    %5487 = vdwg.mxu0
    %5488 = vmatprep.subr.mxu0 0.0
    %5489 = vmatpush1.msra.mxu0 0.0
    %5490 = vmatprep.subr.mxu0 0.0
    %5491 = vmatpush1.msra.mxu0 0.0
    %5492 = vmatprep.subr.mxu0 0.0
    %5493 = vmatpush1.msra.mxu0 0.0
    %5494 = vmatprep.subr.mxu0 0.0
    %5495 = vmatpush1.msra.mxu0 0.0
    %5496 = vmatprep.subr.mxu0 0.0
    %5497 = vmatpush1.msra.mxu0 0.0
    %5498 = vmatprep.subr.mxu0 0.0
    %5499 = vmatpush1.msra.mxu0 0.0
    %5500 = vmatprep.subr.mxu0 0.0
    %5501 = vmatpush1.msra.mxu0 0.0
    %5502 = vmatprep.subr.mxu0 0.0
    %5503 = vmatpush1.msra.mxu0 0.0
    %5504 = vmatprep.subr.mxu0 0.0
    %5505 = vmatpush1.msra.mxu0 0.0
    %5506 = vmatprep.subr.mxu0 0.0
    %5507 = vmatpush1.msra.mxu0 0.0
    %5508 = vmatprep.subr.mxu0 0.0
    %5509 = vmatpush1.msra.mxu0 0.0
    %5510 = vmatprep.subr.mxu0 0.0
    %5511 = vmatpush1.msra.mxu0 0.0
    %5512 = vmatprep.subr.mxu0 0.0
    %5513 = vmatpush1.msra.mxu0 0.0
    %5514 = vmatprep.subr.mxu0 0.0
    %5515 = vmatpush1.msra.mxu0 0.0
    %5516 = vmatprep.subr.mxu0 0.0
    %5517 = vmatpush1.msra.mxu0 0.0
    %5518 = vmatprep.subr.mxu0 0.0
    %v5519 = vand.u32 %v5257, 4294901760
    %5520 = vmatpush1.msra.mxu0 %v5519
    %5521 = vmatprep.subr.mxu0 0.0
    %5522 = vmatpush2.msra.mxu0 0.0
    %5523 = vmatprep.subr.mxu0 0.0
    %5524 = vmatpush2.msra.mxu0 0.0
    %5525 = vmatprep.subr.mxu0 0.0
    %5526 = vmatpush2.msra.mxu0 0.0
    %5527 = vmatprep.subr.mxu0 0.0
    %5528 = vmatpush2.msra.mxu0 0.0
    %5529 = vmatprep.subr.mxu0 0.0
    %5530 = vmatpush2.msra.mxu0 0.0
    %5531 = vmatprep.subr.mxu0 0.0
    %5532 = vmatpush2.msra.mxu0 0.0
    %5533 = vmatprep.subr.mxu0 0.0
    %5534 = vmatpush2.msra.mxu0 0.0
    %5535 = vmatprep.subr.mxu0 0.0
    %5536 = vmatpush2.msra.mxu0 0.0
    %5537 = vmatprep.subr.mxu0 0.0
    %5538 = vmatpush2.msra.mxu0 0.0
    %5539 = vmatprep.subr.mxu0 0.0
    %5540 = vmatpush2.msra.mxu0 0.0
    %5541 = vmatprep.subr.mxu0 0.0
    %5542 = vmatpush2.msra.mxu0 0.0
    %5543 = vmatprep.subr.mxu0 0.0
    %5544 = vmatpush2.msra.mxu0 0.0
    %5545 = vmatprep.subr.mxu0 0.0
    %5546 = vmatpush2.msra.mxu0 0.0
    %5547 = vmatprep.subr.mxu0 0.0
    %5548 = vmatpush2.msra.mxu0 0.0
    %5549 = vmatprep.subr.mxu0 0.0
    %5550 = vmatpush2.msra.mxu0 0.0
    %5551 = vmatprep.subr.mxu0 0.0
    %5552 = vmatpush2.msra.mxu0 0.0
    %5553 = vmatprep.mubr.f32.mxu0 0.0
    %v5554 = vand.u32 %v5260, 4294901760
    %v5555 = vsub.f32 %v5260, %v5554
    %v5556 = vand.u32 %v5555, 4294901760
    %5557 = vmatmul.mubr.f32.gmra.mxu0 %v5556
    %v5558 = vpop.f32.mrf.mxu0
    %v5559 = vadd.f32 %v5485, %v5558
    %v5560 = vpop.f32.mrf.mxu0
    %5561 = vdwg.mxu0
    %5562 = vmatprep.subr.mxu0 0.0
    %5563 = vmatpush1.msra.mxu0 0.0
    %5564 = vmatprep.subr.mxu0 0.0
    %5565 = vmatpush1.msra.mxu0 0.0
    %5566 = vmatprep.subr.mxu0 0.0
    %5567 = vmatpush1.msra.mxu0 0.0
    %5568 = vmatprep.subr.mxu0 0.0
    %5569 = vmatpush1.msra.mxu0 0.0
    %5570 = vmatprep.subr.mxu0 0.0
    %5571 = vmatpush1.msra.mxu0 0.0
    %5572 = vmatprep.subr.mxu0 0.0
    %5573 = vmatpush1.msra.mxu0 0.0
    %5574 = vmatprep.subr.mxu0 0.0
    %5575 = vmatpush1.msra.mxu0 0.0
    %5576 = vmatprep.subr.mxu0 0.0
    %5577 = vmatpush1.msra.mxu0 0.0
    %5578 = vmatprep.subr.mxu0 0.0
    %5579 = vmatpush1.msra.mxu0 0.0
    %5580 = vmatprep.subr.mxu0 0.0
    %5581 = vmatpush1.msra.mxu0 0.0
    %5582 = vmatprep.subr.mxu0 0.0
    %5583 = vmatpush1.msra.mxu0 0.0
    %5584 = vmatprep.subr.mxu0 0.0
    %5585 = vmatpush1.msra.mxu0 0.0
    %5586 = vmatprep.subr.mxu0 0.0
    %5587 = vmatpush1.msra.mxu0 0.0
    %5588 = vmatprep.subr.mxu0 0.0
    %5589 = vmatpush1.msra.mxu0 0.0
    %5590 = vmatprep.subr.mxu0 0.0
    %5591 = vmatpush1.msra.mxu0 0.0
    %5592 = vmatprep.subr.mxu0 0.0
    %v5593 = vand.u32 %v5257, 4294901760
    %v5594 = vsub.f32 %v5257, %v5593
    %v5595 = vand.u32 %v5594, 4294901760
    %5596 = vmatpush1.msra.mxu0 %v5595
    %5597 = vmatprep.subr.mxu0 0.0
    %5598 = vmatpush2.msra.mxu0 0.0
    %5599 = vmatprep.subr.mxu0 0.0
    %5600 = vmatpush2.msra.mxu0 0.0
    %5601 = vmatprep.subr.mxu0 0.0
    %5602 = vmatpush2.msra.mxu0 0.0
    %5603 = vmatprep.subr.mxu0 0.0
    %5604 = vmatpush2.msra.mxu0 0.0
    %5605 = vmatprep.subr.mxu0 0.0
    %5606 = vmatpush2.msra.mxu0 0.0
    %5607 = vmatprep.subr.mxu0 0.0
    %5608 = vmatpush2.msra.mxu0 0.0
    %5609 = vmatprep.subr.mxu0 0.0
    %5610 = vmatpush2.msra.mxu0 0.0
    %5611 = vmatprep.subr.mxu0 0.0
    %5612 = vmatpush2.msra.mxu0 0.0
    %5613 = vmatprep.subr.mxu0 0.0
    %5614 = vmatpush2.msra.mxu0 0.0
    %5615 = vmatprep.subr.mxu0 0.0
    %5616 = vmatpush2.msra.mxu0 0.0
    %5617 = vmatprep.subr.mxu0 0.0
    %5618 = vmatpush2.msra.mxu0 0.0
    %5619 = vmatprep.subr.mxu0 0.0
    %5620 = vmatpush2.msra.mxu0 0.0
    %5621 = vmatprep.subr.mxu0 0.0
    %5622 = vmatpush2.msra.mxu0 0.0
    %5623 = vmatprep.subr.mxu0 0.0
    %5624 = vmatpush2.msra.mxu0 0.0
    %5625 = vmatprep.subr.mxu0 0.0
    %5626 = vmatpush2.msra.mxu0 0.0
    %5627 = vmatprep.subr.mxu0 0.0
    %5628 = vmatpush2.msra.mxu0 0.0
    %5629 = vmatprep.mubr.f32.mxu0 0.0
    %v5630 = vand.u32 %v5260, 4294901760
    %5631 = vmatmul.mubr.f32.gmra.mxu0 %v5630
    %v5632 = vpop.f32.mrf.mxu0
    %v5633 = vadd.f32 %v5559, %v5632
    %v5634 = vpop.f32.mrf.mxu0
    %5635 = vdwg.mxu0
    %5636 = vmatprep.subr.mxu0 0.0
    %5637 = vmatpush1.msra.mxu0 0.0
    %5638 = vmatprep.subr.mxu0 0.0
    %5639 = vmatpush1.msra.mxu0 0.0
    %5640 = vmatprep.subr.mxu0 0.0
    %5641 = vmatpush1.msra.mxu0 0.0
    %5642 = vmatprep.subr.mxu0 0.0
    %5643 = vmatpush1.msra.mxu0 0.0
    %5644 = vmatprep.subr.mxu0 0.0
    %5645 = vmatpush1.msra.mxu0 0.0
    %5646 = vmatprep.subr.mxu0 0.0
    %5647 = vmatpush1.msra.mxu0 0.0
    %5648 = vmatprep.subr.mxu0 0.0
    %5649 = vmatpush1.msra.mxu0 0.0
    %5650 = vmatprep.subr.mxu0 0.0
    %5651 = vmatpush1.msra.mxu0 0.0
    %5652 = vmatprep.subr.mxu0 0.0
    %5653 = vmatpush1.msra.mxu0 0.0
    %5654 = vmatprep.subr.mxu0 0.0
    %5655 = vmatpush1.msra.mxu0 0.0
    %5656 = vmatprep.subr.mxu0 0.0
    %5657 = vmatpush1.msra.mxu0 0.0
    %5658 = vmatprep.subr.mxu0 0.0
    %5659 = vmatpush1.msra.mxu0 0.0
    %5660 = vmatprep.subr.mxu0 0.0
    %5661 = vmatpush1.msra.mxu0 0.0
    %5662 = vmatprep.subr.mxu0 0.0
    %5663 = vmatpush1.msra.mxu0 0.0
    %5664 = vmatprep.subr.mxu0 0.0
    %5665 = vmatpush1.msra.mxu0 0.0
    %5666 = vmatprep.subr.mxu0 0.0
    %v5667 = vand.u32 %v5257, 4294901760
    %5668 = vmatpush1.msra.mxu0 %v5667
    %5669 = vmatprep.subr.mxu0 0.0
    %5670 = vmatpush2.msra.mxu0 0.0
    %5671 = vmatprep.subr.mxu0 0.0
    %5672 = vmatpush2.msra.mxu0 0.0
    %5673 = vmatprep.subr.mxu0 0.0
    %5674 = vmatpush2.msra.mxu0 0.0
    %5675 = vmatprep.subr.mxu0 0.0
    %5676 = vmatpush2.msra.mxu0 0.0
    %5677 = vmatprep.subr.mxu0 0.0
    %5678 = vmatpush2.msra.mxu0 0.0
    %5679 = vmatprep.subr.mxu0 0.0
    %5680 = vmatpush2.msra.mxu0 0.0
    %5681 = vmatprep.subr.mxu0 0.0
    %5682 = vmatpush2.msra.mxu0 0.0
    %5683 = vmatprep.subr.mxu0 0.0
    %5684 = vmatpush2.msra.mxu0 0.0
    %5685 = vmatprep.subr.mxu0 0.0
    %5686 = vmatpush2.msra.mxu0 0.0
    %5687 = vmatprep.subr.mxu0 0.0
    %5688 = vmatpush2.msra.mxu0 0.0
    %5689 = vmatprep.subr.mxu0 0.0
    %5690 = vmatpush2.msra.mxu0 0.0
    %5691 = vmatprep.subr.mxu0 0.0
    %5692 = vmatpush2.msra.mxu0 0.0
    %5693 = vmatprep.subr.mxu0 0.0
    %5694 = vmatpush2.msra.mxu0 0.0
    %5695 = vmatprep.subr.mxu0 0.0
    %5696 = vmatpush2.msra.mxu0 0.0
    %5697 = vmatprep.subr.mxu0 0.0
    %5698 = vmatpush2.msra.mxu0 0.0
    %5699 = vmatprep.subr.mxu0 0.0
    %5700 = vmatpush2.msra.mxu0 0.0
    %5701 = vmatprep.mubr.f32.mxu0 0.0
    %v5702 = vand.u32 %v5260, 4294901760
    %5703 = vmatmul.mubr.f32.gmra.mxu0 %v5702
    %v5704 = vpop.f32.mrf.mxu0
    %v5705 = vadd.f32 %v5633, %v5704
    %v5706 = vpop.f32.mrf.mxu0
    %5707 = vdwg.mxu0
    %5708 = vrot.lane.b32.xlu0 %v620, 64
    %v5709 = vpop.permute.xlu0 %5708
    %v5712 = vsel %vm639, %v4343, 0
    %5714 = vmatprep.subr.mxu0 0.0
    %5715 = vmatpush1.msra.mxu0 0.0
    %5716 = vmatprep.subr.mxu0 0.0
    %5717 = vmatpush1.msra.mxu0 0.0
    %5718 = vmatprep.subr.mxu0 0.0
    %5719 = vmatpush1.msra.mxu0 0.0
    %5720 = vmatprep.subr.mxu0 0.0
    %5721 = vmatpush1.msra.mxu0 0.0
    %5722 = vmatprep.subr.mxu0 0.0
    %5723 = vmatpush1.msra.mxu0 0.0
    %5724 = vmatprep.subr.mxu0 0.0
    %5725 = vmatpush1.msra.mxu0 0.0
    %5726 = vmatprep.subr.mxu0 0.0
    %5727 = vmatpush1.msra.mxu0 0.0
    %5728 = vmatprep.subr.mxu0 0.0
    %5729 = vmatpush1.msra.mxu0 0.0
    %5730 = vmatprep.subr.mxu0 0.0
    %5731 = vmatpush1.msra.mxu0 0.0
    %5732 = vmatprep.subr.mxu0 0.0
    %5733 = vmatpush1.msra.mxu0 0.0
    %5734 = vmatprep.subr.mxu0 0.0
    %5735 = vmatpush1.msra.mxu0 0.0
    %5736 = vmatprep.subr.mxu0 0.0
    %5737 = vmatpush1.msra.mxu0 0.0
    %5738 = vmatprep.subr.mxu0 0.0
    %5739 = vmatpush1.msra.mxu0 0.0
    %5740 = vmatprep.subr.mxu0 0.0
    %5741 = vmatpush1.msra.mxu0 0.0
    %5742 = vmatprep.subr.mxu0 0.0
    %5743 = vmatpush1.msra.mxu0 0.0
    %5744 = vmatprep.subr.mxu0 0.0
    %v5745 = vand.u32 %v5709, 4294901760
    %5746 = vmatpush1.msra.mxu0 %v5745
    %5747 = vmatprep.subr.mxu0 0.0
    %5748 = vmatpush2.msra.mxu0 0.0
    %5749 = vmatprep.subr.mxu0 0.0
    %5750 = vmatpush2.msra.mxu0 0.0
    %5751 = vmatprep.subr.mxu0 0.0
    %5752 = vmatpush2.msra.mxu0 0.0
    %5753 = vmatprep.subr.mxu0 0.0
    %5754 = vmatpush2.msra.mxu0 0.0
    %5755 = vmatprep.subr.mxu0 0.0
    %5756 = vmatpush2.msra.mxu0 0.0
    %5757 = vmatprep.subr.mxu0 0.0
    %5758 = vmatpush2.msra.mxu0 0.0
    %5759 = vmatprep.subr.mxu0 0.0
    %5760 = vmatpush2.msra.mxu0 0.0
    %5761 = vmatprep.subr.mxu0 0.0
    %5762 = vmatpush2.msra.mxu0 0.0
    %5763 = vmatprep.subr.mxu0 0.0
    %5764 = vmatpush2.msra.mxu0 0.0
    %5765 = vmatprep.subr.mxu0 0.0
    %5766 = vmatpush2.msra.mxu0 0.0
    %5767 = vmatprep.subr.mxu0 0.0
    %5768 = vmatpush2.msra.mxu0 0.0
    %5769 = vmatprep.subr.mxu0 0.0
    %5770 = vmatpush2.msra.mxu0 0.0
    %5771 = vmatprep.subr.mxu0 0.0
    %5772 = vmatpush2.msra.mxu0 0.0
    %5773 = vmatprep.subr.mxu0 0.0
    %5774 = vmatpush2.msra.mxu0 0.0
    %5775 = vmatprep.subr.mxu0 0.0
    %5776 = vmatpush2.msra.mxu0 0.0
    %5777 = vmatprep.subr.mxu0 0.0
    %5778 = vmatpush2.msra.mxu0 0.0
    %5779 = vmatprep.mubr.f32.mxu0 0.0
    %v5780 = vand.u32 %v5712, 4294901760
    %v5781 = vsub.f32 %v5712, %v5780
    %v5782 = vand.u32 %v5781, 4294901760
    %v5783 = vsub.f32 %v5781, %v5782
    %v5784 = vand.u32 %v5783, 4294901760
    %5785 = vmatmul.mubr.f32.gmra.mxu0 %v5784
    %v5786 = vpop.f32.mrf.mxu0
    %v5787 = vadd.f32 0.0, %v5786
    %v5788 = vpop.f32.mrf.mxu0
    %5789 = vdwg.mxu0
    %5790 = vmatprep.subr.mxu0 0.0
    %5791 = vmatpush1.msra.mxu0 0.0
    %5792 = vmatprep.subr.mxu0 0.0
    %5793 = vmatpush1.msra.mxu0 0.0
    %5794 = vmatprep.subr.mxu0 0.0
    %5795 = vmatpush1.msra.mxu0 0.0
    %5796 = vmatprep.subr.mxu0 0.0
    %5797 = vmatpush1.msra.mxu0 0.0
    %5798 = vmatprep.subr.mxu0 0.0
    %5799 = vmatpush1.msra.mxu0 0.0
    %5800 = vmatprep.subr.mxu0 0.0
    %5801 = vmatpush1.msra.mxu0 0.0
    %5802 = vmatprep.subr.mxu0 0.0
    %5803 = vmatpush1.msra.mxu0 0.0
    %5804 = vmatprep.subr.mxu0 0.0
    %5805 = vmatpush1.msra.mxu0 0.0
    %5806 = vmatprep.subr.mxu0 0.0
    %5807 = vmatpush1.msra.mxu0 0.0
    %5808 = vmatprep.subr.mxu0 0.0
    %5809 = vmatpush1.msra.mxu0 0.0
    %5810 = vmatprep.subr.mxu0 0.0
    %5811 = vmatpush1.msra.mxu0 0.0
    %5812 = vmatprep.subr.mxu0 0.0
    %5813 = vmatpush1.msra.mxu0 0.0
    %5814 = vmatprep.subr.mxu0 0.0
    %5815 = vmatpush1.msra.mxu0 0.0
    %5816 = vmatprep.subr.mxu0 0.0
    %5817 = vmatpush1.msra.mxu0 0.0
    %5818 = vmatprep.subr.mxu0 0.0
    %5819 = vmatpush1.msra.mxu0 0.0
    %5820 = vmatprep.subr.mxu0 0.0
    %v5821 = vand.u32 %v5709, 4294901760
    %v5822 = vsub.f32 %v5709, %v5821
    %v5823 = vand.u32 %v5822, 4294901760
    %v5824 = vsub.f32 %v5822, %v5823
    %v5825 = vand.u32 %v5824, 4294901760
    %5826 = vmatpush1.msra.mxu0 %v5825
    %5827 = vmatprep.subr.mxu0 0.0
    %5828 = vmatpush2.msra.mxu0 0.0
    %5829 = vmatprep.subr.mxu0 0.0
    %5830 = vmatpush2.msra.mxu0 0.0
    %5831 = vmatprep.subr.mxu0 0.0
    %5832 = vmatpush2.msra.mxu0 0.0
    %5833 = vmatprep.subr.mxu0 0.0
    %5834 = vmatpush2.msra.mxu0 0.0
    %5835 = vmatprep.subr.mxu0 0.0
    %5836 = vmatpush2.msra.mxu0 0.0
    %5837 = vmatprep.subr.mxu0 0.0
    %5838 = vmatpush2.msra.mxu0 0.0
    %5839 = vmatprep.subr.mxu0 0.0
    %5840 = vmatpush2.msra.mxu0 0.0
    %5841 = vmatprep.subr.mxu0 0.0
    %5842 = vmatpush2.msra.mxu0 0.0
    %5843 = vmatprep.subr.mxu0 0.0
    %5844 = vmatpush2.msra.mxu0 0.0
    %5845 = vmatprep.subr.mxu0 0.0
    %5846 = vmatpush2.msra.mxu0 0.0
    %5847 = vmatprep.subr.mxu0 0.0
    %5848 = vmatpush2.msra.mxu0 0.0
    %5849 = vmatprep.subr.mxu0 0.0
    %5850 = vmatpush2.msra.mxu0 0.0
    %5851 = vmatprep.subr.mxu0 0.0
    %5852 = vmatpush2.msra.mxu0 0.0
    %5853 = vmatprep.subr.mxu0 0.0
    %5854 = vmatpush2.msra.mxu0 0.0
    %5855 = vmatprep.subr.mxu0 0.0
    %5856 = vmatpush2.msra.mxu0 0.0
    %5857 = vmatprep.subr.mxu0 0.0
    %5858 = vmatpush2.msra.mxu0 0.0
    %5859 = vmatprep.mubr.f32.mxu0 0.0
    %v5860 = vand.u32 %v5712, 4294901760
    %5861 = vmatmul.mubr.f32.gmra.mxu0 %v5860
    %v5862 = vpop.f32.mrf.mxu0
    %v5863 = vadd.f32 %v5787, %v5862
    %v5864 = vpop.f32.mrf.mxu0
    %5865 = vdwg.mxu0
    %5866 = vmatprep.subr.mxu0 0.0
    %5867 = vmatpush1.msra.mxu0 0.0
    %5868 = vmatprep.subr.mxu0 0.0
    %5869 = vmatpush1.msra.mxu0 0.0
    %5870 = vmatprep.subr.mxu0 0.0
    %5871 = vmatpush1.msra.mxu0 0.0
    %5872 = vmatprep.subr.mxu0 0.0
    %5873 = vmatpush1.msra.mxu0 0.0
    %5874 = vmatprep.subr.mxu0 0.0
    %5875 = vmatpush1.msra.mxu0 0.0
    %5876 = vmatprep.subr.mxu0 0.0
    %5877 = vmatpush1.msra.mxu0 0.0
    %5878 = vmatprep.subr.mxu0 0.0
    %5879 = vmatpush1.msra.mxu0 0.0
    %5880 = vmatprep.subr.mxu0 0.0
    %5881 = vmatpush1.msra.mxu0 0.0
    %5882 = vmatprep.subr.mxu0 0.0
    %5883 = vmatpush1.msra.mxu0 0.0
    %5884 = vmatprep.subr.mxu0 0.0
    %5885 = vmatpush1.msra.mxu0 0.0
    %5886 = vmatprep.subr.mxu0 0.0
    %5887 = vmatpush1.msra.mxu0 0.0
    %5888 = vmatprep.subr.mxu0 0.0
    %5889 = vmatpush1.msra.mxu0 0.0
    %5890 = vmatprep.subr.mxu0 0.0
    %5891 = vmatpush1.msra.mxu0 0.0
    %5892 = vmatprep.subr.mxu0 0.0
    %5893 = vmatpush1.msra.mxu0 0.0
    %5894 = vmatprep.subr.mxu0 0.0
    %5895 = vmatpush1.msra.mxu0 0.0
    %5896 = vmatprep.subr.mxu0 0.0
    %v5897 = vand.u32 %v5709, 4294901760
    %v5898 = vsub.f32 %v5709, %v5897
    %5899 = vmatpush1.msra.mxu0 %v5898
    %5900 = vmatprep.subr.mxu0 0.0
    %5901 = vmatpush2.msra.mxu0 0.0
    %5902 = vmatprep.subr.mxu0 0.0
    %5903 = vmatpush2.msra.mxu0 0.0
    %5904 = vmatprep.subr.mxu0 0.0
    %5905 = vmatpush2.msra.mxu0 0.0
    %5906 = vmatprep.subr.mxu0 0.0
    %5907 = vmatpush2.msra.mxu0 0.0
    %5908 = vmatprep.subr.mxu0 0.0
    %5909 = vmatpush2.msra.mxu0 0.0
    %5910 = vmatprep.subr.mxu0 0.0
    %5911 = vmatpush2.msra.mxu0 0.0
    %5912 = vmatprep.subr.mxu0 0.0
    %5913 = vmatpush2.msra.mxu0 0.0
    %5914 = vmatprep.subr.mxu0 0.0
    %5915 = vmatpush2.msra.mxu0 0.0
    %5916 = vmatprep.subr.mxu0 0.0
    %5917 = vmatpush2.msra.mxu0 0.0
    %5918 = vmatprep.subr.mxu0 0.0
    %5919 = vmatpush2.msra.mxu0 0.0
    %5920 = vmatprep.subr.mxu0 0.0
    %5921 = vmatpush2.msra.mxu0 0.0
    %5922 = vmatprep.subr.mxu0 0.0
    %5923 = vmatpush2.msra.mxu0 0.0
    %5924 = vmatprep.subr.mxu0 0.0
    %5925 = vmatpush2.msra.mxu0 0.0
    %5926 = vmatprep.subr.mxu0 0.0
    %5927 = vmatpush2.msra.mxu0 0.0
    %5928 = vmatprep.subr.mxu0 0.0
    %5929 = vmatpush2.msra.mxu0 0.0
    %5930 = vmatprep.subr.mxu0 0.0
    %5931 = vmatpush2.msra.mxu0 0.0
    %5932 = vmatprep.mubr.f32.mxu0 0.0
    %v5933 = vand.u32 %v5712, 4294901760
    %v5934 = vsub.f32 %v5712, %v5933
    %5935 = vmatmul.mubr.f32.gmra.mxu0 %v5934
    %v5936 = vpop.f32.mrf.mxu0
    %v5937 = vadd.f32 %v5863, %v5936
    %v5938 = vpop.f32.mrf.mxu0
    %5939 = vdwg.mxu0
    %5940 = vmatprep.subr.mxu0 0.0
    %5941 = vmatpush1.msra.mxu0 0.0
    %5942 = vmatprep.subr.mxu0 0.0
    %5943 = vmatpush1.msra.mxu0 0.0
    %5944 = vmatprep.subr.mxu0 0.0
    %5945 = vmatpush1.msra.mxu0 0.0
    %5946 = vmatprep.subr.mxu0 0.0
    %5947 = vmatpush1.msra.mxu0 0.0
    %5948 = vmatprep.subr.mxu0 0.0
    %5949 = vmatpush1.msra.mxu0 0.0
    %5950 = vmatprep.subr.mxu0 0.0
    %5951 = vmatpush1.msra.mxu0 0.0
    %5952 = vmatprep.subr.mxu0 0.0
    %5953 = vmatpush1.msra.mxu0 0.0
    %5954 = vmatprep.subr.mxu0 0.0
    %5955 = vmatpush1.msra.mxu0 0.0
    %5956 = vmatprep.subr.mxu0 0.0
    %5957 = vmatpush1.msra.mxu0 0.0
    %5958 = vmatprep.subr.mxu0 0.0
    %5959 = vmatpush1.msra.mxu0 0.0
    %5960 = vmatprep.subr.mxu0 0.0
    %5961 = vmatpush1.msra.mxu0 0.0
    %5962 = vmatprep.subr.mxu0 0.0
    %5963 = vmatpush1.msra.mxu0 0.0
    %5964 = vmatprep.subr.mxu0 0.0
    %5965 = vmatpush1.msra.mxu0 0.0
    %5966 = vmatprep.subr.mxu0 0.0
    %5967 = vmatpush1.msra.mxu0 0.0
    %5968 = vmatprep.subr.mxu0 0.0
    %5969 = vmatpush1.msra.mxu0 0.0
    %5970 = vmatprep.subr.mxu0 0.0
    %v5971 = vand.u32 %v5709, 4294901760
    %5972 = vmatpush1.msra.mxu0 %v5971
    %5973 = vmatprep.subr.mxu0 0.0
    %5974 = vmatpush2.msra.mxu0 0.0
    %5975 = vmatprep.subr.mxu0 0.0
    %5976 = vmatpush2.msra.mxu0 0.0
    %5977 = vmatprep.subr.mxu0 0.0
    %5978 = vmatpush2.msra.mxu0 0.0
    %5979 = vmatprep.subr.mxu0 0.0
    %5980 = vmatpush2.msra.mxu0 0.0
    %5981 = vmatprep.subr.mxu0 0.0
    %5982 = vmatpush2.msra.mxu0 0.0
    %5983 = vmatprep.subr.mxu0 0.0
    %5984 = vmatpush2.msra.mxu0 0.0
    %5985 = vmatprep.subr.mxu0 0.0
    %5986 = vmatpush2.msra.mxu0 0.0
    %5987 = vmatprep.subr.mxu0 0.0
    %5988 = vmatpush2.msra.mxu0 0.0
    %5989 = vmatprep.subr.mxu0 0.0
    %5990 = vmatpush2.msra.mxu0 0.0
    %5991 = vmatprep.subr.mxu0 0.0
    %5992 = vmatpush2.msra.mxu0 0.0
    %5993 = vmatprep.subr.mxu0 0.0
    %5994 = vmatpush2.msra.mxu0 0.0
    %5995 = vmatprep.subr.mxu0 0.0
    %5996 = vmatpush2.msra.mxu0 0.0
    %5997 = vmatprep.subr.mxu0 0.0
    %5998 = vmatpush2.msra.mxu0 0.0
    %5999 = vmatprep.subr.mxu0 0.0
    %6000 = vmatpush2.msra.mxu0 0.0
    %6001 = vmatprep.subr.mxu0 0.0
    %6002 = vmatpush2.msra.mxu0 0.0
    %6003 = vmatprep.subr.mxu0 0.0
    %6004 = vmatpush2.msra.mxu0 0.0
    %6005 = vmatprep.mubr.f32.mxu0 0.0
    %v6006 = vand.u32 %v5712, 4294901760
    %v6007 = vsub.f32 %v5712, %v6006
    %v6008 = vand.u32 %v6007, 4294901760
    %6009 = vmatmul.mubr.f32.gmra.mxu0 %v6008
    %v6010 = vpop.f32.mrf.mxu0
    %v6011 = vadd.f32 %v5937, %v6010
    %v6012 = vpop.f32.mrf.mxu0
    %6013 = vdwg.mxu0
    %6014 = vmatprep.subr.mxu0 0.0
    %6015 = vmatpush1.msra.mxu0 0.0
    %6016 = vmatprep.subr.mxu0 0.0
    %6017 = vmatpush1.msra.mxu0 0.0
    %6018 = vmatprep.subr.mxu0 0.0
    %6019 = vmatpush1.msra.mxu0 0.0
    %6020 = vmatprep.subr.mxu0 0.0
    %6021 = vmatpush1.msra.mxu0 0.0
    %6022 = vmatprep.subr.mxu0 0.0
    %6023 = vmatpush1.msra.mxu0 0.0
    %6024 = vmatprep.subr.mxu0 0.0
    %6025 = vmatpush1.msra.mxu0 0.0
    %6026 = vmatprep.subr.mxu0 0.0
    %6027 = vmatpush1.msra.mxu0 0.0
    %6028 = vmatprep.subr.mxu0 0.0
    %6029 = vmatpush1.msra.mxu0 0.0
    %6030 = vmatprep.subr.mxu0 0.0
    %6031 = vmatpush1.msra.mxu0 0.0
    %6032 = vmatprep.subr.mxu0 0.0
    %6033 = vmatpush1.msra.mxu0 0.0
    %6034 = vmatprep.subr.mxu0 0.0
    %6035 = vmatpush1.msra.mxu0 0.0
    %6036 = vmatprep.subr.mxu0 0.0
    %6037 = vmatpush1.msra.mxu0 0.0
    %6038 = vmatprep.subr.mxu0 0.0
    %6039 = vmatpush1.msra.mxu0 0.0
    %6040 = vmatprep.subr.mxu0 0.0
    %6041 = vmatpush1.msra.mxu0 0.0
    %6042 = vmatprep.subr.mxu0 0.0
    %6043 = vmatpush1.msra.mxu0 0.0
    %6044 = vmatprep.subr.mxu0 0.0
    %v6045 = vand.u32 %v5709, 4294901760
    %v6046 = vsub.f32 %v5709, %v6045
    %v6047 = vand.u32 %v6046, 4294901760
    %6048 = vmatpush1.msra.mxu0 %v6047
    %6049 = vmatprep.subr.mxu0 0.0
    %6050 = vmatpush2.msra.mxu0 0.0
    %6051 = vmatprep.subr.mxu0 0.0
    %6052 = vmatpush2.msra.mxu0 0.0
    %6053 = vmatprep.subr.mxu0 0.0
    %6054 = vmatpush2.msra.mxu0 0.0
    %6055 = vmatprep.subr.mxu0 0.0
    %6056 = vmatpush2.msra.mxu0 0.0
    %6057 = vmatprep.subr.mxu0 0.0
    %6058 = vmatpush2.msra.mxu0 0.0
    %6059 = vmatprep.subr.mxu0 0.0
    %6060 = vmatpush2.msra.mxu0 0.0
    %6061 = vmatprep.subr.mxu0 0.0
    %6062 = vmatpush2.msra.mxu0 0.0
    %6063 = vmatprep.subr.mxu0 0.0
    %6064 = vmatpush2.msra.mxu0 0.0
    %6065 = vmatprep.subr.mxu0 0.0
    %6066 = vmatpush2.msra.mxu0 0.0
    %6067 = vmatprep.subr.mxu0 0.0
    %6068 = vmatpush2.msra.mxu0 0.0
    %6069 = vmatprep.subr.mxu0 0.0
    %6070 = vmatpush2.msra.mxu0 0.0
    %6071 = vmatprep.subr.mxu0 0.0
    %6072 = vmatpush2.msra.mxu0 0.0
    %6073 = vmatprep.subr.mxu0 0.0
    %6074 = vmatpush2.msra.mxu0 0.0
    %6075 = vmatprep.subr.mxu0 0.0
    %6076 = vmatpush2.msra.mxu0 0.0
    %6077 = vmatprep.subr.mxu0 0.0
    %6078 = vmatpush2.msra.mxu0 0.0
    %6079 = vmatprep.subr.mxu0 0.0
    %6080 = vmatpush2.msra.mxu0 0.0
    %6081 = vmatprep.mubr.f32.mxu0 0.0
    %v6082 = vand.u32 %v5712, 4294901760
    %6083 = vmatmul.mubr.f32.gmra.mxu0 %v6082
    %v6084 = vpop.f32.mrf.mxu0
    %v6085 = vadd.f32 %v6011, %v6084
    %v6086 = vpop.f32.mrf.mxu0
    %6087 = vdwg.mxu0
    %6088 = vmatprep.subr.mxu0 0.0
    %6089 = vmatpush1.msra.mxu0 0.0
    %6090 = vmatprep.subr.mxu0 0.0
    %6091 = vmatpush1.msra.mxu0 0.0
    %6092 = vmatprep.subr.mxu0 0.0
    %6093 = vmatpush1.msra.mxu0 0.0
    %6094 = vmatprep.subr.mxu0 0.0
    %6095 = vmatpush1.msra.mxu0 0.0
    %6096 = vmatprep.subr.mxu0 0.0
    %6097 = vmatpush1.msra.mxu0 0.0
    %6098 = vmatprep.subr.mxu0 0.0
    %6099 = vmatpush1.msra.mxu0 0.0
    %6100 = vmatprep.subr.mxu0 0.0
    %6101 = vmatpush1.msra.mxu0 0.0
    %6102 = vmatprep.subr.mxu0 0.0
    %6103 = vmatpush1.msra.mxu0 0.0
    %6104 = vmatprep.subr.mxu0 0.0
    %6105 = vmatpush1.msra.mxu0 0.0
    %6106 = vmatprep.subr.mxu0 0.0
    %6107 = vmatpush1.msra.mxu0 0.0
    %6108 = vmatprep.subr.mxu0 0.0
    %6109 = vmatpush1.msra.mxu0 0.0
    %6110 = vmatprep.subr.mxu0 0.0
    %6111 = vmatpush1.msra.mxu0 0.0
    %6112 = vmatprep.subr.mxu0 0.0
    %6113 = vmatpush1.msra.mxu0 0.0
    %6114 = vmatprep.subr.mxu0 0.0
    %6115 = vmatpush1.msra.mxu0 0.0
    %6116 = vmatprep.subr.mxu0 0.0
    %6117 = vmatpush1.msra.mxu0 0.0
    %6118 = vmatprep.subr.mxu0 0.0
    %v6119 = vand.u32 %v5709, 4294901760
    %6120 = vmatpush1.msra.mxu0 %v6119
    %6121 = vmatprep.subr.mxu0 0.0
    %6122 = vmatpush2.msra.mxu0 0.0
    %6123 = vmatprep.subr.mxu0 0.0
    %6124 = vmatpush2.msra.mxu0 0.0
    %6125 = vmatprep.subr.mxu0 0.0
    %6126 = vmatpush2.msra.mxu0 0.0
    %6127 = vmatprep.subr.mxu0 0.0
    %6128 = vmatpush2.msra.mxu0 0.0
    %6129 = vmatprep.subr.mxu0 0.0
    %6130 = vmatpush2.msra.mxu0 0.0
    %6131 = vmatprep.subr.mxu0 0.0
    %6132 = vmatpush2.msra.mxu0 0.0
    %6133 = vmatprep.subr.mxu0 0.0
    %6134 = vmatpush2.msra.mxu0 0.0
    %6135 = vmatprep.subr.mxu0 0.0
    %6136 = vmatpush2.msra.mxu0 0.0
    %6137 = vmatprep.subr.mxu0 0.0
    %6138 = vmatpush2.msra.mxu0 0.0
    %6139 = vmatprep.subr.mxu0 0.0
    %6140 = vmatpush2.msra.mxu0 0.0
    %6141 = vmatprep.subr.mxu0 0.0
    %6142 = vmatpush2.msra.mxu0 0.0
    %6143 = vmatprep.subr.mxu0 0.0
    %6144 = vmatpush2.msra.mxu0 0.0
    %6145 = vmatprep.subr.mxu0 0.0
    %6146 = vmatpush2.msra.mxu0 0.0
    %6147 = vmatprep.subr.mxu0 0.0
    %6148 = vmatpush2.msra.mxu0 0.0
    %6149 = vmatprep.subr.mxu0 0.0
    %6150 = vmatpush2.msra.mxu0 0.0
    %6151 = vmatprep.subr.mxu0 0.0
    %6152 = vmatpush2.msra.mxu0 0.0
    %6153 = vmatprep.mubr.f32.mxu0 0.0
    %v6154 = vand.u32 %v5712, 4294901760
    %6155 = vmatmul.mubr.f32.gmra.mxu0 %v6154
    %v6156 = vpop.f32.mrf.mxu0
    %v6157 = vadd.f32 %v6085, %v6156
    %v6158 = vpop.f32.mrf.mxu0
    %6159 = vdwg.mxu0
    %6160 = vrot.lane.b32.xlu0 %v622, 64
    %v6161 = vpop.permute.xlu0 %6160
    %v6164 = vsel %vm639, %v4345, 0
    %6166 = vmatprep.subr.mxu0 0.0
    %6167 = vmatpush1.msra.mxu0 0.0
    %6168 = vmatprep.subr.mxu0 0.0
    %6169 = vmatpush1.msra.mxu0 0.0
    %6170 = vmatprep.subr.mxu0 0.0
    %6171 = vmatpush1.msra.mxu0 0.0
    %6172 = vmatprep.subr.mxu0 0.0
    %6173 = vmatpush1.msra.mxu0 0.0
    %6174 = vmatprep.subr.mxu0 0.0
    %6175 = vmatpush1.msra.mxu0 0.0
    %6176 = vmatprep.subr.mxu0 0.0
    %6177 = vmatpush1.msra.mxu0 0.0
    %6178 = vmatprep.subr.mxu0 0.0
    %6179 = vmatpush1.msra.mxu0 0.0
    %6180 = vmatprep.subr.mxu0 0.0
    %6181 = vmatpush1.msra.mxu0 0.0
    %6182 = vmatprep.subr.mxu0 0.0
    %6183 = vmatpush1.msra.mxu0 0.0
    %6184 = vmatprep.subr.mxu0 0.0
    %6185 = vmatpush1.msra.mxu0 0.0
    %6186 = vmatprep.subr.mxu0 0.0
    %6187 = vmatpush1.msra.mxu0 0.0
    %6188 = vmatprep.subr.mxu0 0.0
    %6189 = vmatpush1.msra.mxu0 0.0
    %6190 = vmatprep.subr.mxu0 0.0
    %6191 = vmatpush1.msra.mxu0 0.0
    %6192 = vmatprep.subr.mxu0 0.0
    %6193 = vmatpush1.msra.mxu0 0.0
    %6194 = vmatprep.subr.mxu0 0.0
    %6195 = vmatpush1.msra.mxu0 0.0
    %6196 = vmatprep.subr.mxu0 0.0
    %v6197 = vand.u32 %v6161, 4294901760
    %6198 = vmatpush1.msra.mxu0 %v6197
    %6199 = vmatprep.subr.mxu0 0.0
    %6200 = vmatpush2.msra.mxu0 0.0
    %6201 = vmatprep.subr.mxu0 0.0
    %6202 = vmatpush2.msra.mxu0 0.0
    %6203 = vmatprep.subr.mxu0 0.0
    %6204 = vmatpush2.msra.mxu0 0.0
    %6205 = vmatprep.subr.mxu0 0.0
    %6206 = vmatpush2.msra.mxu0 0.0
    %6207 = vmatprep.subr.mxu0 0.0
    %6208 = vmatpush2.msra.mxu0 0.0
    %6209 = vmatprep.subr.mxu0 0.0
    %6210 = vmatpush2.msra.mxu0 0.0
    %6211 = vmatprep.subr.mxu0 0.0
    %6212 = vmatpush2.msra.mxu0 0.0
    %6213 = vmatprep.subr.mxu0 0.0
    %6214 = vmatpush2.msra.mxu0 0.0
    %6215 = vmatprep.subr.mxu0 0.0
    %6216 = vmatpush2.msra.mxu0 0.0
    %6217 = vmatprep.subr.mxu0 0.0
    %6218 = vmatpush2.msra.mxu0 0.0
    %6219 = vmatprep.subr.mxu0 0.0
    %6220 = vmatpush2.msra.mxu0 0.0
    %6221 = vmatprep.subr.mxu0 0.0
    %6222 = vmatpush2.msra.mxu0 0.0
    %6223 = vmatprep.subr.mxu0 0.0
    %6224 = vmatpush2.msra.mxu0 0.0
    %6225 = vmatprep.subr.mxu0 0.0
    %6226 = vmatpush2.msra.mxu0 0.0
    %6227 = vmatprep.subr.mxu0 0.0
    %6228 = vmatpush2.msra.mxu0 0.0
    %6229 = vmatprep.subr.mxu0 0.0
    %6230 = vmatpush2.msra.mxu0 0.0
    %6231 = vmatprep.mubr.f32.mxu0 0.0
    %v6232 = vand.u32 %v6164, 4294901760
    %v6233 = vsub.f32 %v6164, %v6232
    %v6234 = vand.u32 %v6233, 4294901760
    %v6235 = vsub.f32 %v6233, %v6234
    %v6236 = vand.u32 %v6235, 4294901760
    %6237 = vmatmul.mubr.f32.gmra.mxu0 %v6236
    %v6238 = vpop.f32.mrf.mxu0
    %v6239 = vadd.f32 0.0, %v6238
    %v6240 = vpop.f32.mrf.mxu0
    %6241 = vdwg.mxu0
    %6242 = vmatprep.subr.mxu0 0.0
    %6243 = vmatpush1.msra.mxu0 0.0
    %6244 = vmatprep.subr.mxu0 0.0
    %6245 = vmatpush1.msra.mxu0 0.0
    %6246 = vmatprep.subr.mxu0 0.0
    %6247 = vmatpush1.msra.mxu0 0.0
    %6248 = vmatprep.subr.mxu0 0.0
    %6249 = vmatpush1.msra.mxu0 0.0
    %6250 = vmatprep.subr.mxu0 0.0
    %6251 = vmatpush1.msra.mxu0 0.0
    %6252 = vmatprep.subr.mxu0 0.0
    %6253 = vmatpush1.msra.mxu0 0.0
    %6254 = vmatprep.subr.mxu0 0.0
    %6255 = vmatpush1.msra.mxu0 0.0
    %6256 = vmatprep.subr.mxu0 0.0
    %6257 = vmatpush1.msra.mxu0 0.0
    %6258 = vmatprep.subr.mxu0 0.0
    %6259 = vmatpush1.msra.mxu0 0.0
    %6260 = vmatprep.subr.mxu0 0.0
    %6261 = vmatpush1.msra.mxu0 0.0
    %6262 = vmatprep.subr.mxu0 0.0
    %6263 = vmatpush1.msra.mxu0 0.0
    %6264 = vmatprep.subr.mxu0 0.0
    %6265 = vmatpush1.msra.mxu0 0.0
    %6266 = vmatprep.subr.mxu0 0.0
    %6267 = vmatpush1.msra.mxu0 0.0
    %6268 = vmatprep.subr.mxu0 0.0
    %6269 = vmatpush1.msra.mxu0 0.0
    %6270 = vmatprep.subr.mxu0 0.0
    %6271 = vmatpush1.msra.mxu0 0.0
    %6272 = vmatprep.subr.mxu0 0.0
    %v6273 = vand.u32 %v6161, 4294901760
    %v6274 = vsub.f32 %v6161, %v6273
    %v6275 = vand.u32 %v6274, 4294901760
    %v6276 = vsub.f32 %v6274, %v6275
    %v6277 = vand.u32 %v6276, 4294901760
    %6278 = vmatpush1.msra.mxu0 %v6277
    %6279 = vmatprep.subr.mxu0 0.0
    %6280 = vmatpush2.msra.mxu0 0.0
    %6281 = vmatprep.subr.mxu0 0.0
    %6282 = vmatpush2.msra.mxu0 0.0
    %6283 = vmatprep.subr.mxu0 0.0
    %6284 = vmatpush2.msra.mxu0 0.0
    %6285 = vmatprep.subr.mxu0 0.0
    %6286 = vmatpush2.msra.mxu0 0.0
    %6287 = vmatprep.subr.mxu0 0.0
    %6288 = vmatpush2.msra.mxu0 0.0
    %6289 = vmatprep.subr.mxu0 0.0
    %6290 = vmatpush2.msra.mxu0 0.0
    %6291 = vmatprep.subr.mxu0 0.0
    %6292 = vmatpush2.msra.mxu0 0.0
    %6293 = vmatprep.subr.mxu0 0.0
    %6294 = vmatpush2.msra.mxu0 0.0
    %6295 = vmatprep.subr.mxu0 0.0
    %6296 = vmatpush2.msra.mxu0 0.0
    %6297 = vmatprep.subr.mxu0 0.0
    %6298 = vmatpush2.msra.mxu0 0.0
    %6299 = vmatprep.subr.mxu0 0.0
    %6300 = vmatpush2.msra.mxu0 0.0
    %6301 = vmatprep.subr.mxu0 0.0
    %6302 = vmatpush2.msra.mxu0 0.0
    %6303 = vmatprep.subr.mxu0 0.0
    %6304 = vmatpush2.msra.mxu0 0.0
    %6305 = vmatprep.subr.mxu0 0.0
    %6306 = vmatpush2.msra.mxu0 0.0
    %6307 = vmatprep.subr.mxu0 0.0
    %6308 = vmatpush2.msra.mxu0 0.0
    %6309 = vmatprep.subr.mxu0 0.0
    %6310 = vmatpush2.msra.mxu0 0.0
    %6311 = vmatprep.mubr.f32.mxu0 0.0
    %v6312 = vand.u32 %v6164, 4294901760
    %6313 = vmatmul.mubr.f32.gmra.mxu0 %v6312
    %v6314 = vpop.f32.mrf.mxu0
    %v6315 = vadd.f32 %v6239, %v6314
    %v6316 = vpop.f32.mrf.mxu0
    %6317 = vdwg.mxu0
    %6318 = vmatprep.subr.mxu0 0.0
    %6319 = vmatpush1.msra.mxu0 0.0
    %6320 = vmatprep.subr.mxu0 0.0
    %6321 = vmatpush1.msra.mxu0 0.0
    %6322 = vmatprep.subr.mxu0 0.0
    %6323 = vmatpush1.msra.mxu0 0.0
    %6324 = vmatprep.subr.mxu0 0.0
    %6325 = vmatpush1.msra.mxu0 0.0
    %6326 = vmatprep.subr.mxu0 0.0
    %6327 = vmatpush1.msra.mxu0 0.0
    %6328 = vmatprep.subr.mxu0 0.0
    %6329 = vmatpush1.msra.mxu0 0.0
    %6330 = vmatprep.subr.mxu0 0.0
    %6331 = vmatpush1.msra.mxu0 0.0
    %6332 = vmatprep.subr.mxu0 0.0
    %6333 = vmatpush1.msra.mxu0 0.0
    %6334 = vmatprep.subr.mxu0 0.0
    %6335 = vmatpush1.msra.mxu0 0.0
    %6336 = vmatprep.subr.mxu0 0.0
    %6337 = vmatpush1.msra.mxu0 0.0
    %6338 = vmatprep.subr.mxu0 0.0
    %6339 = vmatpush1.msra.mxu0 0.0
    %6340 = vmatprep.subr.mxu0 0.0
    %6341 = vmatpush1.msra.mxu0 0.0
    %6342 = vmatprep.subr.mxu0 0.0
    %6343 = vmatpush1.msra.mxu0 0.0
    %6344 = vmatprep.subr.mxu0 0.0
    %6345 = vmatpush1.msra.mxu0 0.0
    %6346 = vmatprep.subr.mxu0 0.0
    %6347 = vmatpush1.msra.mxu0 0.0
    %6348 = vmatprep.subr.mxu0 0.0
    %v6349 = vand.u32 %v6161, 4294901760
    %v6350 = vsub.f32 %v6161, %v6349
    %6351 = vmatpush1.msra.mxu0 %v6350
    %6352 = vmatprep.subr.mxu0 0.0
    %6353 = vmatpush2.msra.mxu0 0.0
    %6354 = vmatprep.subr.mxu0 0.0
    %6355 = vmatpush2.msra.mxu0 0.0
    %6356 = vmatprep.subr.mxu0 0.0
    %6357 = vmatpush2.msra.mxu0 0.0
    %6358 = vmatprep.subr.mxu0 0.0
    %6359 = vmatpush2.msra.mxu0 0.0
    %6360 = vmatprep.subr.mxu0 0.0
    %6361 = vmatpush2.msra.mxu0 0.0
    %6362 = vmatprep.subr.mxu0 0.0
    %6363 = vmatpush2.msra.mxu0 0.0
    %6364 = vmatprep.subr.mxu0 0.0
    %6365 = vmatpush2.msra.mxu0 0.0
    %6366 = vmatprep.subr.mxu0 0.0
    %6367 = vmatpush2.msra.mxu0 0.0
    %6368 = vmatprep.subr.mxu0 0.0
    %6369 = vmatpush2.msra.mxu0 0.0
    %6370 = vmatprep.subr.mxu0 0.0
    %6371 = vmatpush2.msra.mxu0 0.0
    %6372 = vmatprep.subr.mxu0 0.0
    %6373 = vmatpush2.msra.mxu0 0.0
    %6374 = vmatprep.subr.mxu0 0.0
    %6375 = vmatpush2.msra.mxu0 0.0
    %6376 = vmatprep.subr.mxu0 0.0
    %6377 = vmatpush2.msra.mxu0 0.0
    %6378 = vmatprep.subr.mxu0 0.0
    %6379 = vmatpush2.msra.mxu0 0.0
    %6380 = vmatprep.subr.mxu0 0.0
    %6381 = vmatpush2.msra.mxu0 0.0
    %6382 = vmatprep.subr.mxu0 0.0
    %6383 = vmatpush2.msra.mxu0 0.0
    %6384 = vmatprep.mubr.f32.mxu0 0.0
    %v6385 = vand.u32 %v6164, 4294901760
    %v6386 = vsub.f32 %v6164, %v6385
    %6387 = vmatmul.mubr.f32.gmra.mxu0 %v6386
    %v6388 = vpop.f32.mrf.mxu0
    %v6389 = vadd.f32 %v6315, %v6388
    %v6390 = vpop.f32.mrf.mxu0
    %6391 = vdwg.mxu0
    %6392 = vmatprep.subr.mxu0 0.0
    %6393 = vmatpush1.msra.mxu0 0.0
    %6394 = vmatprep.subr.mxu0 0.0
    %6395 = vmatpush1.msra.mxu0 0.0
    %6396 = vmatprep.subr.mxu0 0.0
    %6397 = vmatpush1.msra.mxu0 0.0
    %6398 = vmatprep.subr.mxu0 0.0
    %6399 = vmatpush1.msra.mxu0 0.0
    %6400 = vmatprep.subr.mxu0 0.0
    %6401 = vmatpush1.msra.mxu0 0.0
    %6402 = vmatprep.subr.mxu0 0.0
    %6403 = vmatpush1.msra.mxu0 0.0
    %6404 = vmatprep.subr.mxu0 0.0
    %6405 = vmatpush1.msra.mxu0 0.0
    %6406 = vmatprep.subr.mxu0 0.0
    %6407 = vmatpush1.msra.mxu0 0.0
    %6408 = vmatprep.subr.mxu0 0.0
    %6409 = vmatpush1.msra.mxu0 0.0
    %6410 = vmatprep.subr.mxu0 0.0
    %6411 = vmatpush1.msra.mxu0 0.0
    %6412 = vmatprep.subr.mxu0 0.0
    %6413 = vmatpush1.msra.mxu0 0.0
    %6414 = vmatprep.subr.mxu0 0.0
    %6415 = vmatpush1.msra.mxu0 0.0
    %6416 = vmatprep.subr.mxu0 0.0
    %6417 = vmatpush1.msra.mxu0 0.0
    %6418 = vmatprep.subr.mxu0 0.0
    %6419 = vmatpush1.msra.mxu0 0.0
    %6420 = vmatprep.subr.mxu0 0.0
    %6421 = vmatpush1.msra.mxu0 0.0
    %6422 = vmatprep.subr.mxu0 0.0
    %v6423 = vand.u32 %v6161, 4294901760
    %6424 = vmatpush1.msra.mxu0 %v6423
    %6425 = vmatprep.subr.mxu0 0.0
    %6426 = vmatpush2.msra.mxu0 0.0
    %6427 = vmatprep.subr.mxu0 0.0
    %6428 = vmatpush2.msra.mxu0 0.0
    %6429 = vmatprep.subr.mxu0 0.0
    %6430 = vmatpush2.msra.mxu0 0.0
    %6431 = vmatprep.subr.mxu0 0.0
    %6432 = vmatpush2.msra.mxu0 0.0
    %6433 = vmatprep.subr.mxu0 0.0
    %6434 = vmatpush2.msra.mxu0 0.0
    %6435 = vmatprep.subr.mxu0 0.0
    %6436 = vmatpush2.msra.mxu0 0.0
    %6437 = vmatprep.subr.mxu0 0.0
    %6438 = vmatpush2.msra.mxu0 0.0
    %6439 = vmatprep.subr.mxu0 0.0
    %6440 = vmatpush2.msra.mxu0 0.0
    %6441 = vmatprep.subr.mxu0 0.0
    %6442 = vmatpush2.msra.mxu0 0.0
    %6443 = vmatprep.subr.mxu0 0.0
    %6444 = vmatpush2.msra.mxu0 0.0
    %6445 = vmatprep.subr.mxu0 0.0
    %6446 = vmatpush2.msra.mxu0 0.0
    %6447 = vmatprep.subr.mxu0 0.0
    %6448 = vmatpush2.msra.mxu0 0.0
    %6449 = vmatprep.subr.mxu0 0.0
    %6450 = vmatpush2.msra.mxu0 0.0
    %6451 = vmatprep.subr.mxu0 0.0
    %6452 = vmatpush2.msra.mxu0 0.0
    %6453 = vmatprep.subr.mxu0 0.0
    %6454 = vmatpush2.msra.mxu0 0.0
    %6455 = vmatprep.subr.mxu0 0.0
    %6456 = vmatpush2.msra.mxu0 0.0
    %6457 = vmatprep.mubr.f32.mxu0 0.0
    %v6458 = vand.u32 %v6164, 4294901760
    %v6459 = vsub.f32 %v6164, %v6458
    %v6460 = vand.u32 %v6459, 4294901760
    %6461 = vmatmul.mubr.f32.gmra.mxu0 %v6460
    %v6462 = vpop.f32.mrf.mxu0
    %v6463 = vadd.f32 %v6389, %v6462
    %v6464 = vpop.f32.mrf.mxu0
    %6465 = vdwg.mxu0
    %6466 = vmatprep.subr.mxu0 0.0
    %6467 = vmatpush1.msra.mxu0 0.0
    %6468 = vmatprep.subr.mxu0 0.0
    %6469 = vmatpush1.msra.mxu0 0.0
    %6470 = vmatprep.subr.mxu0 0.0
    %6471 = vmatpush1.msra.mxu0 0.0
    %6472 = vmatprep.subr.mxu0 0.0
    %6473 = vmatpush1.msra.mxu0 0.0
    %6474 = vmatprep.subr.mxu0 0.0
    %6475 = vmatpush1.msra.mxu0 0.0
    %6476 = vmatprep.subr.mxu0 0.0
    %6477 = vmatpush1.msra.mxu0 0.0
    %6478 = vmatprep.subr.mxu0 0.0
    %6479 = vmatpush1.msra.mxu0 0.0
    %6480 = vmatprep.subr.mxu0 0.0
    %6481 = vmatpush1.msra.mxu0 0.0
    %6482 = vmatprep.subr.mxu0 0.0
    %6483 = vmatpush1.msra.mxu0 0.0
    %6484 = vmatprep.subr.mxu0 0.0
    %6485 = vmatpush1.msra.mxu0 0.0
    %6486 = vmatprep.subr.mxu0 0.0
    %6487 = vmatpush1.msra.mxu0 0.0
    %6488 = vmatprep.subr.mxu0 0.0
    %6489 = vmatpush1.msra.mxu0 0.0
    %6490 = vmatprep.subr.mxu0 0.0
    %6491 = vmatpush1.msra.mxu0 0.0
    %6492 = vmatprep.subr.mxu0 0.0
    %6493 = vmatpush1.msra.mxu0 0.0
    %6494 = vmatprep.subr.mxu0 0.0
    %6495 = vmatpush1.msra.mxu0 0.0
    %6496 = vmatprep.subr.mxu0 0.0
    %v6497 = vand.u32 %v6161, 4294901760
    %v6498 = vsub.f32 %v6161, %v6497
    %v6499 = vand.u32 %v6498, 4294901760
    %6500 = vmatpush1.msra.mxu0 %v6499
    %6501 = vmatprep.subr.mxu0 0.0
    %6502 = vmatpush2.msra.mxu0 0.0
    %6503 = vmatprep.subr.mxu0 0.0
    %6504 = vmatpush2.msra.mxu0 0.0
    %6505 = vmatprep.subr.mxu0 0.0
    %6506 = vmatpush2.msra.mxu0 0.0
    %6507 = vmatprep.subr.mxu0 0.0
    %6508 = vmatpush2.msra.mxu0 0.0
    %6509 = vmatprep.subr.mxu0 0.0
    %6510 = vmatpush2.msra.mxu0 0.0
    %6511 = vmatprep.subr.mxu0 0.0
    %6512 = vmatpush2.msra.mxu0 0.0
    %6513 = vmatprep.subr.mxu0 0.0
    %6514 = vmatpush2.msra.mxu0 0.0
    %6515 = vmatprep.subr.mxu0 0.0
    %6516 = vmatpush2.msra.mxu0 0.0
    %6517 = vmatprep.subr.mxu0 0.0
    %6518 = vmatpush2.msra.mxu0 0.0
    %6519 = vmatprep.subr.mxu0 0.0
    %6520 = vmatpush2.msra.mxu0 0.0
    %6521 = vmatprep.subr.mxu0 0.0
    %6522 = vmatpush2.msra.mxu0 0.0
    %6523 = vmatprep.subr.mxu0 0.0
    %6524 = vmatpush2.msra.mxu0 0.0
    %6525 = vmatprep.subr.mxu0 0.0
    %6526 = vmatpush2.msra.mxu0 0.0
    %6527 = vmatprep.subr.mxu0 0.0
    %6528 = vmatpush2.msra.mxu0 0.0
    %6529 = vmatprep.subr.mxu0 0.0
    %6530 = vmatpush2.msra.mxu0 0.0
    %6531 = vmatprep.subr.mxu0 0.0
    %6532 = vmatpush2.msra.mxu0 0.0
    %6533 = vmatprep.mubr.f32.mxu0 0.0
    %v6534 = vand.u32 %v6164, 4294901760
    %6535 = vmatmul.mubr.f32.gmra.mxu0 %v6534
    %v6536 = vpop.f32.mrf.mxu0
    %v6537 = vadd.f32 %v6463, %v6536
    %v6538 = vpop.f32.mrf.mxu0
    %6539 = vdwg.mxu0
    %6540 = vmatprep.subr.mxu0 0.0
    %6541 = vmatpush1.msra.mxu0 0.0
    %6542 = vmatprep.subr.mxu0 0.0
    %6543 = vmatpush1.msra.mxu0 0.0
    %6544 = vmatprep.subr.mxu0 0.0
    %6545 = vmatpush1.msra.mxu0 0.0
    %6546 = vmatprep.subr.mxu0 0.0
    %6547 = vmatpush1.msra.mxu0 0.0
    %6548 = vmatprep.subr.mxu0 0.0
    %6549 = vmatpush1.msra.mxu0 0.0
    %6550 = vmatprep.subr.mxu0 0.0
    %6551 = vmatpush1.msra.mxu0 0.0
    %6552 = vmatprep.subr.mxu0 0.0
    %6553 = vmatpush1.msra.mxu0 0.0
    %6554 = vmatprep.subr.mxu0 0.0
    %6555 = vmatpush1.msra.mxu0 0.0
    %6556 = vmatprep.subr.mxu0 0.0
    %6557 = vmatpush1.msra.mxu0 0.0
    %6558 = vmatprep.subr.mxu0 0.0
    %6559 = vmatpush1.msra.mxu0 0.0
    %6560 = vmatprep.subr.mxu0 0.0
    %6561 = vmatpush1.msra.mxu0 0.0
    %6562 = vmatprep.subr.mxu0 0.0
    %6563 = vmatpush1.msra.mxu0 0.0
    %6564 = vmatprep.subr.mxu0 0.0
    %6565 = vmatpush1.msra.mxu0 0.0
    %6566 = vmatprep.subr.mxu0 0.0
    %6567 = vmatpush1.msra.mxu0 0.0
    %6568 = vmatprep.subr.mxu0 0.0
    %6569 = vmatpush1.msra.mxu0 0.0
    %6570 = vmatprep.subr.mxu0 0.0
    %v6571 = vand.u32 %v6161, 4294901760
    %6572 = vmatpush1.msra.mxu0 %v6571
    %6573 = vmatprep.subr.mxu0 0.0
    %6574 = vmatpush2.msra.mxu0 0.0
    %6575 = vmatprep.subr.mxu0 0.0
    %6576 = vmatpush2.msra.mxu0 0.0
    %6577 = vmatprep.subr.mxu0 0.0
    %6578 = vmatpush2.msra.mxu0 0.0
    %6579 = vmatprep.subr.mxu0 0.0
    %6580 = vmatpush2.msra.mxu0 0.0
    %6581 = vmatprep.subr.mxu0 0.0
    %6582 = vmatpush2.msra.mxu0 0.0
    %6583 = vmatprep.subr.mxu0 0.0
    %6584 = vmatpush2.msra.mxu0 0.0
    %6585 = vmatprep.subr.mxu0 0.0
    %6586 = vmatpush2.msra.mxu0 0.0
    %6587 = vmatprep.subr.mxu0 0.0
    %6588 = vmatpush2.msra.mxu0 0.0
    %6589 = vmatprep.subr.mxu0 0.0
    %6590 = vmatpush2.msra.mxu0 0.0
    %6591 = vmatprep.subr.mxu0 0.0
    %6592 = vmatpush2.msra.mxu0 0.0
    %6593 = vmatprep.subr.mxu0 0.0
    %6594 = vmatpush2.msra.mxu0 0.0
    %6595 = vmatprep.subr.mxu0 0.0
    %6596 = vmatpush2.msra.mxu0 0.0
    %6597 = vmatprep.subr.mxu0 0.0
    %6598 = vmatpush2.msra.mxu0 0.0
    %6599 = vmatprep.subr.mxu0 0.0
    %6600 = vmatpush2.msra.mxu0 0.0
    %6601 = vmatprep.subr.mxu0 0.0
    %6602 = vmatpush2.msra.mxu0 0.0
    %6603 = vmatprep.subr.mxu0 0.0
    %6604 = vmatpush2.msra.mxu0 0.0
    %6605 = vmatprep.mubr.f32.mxu0 0.0
    %v6606 = vand.u32 %v6164, 4294901760
    %6607 = vmatmul.mubr.f32.gmra.mxu0 %v6606
    %v6608 = vpop.f32.mrf.mxu0
    %v6609 = vadd.f32 %v6537, %v6608
    %v6610 = vpop.f32.mrf.mxu0
    %6611 = vdwg.mxu0
    %6612 = vrot.lane.b32.xlu0 %v624, 64
    %v6613 = vpop.permute.xlu0 %6612
    %v6616 = vsel %vm639, %v4347, 0
    %6618 = vmatprep.subr.mxu0 0.0
    %6619 = vmatpush1.msra.mxu0 0.0
    %6620 = vmatprep.subr.mxu0 0.0
    %6621 = vmatpush1.msra.mxu0 0.0
    %6622 = vmatprep.subr.mxu0 0.0
    %6623 = vmatpush1.msra.mxu0 0.0
    %6624 = vmatprep.subr.mxu0 0.0
    %6625 = vmatpush1.msra.mxu0 0.0
    %6626 = vmatprep.subr.mxu0 0.0
    %6627 = vmatpush1.msra.mxu0 0.0
    %6628 = vmatprep.subr.mxu0 0.0
    %6629 = vmatpush1.msra.mxu0 0.0
    %6630 = vmatprep.subr.mxu0 0.0
    %6631 = vmatpush1.msra.mxu0 0.0
    %6632 = vmatprep.subr.mxu0 0.0
    %6633 = vmatpush1.msra.mxu0 0.0
    %6634 = vmatprep.subr.mxu0 0.0
    %6635 = vmatpush1.msra.mxu0 0.0
    %6636 = vmatprep.subr.mxu0 0.0
    %6637 = vmatpush1.msra.mxu0 0.0
    %6638 = vmatprep.subr.mxu0 0.0
    %6639 = vmatpush1.msra.mxu0 0.0
    %6640 = vmatprep.subr.mxu0 0.0
    %6641 = vmatpush1.msra.mxu0 0.0
    %6642 = vmatprep.subr.mxu0 0.0
    %6643 = vmatpush1.msra.mxu0 0.0
    %6644 = vmatprep.subr.mxu0 0.0
    %6645 = vmatpush1.msra.mxu0 0.0
    %6646 = vmatprep.subr.mxu0 0.0
    %6647 = vmatpush1.msra.mxu0 0.0
    %6648 = vmatprep.subr.mxu0 0.0
    %v6649 = vand.u32 %v6613, 4294901760
    %6650 = vmatpush1.msra.mxu0 %v6649
    %6651 = vmatprep.subr.mxu0 0.0
    %6652 = vmatpush2.msra.mxu0 0.0
    %6653 = vmatprep.subr.mxu0 0.0
    %6654 = vmatpush2.msra.mxu0 0.0
    %6655 = vmatprep.subr.mxu0 0.0
    %6656 = vmatpush2.msra.mxu0 0.0
    %6657 = vmatprep.subr.mxu0 0.0
    %6658 = vmatpush2.msra.mxu0 0.0
    %6659 = vmatprep.subr.mxu0 0.0
    %6660 = vmatpush2.msra.mxu0 0.0
    %6661 = vmatprep.subr.mxu0 0.0
    %6662 = vmatpush2.msra.mxu0 0.0
    %6663 = vmatprep.subr.mxu0 0.0
    %6664 = vmatpush2.msra.mxu0 0.0
    %6665 = vmatprep.subr.mxu0 0.0
    %6666 = vmatpush2.msra.mxu0 0.0
    %6667 = vmatprep.subr.mxu0 0.0
    %6668 = vmatpush2.msra.mxu0 0.0
    %6669 = vmatprep.subr.mxu0 0.0
    %6670 = vmatpush2.msra.mxu0 0.0
    %6671 = vmatprep.subr.mxu0 0.0
    %6672 = vmatpush2.msra.mxu0 0.0
    %6673 = vmatprep.subr.mxu0 0.0
    %6674 = vmatpush2.msra.mxu0 0.0
    %6675 = vmatprep.subr.mxu0 0.0
    %6676 = vmatpush2.msra.mxu0 0.0
    %6677 = vmatprep.subr.mxu0 0.0
    %6678 = vmatpush2.msra.mxu0 0.0
    %6679 = vmatprep.subr.mxu0 0.0
    %6680 = vmatpush2.msra.mxu0 0.0
    %6681 = vmatprep.subr.mxu0 0.0
    %6682 = vmatpush2.msra.mxu0 0.0
    %6683 = vmatprep.mubr.f32.mxu0 0.0
    %v6684 = vand.u32 %v6616, 4294901760
    %v6685 = vsub.f32 %v6616, %v6684
    %v6686 = vand.u32 %v6685, 4294901760
    %v6687 = vsub.f32 %v6685, %v6686
    %v6688 = vand.u32 %v6687, 4294901760
    %6689 = vmatmul.mubr.f32.gmra.mxu0 %v6688
    %v6690 = vpop.f32.mrf.mxu0
    %v6691 = vadd.f32 0.0, %v6690
    %v6692 = vpop.f32.mrf.mxu0
    %6693 = vdwg.mxu0
    %6694 = vmatprep.subr.mxu0 0.0
    %6695 = vmatpush1.msra.mxu0 0.0
    %6696 = vmatprep.subr.mxu0 0.0
    %6697 = vmatpush1.msra.mxu0 0.0
    %6698 = vmatprep.subr.mxu0 0.0
    %6699 = vmatpush1.msra.mxu0 0.0
    %6700 = vmatprep.subr.mxu0 0.0
    %6701 = vmatpush1.msra.mxu0 0.0
    %6702 = vmatprep.subr.mxu0 0.0
    %6703 = vmatpush1.msra.mxu0 0.0
    %6704 = vmatprep.subr.mxu0 0.0
    %6705 = vmatpush1.msra.mxu0 0.0
    %6706 = vmatprep.subr.mxu0 0.0
    %6707 = vmatpush1.msra.mxu0 0.0
    %6708 = vmatprep.subr.mxu0 0.0
    %6709 = vmatpush1.msra.mxu0 0.0
    %6710 = vmatprep.subr.mxu0 0.0
    %6711 = vmatpush1.msra.mxu0 0.0
    %6712 = vmatprep.subr.mxu0 0.0
    %6713 = vmatpush1.msra.mxu0 0.0
    %6714 = vmatprep.subr.mxu0 0.0
    %6715 = vmatpush1.msra.mxu0 0.0
    %6716 = vmatprep.subr.mxu0 0.0
    %6717 = vmatpush1.msra.mxu0 0.0
    %6718 = vmatprep.subr.mxu0 0.0
    %6719 = vmatpush1.msra.mxu0 0.0
    %6720 = vmatprep.subr.mxu0 0.0
    %6721 = vmatpush1.msra.mxu0 0.0
    %6722 = vmatprep.subr.mxu0 0.0
    %6723 = vmatpush1.msra.mxu0 0.0
    %6724 = vmatprep.subr.mxu0 0.0
    %v6725 = vand.u32 %v6613, 4294901760
    %v6726 = vsub.f32 %v6613, %v6725
    %v6727 = vand.u32 %v6726, 4294901760
    %v6728 = vsub.f32 %v6726, %v6727
    %v6729 = vand.u32 %v6728, 4294901760
    %6730 = vmatpush1.msra.mxu0 %v6729
    %6731 = vmatprep.subr.mxu0 0.0
    %6732 = vmatpush2.msra.mxu0 0.0
    %6733 = vmatprep.subr.mxu0 0.0
    %6734 = vmatpush2.msra.mxu0 0.0
    %6735 = vmatprep.subr.mxu0 0.0
    %6736 = vmatpush2.msra.mxu0 0.0
    %6737 = vmatprep.subr.mxu0 0.0
    %6738 = vmatpush2.msra.mxu0 0.0
    %6739 = vmatprep.subr.mxu0 0.0
    %6740 = vmatpush2.msra.mxu0 0.0
    %6741 = vmatprep.subr.mxu0 0.0
    %6742 = vmatpush2.msra.mxu0 0.0
    %6743 = vmatprep.subr.mxu0 0.0
    %6744 = vmatpush2.msra.mxu0 0.0
    %6745 = vmatprep.subr.mxu0 0.0
    %6746 = vmatpush2.msra.mxu0 0.0
    %6747 = vmatprep.subr.mxu0 0.0
    %6748 = vmatpush2.msra.mxu0 0.0
    %6749 = vmatprep.subr.mxu0 0.0
    %6750 = vmatpush2.msra.mxu0 0.0
    %6751 = vmatprep.subr.mxu0 0.0
    %6752 = vmatpush2.msra.mxu0 0.0
    %6753 = vmatprep.subr.mxu0 0.0
    %6754 = vmatpush2.msra.mxu0 0.0
    %6755 = vmatprep.subr.mxu0 0.0
    %6756 = vmatpush2.msra.mxu0 0.0
    %6757 = vmatprep.subr.mxu0 0.0
    %6758 = vmatpush2.msra.mxu0 0.0
    %6759 = vmatprep.subr.mxu0 0.0
    %6760 = vmatpush2.msra.mxu0 0.0
    %6761 = vmatprep.subr.mxu0 0.0
    %6762 = vmatpush2.msra.mxu0 0.0
    %6763 = vmatprep.mubr.f32.mxu0 0.0
    %v6764 = vand.u32 %v6616, 4294901760
    %6765 = vmatmul.mubr.f32.gmra.mxu0 %v6764
    %v6766 = vpop.f32.mrf.mxu0
    %v6767 = vadd.f32 %v6691, %v6766
    %v6768 = vpop.f32.mrf.mxu0
    %6769 = vdwg.mxu0
    %6770 = vmatprep.subr.mxu0 0.0
    %6771 = vmatpush1.msra.mxu0 0.0
    %6772 = vmatprep.subr.mxu0 0.0
    %6773 = vmatpush1.msra.mxu0 0.0
    %6774 = vmatprep.subr.mxu0 0.0
    %6775 = vmatpush1.msra.mxu0 0.0
    %6776 = vmatprep.subr.mxu0 0.0
    %6777 = vmatpush1.msra.mxu0 0.0
    %6778 = vmatprep.subr.mxu0 0.0
    %6779 = vmatpush1.msra.mxu0 0.0
    %6780 = vmatprep.subr.mxu0 0.0
    %6781 = vmatpush1.msra.mxu0 0.0
    %6782 = vmatprep.subr.mxu0 0.0
    %6783 = vmatpush1.msra.mxu0 0.0
    %6784 = vmatprep.subr.mxu0 0.0
    %6785 = vmatpush1.msra.mxu0 0.0
    %6786 = vmatprep.subr.mxu0 0.0
    %6787 = vmatpush1.msra.mxu0 0.0
    %6788 = vmatprep.subr.mxu0 0.0
    %6789 = vmatpush1.msra.mxu0 0.0
    %6790 = vmatprep.subr.mxu0 0.0
    %6791 = vmatpush1.msra.mxu0 0.0
    %6792 = vmatprep.subr.mxu0 0.0
    %6793 = vmatpush1.msra.mxu0 0.0
    %6794 = vmatprep.subr.mxu0 0.0
    %6795 = vmatpush1.msra.mxu0 0.0
    %6796 = vmatprep.subr.mxu0 0.0
    %6797 = vmatpush1.msra.mxu0 0.0
    %6798 = vmatprep.subr.mxu0 0.0
    %6799 = vmatpush1.msra.mxu0 0.0
    %6800 = vmatprep.subr.mxu0 0.0
    %v6801 = vand.u32 %v6613, 4294901760
    %v6802 = vsub.f32 %v6613, %v6801
    %6803 = vmatpush1.msra.mxu0 %v6802
    %6804 = vmatprep.subr.mxu0 0.0
    %6805 = vmatpush2.msra.mxu0 0.0
    %6806 = vmatprep.subr.mxu0 0.0
    %6807 = vmatpush2.msra.mxu0 0.0
    %6808 = vmatprep.subr.mxu0 0.0
    %6809 = vmatpush2.msra.mxu0 0.0
    %6810 = vmatprep.subr.mxu0 0.0
    %6811 = vmatpush2.msra.mxu0 0.0
    %6812 = vmatprep.subr.mxu0 0.0
    %6813 = vmatpush2.msra.mxu0 0.0
    %6814 = vmatprep.subr.mxu0 0.0
    %6815 = vmatpush2.msra.mxu0 0.0
    %6816 = vmatprep.subr.mxu0 0.0
    %6817 = vmatpush2.msra.mxu0 0.0
    %6818 = vmatprep.subr.mxu0 0.0
    %6819 = vmatpush2.msra.mxu0 0.0
    %6820 = vmatprep.subr.mxu0 0.0
    %6821 = vmatpush2.msra.mxu0 0.0
    %6822 = vmatprep.subr.mxu0 0.0
    %6823 = vmatpush2.msra.mxu0 0.0
    %6824 = vmatprep.subr.mxu0 0.0
    %6825 = vmatpush2.msra.mxu0 0.0
    %6826 = vmatprep.subr.mxu0 0.0
    %6827 = vmatpush2.msra.mxu0 0.0
    %6828 = vmatprep.subr.mxu0 0.0
    %6829 = vmatpush2.msra.mxu0 0.0
    %6830 = vmatprep.subr.mxu0 0.0
    %6831 = vmatpush2.msra.mxu0 0.0
    %6832 = vmatprep.subr.mxu0 0.0
    %6833 = vmatpush2.msra.mxu0 0.0
    %6834 = vmatprep.subr.mxu0 0.0
    %6835 = vmatpush2.msra.mxu0 0.0
    %6836 = vmatprep.mubr.f32.mxu0 0.0
    %v6837 = vand.u32 %v6616, 4294901760
    %v6838 = vsub.f32 %v6616, %v6837
    %6839 = vmatmul.mubr.f32.gmra.mxu0 %v6838
    %v6840 = vpop.f32.mrf.mxu0
    %v6841 = vadd.f32 %v6767, %v6840
    %v6842 = vpop.f32.mrf.mxu0
    %6843 = vdwg.mxu0
    %6844 = vmatprep.subr.mxu0 0.0
    %6845 = vmatpush1.msra.mxu0 0.0
    %6846 = vmatprep.subr.mxu0 0.0
    %6847 = vmatpush1.msra.mxu0 0.0
    %6848 = vmatprep.subr.mxu0 0.0
    %6849 = vmatpush1.msra.mxu0 0.0
    %6850 = vmatprep.subr.mxu0 0.0
    %6851 = vmatpush1.msra.mxu0 0.0
    %6852 = vmatprep.subr.mxu0 0.0
    %6853 = vmatpush1.msra.mxu0 0.0
    %6854 = vmatprep.subr.mxu0 0.0
    %6855 = vmatpush1.msra.mxu0 0.0
    %6856 = vmatprep.subr.mxu0 0.0
    %6857 = vmatpush1.msra.mxu0 0.0
    %6858 = vmatprep.subr.mxu0 0.0
    %6859 = vmatpush1.msra.mxu0 0.0
    %6860 = vmatprep.subr.mxu0 0.0
    %6861 = vmatpush1.msra.mxu0 0.0
    %6862 = vmatprep.subr.mxu0 0.0
    %6863 = vmatpush1.msra.mxu0 0.0
    %6864 = vmatprep.subr.mxu0 0.0
    %6865 = vmatpush1.msra.mxu0 0.0
    %6866 = vmatprep.subr.mxu0 0.0
    %6867 = vmatpush1.msra.mxu0 0.0
    %6868 = vmatprep.subr.mxu0 0.0
    %6869 = vmatpush1.msra.mxu0 0.0
    %6870 = vmatprep.subr.mxu0 0.0
    %6871 = vmatpush1.msra.mxu0 0.0
    %6872 = vmatprep.subr.mxu0 0.0
    %6873 = vmatpush1.msra.mxu0 0.0
    %6874 = vmatprep.subr.mxu0 0.0
    %v6875 = vand.u32 %v6613, 4294901760
    %6876 = vmatpush1.msra.mxu0 %v6875
    %6877 = vmatprep.subr.mxu0 0.0
    %6878 = vmatpush2.msra.mxu0 0.0
    %6879 = vmatprep.subr.mxu0 0.0
    %6880 = vmatpush2.msra.mxu0 0.0
    %6881 = vmatprep.subr.mxu0 0.0
    %6882 = vmatpush2.msra.mxu0 0.0
    %6883 = vmatprep.subr.mxu0 0.0
    %6884 = vmatpush2.msra.mxu0 0.0
    %6885 = vmatprep.subr.mxu0 0.0
    %6886 = vmatpush2.msra.mxu0 0.0
    %6887 = vmatprep.subr.mxu0 0.0
    %6888 = vmatpush2.msra.mxu0 0.0
    %6889 = vmatprep.subr.mxu0 0.0
    %6890 = vmatpush2.msra.mxu0 0.0
    %6891 = vmatprep.subr.mxu0 0.0
    %6892 = vmatpush2.msra.mxu0 0.0
    %6893 = vmatprep.subr.mxu0 0.0
    %6894 = vmatpush2.msra.mxu0 0.0
    %6895 = vmatprep.subr.mxu0 0.0
    %6896 = vmatpush2.msra.mxu0 0.0
    %6897 = vmatprep.subr.mxu0 0.0
    %6898 = vmatpush2.msra.mxu0 0.0
    %6899 = vmatprep.subr.mxu0 0.0
    %6900 = vmatpush2.msra.mxu0 0.0
    %6901 = vmatprep.subr.mxu0 0.0
    %6902 = vmatpush2.msra.mxu0 0.0
    %6903 = vmatprep.subr.mxu0 0.0
    %6904 = vmatpush2.msra.mxu0 0.0
    %6905 = vmatprep.subr.mxu0 0.0
    %6906 = vmatpush2.msra.mxu0 0.0
    %6907 = vmatprep.subr.mxu0 0.0
    %6908 = vmatpush2.msra.mxu0 0.0
    %6909 = vmatprep.mubr.f32.mxu0 0.0
    %v6910 = vand.u32 %v6616, 4294901760
    %v6911 = vsub.f32 %v6616, %v6910
    %v6912 = vand.u32 %v6911, 4294901760
    %6913 = vmatmul.mubr.f32.gmra.mxu0 %v6912
    %v6914 = vpop.f32.mrf.mxu0
    %v6915 = vadd.f32 %v6841, %v6914
    %v6916 = vpop.f32.mrf.mxu0
    %6917 = vdwg.mxu0
    %6918 = vmatprep.subr.mxu0 0.0
    %6919 = vmatpush1.msra.mxu0 0.0
    %6920 = vmatprep.subr.mxu0 0.0
    %6921 = vmatpush1.msra.mxu0 0.0
    %6922 = vmatprep.subr.mxu0 0.0
    %6923 = vmatpush1.msra.mxu0 0.0
    %6924 = vmatprep.subr.mxu0 0.0
    %6925 = vmatpush1.msra.mxu0 0.0
    %6926 = vmatprep.subr.mxu0 0.0
    %6927 = vmatpush1.msra.mxu0 0.0
    %6928 = vmatprep.subr.mxu0 0.0
    %6929 = vmatpush1.msra.mxu0 0.0
    %6930 = vmatprep.subr.mxu0 0.0
    %6931 = vmatpush1.msra.mxu0 0.0
    %6932 = vmatprep.subr.mxu0 0.0
    %6933 = vmatpush1.msra.mxu0 0.0
    %6934 = vmatprep.subr.mxu0 0.0
    %6935 = vmatpush1.msra.mxu0 0.0
    %6936 = vmatprep.subr.mxu0 0.0
    %6937 = vmatpush1.msra.mxu0 0.0
    %6938 = vmatprep.subr.mxu0 0.0
    %6939 = vmatpush1.msra.mxu0 0.0
    %6940 = vmatprep.subr.mxu0 0.0
    %6941 = vmatpush1.msra.mxu0 0.0
    %6942 = vmatprep.subr.mxu0 0.0
    %6943 = vmatpush1.msra.mxu0 0.0
    %6944 = vmatprep.subr.mxu0 0.0
    %6945 = vmatpush1.msra.mxu0 0.0
    %6946 = vmatprep.subr.mxu0 0.0
    %6947 = vmatpush1.msra.mxu0 0.0
    %6948 = vmatprep.subr.mxu0 0.0
    %v6949 = vand.u32 %v6613, 4294901760
    %v6950 = vsub.f32 %v6613, %v6949
    %v6951 = vand.u32 %v6950, 4294901760
    %6952 = vmatpush1.msra.mxu0 %v6951
    %6953 = vmatprep.subr.mxu0 0.0
    %6954 = vmatpush2.msra.mxu0 0.0
    %6955 = vmatprep.subr.mxu0 0.0
    %6956 = vmatpush2.msra.mxu0 0.0
    %6957 = vmatprep.subr.mxu0 0.0
    %6958 = vmatpush2.msra.mxu0 0.0
    %6959 = vmatprep.subr.mxu0 0.0
    %6960 = vmatpush2.msra.mxu0 0.0
    %6961 = vmatprep.subr.mxu0 0.0
    %6962 = vmatpush2.msra.mxu0 0.0
    %6963 = vmatprep.subr.mxu0 0.0
    %6964 = vmatpush2.msra.mxu0 0.0
    %6965 = vmatprep.subr.mxu0 0.0
    %6966 = vmatpush2.msra.mxu0 0.0
    %6967 = vmatprep.subr.mxu0 0.0
    %6968 = vmatpush2.msra.mxu0 0.0
    %6969 = vmatprep.subr.mxu0 0.0
    %6970 = vmatpush2.msra.mxu0 0.0
    %6971 = vmatprep.subr.mxu0 0.0
    %6972 = vmatpush2.msra.mxu0 0.0
    %6973 = vmatprep.subr.mxu0 0.0
    %6974 = vmatpush2.msra.mxu0 0.0
    %6975 = vmatprep.subr.mxu0 0.0
    %6976 = vmatpush2.msra.mxu0 0.0
    %6977 = vmatprep.subr.mxu0 0.0
    %6978 = vmatpush2.msra.mxu0 0.0
    %6979 = vmatprep.subr.mxu0 0.0
    %6980 = vmatpush2.msra.mxu0 0.0
    %6981 = vmatprep.subr.mxu0 0.0
    %6982 = vmatpush2.msra.mxu0 0.0
    %6983 = vmatprep.subr.mxu0 0.0
    %6984 = vmatpush2.msra.mxu0 0.0
    %6985 = vmatprep.mubr.f32.mxu0 0.0
    %v6986 = vand.u32 %v6616, 4294901760
    %6987 = vmatmul.mubr.f32.gmra.mxu0 %v6986
    %v6988 = vpop.f32.mrf.mxu0
    %v6989 = vadd.f32 %v6915, %v6988
    %v6990 = vpop.f32.mrf.mxu0
    %6991 = vdwg.mxu0
    %6992 = vmatprep.subr.mxu0 0.0
    %6993 = vmatpush1.msra.mxu0 0.0
    %6994 = vmatprep.subr.mxu0 0.0
    %6995 = vmatpush1.msra.mxu0 0.0
    %6996 = vmatprep.subr.mxu0 0.0
    %6997 = vmatpush1.msra.mxu0 0.0
    %6998 = vmatprep.subr.mxu0 0.0
    %6999 = vmatpush1.msra.mxu0 0.0
    %7000 = vmatprep.subr.mxu0 0.0
    %7001 = vmatpush1.msra.mxu0 0.0
    %7002 = vmatprep.subr.mxu0 0.0
    %7003 = vmatpush1.msra.mxu0 0.0
    %7004 = vmatprep.subr.mxu0 0.0
    %7005 = vmatpush1.msra.mxu0 0.0
    %7006 = vmatprep.subr.mxu0 0.0
    %7007 = vmatpush1.msra.mxu0 0.0
    %7008 = vmatprep.subr.mxu0 0.0
    %7009 = vmatpush1.msra.mxu0 0.0
    %7010 = vmatprep.subr.mxu0 0.0
    %7011 = vmatpush1.msra.mxu0 0.0
    %7012 = vmatprep.subr.mxu0 0.0
    %7013 = vmatpush1.msra.mxu0 0.0
    %7014 = vmatprep.subr.mxu0 0.0
    %7015 = vmatpush1.msra.mxu0 0.0
    %7016 = vmatprep.subr.mxu0 0.0
    %7017 = vmatpush1.msra.mxu0 0.0
    %7018 = vmatprep.subr.mxu0 0.0
    %7019 = vmatpush1.msra.mxu0 0.0
    %7020 = vmatprep.subr.mxu0 0.0
    %7021 = vmatpush1.msra.mxu0 0.0
    %7022 = vmatprep.subr.mxu0 0.0
    %v7023 = vand.u32 %v6613, 4294901760
    %7024 = vmatpush1.msra.mxu0 %v7023
    %7025 = vmatprep.subr.mxu0 0.0
    %7026 = vmatpush2.msra.mxu0 0.0
    %7027 = vmatprep.subr.mxu0 0.0
    %7028 = vmatpush2.msra.mxu0 0.0
    %7029 = vmatprep.subr.mxu0 0.0
    %7030 = vmatpush2.msra.mxu0 0.0
    %7031 = vmatprep.subr.mxu0 0.0
    %7032 = vmatpush2.msra.mxu0 0.0
    %7033 = vmatprep.subr.mxu0 0.0
    %7034 = vmatpush2.msra.mxu0 0.0
    %7035 = vmatprep.subr.mxu0 0.0
    %7036 = vmatpush2.msra.mxu0 0.0
    %7037 = vmatprep.subr.mxu0 0.0
    %7038 = vmatpush2.msra.mxu0 0.0
    %7039 = vmatprep.subr.mxu0 0.0
    %7040 = vmatpush2.msra.mxu0 0.0
    %7041 = vmatprep.subr.mxu0 0.0
    %7042 = vmatpush2.msra.mxu0 0.0
    %7043 = vmatprep.subr.mxu0 0.0
    %7044 = vmatpush2.msra.mxu0 0.0
    %7045 = vmatprep.subr.mxu0 0.0
    %7046 = vmatpush2.msra.mxu0 0.0
    %7047 = vmatprep.subr.mxu0 0.0
    %7048 = vmatpush2.msra.mxu0 0.0
    %7049 = vmatprep.subr.mxu0 0.0
    %7050 = vmatpush2.msra.mxu0 0.0
    %7051 = vmatprep.subr.mxu0 0.0
    %7052 = vmatpush2.msra.mxu0 0.0
    %7053 = vmatprep.subr.mxu0 0.0
    %7054 = vmatpush2.msra.mxu0 0.0
    %7055 = vmatprep.subr.mxu0 0.0
    %7056 = vmatpush2.msra.mxu0 0.0
    %7057 = vmatprep.mubr.f32.mxu0 0.0
    %v7058 = vand.u32 %v6616, 4294901760
    %7059 = vmatmul.mubr.f32.gmra.mxu0 %v7058
    %v7060 = vpop.f32.mrf.mxu0
    %v7061 = vadd.f32 %v6989, %v7060
    %v7062 = vpop.f32.mrf.mxu0
    %7063 = vdwg.mxu0
    %7064 = vrot.lane.b32.xlu0 %v626, 64
    %v7065 = vpop.permute.xlu0 %7064
    %v7068 = vsel %vm639, %v4349, 0
    %7070 = vmatprep.subr.mxu0 0.0
    %7071 = vmatpush1.msra.mxu0 0.0
    %7072 = vmatprep.subr.mxu0 0.0
    %7073 = vmatpush1.msra.mxu0 0.0
    %7074 = vmatprep.subr.mxu0 0.0
    %7075 = vmatpush1.msra.mxu0 0.0
    %7076 = vmatprep.subr.mxu0 0.0
    %7077 = vmatpush1.msra.mxu0 0.0
    %7078 = vmatprep.subr.mxu0 0.0
    %7079 = vmatpush1.msra.mxu0 0.0
    %7080 = vmatprep.subr.mxu0 0.0
    %7081 = vmatpush1.msra.mxu0 0.0
    %7082 = vmatprep.subr.mxu0 0.0
    %7083 = vmatpush1.msra.mxu0 0.0
    %7084 = vmatprep.subr.mxu0 0.0
    %7085 = vmatpush1.msra.mxu0 0.0
    %7086 = vmatprep.subr.mxu0 0.0
    %7087 = vmatpush1.msra.mxu0 0.0
    %7088 = vmatprep.subr.mxu0 0.0
    %7089 = vmatpush1.msra.mxu0 0.0
    %7090 = vmatprep.subr.mxu0 0.0
    %7091 = vmatpush1.msra.mxu0 0.0
    %7092 = vmatprep.subr.mxu0 0.0
    %7093 = vmatpush1.msra.mxu0 0.0
    %7094 = vmatprep.subr.mxu0 0.0
    %7095 = vmatpush1.msra.mxu0 0.0
    %7096 = vmatprep.subr.mxu0 0.0
    %7097 = vmatpush1.msra.mxu0 0.0
    %7098 = vmatprep.subr.mxu0 0.0
    %7099 = vmatpush1.msra.mxu0 0.0
    %7100 = vmatprep.subr.mxu0 0.0
    %v7101 = vand.u32 %v7065, 4294901760
    %7102 = vmatpush1.msra.mxu0 %v7101
    %7103 = vmatprep.subr.mxu0 0.0
    %7104 = vmatpush2.msra.mxu0 0.0
    %7105 = vmatprep.subr.mxu0 0.0
    %7106 = vmatpush2.msra.mxu0 0.0
    %7107 = vmatprep.subr.mxu0 0.0
    %7108 = vmatpush2.msra.mxu0 0.0
    %7109 = vmatprep.subr.mxu0 0.0
    %7110 = vmatpush2.msra.mxu0 0.0
    %7111 = vmatprep.subr.mxu0 0.0
    %7112 = vmatpush2.msra.mxu0 0.0
    %7113 = vmatprep.subr.mxu0 0.0
    %7114 = vmatpush2.msra.mxu0 0.0
    %7115 = vmatprep.subr.mxu0 0.0
    %7116 = vmatpush2.msra.mxu0 0.0
    %7117 = vmatprep.subr.mxu0 0.0
    %7118 = vmatpush2.msra.mxu0 0.0
    %7119 = vmatprep.subr.mxu0 0.0
    %7120 = vmatpush2.msra.mxu0 0.0
    %7121 = vmatprep.subr.mxu0 0.0
    %7122 = vmatpush2.msra.mxu0 0.0
    %7123 = vmatprep.subr.mxu0 0.0
    %7124 = vmatpush2.msra.mxu0 0.0
    %7125 = vmatprep.subr.mxu0 0.0
    %7126 = vmatpush2.msra.mxu0 0.0
    %7127 = vmatprep.subr.mxu0 0.0
    %7128 = vmatpush2.msra.mxu0 0.0
    %7129 = vmatprep.subr.mxu0 0.0
    %7130 = vmatpush2.msra.mxu0 0.0
    %7131 = vmatprep.subr.mxu0 0.0
    %7132 = vmatpush2.msra.mxu0 0.0
    %7133 = vmatprep.subr.mxu0 0.0
    %7134 = vmatpush2.msra.mxu0 0.0
    %7135 = vmatprep.mubr.f32.mxu0 0.0
    %v7136 = vand.u32 %v7068, 4294901760
    %v7137 = vsub.f32 %v7068, %v7136
    %v7138 = vand.u32 %v7137, 4294901760
    %v7139 = vsub.f32 %v7137, %v7138
    %v7140 = vand.u32 %v7139, 4294901760
    %7141 = vmatmul.mubr.f32.gmra.mxu0 %v7140
    %v7142 = vpop.f32.mrf.mxu0
    %v7143 = vadd.f32 0.0, %v7142
    %v7144 = vpop.f32.mrf.mxu0
    %7145 = vdwg.mxu0
    %7146 = vmatprep.subr.mxu0 0.0
    %7147 = vmatpush1.msra.mxu0 0.0
    %7148 = vmatprep.subr.mxu0 0.0
    %7149 = vmatpush1.msra.mxu0 0.0
    %7150 = vmatprep.subr.mxu0 0.0
    %7151 = vmatpush1.msra.mxu0 0.0
    %7152 = vmatprep.subr.mxu0 0.0
    %7153 = vmatpush1.msra.mxu0 0.0
    %7154 = vmatprep.subr.mxu0 0.0
    %7155 = vmatpush1.msra.mxu0 0.0
    %7156 = vmatprep.subr.mxu0 0.0
    %7157 = vmatpush1.msra.mxu0 0.0
    %7158 = vmatprep.subr.mxu0 0.0
    %7159 = vmatpush1.msra.mxu0 0.0
    %7160 = vmatprep.subr.mxu0 0.0
    %7161 = vmatpush1.msra.mxu0 0.0
    %7162 = vmatprep.subr.mxu0 0.0
    %7163 = vmatpush1.msra.mxu0 0.0
    %7164 = vmatprep.subr.mxu0 0.0
    %7165 = vmatpush1.msra.mxu0 0.0
    %7166 = vmatprep.subr.mxu0 0.0
    %7167 = vmatpush1.msra.mxu0 0.0
    %7168 = vmatprep.subr.mxu0 0.0
    %7169 = vmatpush1.msra.mxu0 0.0
    %7170 = vmatprep.subr.mxu0 0.0
    %7171 = vmatpush1.msra.mxu0 0.0
    %7172 = vmatprep.subr.mxu0 0.0
    %7173 = vmatpush1.msra.mxu0 0.0
    %7174 = vmatprep.subr.mxu0 0.0
    %7175 = vmatpush1.msra.mxu0 0.0
    %7176 = vmatprep.subr.mxu0 0.0
    %v7177 = vand.u32 %v7065, 4294901760
    %v7178 = vsub.f32 %v7065, %v7177
    %v7179 = vand.u32 %v7178, 4294901760
    %v7180 = vsub.f32 %v7178, %v7179
    %v7181 = vand.u32 %v7180, 4294901760
    %7182 = vmatpush1.msra.mxu0 %v7181
    %7183 = vmatprep.subr.mxu0 0.0
    %7184 = vmatpush2.msra.mxu0 0.0
    %7185 = vmatprep.subr.mxu0 0.0
    %7186 = vmatpush2.msra.mxu0 0.0
    %7187 = vmatprep.subr.mxu0 0.0
    %7188 = vmatpush2.msra.mxu0 0.0
    %7189 = vmatprep.subr.mxu0 0.0
    %7190 = vmatpush2.msra.mxu0 0.0
    %7191 = vmatprep.subr.mxu0 0.0
    %7192 = vmatpush2.msra.mxu0 0.0
    %7193 = vmatprep.subr.mxu0 0.0
    %7194 = vmatpush2.msra.mxu0 0.0
    %7195 = vmatprep.subr.mxu0 0.0
    %7196 = vmatpush2.msra.mxu0 0.0
    %7197 = vmatprep.subr.mxu0 0.0
    %7198 = vmatpush2.msra.mxu0 0.0
    %7199 = vmatprep.subr.mxu0 0.0
    %7200 = vmatpush2.msra.mxu0 0.0
    %7201 = vmatprep.subr.mxu0 0.0
    %7202 = vmatpush2.msra.mxu0 0.0
    %7203 = vmatprep.subr.mxu0 0.0
    %7204 = vmatpush2.msra.mxu0 0.0
    %7205 = vmatprep.subr.mxu0 0.0
    %7206 = vmatpush2.msra.mxu0 0.0
    %7207 = vmatprep.subr.mxu0 0.0
    %7208 = vmatpush2.msra.mxu0 0.0
    %7209 = vmatprep.subr.mxu0 0.0
    %7210 = vmatpush2.msra.mxu0 0.0
    %7211 = vmatprep.subr.mxu0 0.0
    %7212 = vmatpush2.msra.mxu0 0.0
    %7213 = vmatprep.subr.mxu0 0.0
    %7214 = vmatpush2.msra.mxu0 0.0
    %7215 = vmatprep.mubr.f32.mxu0 0.0
    %v7216 = vand.u32 %v7068, 4294901760
    %7217 = vmatmul.mubr.f32.gmra.mxu0 %v7216
    %v7218 = vpop.f32.mrf.mxu0
    %v7219 = vadd.f32 %v7143, %v7218
    %v7220 = vpop.f32.mrf.mxu0
    %7221 = vdwg.mxu0
    %7222 = vmatprep.subr.mxu0 0.0
    %7223 = vmatpush1.msra.mxu0 0.0
    %7224 = vmatprep.subr.mxu0 0.0
    %7225 = vmatpush1.msra.mxu0 0.0
    %7226 = vmatprep.subr.mxu0 0.0
    %7227 = vmatpush1.msra.mxu0 0.0
    %7228 = vmatprep.subr.mxu0 0.0
    %7229 = vmatpush1.msra.mxu0 0.0
    %7230 = vmatprep.subr.mxu0 0.0
    %7231 = vmatpush1.msra.mxu0 0.0
    %7232 = vmatprep.subr.mxu0 0.0
    %7233 = vmatpush1.msra.mxu0 0.0
    %7234 = vmatprep.subr.mxu0 0.0
    %7235 = vmatpush1.msra.mxu0 0.0
    %7236 = vmatprep.subr.mxu0 0.0
    %7237 = vmatpush1.msra.mxu0 0.0
    %7238 = vmatprep.subr.mxu0 0.0
    %7239 = vmatpush1.msra.mxu0 0.0
    %7240 = vmatprep.subr.mxu0 0.0
    %7241 = vmatpush1.msra.mxu0 0.0
    %7242 = vmatprep.subr.mxu0 0.0
    %7243 = vmatpush1.msra.mxu0 0.0
    %7244 = vmatprep.subr.mxu0 0.0
    %7245 = vmatpush1.msra.mxu0 0.0
    %7246 = vmatprep.subr.mxu0 0.0
    %7247 = vmatpush1.msra.mxu0 0.0
    %7248 = vmatprep.subr.mxu0 0.0
    %7249 = vmatpush1.msra.mxu0 0.0
    %7250 = vmatprep.subr.mxu0 0.0
    %7251 = vmatpush1.msra.mxu0 0.0
    %7252 = vmatprep.subr.mxu0 0.0
    %v7253 = vand.u32 %v7065, 4294901760
    %v7254 = vsub.f32 %v7065, %v7253
    %7255 = vmatpush1.msra.mxu0 %v7254
    %7256 = vmatprep.subr.mxu0 0.0
    %7257 = vmatpush2.msra.mxu0 0.0
    %7258 = vmatprep.subr.mxu0 0.0
    %7259 = vmatpush2.msra.mxu0 0.0
    %7260 = vmatprep.subr.mxu0 0.0
    %7261 = vmatpush2.msra.mxu0 0.0
    %7262 = vmatprep.subr.mxu0 0.0
    %7263 = vmatpush2.msra.mxu0 0.0
    %7264 = vmatprep.subr.mxu0 0.0
    %7265 = vmatpush2.msra.mxu0 0.0
    %7266 = vmatprep.subr.mxu0 0.0
    %7267 = vmatpush2.msra.mxu0 0.0
    %7268 = vmatprep.subr.mxu0 0.0
    %7269 = vmatpush2.msra.mxu0 0.0
    %7270 = vmatprep.subr.mxu0 0.0
    %7271 = vmatpush2.msra.mxu0 0.0
    %7272 = vmatprep.subr.mxu0 0.0
    %7273 = vmatpush2.msra.mxu0 0.0
    %7274 = vmatprep.subr.mxu0 0.0
    %7275 = vmatpush2.msra.mxu0 0.0
    %7276 = vmatprep.subr.mxu0 0.0
    %7277 = vmatpush2.msra.mxu0 0.0
    %7278 = vmatprep.subr.mxu0 0.0
    %7279 = vmatpush2.msra.mxu0 0.0
    %7280 = vmatprep.subr.mxu0 0.0
    %7281 = vmatpush2.msra.mxu0 0.0
    %7282 = vmatprep.subr.mxu0 0.0
    %7283 = vmatpush2.msra.mxu0 0.0
    %7284 = vmatprep.subr.mxu0 0.0
    %7285 = vmatpush2.msra.mxu0 0.0
    %7286 = vmatprep.subr.mxu0 0.0
    %7287 = vmatpush2.msra.mxu0 0.0
    %7288 = vmatprep.mubr.f32.mxu0 0.0
    %v7289 = vand.u32 %v7068, 4294901760
    %v7290 = vsub.f32 %v7068, %v7289
    %7291 = vmatmul.mubr.f32.gmra.mxu0 %v7290
    %v7292 = vpop.f32.mrf.mxu0
    %v7293 = vadd.f32 %v7219, %v7292
    %v7294 = vpop.f32.mrf.mxu0
    %7295 = vdwg.mxu0
    %7296 = vmatprep.subr.mxu0 0.0
    %7297 = vmatpush1.msra.mxu0 0.0
    %7298 = vmatprep.subr.mxu0 0.0
    %7299 = vmatpush1.msra.mxu0 0.0
    %7300 = vmatprep.subr.mxu0 0.0
    %7301 = vmatpush1.msra.mxu0 0.0
    %7302 = vmatprep.subr.mxu0 0.0
    %7303 = vmatpush1.msra.mxu0 0.0
    %7304 = vmatprep.subr.mxu0 0.0
    %7305 = vmatpush1.msra.mxu0 0.0
    %7306 = vmatprep.subr.mxu0 0.0
    %7307 = vmatpush1.msra.mxu0 0.0
    %7308 = vmatprep.subr.mxu0 0.0
    %7309 = vmatpush1.msra.mxu0 0.0
    %7310 = vmatprep.subr.mxu0 0.0
    %7311 = vmatpush1.msra.mxu0 0.0
    %7312 = vmatprep.subr.mxu0 0.0
    %7313 = vmatpush1.msra.mxu0 0.0
    %7314 = vmatprep.subr.mxu0 0.0
    %7315 = vmatpush1.msra.mxu0 0.0
    %7316 = vmatprep.subr.mxu0 0.0
    %7317 = vmatpush1.msra.mxu0 0.0
    %7318 = vmatprep.subr.mxu0 0.0
    %7319 = vmatpush1.msra.mxu0 0.0
    %7320 = vmatprep.subr.mxu0 0.0
    %7321 = vmatpush1.msra.mxu0 0.0
    %7322 = vmatprep.subr.mxu0 0.0
    %7323 = vmatpush1.msra.mxu0 0.0
    %7324 = vmatprep.subr.mxu0 0.0
    %7325 = vmatpush1.msra.mxu0 0.0
    %7326 = vmatprep.subr.mxu0 0.0
    %v7327 = vand.u32 %v7065, 4294901760
    %7328 = vmatpush1.msra.mxu0 %v7327
    %7329 = vmatprep.subr.mxu0 0.0
    %7330 = vmatpush2.msra.mxu0 0.0
    %7331 = vmatprep.subr.mxu0 0.0
    %7332 = vmatpush2.msra.mxu0 0.0
    %7333 = vmatprep.subr.mxu0 0.0
    %7334 = vmatpush2.msra.mxu0 0.0
    %7335 = vmatprep.subr.mxu0 0.0
    %7336 = vmatpush2.msra.mxu0 0.0
    %7337 = vmatprep.subr.mxu0 0.0
    %7338 = vmatpush2.msra.mxu0 0.0
    %7339 = vmatprep.subr.mxu0 0.0
    %7340 = vmatpush2.msra.mxu0 0.0
    %7341 = vmatprep.subr.mxu0 0.0
    %7342 = vmatpush2.msra.mxu0 0.0
    %7343 = vmatprep.subr.mxu0 0.0
    %7344 = vmatpush2.msra.mxu0 0.0
    %7345 = vmatprep.subr.mxu0 0.0
    %7346 = vmatpush2.msra.mxu0 0.0
    %7347 = vmatprep.subr.mxu0 0.0
    %7348 = vmatpush2.msra.mxu0 0.0
    %7349 = vmatprep.subr.mxu0 0.0
    %7350 = vmatpush2.msra.mxu0 0.0
    %7351 = vmatprep.subr.mxu0 0.0
    %7352 = vmatpush2.msra.mxu0 0.0
    %7353 = vmatprep.subr.mxu0 0.0
    %7354 = vmatpush2.msra.mxu0 0.0
    %7355 = vmatprep.subr.mxu0 0.0
    %7356 = vmatpush2.msra.mxu0 0.0
    %7357 = vmatprep.subr.mxu0 0.0
    %7358 = vmatpush2.msra.mxu0 0.0
    %7359 = vmatprep.subr.mxu0 0.0
    %7360 = vmatpush2.msra.mxu0 0.0
    %7361 = vmatprep.mubr.f32.mxu0 0.0
    %v7362 = vand.u32 %v7068, 4294901760
    %v7363 = vsub.f32 %v7068, %v7362
    %v7364 = vand.u32 %v7363, 4294901760
    %7365 = vmatmul.mubr.f32.gmra.mxu0 %v7364
    %v7366 = vpop.f32.mrf.mxu0
    %v7367 = vadd.f32 %v7293, %v7366
    %v7368 = vpop.f32.mrf.mxu0
    %7369 = vdwg.mxu0
    %7370 = vmatprep.subr.mxu0 0.0
    %7371 = vmatpush1.msra.mxu0 0.0
    %7372 = vmatprep.subr.mxu0 0.0
    %7373 = vmatpush1.msra.mxu0 0.0
    %7374 = vmatprep.subr.mxu0 0.0
    %7375 = vmatpush1.msra.mxu0 0.0
    %7376 = vmatprep.subr.mxu0 0.0
    %7377 = vmatpush1.msra.mxu0 0.0
    %7378 = vmatprep.subr.mxu0 0.0
    %7379 = vmatpush1.msra.mxu0 0.0
    %7380 = vmatprep.subr.mxu0 0.0
    %7381 = vmatpush1.msra.mxu0 0.0
    %7382 = vmatprep.subr.mxu0 0.0
    %7383 = vmatpush1.msra.mxu0 0.0
    %7384 = vmatprep.subr.mxu0 0.0
    %7385 = vmatpush1.msra.mxu0 0.0
    %7386 = vmatprep.subr.mxu0 0.0
    %7387 = vmatpush1.msra.mxu0 0.0
    %7388 = vmatprep.subr.mxu0 0.0
    %7389 = vmatpush1.msra.mxu0 0.0
    %7390 = vmatprep.subr.mxu0 0.0
    %7391 = vmatpush1.msra.mxu0 0.0
    %7392 = vmatprep.subr.mxu0 0.0
    %7393 = vmatpush1.msra.mxu0 0.0
    %7394 = vmatprep.subr.mxu0 0.0
    %7395 = vmatpush1.msra.mxu0 0.0
    %7396 = vmatprep.subr.mxu0 0.0
    %7397 = vmatpush1.msra.mxu0 0.0
    %7398 = vmatprep.subr.mxu0 0.0
    %7399 = vmatpush1.msra.mxu0 0.0
    %7400 = vmatprep.subr.mxu0 0.0
    %v7401 = vand.u32 %v7065, 4294901760
    %v7402 = vsub.f32 %v7065, %v7401
    %v7403 = vand.u32 %v7402, 4294901760
    %7404 = vmatpush1.msra.mxu0 %v7403
    %7405 = vmatprep.subr.mxu0 0.0
    %7406 = vmatpush2.msra.mxu0 0.0
    %7407 = vmatprep.subr.mxu0 0.0
    %7408 = vmatpush2.msra.mxu0 0.0
    %7409 = vmatprep.subr.mxu0 0.0
    %7410 = vmatpush2.msra.mxu0 0.0
    %7411 = vmatprep.subr.mxu0 0.0
    %7412 = vmatpush2.msra.mxu0 0.0
    %7413 = vmatprep.subr.mxu0 0.0
    %7414 = vmatpush2.msra.mxu0 0.0
    %7415 = vmatprep.subr.mxu0 0.0
    %7416 = vmatpush2.msra.mxu0 0.0
    %7417 = vmatprep.subr.mxu0 0.0
    %7418 = vmatpush2.msra.mxu0 0.0
    %7419 = vmatprep.subr.mxu0 0.0
    %7420 = vmatpush2.msra.mxu0 0.0
    %7421 = vmatprep.subr.mxu0 0.0
    %7422 = vmatpush2.msra.mxu0 0.0
    %7423 = vmatprep.subr.mxu0 0.0
    %7424 = vmatpush2.msra.mxu0 0.0
    %7425 = vmatprep.subr.mxu0 0.0
    %7426 = vmatpush2.msra.mxu0 0.0
    %7427 = vmatprep.subr.mxu0 0.0
    %7428 = vmatpush2.msra.mxu0 0.0
    %7429 = vmatprep.subr.mxu0 0.0
    %7430 = vmatpush2.msra.mxu0 0.0
    %7431 = vmatprep.subr.mxu0 0.0
    %7432 = vmatpush2.msra.mxu0 0.0
    %7433 = vmatprep.subr.mxu0 0.0
    %7434 = vmatpush2.msra.mxu0 0.0
    %7435 = vmatprep.subr.mxu0 0.0
    %7436 = vmatpush2.msra.mxu0 0.0
    %7437 = vmatprep.mubr.f32.mxu0 0.0
    %v7438 = vand.u32 %v7068, 4294901760
    %7439 = vmatmul.mubr.f32.gmra.mxu0 %v7438
    %v7440 = vpop.f32.mrf.mxu0
    %v7441 = vadd.f32 %v7367, %v7440
    %v7442 = vpop.f32.mrf.mxu0
    %7443 = vdwg.mxu0
    %7444 = vmatprep.subr.mxu0 0.0
    %7445 = vmatpush1.msra.mxu0 0.0
    %7446 = vmatprep.subr.mxu0 0.0
    %7447 = vmatpush1.msra.mxu0 0.0
    %7448 = vmatprep.subr.mxu0 0.0
    %7449 = vmatpush1.msra.mxu0 0.0
    %7450 = vmatprep.subr.mxu0 0.0
    %7451 = vmatpush1.msra.mxu0 0.0
    %7452 = vmatprep.subr.mxu0 0.0
    %7453 = vmatpush1.msra.mxu0 0.0
    %7454 = vmatprep.subr.mxu0 0.0
    %7455 = vmatpush1.msra.mxu0 0.0
    %7456 = vmatprep.subr.mxu0 0.0
    %7457 = vmatpush1.msra.mxu0 0.0
    %7458 = vmatprep.subr.mxu0 0.0
    %7459 = vmatpush1.msra.mxu0 0.0
    %7460 = vmatprep.subr.mxu0 0.0
    %7461 = vmatpush1.msra.mxu0 0.0
    %7462 = vmatprep.subr.mxu0 0.0
    %7463 = vmatpush1.msra.mxu0 0.0
    %7464 = vmatprep.subr.mxu0 0.0
    %7465 = vmatpush1.msra.mxu0 0.0
    %7466 = vmatprep.subr.mxu0 0.0
    %7467 = vmatpush1.msra.mxu0 0.0
    %7468 = vmatprep.subr.mxu0 0.0
    %7469 = vmatpush1.msra.mxu0 0.0
    %7470 = vmatprep.subr.mxu0 0.0
    %7471 = vmatpush1.msra.mxu0 0.0
    %7472 = vmatprep.subr.mxu0 0.0
    %7473 = vmatpush1.msra.mxu0 0.0
    %7474 = vmatprep.subr.mxu0 0.0
    %v7475 = vand.u32 %v7065, 4294901760
    %7476 = vmatpush1.msra.mxu0 %v7475
    %7477 = vmatprep.subr.mxu0 0.0
    %7478 = vmatpush2.msra.mxu0 0.0
    %7479 = vmatprep.subr.mxu0 0.0
    %7480 = vmatpush2.msra.mxu0 0.0
    %7481 = vmatprep.subr.mxu0 0.0
    %7482 = vmatpush2.msra.mxu0 0.0
    %7483 = vmatprep.subr.mxu0 0.0
    %7484 = vmatpush2.msra.mxu0 0.0
    %7485 = vmatprep.subr.mxu0 0.0
    %7486 = vmatpush2.msra.mxu0 0.0
    %7487 = vmatprep.subr.mxu0 0.0
    %7488 = vmatpush2.msra.mxu0 0.0
    %7489 = vmatprep.subr.mxu0 0.0
    %7490 = vmatpush2.msra.mxu0 0.0
    %7491 = vmatprep.subr.mxu0 0.0
    %7492 = vmatpush2.msra.mxu0 0.0
    %7493 = vmatprep.subr.mxu0 0.0
    %7494 = vmatpush2.msra.mxu0 0.0
    %7495 = vmatprep.subr.mxu0 0.0
    %7496 = vmatpush2.msra.mxu0 0.0
    %7497 = vmatprep.subr.mxu0 0.0
    %7498 = vmatpush2.msra.mxu0 0.0
    %7499 = vmatprep.subr.mxu0 0.0
    %7500 = vmatpush2.msra.mxu0 0.0
    %7501 = vmatprep.subr.mxu0 0.0
    %7502 = vmatpush2.msra.mxu0 0.0
    %7503 = vmatprep.subr.mxu0 0.0
    %7504 = vmatpush2.msra.mxu0 0.0
    %7505 = vmatprep.subr.mxu0 0.0
    %7506 = vmatpush2.msra.mxu0 0.0
    %7507 = vmatprep.subr.mxu0 0.0
    %7508 = vmatpush2.msra.mxu0 0.0
    %7509 = vmatprep.mubr.f32.mxu0 0.0
    %v7510 = vand.u32 %v7068, 4294901760
    %7511 = vmatmul.mubr.f32.gmra.mxu0 %v7510
    %v7512 = vpop.f32.mrf.mxu0
    %v7513 = vadd.f32 %v7441, %v7512
    %v7514 = vpop.f32.mrf.mxu0
    %7515 = vdwg.mxu0
    %7516 = vrot.lane.b32.xlu0 %v628, 64
    %v7517 = vpop.permute.xlu0 %7516
    %v7520 = vsel %vm639, %v4351, 0
    %7522 = vmatprep.subr.mxu0 0.0
    %7523 = vmatpush1.msra.mxu0 0.0
    %7524 = vmatprep.subr.mxu0 0.0
    %7525 = vmatpush1.msra.mxu0 0.0
    %7526 = vmatprep.subr.mxu0 0.0
    %7527 = vmatpush1.msra.mxu0 0.0
    %7528 = vmatprep.subr.mxu0 0.0
    %7529 = vmatpush1.msra.mxu0 0.0
    %7530 = vmatprep.subr.mxu0 0.0
    %7531 = vmatpush1.msra.mxu0 0.0
    %7532 = vmatprep.subr.mxu0 0.0
    %7533 = vmatpush1.msra.mxu0 0.0
    %7534 = vmatprep.subr.mxu0 0.0
    %7535 = vmatpush1.msra.mxu0 0.0
    %7536 = vmatprep.subr.mxu0 0.0
    %7537 = vmatpush1.msra.mxu0 0.0
    %7538 = vmatprep.subr.mxu0 0.0
    %7539 = vmatpush1.msra.mxu0 0.0
    %7540 = vmatprep.subr.mxu0 0.0
    %7541 = vmatpush1.msra.mxu0 0.0
    %7542 = vmatprep.subr.mxu0 0.0
    %7543 = vmatpush1.msra.mxu0 0.0
    %7544 = vmatprep.subr.mxu0 0.0
    %7545 = vmatpush1.msra.mxu0 0.0
    %7546 = vmatprep.subr.mxu0 0.0
    %7547 = vmatpush1.msra.mxu0 0.0
    %7548 = vmatprep.subr.mxu0 0.0
    %7549 = vmatpush1.msra.mxu0 0.0
    %7550 = vmatprep.subr.mxu0 0.0
    %7551 = vmatpush1.msra.mxu0 0.0
    %7552 = vmatprep.subr.mxu0 0.0
    %v7553 = vand.u32 %v7517, 4294901760
    %7554 = vmatpush1.msra.mxu0 %v7553
    %7555 = vmatprep.subr.mxu0 0.0
    %7556 = vmatpush2.msra.mxu0 0.0
    %7557 = vmatprep.subr.mxu0 0.0
    %7558 = vmatpush2.msra.mxu0 0.0
    %7559 = vmatprep.subr.mxu0 0.0
    %7560 = vmatpush2.msra.mxu0 0.0
    %7561 = vmatprep.subr.mxu0 0.0
    %7562 = vmatpush2.msra.mxu0 0.0
    %7563 = vmatprep.subr.mxu0 0.0
    %7564 = vmatpush2.msra.mxu0 0.0
    %7565 = vmatprep.subr.mxu0 0.0
    %7566 = vmatpush2.msra.mxu0 0.0
    %7567 = vmatprep.subr.mxu0 0.0
    %7568 = vmatpush2.msra.mxu0 0.0
    %7569 = vmatprep.subr.mxu0 0.0
    %7570 = vmatpush2.msra.mxu0 0.0
    %7571 = vmatprep.subr.mxu0 0.0
    %7572 = vmatpush2.msra.mxu0 0.0
    %7573 = vmatprep.subr.mxu0 0.0
    %7574 = vmatpush2.msra.mxu0 0.0
    %7575 = vmatprep.subr.mxu0 0.0
    %7576 = vmatpush2.msra.mxu0 0.0
    %7577 = vmatprep.subr.mxu0 0.0
    %7578 = vmatpush2.msra.mxu0 0.0
    %7579 = vmatprep.subr.mxu0 0.0
    %7580 = vmatpush2.msra.mxu0 0.0
    %7581 = vmatprep.subr.mxu0 0.0
    %7582 = vmatpush2.msra.mxu0 0.0
    %7583 = vmatprep.subr.mxu0 0.0
    %7584 = vmatpush2.msra.mxu0 0.0
    %7585 = vmatprep.subr.mxu0 0.0
    %7586 = vmatpush2.msra.mxu0 0.0
    %7587 = vmatprep.mubr.f32.mxu0 0.0
    %v7588 = vand.u32 %v7520, 4294901760
    %v7589 = vsub.f32 %v7520, %v7588
    %v7590 = vand.u32 %v7589, 4294901760
    %v7591 = vsub.f32 %v7589, %v7590
    %v7592 = vand.u32 %v7591, 4294901760
    %7593 = vmatmul.mubr.f32.gmra.mxu0 %v7592
    %v7594 = vpop.f32.mrf.mxu0
    %v7595 = vadd.f32 0.0, %v7594
    %v7596 = vpop.f32.mrf.mxu0
    %7597 = vdwg.mxu0
    %7598 = vmatprep.subr.mxu0 0.0
    %7599 = vmatpush1.msra.mxu0 0.0
    %7600 = vmatprep.subr.mxu0 0.0
    %7601 = vmatpush1.msra.mxu0 0.0
    %7602 = vmatprep.subr.mxu0 0.0
    %7603 = vmatpush1.msra.mxu0 0.0
    %7604 = vmatprep.subr.mxu0 0.0
    %7605 = vmatpush1.msra.mxu0 0.0
    %7606 = vmatprep.subr.mxu0 0.0
    %7607 = vmatpush1.msra.mxu0 0.0
    %7608 = vmatprep.subr.mxu0 0.0
    %7609 = vmatpush1.msra.mxu0 0.0
    %7610 = vmatprep.subr.mxu0 0.0
    %7611 = vmatpush1.msra.mxu0 0.0
    %7612 = vmatprep.subr.mxu0 0.0
    %7613 = vmatpush1.msra.mxu0 0.0
    %7614 = vmatprep.subr.mxu0 0.0
    %7615 = vmatpush1.msra.mxu0 0.0
    %7616 = vmatprep.subr.mxu0 0.0
    %7617 = vmatpush1.msra.mxu0 0.0
    %7618 = vmatprep.subr.mxu0 0.0
    %7619 = vmatpush1.msra.mxu0 0.0
    %7620 = vmatprep.subr.mxu0 0.0
    %7621 = vmatpush1.msra.mxu0 0.0
    %7622 = vmatprep.subr.mxu0 0.0
    %7623 = vmatpush1.msra.mxu0 0.0
    %7624 = vmatprep.subr.mxu0 0.0
    %7625 = vmatpush1.msra.mxu0 0.0
    %7626 = vmatprep.subr.mxu0 0.0
    %7627 = vmatpush1.msra.mxu0 0.0
    %7628 = vmatprep.subr.mxu0 0.0
    %v7629 = vand.u32 %v7517, 4294901760
    %v7630 = vsub.f32 %v7517, %v7629
    %v7631 = vand.u32 %v7630, 4294901760
    %v7632 = vsub.f32 %v7630, %v7631
    %v7633 = vand.u32 %v7632, 4294901760
    %7634 = vmatpush1.msra.mxu0 %v7633
    %7635 = vmatprep.subr.mxu0 0.0
    %7636 = vmatpush2.msra.mxu0 0.0
    %7637 = vmatprep.subr.mxu0 0.0
    %7638 = vmatpush2.msra.mxu0 0.0
    %7639 = vmatprep.subr.mxu0 0.0
    %7640 = vmatpush2.msra.mxu0 0.0
    %7641 = vmatprep.subr.mxu0 0.0
    %7642 = vmatpush2.msra.mxu0 0.0
    %7643 = vmatprep.subr.mxu0 0.0
    %7644 = vmatpush2.msra.mxu0 0.0
    %7645 = vmatprep.subr.mxu0 0.0
    %7646 = vmatpush2.msra.mxu0 0.0
    %7647 = vmatprep.subr.mxu0 0.0
    %7648 = vmatpush2.msra.mxu0 0.0
    %7649 = vmatprep.subr.mxu0 0.0
    %7650 = vmatpush2.msra.mxu0 0.0
    %7651 = vmatprep.subr.mxu0 0.0
    %7652 = vmatpush2.msra.mxu0 0.0
    %7653 = vmatprep.subr.mxu0 0.0
    %7654 = vmatpush2.msra.mxu0 0.0
    %7655 = vmatprep.subr.mxu0 0.0
    %7656 = vmatpush2.msra.mxu0 0.0
    %7657 = vmatprep.subr.mxu0 0.0
    %7658 = vmatpush2.msra.mxu0 0.0
    %7659 = vmatprep.subr.mxu0 0.0
    %7660 = vmatpush2.msra.mxu0 0.0
    %7661 = vmatprep.subr.mxu0 0.0
    %7662 = vmatpush2.msra.mxu0 0.0
    %7663 = vmatprep.subr.mxu0 0.0
    %7664 = vmatpush2.msra.mxu0 0.0
    %7665 = vmatprep.subr.mxu0 0.0
    %7666 = vmatpush2.msra.mxu0 0.0
    %7667 = vmatprep.mubr.f32.mxu0 0.0
    %v7668 = vand.u32 %v7520, 4294901760
    %7669 = vmatmul.mubr.f32.gmra.mxu0 %v7668
    %v7670 = vpop.f32.mrf.mxu0
    %v7671 = vadd.f32 %v7595, %v7670
    %v7672 = vpop.f32.mrf.mxu0
    %7673 = vdwg.mxu0
    %7674 = vmatprep.subr.mxu0 0.0
    %7675 = vmatpush1.msra.mxu0 0.0
    %7676 = vmatprep.subr.mxu0 0.0
    %7677 = vmatpush1.msra.mxu0 0.0
    %7678 = vmatprep.subr.mxu0 0.0
    %7679 = vmatpush1.msra.mxu0 0.0
    %7680 = vmatprep.subr.mxu0 0.0
    %7681 = vmatpush1.msra.mxu0 0.0
    %7682 = vmatprep.subr.mxu0 0.0
    %7683 = vmatpush1.msra.mxu0 0.0
    %7684 = vmatprep.subr.mxu0 0.0
    %7685 = vmatpush1.msra.mxu0 0.0
    %7686 = vmatprep.subr.mxu0 0.0
    %7687 = vmatpush1.msra.mxu0 0.0
    %7688 = vmatprep.subr.mxu0 0.0
    %7689 = vmatpush1.msra.mxu0 0.0
    %7690 = vmatprep.subr.mxu0 0.0
    %7691 = vmatpush1.msra.mxu0 0.0
    %7692 = vmatprep.subr.mxu0 0.0
    %7693 = vmatpush1.msra.mxu0 0.0
    %7694 = vmatprep.subr.mxu0 0.0
    %7695 = vmatpush1.msra.mxu0 0.0
    %7696 = vmatprep.subr.mxu0 0.0
    %7697 = vmatpush1.msra.mxu0 0.0
    %7698 = vmatprep.subr.mxu0 0.0
    %7699 = vmatpush1.msra.mxu0 0.0
    %7700 = vmatprep.subr.mxu0 0.0
    %7701 = vmatpush1.msra.mxu0 0.0
    %7702 = vmatprep.subr.mxu0 0.0
    %7703 = vmatpush1.msra.mxu0 0.0
    %7704 = vmatprep.subr.mxu0 0.0
    %v7705 = vand.u32 %v7517, 4294901760
    %v7706 = vsub.f32 %v7517, %v7705
    %7707 = vmatpush1.msra.mxu0 %v7706
    %7708 = vmatprep.subr.mxu0 0.0
    %7709 = vmatpush2.msra.mxu0 0.0
    %7710 = vmatprep.subr.mxu0 0.0
    %7711 = vmatpush2.msra.mxu0 0.0
    %7712 = vmatprep.subr.mxu0 0.0
    %7713 = vmatpush2.msra.mxu0 0.0
    %7714 = vmatprep.subr.mxu0 0.0
    %7715 = vmatpush2.msra.mxu0 0.0
    %7716 = vmatprep.subr.mxu0 0.0
    %7717 = vmatpush2.msra.mxu0 0.0
    %7718 = vmatprep.subr.mxu0 0.0
    %7719 = vmatpush2.msra.mxu0 0.0
    %7720 = vmatprep.subr.mxu0 0.0
    %7721 = vmatpush2.msra.mxu0 0.0
    %7722 = vmatprep.subr.mxu0 0.0
    %7723 = vmatpush2.msra.mxu0 0.0
    %7724 = vmatprep.subr.mxu0 0.0
    %7725 = vmatpush2.msra.mxu0 0.0
    %7726 = vmatprep.subr.mxu0 0.0
    %7727 = vmatpush2.msra.mxu0 0.0
    %7728 = vmatprep.subr.mxu0 0.0
    %7729 = vmatpush2.msra.mxu0 0.0
    %7730 = vmatprep.subr.mxu0 0.0
    %7731 = vmatpush2.msra.mxu0 0.0
    %7732 = vmatprep.subr.mxu0 0.0
    %7733 = vmatpush2.msra.mxu0 0.0
    %7734 = vmatprep.subr.mxu0 0.0
    %7735 = vmatpush2.msra.mxu0 0.0
    %7736 = vmatprep.subr.mxu0 0.0
    %7737 = vmatpush2.msra.mxu0 0.0
    %7738 = vmatprep.subr.mxu0 0.0
    %7739 = vmatpush2.msra.mxu0 0.0
    %7740 = vmatprep.mubr.f32.mxu0 0.0
    %v7741 = vand.u32 %v7520, 4294901760
    %v7742 = vsub.f32 %v7520, %v7741
    %7743 = vmatmul.mubr.f32.gmra.mxu0 %v7742
    %v7744 = vpop.f32.mrf.mxu0
    %v7745 = vadd.f32 %v7671, %v7744
    %v7746 = vpop.f32.mrf.mxu0
    %7747 = vdwg.mxu0
    %7748 = vmatprep.subr.mxu0 0.0
    %7749 = vmatpush1.msra.mxu0 0.0
    %7750 = vmatprep.subr.mxu0 0.0
    %7751 = vmatpush1.msra.mxu0 0.0
    %7752 = vmatprep.subr.mxu0 0.0
    %7753 = vmatpush1.msra.mxu0 0.0
    %7754 = vmatprep.subr.mxu0 0.0
    %7755 = vmatpush1.msra.mxu0 0.0
    %7756 = vmatprep.subr.mxu0 0.0
    %7757 = vmatpush1.msra.mxu0 0.0
    %7758 = vmatprep.subr.mxu0 0.0
    %7759 = vmatpush1.msra.mxu0 0.0
    %7760 = vmatprep.subr.mxu0 0.0
    %7761 = vmatpush1.msra.mxu0 0.0
    %7762 = vmatprep.subr.mxu0 0.0
    %7763 = vmatpush1.msra.mxu0 0.0
    %7764 = vmatprep.subr.mxu0 0.0
    %7765 = vmatpush1.msra.mxu0 0.0
    %7766 = vmatprep.subr.mxu0 0.0
    %7767 = vmatpush1.msra.mxu0 0.0
    %7768 = vmatprep.subr.mxu0 0.0
    %7769 = vmatpush1.msra.mxu0 0.0
    %7770 = vmatprep.subr.mxu0 0.0
    %7771 = vmatpush1.msra.mxu0 0.0
    %7772 = vmatprep.subr.mxu0 0.0
    %7773 = vmatpush1.msra.mxu0 0.0
    %7774 = vmatprep.subr.mxu0 0.0
    %7775 = vmatpush1.msra.mxu0 0.0
    %7776 = vmatprep.subr.mxu0 0.0
    %7777 = vmatpush1.msra.mxu0 0.0
    %7778 = vmatprep.subr.mxu0 0.0
    %v7779 = vand.u32 %v7517, 4294901760
    %7780 = vmatpush1.msra.mxu0 %v7779
    %7781 = vmatprep.subr.mxu0 0.0
    %7782 = vmatpush2.msra.mxu0 0.0
    %7783 = vmatprep.subr.mxu0 0.0
    %7784 = vmatpush2.msra.mxu0 0.0
    %7785 = vmatprep.subr.mxu0 0.0
    %7786 = vmatpush2.msra.mxu0 0.0
    %7787 = vmatprep.subr.mxu0 0.0
    %7788 = vmatpush2.msra.mxu0 0.0
    %7789 = vmatprep.subr.mxu0 0.0
    %7790 = vmatpush2.msra.mxu0 0.0
    %7791 = vmatprep.subr.mxu0 0.0
    %7792 = vmatpush2.msra.mxu0 0.0
    %7793 = vmatprep.subr.mxu0 0.0
    %7794 = vmatpush2.msra.mxu0 0.0
    %7795 = vmatprep.subr.mxu0 0.0
    %7796 = vmatpush2.msra.mxu0 0.0
    %7797 = vmatprep.subr.mxu0 0.0
    %7798 = vmatpush2.msra.mxu0 0.0
    %7799 = vmatprep.subr.mxu0 0.0
    %7800 = vmatpush2.msra.mxu0 0.0
    %7801 = vmatprep.subr.mxu0 0.0
    %7802 = vmatpush2.msra.mxu0 0.0
    %7803 = vmatprep.subr.mxu0 0.0
    %7804 = vmatpush2.msra.mxu0 0.0
    %7805 = vmatprep.subr.mxu0 0.0
    %7806 = vmatpush2.msra.mxu0 0.0
    %7807 = vmatprep.subr.mxu0 0.0
    %7808 = vmatpush2.msra.mxu0 0.0
    %7809 = vmatprep.subr.mxu0 0.0
    %7810 = vmatpush2.msra.mxu0 0.0
    %7811 = vmatprep.subr.mxu0 0.0
    %7812 = vmatpush2.msra.mxu0 0.0
    %7813 = vmatprep.mubr.f32.mxu0 0.0
    %v7814 = vand.u32 %v7520, 4294901760
    %v7815 = vsub.f32 %v7520, %v7814
    %v7816 = vand.u32 %v7815, 4294901760
    %7817 = vmatmul.mubr.f32.gmra.mxu0 %v7816
    %v7818 = vpop.f32.mrf.mxu0
    %v7819 = vadd.f32 %v7745, %v7818
    %v7820 = vpop.f32.mrf.mxu0
    %7821 = vdwg.mxu0
    %7822 = vmatprep.subr.mxu0 0.0
    %7823 = vmatpush1.msra.mxu0 0.0
    %7824 = vmatprep.subr.mxu0 0.0
    %7825 = vmatpush1.msra.mxu0 0.0
    %7826 = vmatprep.subr.mxu0 0.0
    %7827 = vmatpush1.msra.mxu0 0.0
    %7828 = vmatprep.subr.mxu0 0.0
    %7829 = vmatpush1.msra.mxu0 0.0
    %7830 = vmatprep.subr.mxu0 0.0
    %7831 = vmatpush1.msra.mxu0 0.0
    %7832 = vmatprep.subr.mxu0 0.0
    %7833 = vmatpush1.msra.mxu0 0.0
    %7834 = vmatprep.subr.mxu0 0.0
    %7835 = vmatpush1.msra.mxu0 0.0
    %7836 = vmatprep.subr.mxu0 0.0
    %7837 = vmatpush1.msra.mxu0 0.0
    %7838 = vmatprep.subr.mxu0 0.0
    %7839 = vmatpush1.msra.mxu0 0.0
    %7840 = vmatprep.subr.mxu0 0.0
    %7841 = vmatpush1.msra.mxu0 0.0
    %7842 = vmatprep.subr.mxu0 0.0
    %7843 = vmatpush1.msra.mxu0 0.0
    %7844 = vmatprep.subr.mxu0 0.0
    %7845 = vmatpush1.msra.mxu0 0.0
    %7846 = vmatprep.subr.mxu0 0.0
    %7847 = vmatpush1.msra.mxu0 0.0
    %7848 = vmatprep.subr.mxu0 0.0
    %7849 = vmatpush1.msra.mxu0 0.0
    %7850 = vmatprep.subr.mxu0 0.0
    %7851 = vmatpush1.msra.mxu0 0.0
    %7852 = vmatprep.subr.mxu0 0.0
    %v7853 = vand.u32 %v7517, 4294901760
    %v7854 = vsub.f32 %v7517, %v7853
    %v7855 = vand.u32 %v7854, 4294901760
    %7856 = vmatpush1.msra.mxu0 %v7855
    %7857 = vmatprep.subr.mxu0 0.0
    %7858 = vmatpush2.msra.mxu0 0.0
    %7859 = vmatprep.subr.mxu0 0.0
    %7860 = vmatpush2.msra.mxu0 0.0
    %7861 = vmatprep.subr.mxu0 0.0
    %7862 = vmatpush2.msra.mxu0 0.0
    %7863 = vmatprep.subr.mxu0 0.0
    %7864 = vmatpush2.msra.mxu0 0.0
    %7865 = vmatprep.subr.mxu0 0.0
    %7866 = vmatpush2.msra.mxu0 0.0
    %7867 = vmatprep.subr.mxu0 0.0
    %7868 = vmatpush2.msra.mxu0 0.0
    %7869 = vmatprep.subr.mxu0 0.0
    %7870 = vmatpush2.msra.mxu0 0.0
    %7871 = vmatprep.subr.mxu0 0.0
    %7872 = vmatpush2.msra.mxu0 0.0
    %7873 = vmatprep.subr.mxu0 0.0
    %7874 = vmatpush2.msra.mxu0 0.0
    %7875 = vmatprep.subr.mxu0 0.0
    %7876 = vmatpush2.msra.mxu0 0.0
    %7877 = vmatprep.subr.mxu0 0.0
    %7878 = vmatpush2.msra.mxu0 0.0
    %7879 = vmatprep.subr.mxu0 0.0
    %7880 = vmatpush2.msra.mxu0 0.0
    %7881 = vmatprep.subr.mxu0 0.0
    %7882 = vmatpush2.msra.mxu0 0.0
    %7883 = vmatprep.subr.mxu0 0.0
    %7884 = vmatpush2.msra.mxu0 0.0
    %7885 = vmatprep.subr.mxu0 0.0
    %7886 = vmatpush2.msra.mxu0 0.0
    %7887 = vmatprep.subr.mxu0 0.0
    %7888 = vmatpush2.msra.mxu0 0.0
    %7889 = vmatprep.mubr.f32.mxu0 0.0
    %v7890 = vand.u32 %v7520, 4294901760
    %7891 = vmatmul.mubr.f32.gmra.mxu0 %v7890
    %v7892 = vpop.f32.mrf.mxu0
    %v7893 = vadd.f32 %v7819, %v7892
    %v7894 = vpop.f32.mrf.mxu0
    %7895 = vdwg.mxu0
    %7896 = vmatprep.subr.mxu0 0.0
    %7897 = vmatpush1.msra.mxu0 0.0
    %7898 = vmatprep.subr.mxu0 0.0
    %7899 = vmatpush1.msra.mxu0 0.0
    %7900 = vmatprep.subr.mxu0 0.0
    %7901 = vmatpush1.msra.mxu0 0.0
    %7902 = vmatprep.subr.mxu0 0.0
    %7903 = vmatpush1.msra.mxu0 0.0
    %7904 = vmatprep.subr.mxu0 0.0
    %7905 = vmatpush1.msra.mxu0 0.0
    %7906 = vmatprep.subr.mxu0 0.0
    %7907 = vmatpush1.msra.mxu0 0.0
    %7908 = vmatprep.subr.mxu0 0.0
    %7909 = vmatpush1.msra.mxu0 0.0
    %7910 = vmatprep.subr.mxu0 0.0
    %7911 = vmatpush1.msra.mxu0 0.0
    %7912 = vmatprep.subr.mxu0 0.0
    %7913 = vmatpush1.msra.mxu0 0.0
    %7914 = vmatprep.subr.mxu0 0.0
    %7915 = vmatpush1.msra.mxu0 0.0
    %7916 = vmatprep.subr.mxu0 0.0
    %7917 = vmatpush1.msra.mxu0 0.0
    %7918 = vmatprep.subr.mxu0 0.0
    %7919 = vmatpush1.msra.mxu0 0.0
    %7920 = vmatprep.subr.mxu0 0.0
    %7921 = vmatpush1.msra.mxu0 0.0
    %7922 = vmatprep.subr.mxu0 0.0
    %7923 = vmatpush1.msra.mxu0 0.0
    %7924 = vmatprep.subr.mxu0 0.0
    %7925 = vmatpush1.msra.mxu0 0.0
    %7926 = vmatprep.subr.mxu0 0.0
    %v7927 = vand.u32 %v7517, 4294901760
    %7928 = vmatpush1.msra.mxu0 %v7927
    %7929 = vmatprep.subr.mxu0 0.0
    %7930 = vmatpush2.msra.mxu0 0.0
    %7931 = vmatprep.subr.mxu0 0.0
    %7932 = vmatpush2.msra.mxu0 0.0
    %7933 = vmatprep.subr.mxu0 0.0
    %7934 = vmatpush2.msra.mxu0 0.0
    %7935 = vmatprep.subr.mxu0 0.0
    %7936 = vmatpush2.msra.mxu0 0.0
    %7937 = vmatprep.subr.mxu0 0.0
    %7938 = vmatpush2.msra.mxu0 0.0
    %7939 = vmatprep.subr.mxu0 0.0
    %7940 = vmatpush2.msra.mxu0 0.0
    %7941 = vmatprep.subr.mxu0 0.0
    %7942 = vmatpush2.msra.mxu0 0.0
    %7943 = vmatprep.subr.mxu0 0.0
    %7944 = vmatpush2.msra.mxu0 0.0
    %7945 = vmatprep.subr.mxu0 0.0
    %7946 = vmatpush2.msra.mxu0 0.0
    %7947 = vmatprep.subr.mxu0 0.0
    %7948 = vmatpush2.msra.mxu0 0.0
    %7949 = vmatprep.subr.mxu0 0.0
    %7950 = vmatpush2.msra.mxu0 0.0
    %7951 = vmatprep.subr.mxu0 0.0
    %7952 = vmatpush2.msra.mxu0 0.0
    %7953 = vmatprep.subr.mxu0 0.0
    %7954 = vmatpush2.msra.mxu0 0.0
    %7955 = vmatprep.subr.mxu0 0.0
    %7956 = vmatpush2.msra.mxu0 0.0
    %7957 = vmatprep.subr.mxu0 0.0
    %7958 = vmatpush2.msra.mxu0 0.0
    %7959 = vmatprep.subr.mxu0 0.0
    %7960 = vmatpush2.msra.mxu0 0.0
    %7961 = vmatprep.mubr.f32.mxu0 0.0
    %v7962 = vand.u32 %v7520, 4294901760
    %7963 = vmatmul.mubr.f32.gmra.mxu0 %v7962
    %v7964 = vpop.f32.mrf.mxu0
    %v7965 = vadd.f32 %v7893, %v7964
    %v7966 = vpop.f32.mrf.mxu0
    %7967 = vdwg.mxu0
    %7970 = vrot.lane.b32.xlu0 %v5705, 8
    %v7971 = vpop.permute.xlu0 %7970
    %7972 = vrot.lane.b32.xlu0 %v6157, 8
    %v7973 = vpop.permute.xlu0 %7972
    %7978 = vrot.lane.b32.xlu0 %v6609, 16
    %v7979 = vpop.permute.xlu0 %7978
    %7980 = vrot.lane.b32.xlu0 %v7061, 16
    %v7981 = vpop.permute.xlu0 %7980
    %7986 = vrot.lane.b32.xlu0 %v7513, 24
    %v7987 = vpop.permute.xlu0 %7986
    %7988 = vrot.lane.b32.xlu0 %v7965, 24
    %v7989 = vpop.permute.xlu0 %7988
    %v7992 = vsel %vm639, %v4801, %v7971
    %v7993 = vsel %vm639, %v5253, %v7973
    %vm7994 = vcmask 130048
    %v7995 = vsel %vm7994, %v7992, %v7979
    %v7996 = vsel %vm7994, %v7993, %v7981
    %vm7997 = vcmask 195584
    %v7998 = vsel %vm7997, %v7995, %v7987
    %v7999 = vsel %vm7997, %v7996, %v7989
    %v8001 = vlaneseq
    %v8002 = vshrl.u32 %v8001, 7
    %v8003 = vsub.s32 0, %v8002
    %v8004 = vrot.slane %v34, %v8003
    %v8007 = vsel %vm37, %v7998, 0
    %v8010 = vsel %vm37, %v7999, 0
    %8012 = vmatprep.subr.mxu0 0.0
    %8013 = vmatpush1.msra.mxu0 0.0
    %8014 = vmatprep.subr.mxu0 0.0
    %8015 = vmatpush1.msra.mxu0 0.0
    %8016 = vmatprep.subr.mxu0 0.0
    %8017 = vmatpush1.msra.mxu0 0.0
    %8018 = vmatprep.subr.mxu0 0.0
    %8019 = vmatpush1.msra.mxu0 0.0
    %8020 = vmatprep.subr.mxu0 0.0
    %8021 = vmatpush1.msra.mxu0 0.0
    %8022 = vmatprep.subr.mxu0 0.0
    %8023 = vmatpush1.msra.mxu0 0.0
    %8024 = vmatprep.subr.mxu0 0.0
    %8025 = vmatpush1.msra.mxu0 0.0
    %8026 = vmatprep.subr.mxu0 0.0
    %8027 = vmatpush1.msra.mxu0 0.0
    %8028 = vmatprep.subr.mxu0 0.0
    %8029 = vmatpush1.msra.mxu0 0.0
    %8030 = vmatprep.subr.mxu0 0.0
    %8031 = vmatpush1.msra.mxu0 0.0
    %8032 = vmatprep.subr.mxu0 0.0
    %8033 = vmatpush1.msra.mxu0 0.0
    %8034 = vmatprep.subr.mxu0 0.0
    %8035 = vmatpush1.msra.mxu0 0.0
    %8036 = vmatprep.subr.mxu0 0.0
    %v8037 = vand.u32 %v33, 4294901760
    %8038 = vmatpush1.msra.mxu0 %v8037
    %8039 = vmatprep.subr.mxu0 0.0
    %v8040 = vand.u32 %v32, 4294901760
    %8041 = vmatpush1.msra.mxu0 %v8040
    %8042 = vmatprep.subr.mxu0 0.0
    %v8043 = vand.u32 %v31, 4294901760
    %8044 = vmatpush1.msra.mxu0 %v8043
    %8045 = vmatprep.subr.mxu0 0.0
    %v8046 = vand.u32 %v30, 4294901760
    %8047 = vmatpush1.msra.mxu0 %v8046
    %8048 = vmatprep.subr.mxu0 0.0
    %8049 = vmatpush2.msra.mxu0 0.0
    %8050 = vmatprep.subr.mxu0 0.0
    %8051 = vmatpush2.msra.mxu0 0.0
    %8052 = vmatprep.subr.mxu0 0.0
    %8053 = vmatpush2.msra.mxu0 0.0
    %8054 = vmatprep.subr.mxu0 0.0
    %8055 = vmatpush2.msra.mxu0 0.0
    %8056 = vmatprep.subr.mxu0 0.0
    %8057 = vmatpush2.msra.mxu0 0.0
    %8058 = vmatprep.subr.mxu0 0.0
    %8059 = vmatpush2.msra.mxu0 0.0
    %8060 = vmatprep.subr.mxu0 0.0
    %8061 = vmatpush2.msra.mxu0 0.0
    %8062 = vmatprep.subr.mxu0 0.0
    %8063 = vmatpush2.msra.mxu0 0.0
    %8064 = vmatprep.subr.mxu0 0.0
    %8065 = vmatpush2.msra.mxu0 0.0
    %8066 = vmatprep.subr.mxu0 0.0
    %8067 = vmatpush2.msra.mxu0 0.0
    %8068 = vmatprep.subr.mxu0 0.0
    %8069 = vmatpush2.msra.mxu0 0.0
    %8070 = vmatprep.subr.mxu0 0.0
    %8071 = vmatpush2.msra.mxu0 0.0
    %8072 = vmatprep.subr.mxu0 0.0
    %8073 = vmatpush2.msra.mxu0 0.0
    %8074 = vmatprep.subr.mxu0 0.0
    %8075 = vmatpush2.msra.mxu0 0.0
    %8076 = vmatprep.subr.mxu0 0.0
    %8077 = vmatpush2.msra.mxu0 0.0
    %8078 = vmatprep.subr.mxu0 0.0
    %8079 = vmatpush2.msra.mxu0 0.0
    %8080 = vmatprep.mubr.f32.mxu0 0.0
    %v8081 = vand.u32 %v8007, 4294901760
    %v8082 = vsub.f32 %v8007, %v8081
    %v8083 = vand.u32 %v8082, 4294901760
    %v8084 = vsub.f32 %v8082, %v8083
    %v8085 = vand.u32 %v8084, 4294901760
    %8086 = vmatmul.mubr.f32.gmra.mxu0 %v8085
    %v8087 = vpop.f32.mrf.mxu0
    %v8088 = vadd.f32 %v8004, %v8087
    %v8089 = vpop.f32.mrf.mxu0
    %8090 = vmatprep.mubr.f32.mxu0 0.0
    %v8091 = vand.u32 %v8010, 4294901760
    %v8092 = vsub.f32 %v8010, %v8091
    %v8093 = vand.u32 %v8092, 4294901760
    %v8094 = vsub.f32 %v8092, %v8093
    %v8095 = vand.u32 %v8094, 4294901760
    %8096 = vmatmul.mubr.f32.gmra.mxu0 %v8095
    %v8097 = vpop.f32.mrf.mxu0
    %v8098 = vadd.f32 %v8004, %v8097
    %v8099 = vpop.f32.mrf.mxu0
    %8100 = vdwg.mxu0
    %8101 = vmatprep.subr.mxu0 0.0
    %8102 = vmatpush1.msra.mxu0 0.0
    %8103 = vmatprep.subr.mxu0 0.0
    %8104 = vmatpush1.msra.mxu0 0.0
    %8105 = vmatprep.subr.mxu0 0.0
    %8106 = vmatpush1.msra.mxu0 0.0
    %8107 = vmatprep.subr.mxu0 0.0
    %8108 = vmatpush1.msra.mxu0 0.0
    %8109 = vmatprep.subr.mxu0 0.0
    %8110 = vmatpush1.msra.mxu0 0.0
    %8111 = vmatprep.subr.mxu0 0.0
    %8112 = vmatpush1.msra.mxu0 0.0
    %8113 = vmatprep.subr.mxu0 0.0
    %8114 = vmatpush1.msra.mxu0 0.0
    %8115 = vmatprep.subr.mxu0 0.0
    %8116 = vmatpush1.msra.mxu0 0.0
    %8117 = vmatprep.subr.mxu0 0.0
    %8118 = vmatpush1.msra.mxu0 0.0
    %8119 = vmatprep.subr.mxu0 0.0
    %8120 = vmatpush1.msra.mxu0 0.0
    %8121 = vmatprep.subr.mxu0 0.0
    %8122 = vmatpush1.msra.mxu0 0.0
    %8123 = vmatprep.subr.mxu0 0.0
    %8124 = vmatpush1.msra.mxu0 0.0
    %8125 = vmatprep.subr.mxu0 0.0
    %v8126 = vand.u32 %v33, 4294901760
    %v8127 = vsub.f32 %v33, %v8126
    %v8128 = vand.u32 %v8127, 4294901760
    %v8129 = vsub.f32 %v8127, %v8128
    %v8130 = vand.u32 %v8129, 4294901760
    %8131 = vmatpush1.msra.mxu0 %v8130
    %8132 = vmatprep.subr.mxu0 0.0
    %v8133 = vand.u32 %v32, 4294901760
    %v8134 = vsub.f32 %v32, %v8133
    %v8135 = vand.u32 %v8134, 4294901760
    %v8136 = vsub.f32 %v8134, %v8135
    %v8137 = vand.u32 %v8136, 4294901760
    %8138 = vmatpush1.msra.mxu0 %v8137
    %8139 = vmatprep.subr.mxu0 0.0
    %v8140 = vand.u32 %v31, 4294901760
    %v8141 = vsub.f32 %v31, %v8140
    %v8142 = vand.u32 %v8141, 4294901760
    %v8143 = vsub.f32 %v8141, %v8142
    %v8144 = vand.u32 %v8143, 4294901760
    %8145 = vmatpush1.msra.mxu0 %v8144
    %8146 = vmatprep.subr.mxu0 0.0
    %v8147 = vand.u32 %v30, 4294901760
    %v8148 = vsub.f32 %v30, %v8147
    %v8149 = vand.u32 %v8148, 4294901760
    %v8150 = vsub.f32 %v8148, %v8149
    %v8151 = vand.u32 %v8150, 4294901760
    %8152 = vmatpush1.msra.mxu0 %v8151
    %8153 = vmatprep.subr.mxu0 0.0
    %8154 = vmatpush2.msra.mxu0 0.0
    %8155 = vmatprep.subr.mxu0 0.0
    %8156 = vmatpush2.msra.mxu0 0.0
    %8157 = vmatprep.subr.mxu0 0.0
    %8158 = vmatpush2.msra.mxu0 0.0
    %8159 = vmatprep.subr.mxu0 0.0
    %8160 = vmatpush2.msra.mxu0 0.0
    %8161 = vmatprep.subr.mxu0 0.0
    %8162 = vmatpush2.msra.mxu0 0.0
    %8163 = vmatprep.subr.mxu0 0.0
    %8164 = vmatpush2.msra.mxu0 0.0
    %8165 = vmatprep.subr.mxu0 0.0
    %8166 = vmatpush2.msra.mxu0 0.0
    %8167 = vmatprep.subr.mxu0 0.0
    %8168 = vmatpush2.msra.mxu0 0.0
    %8169 = vmatprep.subr.mxu0 0.0
    %8170 = vmatpush2.msra.mxu0 0.0
    %8171 = vmatprep.subr.mxu0 0.0
    %8172 = vmatpush2.msra.mxu0 0.0
    %8173 = vmatprep.subr.mxu0 0.0
    %8174 = vmatpush2.msra.mxu0 0.0
    %8175 = vmatprep.subr.mxu0 0.0
    %8176 = vmatpush2.msra.mxu0 0.0
    %8177 = vmatprep.subr.mxu0 0.0
    %8178 = vmatpush2.msra.mxu0 0.0
    %8179 = vmatprep.subr.mxu0 0.0
    %8180 = vmatpush2.msra.mxu0 0.0
    %8181 = vmatprep.subr.mxu0 0.0
    %8182 = vmatpush2.msra.mxu0 0.0
    %8183 = vmatprep.subr.mxu0 0.0
    %8184 = vmatpush2.msra.mxu0 0.0
    %8185 = vmatprep.mubr.f32.mxu0 0.0
    %v8186 = vand.u32 %v8007, 4294901760
    %8187 = vmatmul.mubr.f32.gmra.mxu0 %v8186
    %v8188 = vpop.f32.mrf.mxu0
    %v8189 = vadd.f32 %v8088, %v8188
    %v8190 = vpop.f32.mrf.mxu0
    %8191 = vmatprep.mubr.f32.mxu0 0.0
    %v8192 = vand.u32 %v8010, 4294901760
    %8193 = vmatmul.mubr.f32.gmra.mxu0 %v8192
    %v8194 = vpop.f32.mrf.mxu0
    %v8195 = vadd.f32 %v8098, %v8194
    %v8196 = vpop.f32.mrf.mxu0
    %8197 = vdwg.mxu0
    %8198 = vmatprep.subr.mxu0 0.0
    %8199 = vmatpush1.msra.mxu0 0.0
    %8200 = vmatprep.subr.mxu0 0.0
    %8201 = vmatpush1.msra.mxu0 0.0
    %8202 = vmatprep.subr.mxu0 0.0
    %8203 = vmatpush1.msra.mxu0 0.0
    %8204 = vmatprep.subr.mxu0 0.0
    %8205 = vmatpush1.msra.mxu0 0.0
    %8206 = vmatprep.subr.mxu0 0.0
    %8207 = vmatpush1.msra.mxu0 0.0
    %8208 = vmatprep.subr.mxu0 0.0
    %8209 = vmatpush1.msra.mxu0 0.0
    %8210 = vmatprep.subr.mxu0 0.0
    %8211 = vmatpush1.msra.mxu0 0.0
    %8212 = vmatprep.subr.mxu0 0.0
    %8213 = vmatpush1.msra.mxu0 0.0
    %8214 = vmatprep.subr.mxu0 0.0
    %8215 = vmatpush1.msra.mxu0 0.0
    %8216 = vmatprep.subr.mxu0 0.0
    %8217 = vmatpush1.msra.mxu0 0.0
    %8218 = vmatprep.subr.mxu0 0.0
    %8219 = vmatpush1.msra.mxu0 0.0
    %8220 = vmatprep.subr.mxu0 0.0
    %8221 = vmatpush1.msra.mxu0 0.0
    %8222 = vmatprep.subr.mxu0 0.0
    %v8223 = vand.u32 %v33, 4294901760
    %v8224 = vsub.f32 %v33, %v8223
    %8225 = vmatpush1.msra.mxu0 %v8224
    %8226 = vmatprep.subr.mxu0 0.0
    %v8227 = vand.u32 %v32, 4294901760
    %v8228 = vsub.f32 %v32, %v8227
    %8229 = vmatpush1.msra.mxu0 %v8228
    %8230 = vmatprep.subr.mxu0 0.0
    %v8231 = vand.u32 %v31, 4294901760
    %v8232 = vsub.f32 %v31, %v8231
    %8233 = vmatpush1.msra.mxu0 %v8232
    %8234 = vmatprep.subr.mxu0 0.0
    %v8235 = vand.u32 %v30, 4294901760
    %v8236 = vsub.f32 %v30, %v8235
    %8237 = vmatpush1.msra.mxu0 %v8236
    %8238 = vmatprep.subr.mxu0 0.0
    %8239 = vmatpush2.msra.mxu0 0.0
    %8240 = vmatprep.subr.mxu0 0.0
    %8241 = vmatpush2.msra.mxu0 0.0
    %8242 = vmatprep.subr.mxu0 0.0
    %8243 = vmatpush2.msra.mxu0 0.0
    %8244 = vmatprep.subr.mxu0 0.0
    %8245 = vmatpush2.msra.mxu0 0.0
    %8246 = vmatprep.subr.mxu0 0.0
    %8247 = vmatpush2.msra.mxu0 0.0
    %8248 = vmatprep.subr.mxu0 0.0
    %8249 = vmatpush2.msra.mxu0 0.0
    %8250 = vmatprep.subr.mxu0 0.0
    %8251 = vmatpush2.msra.mxu0 0.0
    %8252 = vmatprep.subr.mxu0 0.0
    %8253 = vmatpush2.msra.mxu0 0.0
    %8254 = vmatprep.subr.mxu0 0.0
    %8255 = vmatpush2.msra.mxu0 0.0
    %8256 = vmatprep.subr.mxu0 0.0
    %8257 = vmatpush2.msra.mxu0 0.0
    %8258 = vmatprep.subr.mxu0 0.0
    %8259 = vmatpush2.msra.mxu0 0.0
    %8260 = vmatprep.subr.mxu0 0.0
    %8261 = vmatpush2.msra.mxu0 0.0
    %8262 = vmatprep.subr.mxu0 0.0
    %8263 = vmatpush2.msra.mxu0 0.0
    %8264 = vmatprep.subr.mxu0 0.0
    %8265 = vmatpush2.msra.mxu0 0.0
    %8266 = vmatprep.subr.mxu0 0.0
    %8267 = vmatpush2.msra.mxu0 0.0
    %8268 = vmatprep.subr.mxu0 0.0
    %8269 = vmatpush2.msra.mxu0 0.0
    %8270 = vmatprep.mubr.f32.mxu0 0.0
    %v8271 = vand.u32 %v8007, 4294901760
    %v8272 = vsub.f32 %v8007, %v8271
    %8273 = vmatmul.mubr.f32.gmra.mxu0 %v8272
    %v8274 = vpop.f32.mrf.mxu0
    %v8275 = vadd.f32 %v8189, %v8274
    %v8276 = vpop.f32.mrf.mxu0
    %8277 = vmatprep.mubr.f32.mxu0 0.0
    %v8278 = vand.u32 %v8010, 4294901760
    %v8279 = vsub.f32 %v8010, %v8278
    %8280 = vmatmul.mubr.f32.gmra.mxu0 %v8279
    %v8281 = vpop.f32.mrf.mxu0
    %v8282 = vadd.f32 %v8195, %v8281
    %v8283 = vpop.f32.mrf.mxu0
    %8284 = vdwg.mxu0
    %8285 = vmatprep.subr.mxu0 0.0
    %8286 = vmatpush1.msra.mxu0 0.0
    %8287 = vmatprep.subr.mxu0 0.0
    %8288 = vmatpush1.msra.mxu0 0.0
    %8289 = vmatprep.subr.mxu0 0.0
    %8290 = vmatpush1.msra.mxu0 0.0
    %8291 = vmatprep.subr.mxu0 0.0
    %8292 = vmatpush1.msra.mxu0 0.0
    %8293 = vmatprep.subr.mxu0 0.0
    %8294 = vmatpush1.msra.mxu0 0.0
    %8295 = vmatprep.subr.mxu0 0.0
    %8296 = vmatpush1.msra.mxu0 0.0
    %8297 = vmatprep.subr.mxu0 0.0
    %8298 = vmatpush1.msra.mxu0 0.0
    %8299 = vmatprep.subr.mxu0 0.0
    %8300 = vmatpush1.msra.mxu0 0.0
    %8301 = vmatprep.subr.mxu0 0.0
    %8302 = vmatpush1.msra.mxu0 0.0
    %8303 = vmatprep.subr.mxu0 0.0
    %8304 = vmatpush1.msra.mxu0 0.0
    %8305 = vmatprep.subr.mxu0 0.0
    %8306 = vmatpush1.msra.mxu0 0.0
    %8307 = vmatprep.subr.mxu0 0.0
    %8308 = vmatpush1.msra.mxu0 0.0
    %8309 = vmatprep.subr.mxu0 0.0
    %v8310 = vand.u32 %v33, 4294901760
    %8311 = vmatpush1.msra.mxu0 %v8310
    %8312 = vmatprep.subr.mxu0 0.0
    %v8313 = vand.u32 %v32, 4294901760
    %8314 = vmatpush1.msra.mxu0 %v8313
    %8315 = vmatprep.subr.mxu0 0.0
    %v8316 = vand.u32 %v31, 4294901760
    %8317 = vmatpush1.msra.mxu0 %v8316
    %8318 = vmatprep.subr.mxu0 0.0
    %v8319 = vand.u32 %v30, 4294901760
    %8320 = vmatpush1.msra.mxu0 %v8319
    %8321 = vmatprep.subr.mxu0 0.0
    %8322 = vmatpush2.msra.mxu0 0.0
    %8323 = vmatprep.subr.mxu0 0.0
    %8324 = vmatpush2.msra.mxu0 0.0
    %8325 = vmatprep.subr.mxu0 0.0
    %8326 = vmatpush2.msra.mxu0 0.0
    %8327 = vmatprep.subr.mxu0 0.0
    %8328 = vmatpush2.msra.mxu0 0.0
    %8329 = vmatprep.subr.mxu0 0.0
    %8330 = vmatpush2.msra.mxu0 0.0
    %8331 = vmatprep.subr.mxu0 0.0
    %8332 = vmatpush2.msra.mxu0 0.0
    %8333 = vmatprep.subr.mxu0 0.0
    %8334 = vmatpush2.msra.mxu0 0.0
    %8335 = vmatprep.subr.mxu0 0.0
    %8336 = vmatpush2.msra.mxu0 0.0
    %8337 = vmatprep.subr.mxu0 0.0
    %8338 = vmatpush2.msra.mxu0 0.0
    %8339 = vmatprep.subr.mxu0 0.0
    %8340 = vmatpush2.msra.mxu0 0.0
    %8341 = vmatprep.subr.mxu0 0.0
    %8342 = vmatpush2.msra.mxu0 0.0
    %8343 = vmatprep.subr.mxu0 0.0
    %8344 = vmatpush2.msra.mxu0 0.0
    %8345 = vmatprep.subr.mxu0 0.0
    %8346 = vmatpush2.msra.mxu0 0.0
    %8347 = vmatprep.subr.mxu0 0.0
    %8348 = vmatpush2.msra.mxu0 0.0
    %8349 = vmatprep.subr.mxu0 0.0
    %8350 = vmatpush2.msra.mxu0 0.0
    %8351 = vmatprep.subr.mxu0 0.0
    %8352 = vmatpush2.msra.mxu0 0.0
    %8353 = vmatprep.mubr.f32.mxu0 0.0
    %v8354 = vand.u32 %v8007, 4294901760
    %v8355 = vsub.f32 %v8007, %v8354
    %v8356 = vand.u32 %v8355, 4294901760
    %8357 = vmatmul.mubr.f32.gmra.mxu0 %v8356
    %v8358 = vpop.f32.mrf.mxu0
    %v8359 = vadd.f32 %v8275, %v8358
    %v8360 = vpop.f32.mrf.mxu0
    %8361 = vmatprep.mubr.f32.mxu0 0.0
    %v8362 = vand.u32 %v8010, 4294901760
    %v8363 = vsub.f32 %v8010, %v8362
    %v8364 = vand.u32 %v8363, 4294901760
    %8365 = vmatmul.mubr.f32.gmra.mxu0 %v8364
    %v8366 = vpop.f32.mrf.mxu0
    %v8367 = vadd.f32 %v8282, %v8366
    %v8368 = vpop.f32.mrf.mxu0
    %8369 = vdwg.mxu0
    %8370 = vmatprep.subr.mxu0 0.0
    %8371 = vmatpush1.msra.mxu0 0.0
    %8372 = vmatprep.subr.mxu0 0.0
    %8373 = vmatpush1.msra.mxu0 0.0
    %8374 = vmatprep.subr.mxu0 0.0
    %8375 = vmatpush1.msra.mxu0 0.0
    %8376 = vmatprep.subr.mxu0 0.0
    %8377 = vmatpush1.msra.mxu0 0.0
    %8378 = vmatprep.subr.mxu0 0.0
    %8379 = vmatpush1.msra.mxu0 0.0
    %8380 = vmatprep.subr.mxu0 0.0
    %8381 = vmatpush1.msra.mxu0 0.0
    %8382 = vmatprep.subr.mxu0 0.0
    %8383 = vmatpush1.msra.mxu0 0.0
    %8384 = vmatprep.subr.mxu0 0.0
    %8385 = vmatpush1.msra.mxu0 0.0
    %8386 = vmatprep.subr.mxu0 0.0
    %8387 = vmatpush1.msra.mxu0 0.0
    %8388 = vmatprep.subr.mxu0 0.0
    %8389 = vmatpush1.msra.mxu0 0.0
    %8390 = vmatprep.subr.mxu0 0.0
    %8391 = vmatpush1.msra.mxu0 0.0
    %8392 = vmatprep.subr.mxu0 0.0
    %8393 = vmatpush1.msra.mxu0 0.0
    %8394 = vmatprep.subr.mxu0 0.0
    %v8395 = vand.u32 %v33, 4294901760
    %v8396 = vsub.f32 %v33, %v8395
    %v8397 = vand.u32 %v8396, 4294901760
    %8398 = vmatpush1.msra.mxu0 %v8397
    %8399 = vmatprep.subr.mxu0 0.0
    %v8400 = vand.u32 %v32, 4294901760
    %v8401 = vsub.f32 %v32, %v8400
    %v8402 = vand.u32 %v8401, 4294901760
    %8403 = vmatpush1.msra.mxu0 %v8402
    %8404 = vmatprep.subr.mxu0 0.0
    %v8405 = vand.u32 %v31, 4294901760
    %v8406 = vsub.f32 %v31, %v8405
    %v8407 = vand.u32 %v8406, 4294901760
    %8408 = vmatpush1.msra.mxu0 %v8407
    %8409 = vmatprep.subr.mxu0 0.0
    %v8410 = vand.u32 %v30, 4294901760
    %v8411 = vsub.f32 %v30, %v8410
    %v8412 = vand.u32 %v8411, 4294901760
    %8413 = vmatpush1.msra.mxu0 %v8412
    %8414 = vmatprep.subr.mxu0 0.0
    %8415 = vmatpush2.msra.mxu0 0.0
    %8416 = vmatprep.subr.mxu0 0.0
    %8417 = vmatpush2.msra.mxu0 0.0
    %8418 = vmatprep.subr.mxu0 0.0
    %8419 = vmatpush2.msra.mxu0 0.0
    %8420 = vmatprep.subr.mxu0 0.0
    %8421 = vmatpush2.msra.mxu0 0.0
    %8422 = vmatprep.subr.mxu0 0.0
    %8423 = vmatpush2.msra.mxu0 0.0
    %8424 = vmatprep.subr.mxu0 0.0
    %8425 = vmatpush2.msra.mxu0 0.0
    %8426 = vmatprep.subr.mxu0 0.0
    %8427 = vmatpush2.msra.mxu0 0.0
    %8428 = vmatprep.subr.mxu0 0.0
    %8429 = vmatpush2.msra.mxu0 0.0
    %8430 = vmatprep.subr.mxu0 0.0
    %8431 = vmatpush2.msra.mxu0 0.0
    %8432 = vmatprep.subr.mxu0 0.0
    %8433 = vmatpush2.msra.mxu0 0.0
    %8434 = vmatprep.subr.mxu0 0.0
    %8435 = vmatpush2.msra.mxu0 0.0
    %8436 = vmatprep.subr.mxu0 0.0
    %8437 = vmatpush2.msra.mxu0 0.0
    %8438 = vmatprep.subr.mxu0 0.0
    %8439 = vmatpush2.msra.mxu0 0.0
    %8440 = vmatprep.subr.mxu0 0.0
    %8441 = vmatpush2.msra.mxu0 0.0
    %8442 = vmatprep.subr.mxu0 0.0
    %8443 = vmatpush2.msra.mxu0 0.0
    %8444 = vmatprep.subr.mxu0 0.0
    %8445 = vmatpush2.msra.mxu0 0.0
    %8446 = vmatprep.mubr.f32.mxu0 0.0
    %v8447 = vand.u32 %v8007, 4294901760
    %8448 = vmatmul.mubr.f32.gmra.mxu0 %v8447
    %v8449 = vpop.f32.mrf.mxu0
    %v8450 = vadd.f32 %v8359, %v8449
    %v8451 = vpop.f32.mrf.mxu0
    %8452 = vmatprep.mubr.f32.mxu0 0.0
    %v8453 = vand.u32 %v8010, 4294901760
    %8454 = vmatmul.mubr.f32.gmra.mxu0 %v8453
    %v8455 = vpop.f32.mrf.mxu0
    %v8456 = vadd.f32 %v8367, %v8455
    %v8457 = vpop.f32.mrf.mxu0
    %8458 = vdwg.mxu0
    %8459 = vmatprep.subr.mxu0 0.0
    %8460 = vmatpush1.msra.mxu0 0.0
    %8461 = vmatprep.subr.mxu0 0.0
    %8462 = vmatpush1.msra.mxu0 0.0
    %8463 = vmatprep.subr.mxu0 0.0
    %8464 = vmatpush1.msra.mxu0 0.0
    %8465 = vmatprep.subr.mxu0 0.0
    %8466 = vmatpush1.msra.mxu0 0.0
    %8467 = vmatprep.subr.mxu0 0.0
    %8468 = vmatpush1.msra.mxu0 0.0
    %8469 = vmatprep.subr.mxu0 0.0
    %8470 = vmatpush1.msra.mxu0 0.0
    %8471 = vmatprep.subr.mxu0 0.0
    %8472 = vmatpush1.msra.mxu0 0.0
    %8473 = vmatprep.subr.mxu0 0.0
    %8474 = vmatpush1.msra.mxu0 0.0
    %8475 = vmatprep.subr.mxu0 0.0
    %8476 = vmatpush1.msra.mxu0 0.0
    %8477 = vmatprep.subr.mxu0 0.0
    %8478 = vmatpush1.msra.mxu0 0.0
    %8479 = vmatprep.subr.mxu0 0.0
    %8480 = vmatpush1.msra.mxu0 0.0
    %8481 = vmatprep.subr.mxu0 0.0
    %8482 = vmatpush1.msra.mxu0 0.0
    %8483 = vmatprep.subr.mxu0 0.0
    %v8484 = vand.u32 %v33, 4294901760
    %8485 = vmatpush1.msra.mxu0 %v8484
    %8486 = vmatprep.subr.mxu0 0.0
    %v8487 = vand.u32 %v32, 4294901760
    %8488 = vmatpush1.msra.mxu0 %v8487
    %8489 = vmatprep.subr.mxu0 0.0
    %v8490 = vand.u32 %v31, 4294901760
    %8491 = vmatpush1.msra.mxu0 %v8490
    %8492 = vmatprep.subr.mxu0 0.0
    %v8493 = vand.u32 %v30, 4294901760
    %8494 = vmatpush1.msra.mxu0 %v8493
    %8495 = vmatprep.subr.mxu0 0.0
    %8496 = vmatpush2.msra.mxu0 0.0
    %8497 = vmatprep.subr.mxu0 0.0
    %8498 = vmatpush2.msra.mxu0 0.0
    %8499 = vmatprep.subr.mxu0 0.0
    %8500 = vmatpush2.msra.mxu0 0.0
    %8501 = vmatprep.subr.mxu0 0.0
    %8502 = vmatpush2.msra.mxu0 0.0
    %8503 = vmatprep.subr.mxu0 0.0
    %8504 = vmatpush2.msra.mxu0 0.0
    %8505 = vmatprep.subr.mxu0 0.0
    %8506 = vmatpush2.msra.mxu0 0.0
    %8507 = vmatprep.subr.mxu0 0.0
    %8508 = vmatpush2.msra.mxu0 0.0
    %8509 = vmatprep.subr.mxu0 0.0
    %8510 = vmatpush2.msra.mxu0 0.0
    %8511 = vmatprep.subr.mxu0 0.0
    %8512 = vmatpush2.msra.mxu0 0.0
    %8513 = vmatprep.subr.mxu0 0.0
    %8514 = vmatpush2.msra.mxu0 0.0
    %8515 = vmatprep.subr.mxu0 0.0
    %8516 = vmatpush2.msra.mxu0 0.0
    %8517 = vmatprep.subr.mxu0 0.0
    %8518 = vmatpush2.msra.mxu0 0.0
    %8519 = vmatprep.subr.mxu0 0.0
    %8520 = vmatpush2.msra.mxu0 0.0
    %8521 = vmatprep.subr.mxu0 0.0
    %8522 = vmatpush2.msra.mxu0 0.0
    %8523 = vmatprep.subr.mxu0 0.0
    %8524 = vmatpush2.msra.mxu0 0.0
    %8525 = vmatprep.subr.mxu0 0.0
    %8526 = vmatpush2.msra.mxu0 0.0
    %8527 = vmatprep.mubr.f32.mxu0 0.0
    %v8528 = vand.u32 %v8007, 4294901760
    %8529 = vmatmul.mubr.f32.gmra.mxu0 %v8528
    %v8530 = vpop.f32.mrf.mxu0
    %v8531 = vadd.f32 %v8450, %v8530
    %v8532 = vpop.f32.mrf.mxu0
    %8533 = vmatprep.mubr.f32.mxu0 0.0
    %v8534 = vand.u32 %v8010, 4294901760
    %8535 = vmatmul.mubr.f32.gmra.mxu0 %v8534
    %v8536 = vpop.f32.mrf.mxu0
    %v8537 = vadd.f32 %v8456, %v8536
    %v8538 = vpop.f32.mrf.mxu0
    %8539 = vdwg.mxu0
    %8540 = vst.msk [vmem:[#allocation2] sm:$0xff] %vm37, %v8531
    %8541 = vst.msk [vmem:[#allocation2 + $0x8] sm:$0xff] %vm37, %v8537
    // Predicated region
    $region26: #{inner_attention_forward.1} parent=1 // pred_check
      _
    $region27: #{inner_attention_forward.1} parent=1 // pred_check_branch
      %8543 = sbr.rel (0) target = $region29
    $region28: #{inner_attention_forward.1} parent=1 // pred_region
      %s8545 = ssub.s32 256, 256
      %8546 = vsyncadd [#allocation3], %s8545
      %s8547 = sshll.u32 [#allocation2], 4
      %s8548 = int_to_ptr.vmem [resolvable:$true] %s8547
      %8553 = dma.vmem_to_hbm [thread:$0]  %s8548, 256, %s6, [#allocation3], 128, 128, 8
    $region29: #{inner_attention_forward.1} parent=1 // pred_fallthru
      _
    // Predicated region
    $region30: #{inner_attention_forward.1} parent=1 // pred_check
      _
    $region31: #{inner_attention_forward.1} parent=1 // pred_check_branch
      %8555 = sbr.rel (0) target = $region33
    $region32: #{inner_attention_forward.1} parent=1 // pred_region
      %8556 = dma.done [#allocation3], 256
    $region33: #{inner_attention_forward.1} parent=1 // pred_fallthru
      _
    %8557 = vsyncpa [#allocation3], 1

</llo_original>
